<compile_context>
chip_gen: v6e
topology: v6e:2x2x1
jax: 0.10.0
libtpu: 0.0.40
codegen_flags: <defaults>
</compile_context>

<pallas_src>
import functools

import jax
import jax.numpy as jnp
from jax.experimental import pallas as pl
from jax.experimental.pallas import tpu as pltpu


def _full_spec(shape):
    # Whole-array block (no grid): index_map takes no args.
    return pl.BlockSpec(shape, lambda: (0,) * len(shape))


# ---------------------------------------------------------------------------
# Fused kernel: GraphConv1 -> GraphConv2 -> max-pool -> Linear2 -> Linear3 -> sigmoid
# ---------------------------------------------------------------------------
def fused_graph_head_kernel(
    x_ref, adj_ref, deg_ref,                 # (V, Fpad) f32, (V, V) bf16, (V, 1) f32
    w0a_ref, w1a_ref, b0a_ref, b1a_ref,      # layer-1: (Fpad, D1) bf16 x2, (1, D1) f32 x2
    wg2_ref, b0b_ref, b1b_ref,               # layer-2: (2*D1, D2) bf16, (1, D2) f32 x2
    w2q_hbm, w3q_hbm,                        # int8 head weights left in HBM (pl.ANY)
    s2_ref, b2_ref, s3_ref, b3_ref,          # per-col scales + biases (1, DLIN)/(1, OUT) f32
    y_ref,                                   # out: (1, OUT) f32
    w2q_vmem, w3q_vmem, w2_deq, w3_deq, dma_sem,   # VMEM scratch + DMA semaphores
):
    f32 = jnp.float32
    bf16 = jnp.bfloat16

    # Prefetch the int8 MLP-head weights (the dominant HBM traffic) so their DMA
    # overlaps the GraphConv compute; only wait right before each matvec needs them.
    # TODO(synk): these copies could be started one pallas_call earlier (cross-call
    # prefetch returning DMA semaphores + VMEM refs) so they also overlap the BlockSpec
    # input DMAs and the XLA-side padding work.
    cp2 = pltpu.make_async_copy(w2q_hbm, w2q_vmem, dma_sem.at[0])
    cp3 = pltpu.make_async_copy(w3q_hbm, w3q_vmem, dma_sem.at[1])
    cp2.start()
    cp3.start()

    adjb = adj_ref[...]                      # bf16; small integer edge counts are exact
    deg = deg_ref[...]                       # (V, 1) f32, precomputed row sums

    # GraphConv 1:  relu(x@W0 + b0 + A@(x@W1 + b1))
    #            == relu(x@W0 + (A@x)@W1 + b0 + deg*b1)   (A@(x@W1) reordered)
    x0 = x_ref[...].astype(bf16)
    ax0 = jnp.dot(adjb, x0, preferred_element_type=f32)
    h1 = (jnp.dot(x0, w0a_ref[...], preferred_element_type=f32)
          + jnp.dot(ax0.astype(bf16), w1a_ref[...], preferred_element_type=f32)
          + b0a_ref[...] + deg * b1a_ref[...])
    x1 = jnp.maximum(h1, 0.0)                # (V, D1) f32
    x1b = x1.astype(bf16)
    d1 = x1.shape[1]

    # GraphConv 2: two matmuls against static (sublane-aligned) views of the stacked
    # [W0; W1] weight -- no concat staging through scratch, no store->load serialization.
    ax1 = jnp.dot(adjb, x1b, preferred_element_type=f32)
    h2 = (jnp.dot(x1b, wg2_ref[0:d1, :], preferred_element_type=f32)
          + jnp.dot(ax1.astype(bf16), wg2_ref[d1:2 * d1, :], preferred_element_type=f32)
          + b0b_ref[...] + deg * b1b_ref[...])
    x2 = jnp.maximum(h2, 0.0)                # (V, D2) f32

    # Global max over vertices, then the MLP head (M = 1 matvecs -> weight-BW bound,
    # which is why the head weights are int8-in-HBM and prefetched above).
    g = jnp.max(x2, axis=0, keepdims=True).astype(bf16)      # (1, D2)

    # Dequant = cast only (int8 values are exact in bf16); the per-output-column scale
    # is applied to the f32 accumulator, so the only approximation is int8 rounding.
    # TODO(synk): per-generation fast paths -- int8 x int8 MXU operands on v5e/v6e
    # (quantizing g with a runtime scale) or fp8(e4m3) weights fed straight to the MXU
    # on v7x -- would also remove the dequant cast; the cast path is the portable choice.
    cp2.wait()
    w2_deq[...] = w2q_vmem[...].astype(f32).astype(bf16)
    h3 = (jnp.dot(g, w2_deq[...], preferred_element_type=f32) * s2_ref[...]
          + b2_ref[...])
    h3 = jnp.maximum(h3, 0.0).astype(bf16)   # (1, DLIN)

    cp3.wait()
    w3_deq[...] = w3q_vmem[...].astype(f32).astype(bf16)
    z = (jnp.dot(h3, w3_deq[...], preferred_element_type=f32) * s3_ref[...]
         + b3_ref[...])
    y_ref[...] = jax.nn.sigmoid(z)           # (1, 3*H*W), lane-dense (768 = 6*128)


def fused_graph_head(xpad, adj_bf16, deg, kp):
    out_dim = kp["lin3_b"].shape[1]
    # TODO(synk): for a batch of meshes on v7x, add a leading batch grid axis marked
    # "parallel" (dimension_semantics) so the two TensorCores split the batch; a single
    # mesh keeps this a gridless single-program kernel.
    return pl.pallas_call(
        fused_graph_head_kernel,
        out_shape=jax.ShapeDtypeStruct((1, out_dim), jnp.float32),
        in_specs=[
            _full_spec(xpad.shape),
            _full_spec(adj_bf16.shape),
            _full_spec(deg.shape),
            _full_spec(kp["w0_g1"].shape),
            _full_spec(kp["w1_g1"].shape),
            _full_spec(kp["b0_g1"].shape),
            _full_spec(kp["b1_g1"].shape),
            _full_spec(kp["w_g2"].shape),
            _full_spec(kp["b0_g2"].shape),
            _full_spec(kp["b1_g2"].shape),
            pl.BlockSpec(memory_space=pl.ANY),   # lin2_wq stays in HBM, DMA'd in-kernel
            pl.BlockSpec(memory_space=pl.ANY),   # lin3_wq stays in HBM, DMA'd in-kernel
            _full_spec(kp["lin2_s"].shape),
            _full_spec(kp["lin2_b"].shape),
            _full_spec(kp["lin3_s"].shape),
            _full_spec(kp["lin3_b"].shape),
        ],
        out_specs=_full_spec((1, out_dim)),
        scratch_shapes=[
            pltpu.VMEM(kp["lin2_wq"].shape, jnp.int8),       # DMA landing buffer (0.5 MiB)
            pltpu.VMEM(kp["lin3_wq"].shape, jnp.int8),       # DMA landing buffer (0.75 MiB)
            pltpu.VMEM(kp["lin2_wq"].shape, jnp.bfloat16),   # dequantized lin2_w operand
            pltpu.VMEM(kp["lin3_wq"].shape, jnp.bfloat16),   # dequantized lin3_w operand
            pltpu.SemaphoreType.DMA((2,)),
        ],
        compiler_params=pltpu.CompilerParams(vmem_limit_bytes=16 * 1024 * 1024),
    )(xpad, adj_bf16, deg,
      kp["w0_g1"], kp["w1_g1"], kp["b0_g1"], kp["b1_g1"],
      kp["w_g2"], kp["b0_g2"], kp["b1_g2"],
      kp["lin2_wq"], kp["lin3_wq"],
      kp["lin2_s"], kp["lin2_b"], kp["lin3_s"], kp["lin3_b"])


# ---------------------------------------------------------------------------
# Parameter / mesh preprocessing + full forward (glue in plain JAX)
# ---------------------------------------------------------------------------
def init_params(key, input_dim, d1, d2, d_lin, out_dim):
    def linear(k, din, dout):
        kw, kb = jax.random.split(k)
        scale = 1.0 / jnp.sqrt(jnp.float32(din))
        w = jax.random.normal(kw, (din, dout), jnp.float32) * scale
        b = jax.random.normal(kb, (1, dout), jnp.float32) * scale
        return w, b

    keys = jax.random.split(key, 6)
    p = {}
    p["g1_w0"], p["g1_b0"] = linear(keys[0], input_dim, d1)
    p["g1_w1"], p["g1_b1"] = linear(keys[1], input_dim, d1)
    p["g2_w0"], p["g2_b0"] = linear(keys[2], d1, d2)
    p["g2_w1"], p["g2_b1"] = linear(keys[3], d1, d2)
    p["lin2_w"], p["lin2_b"] = linear(keys[4], d2, d_lin)
    p["lin3_w"], p["lin3_b"] = linear(keys[5], d_lin, out_dim)
    return p


def _quantize_int8_per_col(w):
    """Symmetric int8 quantization with one scale per output column; the scale is
    applied to the f32 accumulator after the matvec, so the algebra is exact up to
    the int8 rounding of each weight."""
    absmax = jnp.max(jnp.abs(w), axis=0, keepdims=True)
    scale = jnp.maximum(absmax, 1e-8) / 127.0
    q = jnp.clip(jnp.round(w / scale), -127.0, 127.0).astype(jnp.int8)
    return q, scale.astype(jnp.float32)


def prepare_params(params, padded_input_dim=8):
    """One-time preprocessing at the pallas_call boundary: zero-pad the tiny layer-1
    weights to the padded feature dim, stack [W0; W1] of layer 2 (sliced in-kernel),
    cast GraphConv weights to bf16, and quantize the two big head weights to int8
    with per-output-column scales (halves the dominant HBM traffic)."""
    bf16, f32 = jnp.bfloat16, jnp.float32

    def pad_rows(w, rows):
        return jnp.pad(w, ((0, rows - w.shape[0]), (0, 0)))

    kp = {}
    kp["w0_g1"] = pad_rows(params["g1_w0"], padded_input_dim).astype(bf16)
    kp["w1_g1"] = pad_rows(params["g1_w1"], padded_input_dim).astype(bf16)
    kp["b0_g1"] = params["g1_b0"].astype(f32)
    kp["b1_g1"] = params["g1_b1"].astype(f32)
    kp["w_g2"] = jnp.concatenate([params["g2_w0"], params["g2_w1"]], axis=0).astype(bf16)
    kp["b0_g2"] = params["g2_b0"].astype(f32)
    kp["b1_g2"] = params["g2_b1"].astype(f32)
    kp["lin2_wq"], kp["lin2_s"] = _quantize_int8_per_col(params["lin2_w"])
    kp["lin2_b"] = params["lin2_b"].astype(f32)
    kp["lin3_wq"], kp["lin3_s"] = _quantize_int8_per_col(params["lin3_w"])
    kp["lin3_b"] = params["lin3_b"].astype(f32)
    return kp


def build_adjacency(edges, num_verts):
    # Undirected scatter-add: for edge (v0, v1) add both directions.
    a = jnp.zeros((num_verts, num_verts), jnp.float32)
    a = a.at[edges[:, 0], edges[:, 1]].add(1.0)
    a = a.at[edges[:, 1], edges[:, 0]].add(1.0)
    return a


def prepare_mesh(edges, num_verts):
    """One-time, off the jit critical path (static mesh): dense adjacency + degree
    vector; adj is cast to bf16 (small integer edge counts are exact) to halve its DMA."""
    adj = build_adjacency(edges, num_verts)
    deg = jnp.sum(adj, axis=1, keepdims=True)
    return adj.astype(jnp.bfloat16), deg


@functools.partial(jax.jit, static_argnames=("image_h", "image_w"))
def mesh_renderer_forward(verts, adj_bf16, deg, kp, image_h, image_w):
    xpad = jnp.pad(verts, ((0, 0), (0, kp["w0_g1"].shape[0] - verts.shape[1])))
    y = fused_graph_head(xpad, adj_bf16, deg, kp)              # (1, 3*H*W)

    # Nearest x4 upsample: the dedicated upsample pallas_call is gone; XLA fuses the
    # reshape + two repeats of the 3 KiB kernel output into one tiny op.
    # TODO(synk): fully in-kernel upsample would need a (1, 3*H*W) -> (3*H, W) relayout
    # inside the kernel followed by two 0/1 replication matmuls; skipped here to avoid
    # Mosaic reshape-lowering risk for the narrow (48, 16) intermediate.
    img = y.reshape(3, image_h, image_w)
    img = jnp.repeat(jnp.repeat(img, 4, axis=-2), 4, axis=-1)
    return img[None]                                           # NCHW (1, 3, 4H, 4W)


# ---------------------------------------------------------------------------
# References
# ---------------------------------------------------------------------------
def matched_reference(verts, adj_bf16, deg, kp, image_h, image_w):
    """Plain-JAX reference with the same bf16-operand / f32-accumulation / int8-head
    recipe and the same algebraic restructuring as the kernel (validates Pallas vs XLA)."""
    f32, bf16 = jnp.float32, jnp.bfloat16
    xpad = jnp.pad(verts, ((0, 0), (0, kp["w0_g1"].shape[0] - verts.shape[1])))

    x0 = xpad.astype(bf16)
    ax0 = jnp.dot(adj_bf16, x0, preferred_element_type=f32)
    h1 = (jnp.dot(x0, kp["w0_g1"], preferred_element_type=f32)
          + jnp.dot(ax0.astype(bf16), kp["w1_g1"], preferred_element_type=f32)
          + kp["b0_g1"] + deg * kp["b1_g1"])
    x1 = jnp.maximum(h1, 0.0)
    x1b = x1.astype(bf16)
    d1 = x1.shape[1]

    ax1 = jnp.dot(adj_bf16, x1b, preferred_element_type=f32)
    h2 = (jnp.dot(x1b, kp["w_g2"][0:d1, :], preferred_element_type=f32)
          + jnp.dot(ax1.astype(bf16), kp["w_g2"][d1:2 * d1, :], preferred_element_type=f32)
          + kp["b0_g2"] + deg * kp["b1_g2"])
    x2 = jnp.maximum(h2, 0.0)

    g = jnp.max(x2, axis=0, keepdims=True).astype(bf16)
    w2 = kp["lin2_wq"].astype(f32).astype(bf16)
    h3 = jnp.maximum(jnp.dot(g, w2, preferred_element_type=f32) * kp["lin2_s"]
                     + kp["lin2_b"], 0.0).astype(bf16)
    w3 = kp["lin3_wq"].astype(f32).astype(bf16)
    y = jax.nn.sigmoid(jnp.dot(h3, w3, preferred_element_type=f32) * kp["lin3_s"]
                       + kp["lin3_b"])

    img = y.reshape(3, image_h, image_w)
    img = jnp.repeat(jnp.repeat(img, 4, axis=-2), 4, axis=-1)
    return img[None]


def reference_forward_f32(verts, edges, params, image_h, image_w):
    """Full-precision reference with the original per-layer formulation (sanity check)."""
    V = verts.shape[0]
    adj = build_adjacency(edges, V)
    with jax.default_matmul_precision("highest"):
        def gconv(x, w0, b0, w1, b1):
            return jax.nn.relu(x @ w0 + b0 + adj @ (x @ w1 + b1))

        x = gconv(verts, params["g1_w0"], params["g1_b0"], params["g1_w1"], params["g1_b1"])
        x = gconv(x, params["g2_w0"], params["g2_b0"], params["g2_w1"], params["g2_b1"])
        x = jnp.max(x, axis=0, keepdims=True)
        x = jax.nn.relu(x @ params["lin2_w"] + params["lin2_b"])
        x = jax.nn.sigmoid(x @ params["lin3_w"] + params["lin3_b"])
    img = x.reshape(3, image_h, image_w)
    img = jnp.repeat(jnp.repeat(img, 4, axis=-2), 4, axis=-1)
    return img[None]


if __name__ == "__main__":
    # Small shapes consistent with the module: verts (V, 3), edges (E, 2),
    # graph dims 3 -> 256 -> 512, head 512 -> 1024 -> 3*H*W with H = W = 16.
    V, E = 64, 128
    INPUT_DIM = 3
    D1, D2, D_LIN = 256, 512, 1024
    IMAGE_H = IMAGE_W = 16
    OUT_DIM = 3 * IMAGE_H * IMAGE_W

    key = jax.random.PRNGKey(0)
    k_verts, k_edges, k_params = jax.random.split(key, 3)

    verts = jax.random.normal(k_verts, (V, INPUT_DIM), jnp.float32)
    edges = jax.random.randint(k_edges, (E, 2), 0, V, jnp.int32)
    params = init_params(k_params, INPUT_DIM, D1, D2, D_LIN, OUT_DIM)
    kparams = prepare_params(params)
    adj_bf16, deg = prepare_mesh(edges, V)      # static mesh: precomputed once

    out = mesh_renderer_forward(verts, adj_bf16, deg, kparams, IMAGE_H, IMAGE_W)
    out = jax.block_until_ready(out)
    assert out.shape == (1, 3, 4 * IMAGE_H, 4 * IMAGE_W), out.shape

    # Tight check vs the precision-matched JAX reference (same math, same bf16/int8 recipe).
    ref_m = matched_reference(verts, adj_bf16, deg, kparams, IMAGE_H, IMAGE_W)
    max_diff_m = float(jnp.max(jnp.abs(out - ref_m)))
    assert jnp.allclose(out, ref_m, rtol=1e-2, atol=1e-3), (
        f"mismatch vs precision-matched reference, max|diff|={max_diff_m}")

    # Loose sanity check vs the full-f32 original formulation: the bound budgets for the
    # deliberate bf16 + int8-head quantization noise while still catching layout/algebra
    # bugs (those decorrelate the sigmoid outputs and give O(0.5+) differences).
    ref_f32 = reference_forward_f32(verts, edges, params, IMAGE_H, IMAGE_W)
    max_diff_f32 = float(jnp.max(jnp.abs(out - ref_f32)))
    assert max_diff_f32 < 0.25, f"too far from f32 reference, max|diff|={max_diff_f32}"

    print("KERNEL_OK")
</pallas_src>

<mosaic_0001>
module attributes {stable_mosaic.version = 11 : i64} {
  func.func @fused_graph_head_kernel(%arg0: memref<64x8xf32, #tpu.memory_space<vmem>>, %arg1: memref<64x64xbf16, #tpu.memory_space<vmem>>, %arg2: memref<64x1xf32, #tpu.memory_space<vmem>>, %arg3: memref<8x256xbf16, #tpu.memory_space<vmem>>, %arg4: memref<8x256xbf16, #tpu.memory_space<vmem>>, %arg5: memref<1x256xf32, #tpu.memory_space<vmem>>, %arg6: memref<1x256xf32, #tpu.memory_space<vmem>>, %arg7: memref<512x512xbf16, #tpu.memory_space<vmem>>, %arg8: memref<1x512xf32, #tpu.memory_space<vmem>>, %arg9: memref<1x512xf32, #tpu.memory_space<vmem>>, %arg10: memref<512x1024xi8, #tpu.memory_space<any>>, %arg11: memref<1024x768xi8, #tpu.memory_space<any>>, %arg12: memref<1x1024xf32, #tpu.memory_space<vmem>>, %arg13: memref<1x1024xf32, #tpu.memory_space<vmem>>, %arg14: memref<1x768xf32, #tpu.memory_space<vmem>>, %arg15: memref<1x768xf32, #tpu.memory_space<vmem>>, %arg16: memref<1x768xf32, #tpu.memory_space<vmem>>, %arg17: memref<512x1024xi8, #tpu.memory_space<vmem>>, %arg18: memref<1024x768xi8, #tpu.memory_space<vmem>>, %arg19: memref<512x1024xbf16, #tpu.memory_space<vmem>>, %arg20: memref<1024x768xbf16, #tpu.memory_space<vmem>>, %arg21: memref<2x!tpu.dma_semaphore, #tpu.memory_space<semaphore_mem>>) attributes {dimension_semantics = [], scalar_prefetch = 0 : i64, scratch_operands = 5 : i64, tpu.core_type = #tpu.core_type<tc>} {
    %c0_i32 = arith.constant 0 : i32
    %0 = tpu.memref_slice %arg21[%c0_i32] : memref<2x!tpu.dma_semaphore, #tpu.memory_space<semaphore_mem>> -> memref<1x!tpu.dma_semaphore, #tpu.memory_space<semaphore_mem>>
    %1 = tpu.memref_squeeze %0 : memref<1x!tpu.dma_semaphore, #tpu.memory_space<semaphore_mem>> -> memref<!tpu.dma_semaphore, #tpu.memory_space<semaphore_mem>>
    tpu.enqueue_dma source(%arg10 : memref<512x1024xi8, #tpu.memory_space<any>>) target(%arg17 : memref<512x1024xi8, #tpu.memory_space<vmem>>) target_semaphore(%1 : memref<!tpu.dma_semaphore, #tpu.memory_space<semaphore_mem>>)
    %c1_i32 = arith.constant 1 : i32
    %2 = tpu.memref_slice %arg21[%c1_i32] : memref<2x!tpu.dma_semaphore, #tpu.memory_space<semaphore_mem>> -> memref<1x!tpu.dma_semaphore, #tpu.memory_space<semaphore_mem>>
    %3 = tpu.memref_squeeze %2 : memref<1x!tpu.dma_semaphore, #tpu.memory_space<semaphore_mem>> -> memref<!tpu.dma_semaphore, #tpu.memory_space<semaphore_mem>>
    tpu.enqueue_dma source(%arg11 : memref<1024x768xi8, #tpu.memory_space<any>>) target(%arg18 : memref<1024x768xi8, #tpu.memory_space<vmem>>) target_semaphore(%3 : memref<!tpu.dma_semaphore, #tpu.memory_space<semaphore_mem>>)
    %c0 = arith.constant 0 : index
    %c0_0 = arith.constant 0 : index
    %4 = vector.load %arg1[%c0, %c0_0] : memref<64x64xbf16, #tpu.memory_space<vmem>>, vector<64x64xbf16>
    %c0_1 = arith.constant 0 : index
    %c0_2 = arith.constant 0 : index
    %5 = vector.load %arg2[%c0_1, %c0_2] : memref<64x1xf32, #tpu.memory_space<vmem>>, vector<64x1xf32>
    %c0_3 = arith.constant 0 : index
    %c0_4 = arith.constant 0 : index
    %6 = vector.load %arg0[%c0_3, %c0_4] : memref<64x8xf32, #tpu.memory_space<vmem>>, vector<64x8xf32>
    %7 = arith.truncf %6 : vector<64x8xf32> to vector<64x8xbf16>
    %cst = arith.constant dense<0.000000e+00> : vector<64x8xf32>
    %8 = tpu.matmul %4, %7, %cst {dimension_numbers = #tpu.dot_dimension_numbers<[1], [0], [0], [1], [0, 0, 1, 1], [], []>} : vector<64x64xbf16>, vector<64x8xbf16>, vector<64x8xf32> -> vector<64x8xf32>
    %c0_5 = arith.constant 0 : index
    %c0_6 = arith.constant 0 : index
    %9 = vector.load %arg3[%c0_5, %c0_6] : memref<8x256xbf16, #tpu.memory_space<vmem>>, vector<8x256xbf16>
    %cst_7 = arith.constant dense<0.000000e+00> : vector<64x256xf32>
    %10 = tpu.matmul %7, %9, %cst_7 {dimension_numbers = #tpu.dot_dimension_numbers<[1], [0], [0], [1], [0, 0, 1, 1], [], []>} : vector<64x8xbf16>, vector<8x256xbf16>, vector<64x256xf32> -> vector<64x256xf32>
    %11 = arith.truncf %8 : vector<64x8xf32> to vector<64x8xbf16>
    %c0_8 = arith.constant 0 : index
    %c0_9 = arith.constant 0 : index
    %12 = vector.load %arg4[%c0_8, %c0_9] : memref<8x256xbf16, #tpu.memory_space<vmem>>, vector<8x256xbf16>
    %cst_10 = arith.constant dense<0.000000e+00> : vector<64x256xf32>
    %13 = tpu.matmul %11, %12, %cst_10 {dimension_numbers = #tpu.dot_dimension_numbers<[1], [0], [0], [1], [0, 0, 1, 1], [], []>} : vector<64x8xbf16>, vector<8x256xbf16>, vector<64x256xf32> -> vector<64x256xf32>
    %14 = arith.addf %10, %13 : vector<64x256xf32>
    %c0_11 = arith.constant 0 : index
    %c0_12 = arith.constant 0 : index
    %15 = vector.load %arg5[%c0_11, %c0_12] : memref<1x256xf32, #tpu.memory_space<vmem>>, vector<1x256xf32>
    %16 = vector.broadcast %15 : vector<1x256xf32> to vector<64x256xf32>
    %17 = arith.addf %14, %16 : vector<64x256xf32>
    %c0_13 = arith.constant 0 : index
    %c0_14 = arith.constant 0 : index
    %18 = vector.load %arg6[%c0_13, %c0_14] : memref<1x256xf32, #tpu.memory_space<vmem>>, vector<1x256xf32>
    %19 = vector.broadcast %5 : vector<64x1xf32> to vector<64x256xf32>
    %20 = vector.broadcast %18 : vector<1x256xf32> to vector<64x256xf32>
    %21 = arith.mulf %19, %20 : vector<64x256xf32>
    %22 = arith.addf %17, %21 : vector<64x256xf32>
    %cst_15 = arith.constant 0.000000e+00 : f32
    %23 = vector.broadcast %cst_15 : f32 to vector<64x256xf32>
    %24 = arith.maximumf %22, %23 : vector<64x256xf32>
    %25 = arith.truncf %24 : vector<64x256xf32> to vector<64x256xbf16>
    %cst_16 = arith.constant dense<0.000000e+00> : vector<64x256xf32>
    %26 = tpu.matmul %4, %25, %cst_16 {dimension_numbers = #tpu.dot_dimension_numbers<[1], [0], [0], [1], [0, 0, 1, 1], [], []>} : vector<64x64xbf16>, vector<64x256xbf16>, vector<64x256xf32> -> vector<64x256xf32>
    %c0_17 = arith.constant 0 : index
    %c0_18 = arith.constant 0 : index
    %27 = vector.load %arg7[%c0_17, %c0_18] : memref<512x512xbf16, #tpu.memory_space<vmem>>, vector<256x512xbf16>
    %cst_19 = arith.constant dense<0.000000e+00> : vector<64x512xf32>
    %28 = tpu.matmul %25, %27, %cst_19 {dimension_numbers = #tpu.dot_dimension_numbers<[1], [0], [0], [1], [0, 0, 1, 1], [], []>} : vector<64x256xbf16>, vector<256x512xbf16>, vector<64x512xf32> -> vector<64x512xf32>
    %29 = arith.truncf %26 : vector<64x256xf32> to vector<64x256xbf16>
    %c256 = arith.constant 256 : index
    %c0_20 = arith.constant 0 : index
    %30 = vector.load %arg7[%c256, %c0_20] : memref<512x512xbf16, #tpu.memory_space<vmem>>, vector<256x512xbf16>
    %cst_21 = arith.constant dense<0.000000e+00> : vector<64x512xf32>
    %31 = tpu.matmul %29, %30, %cst_21 {dimension_numbers = #tpu.dot_dimension_numbers<[1], [0], [0], [1], [0, 0, 1, 1], [], []>} : vector<64x256xbf16>, vector<256x512xbf16>, vector<64x512xf32> -> vector<64x512xf32>
    %32 = arith.addf %28, %31 : vector<64x512xf32>
    %c0_22 = arith.constant 0 : index
    %c0_23 = arith.constant 0 : index
    %33 = vector.load %arg8[%c0_22, %c0_23] : memref<1x512xf32, #tpu.memory_space<vmem>>, vector<1x512xf32>
    %34 = vector.broadcast %33 : vector<1x512xf32> to vector<64x512xf32>
    %35 = arith.addf %32, %34 : vector<64x512xf32>
    %c0_24 = arith.constant 0 : index
    %c0_25 = arith.constant 0 : index
    %36 = vector.load %arg9[%c0_24, %c0_25] : memref<1x512xf32, #tpu.memory_space<vmem>>, vector<1x512xf32>
    %37 = vector.broadcast %5 : vector<64x1xf32> to vector<64x512xf32>
    %38 = vector.broadcast %36 : vector<1x512xf32> to vector<64x512xf32>
    %39 = arith.mulf %37, %38 : vector<64x512xf32>
    %40 = arith.addf %35, %39 : vector<64x512xf32>
    %cst_26 = arith.constant 0.000000e+00 : f32
    %41 = vector.broadcast %cst_26 : f32 to vector<64x512xf32>
    %42 = arith.maximumf %40, %41 : vector<64x512xf32>
    %cst_27 = arith.constant dense<0xFF800000> : vector<512xf32>
    %43 = vector.multi_reduction <maximumf>, %42, %cst_27 [0] : vector<64x512xf32> to vector<512xf32>
    %44 = vector.shape_cast %43 : vector<512xf32> to vector<1x512xf32>
    %45 = arith.truncf %44 : vector<1x512xf32> to vector<1x512xbf16>
    %c0_i32_28 = arith.constant 0 : i32
    %46 = tpu.memref_slice %arg21[%c0_i32_28] : memref<2x!tpu.dma_semaphore, #tpu.memory_space<semaphore_mem>> -> memref<1x!tpu.dma_semaphore, #tpu.memory_space<semaphore_mem>>
    %47 = tpu.memref_squeeze %46 : memref<1x!tpu.dma_semaphore, #tpu.memory_space<semaphore_mem>> -> memref<!tpu.dma_semaphore, #tpu.memory_space<semaphore_mem>>
    tpu.wait_dma2 semaphore(%47 : memref<!tpu.dma_semaphore, #tpu.memory_space<semaphore_mem>>) src(%arg10 : memref<512x1024xi8, #tpu.memory_space<any>>) dst(%arg17 : memref<512x1024xi8, #tpu.memory_space<vmem>>)
    %c0_29 = arith.constant 0 : index
    %c0_30 = arith.constant 0 : index
    %48 = vector.load %arg17[%c0_29, %c0_30] : memref<512x1024xi8, #tpu.memory_space<vmem>>, vector<512x1024xi8>
    %49 = arith.sitofp %48 : vector<512x1024xi8> to vector<512x1024xf32>
    %50 = arith.truncf %49 : vector<512x1024xf32> to vector<512x1024xbf16>
    %c0_31 = arith.constant 0 : index
    %c0_32 = arith.constant 0 : index
    %51 = vector.load %arg19[%c0_31, %c0_32] : memref<512x1024xbf16, #tpu.memory_space<vmem>>, vector<512x1024xbf16>
    tpu.vector_store %arg19[%c0_31, %c0_32], %50 {strides = array<i32>} : memref<512x1024xbf16, #tpu.memory_space<vmem>>, vector<512x1024xbf16>,
    %c0_33 = arith.constant 0 : index
    %c0_34 = arith.constant 0 : index
    %52 = vector.load %arg19[%c0_33, %c0_34] : memref<512x1024xbf16, #tpu.memory_space<vmem>>, vector<512x1024xbf16>
    %cst_35 = arith.constant dense<0.000000e+00> : vector<1x1024xf32>
    %53 = tpu.matmul %45, %52, %cst_35 {dimension_numbers = #tpu.dot_dimension_numbers<[1], [0], [0], [1], [0, 0, 1, 1], [], []>} : vector<1x512xbf16>, vector<512x1024xbf16>, vector<1x1024xf32> -> vector<1x1024xf32>
    %c0_36 = arith.constant 0 : index
    %c0_37 = arith.constant 0 : index
    %54 = vector.load %arg12[%c0_36, %c0_37] : memref<1x1024xf32, #tpu.memory_space<vmem>>, vector<1x1024xf32>
    %55 = arith.mulf %53, %54 : vector<1x1024xf32>
    %c0_38 = arith.constant 0 : index
    %c0_39 = arith.constant 0 : index
    %56 = vector.load %arg13[%c0_38, %c0_39] : memref<1x1024xf32, #tpu.memory_space<vmem>>, vector<1x1024xf32>
    %57 = arith.addf %55, %56 : vector<1x1024xf32>
    %cst_40 = arith.constant 0.000000e+00 : f32
    %58 = vector.broadcast %cst_40 : f32 to vector<1x1024xf32>
    %59 = arith.maximumf %57, %58 : vector<1x1024xf32>
    %60 = arith.truncf %59 : vector<1x1024xf32> to vector<1x1024xbf16>
    %c1_i32_41 = arith.constant 1 : i32
    %61 = tpu.memref_slice %arg21[%c1_i32_41] : memref<2x!tpu.dma_semaphore, #tpu.memory_space<semaphore_mem>> -> memref<1x!tpu.dma_semaphore, #tpu.memory_space<semaphore_mem>>
    %62 = tpu.memref_squeeze %61 : memref<1x!tpu.dma_semaphore, #tpu.memory_space<semaphore_mem>> -> memref<!tpu.dma_semaphore, #tpu.memory_space<semaphore_mem>>
    tpu.wait_dma2 semaphore(%62 : memref<!tpu.dma_semaphore, #tpu.memory_space<semaphore_mem>>) src(%arg11 : memref<1024x768xi8, #tpu.memory_space<any>>) dst(%arg18 : memref<1024x768xi8, #tpu.memory_space<vmem>>)
    %c0_42 = arith.constant 0 : index
    %c0_43 = arith.constant 0 : index
    %63 = vector.load %arg18[%c0_42, %c0_43] : memref<1024x768xi8, #tpu.memory_space<vmem>>, vector<1024x768xi8>
    %64 = arith.sitofp %63 : vector<1024x768xi8> to vector<1024x768xf32>
    %65 = arith.truncf %64 : vector<1024x768xf32> to vector<1024x768xbf16>
    %c0_44 = arith.constant 0 : index
    %c0_45 = arith.constant 0 : index
    %66 = vector.load %arg20[%c0_44, %c0_45] : memref<1024x768xbf16, #tpu.memory_space<vmem>>, vector<1024x768xbf16>
    tpu.vector_store %arg20[%c0_44, %c0_45], %65 {strides = array<i32>} : memref<1024x768xbf16, #tpu.memory_space<vmem>>, vector<1024x768xbf16>,
    %c0_46 = arith.constant 0 : index
    %c0_47 = arith.constant 0 : index
    %67 = vector.load %arg20[%c0_46, %c0_47] : memref<1024x768xbf16, #tpu.memory_space<vmem>>, vector<1024x768xbf16>
    %cst_48 = arith.constant dense<0.000000e+00> : vector<1x768xf32>
    %68 = tpu.matmul %60, %67, %cst_48 {dimension_numbers = #tpu.dot_dimension_numbers<[1], [0], [0], [1], [0, 0, 1, 1], [], []>} : vector<1x1024xbf16>, vector<1024x768xbf16>, vector<1x768xf32> -> vector<1x768xf32>
    %c0_49 = arith.constant 0 : index
    %c0_50 = arith.constant 0 : index
    %69 = vector.load %arg14[%c0_49, %c0_50] : memref<1x768xf32, #tpu.memory_space<vmem>>, vector<1x768xf32>
    %70 = arith.mulf %68, %69 : vector<1x768xf32>
    %c0_51 = arith.constant 0 : index
    %c0_52 = arith.constant 0 : index
    %71 = vector.load %arg15[%c0_51, %c0_52] : memref<1x768xf32, #tpu.memory_space<vmem>>, vector<1x768xf32>
    %72 = arith.addf %70, %71 : vector<1x768xf32>
    %73 = arith.negf %72 : vector<1x768xf32>
    %74 = math.exp %73 : vector<1x768xf32>
    %cst_53 = arith.constant 1.000000e+00 : f32
    %75 = vector.broadcast %cst_53 : f32 to vector<1x768xf32>
    %76 = arith.addf %75, %74 : vector<1x768xf32>
    %77 = arith.divf %75, %76 : vector<1x768xf32>
    %c0_54 = arith.constant 0 : index
    %c0_55 = arith.constant 0 : index
    %78 = vector.load %arg16[%c0_54, %c0_55] : memref<1x768xf32, #tpu.memory_space<vmem>>, vector<1x768xf32>
    tpu.vector_store %arg16[%c0_54, %c0_55], %77 {strides = array<i32>} : memref<1x768xf32, #tpu.memory_space<vmem>>, vector<1x768xf32>,
    return
  }
}

</mosaic_0001>

<llo_original>
// kernel: mesh_renderer_forward.1
$region0: #{mesh_renderer_forward.1}
  #allocation0 [shape = 'u32[]', space=smem, size = 0x4, offset = 0x4, fixed_abs, tag = 'smem constant byte address 0x4 - core index']
  #allocation1 [shape = 'u32[144,128]{1,0:T(1,128)}', space=vmem, size = 0x12000, scoped, tag = 'internal scratch']
  #allocation2 [shape = 's8[512,1024]{1,0:T(32,128)(4,1)}', space=vmem, size = 0x80000, scoped, tag = 'scratch operand']
  #allocation3 [shape = 's8[1024,768]{1,0:T(32,128)(4,1)}', space=vmem, size = 0xc0000, scoped, tag = 'scratch operand']
  #allocation4 [shape = 'bf16[512,1024]{1,0:T(8,128)(2,1)}', space=vmem, size = 0x100000, scoped, tag = 'scratch operand']
  #allocation5 [shape = 'bf16[1024,768]{1,0:T(8,128)(2,1)}', space=vmem, size = 0x180000, scoped, tag = 'scratch operand']
  #allocation6 [shape = 's32[2]{0}', space=sflag, size = 0x8, scoped, tag = 'scratch operand']
  #allocation9 [shape = 's32[]', space=sflag, size = 0x4, offset = 0, fixed_abs, tag = 'sflag constant byte address 0x0 - dummy sync flag']
  #allocation10 [shape = 's32[]', space=sflag, size = 0x4, offset = 0, fixed_abs, tag = 'sflag constant byte address 0x0 - dummy sync flag']
  #allocation11 [shape = 'u32[]', space=smem, size = 0x4, offset = 0x44, fixed_abs, tag = 'smem constant byte address 0x44 - assertion arg 0']
  #allocation12 [shape = 'u32[]', space=smem, size = 0x4, offset = 0x48, fixed_abs, tag = 'smem constant byte address 0x48 - assertion arg 1']
  #allocation13 [shape = 's32[]', space=sflag, size = 0x4, offset = 0, fixed_abs, tag = 'sflag constant byte address 0x0 - dummy sync flag']
  #allocation14 [shape = 's32[]', space=sflag, size = 0x4, offset = 0, fixed_abs, tag = 'sflag constant byte address 0x0 - dummy sync flag']
  %s0 = inlined_call_operand.vmem [shape: f32[64,8], index: 0, kind: input, shape index: {}]
  %s1 = inlined_call_operand.vmem [shape: bf16[64,64], index: 1, kind: input, shape index: {}]
  %s2 = inlined_call_operand.vmem [shape: f32[64,1], index: 2, kind: input, shape index: {}]
  %s3 = inlined_call_operand.vmem [shape: bf16[8,256], index: 3, kind: input, shape index: {}]
  %s4 = inlined_call_operand.vmem [shape: bf16[8,256], index: 4, kind: input, shape index: {}]
  %s5 = inlined_call_operand.vmem [shape: f32[1,256], index: 5, kind: input, shape index: {}]
  %s6 = inlined_call_operand.vmem [shape: f32[1,256], index: 6, kind: input, shape index: {}]
  %s7 = inlined_call_operand.hbm [shape: bf16[512,512], index: 7, kind: input, shape index: {}]
  %s8 = inlined_call_operand.vmem [shape: f32[1,512], index: 8, kind: input, shape index: {}]
  %s9 = inlined_call_operand.vmem [shape: f32[1,512], index: 9, kind: input, shape index: {}]
  %s10 = inlined_call_operand.hbm [shape: s8[512,1024], index: 10, kind: input, shape index: {}]
  %s11 = inlined_call_operand.hbm [shape: s8[1024,768], index: 11, kind: input, shape index: {}]
  %s12 = inlined_call_operand.vmem [shape: f32[1,1024], index: 12, kind: input, shape index: {}]
  %s13 = inlined_call_operand.vmem [shape: f32[1,1024], index: 13, kind: input, shape index: {}]
  %s14 = inlined_call_operand.vmem [shape: f32[1,768], index: 14, kind: input, shape index: {}]
  %s15 = inlined_call_operand.vmem [shape: f32[1,768], index: 15, kind: input, shape index: {}]
  %s16 = inlined_call_operand.vmem [shape: f32[1,768], index: 16, kind: output, shape index: {}]
  %s17 = sld [smem:[#allocation0]]
  $region78: #{mesh_renderer_forward.1} parent=0
    _
  %s19 = ssub.s32 1, %s17
  %s20 = scalar_select 0, %s19, %s17
  $region1: #{mesh_renderer_forward.1} parent=0
    #allocation7 [shape = 'u8[524288]{0}', space=vmem, size = 0x80000, scoped, tag = 'input window, operand 7, single buffered']
    #allocation8 [shape = 's32[1]{0}', space=sflag, size = 0x4, scoped, tag = 'scoped memory for mesh_renderer_forward.1']
    %21 = vsyncpa [#allocation8], 0
    // Predicated region
    $region2: #{mesh_renderer_forward.1} parent=1 // pred_check
      _
    $region3: #{mesh_renderer_forward.1} parent=1 // pred_check_branch
      %23 = sbr.rel (0) target = $region5
    $region4: #{mesh_renderer_forward.1} parent=1 // pred_region
      _
    $region5: #{mesh_renderer_forward.1} parent=1 // pred_fallthru
      _
    // Predicated region
    $region6: #{mesh_renderer_forward.1} parent=1 // pred_check
      _
    $region7: #{mesh_renderer_forward.1} parent=1 // pred_check_branch
      %25 = sbr.rel (0) target = $region9
    $region8: #{mesh_renderer_forward.1} parent=1 // pred_region
      _
    $region9: #{mesh_renderer_forward.1} parent=1 // pred_fallthru
      _
    // Predicated region
    $region10: #{mesh_renderer_forward.1} parent=1 // pred_check
      _
    $region11: #{mesh_renderer_forward.1} parent=1 // pred_check_branch
      %27 = sbr.rel (0) target = $region13
    $region12: #{mesh_renderer_forward.1} parent=1 // pred_region
      _
    $region13: #{mesh_renderer_forward.1} parent=1 // pred_fallthru
      _
    // Predicated region
    $region14: #{mesh_renderer_forward.1} parent=1 // pred_check
      _
    $region15: #{mesh_renderer_forward.1} parent=1 // pred_check_branch
      %29 = sbr.rel (0) target = $region17
    $region16: #{mesh_renderer_forward.1} parent=1 // pred_region
      _
    $region17: #{mesh_renderer_forward.1} parent=1 // pred_fallthru
      _
    // Predicated region
    $region18: #{mesh_renderer_forward.1} parent=1 // pred_check
      _
    $region19: #{mesh_renderer_forward.1} parent=1 // pred_check_branch
      %31 = sbr.rel (0) target = $region21
    $region20: #{mesh_renderer_forward.1} parent=1 // pred_region
      _
    $region21: #{mesh_renderer_forward.1} parent=1 // pred_fallthru
      _
    // Predicated region
    $region22: #{mesh_renderer_forward.1} parent=1 // pred_check
      _
    $region23: #{mesh_renderer_forward.1} parent=1 // pred_check_branch
      %33 = sbr.rel (0) target = $region25
    $region24: #{mesh_renderer_forward.1} parent=1 // pred_region
      _
    $region25: #{mesh_renderer_forward.1} parent=1 // pred_fallthru
      _
    // Predicated region
    $region26: #{mesh_renderer_forward.1} parent=1 // pred_check
      _
    $region27: #{mesh_renderer_forward.1} parent=1 // pred_check_branch
      %35 = sbr.rel (0) target = $region29
    $region28: #{mesh_renderer_forward.1} parent=1 // pred_region
      _
    $region29: #{mesh_renderer_forward.1} parent=1 // pred_fallthru
      _
    // Predicated region
    $region30: #{mesh_renderer_forward.1} parent=1 // pred_check
      _
    $region31: #{mesh_renderer_forward.1} parent=1 // pred_check_branch
      %37 = sbr.rel (0) target = $region33
    $region32: #{mesh_renderer_forward.1} parent=1 // pred_region
      %s39 = ssub.s32 16384, 16384
      %40 = vsyncadd [#allocation8], %s39
      %s41 = sshll.u32 [#allocation7], 4
      %s42 = int_to_ptr.vmem [resolvable:$true] %s41
      %47 = dma.hbm_to_vmem [thread:$0]  %s7, 16384, %s42, [#allocation8], 256, 256, 16
    $region33: #{mesh_renderer_forward.1} parent=1 // pred_fallthru
      _
    // Predicated region
    $region34: #{mesh_renderer_forward.1} parent=1 // pred_check
      _
    $region35: #{mesh_renderer_forward.1} parent=1 // pred_check_branch
      %49 = sbr.rel (0) target = $region37
    $region36: #{mesh_renderer_forward.1} parent=1 // pred_region
      _
    $region37: #{mesh_renderer_forward.1} parent=1 // pred_fallthru
      _
    // Predicated region
    $region38: #{mesh_renderer_forward.1} parent=1 // pred_check
      _
    $region39: #{mesh_renderer_forward.1} parent=1 // pred_check_branch
      %51 = sbr.rel (0) target = $region41
    $region40: #{mesh_renderer_forward.1} parent=1 // pred_region
      _
    $region41: #{mesh_renderer_forward.1} parent=1 // pred_fallthru
      _
    // Predicated region
    $region42: #{mesh_renderer_forward.1} parent=1 // pred_check
      _
    $region43: #{mesh_renderer_forward.1} parent=1 // pred_check_branch
      %53 = sbr.rel (0) target = $region45
    $region44: #{mesh_renderer_forward.1} parent=1 // pred_region
      _
    $region45: #{mesh_renderer_forward.1} parent=1 // pred_fallthru
      _
    // Predicated region
    $region46: #{mesh_renderer_forward.1} parent=1 // pred_check
      _
    $region47: #{mesh_renderer_forward.1} parent=1 // pred_check_branch
      %55 = sbr.rel (0) target = $region49
    $region48: #{mesh_renderer_forward.1} parent=1 // pred_region
      _
    $region49: #{mesh_renderer_forward.1} parent=1 // pred_fallthru
      _
    // Predicated region
    $region50: #{mesh_renderer_forward.1} parent=1 // pred_check
      _
    $region51: #{mesh_renderer_forward.1} parent=1 // pred_check_branch
      %57 = sbr.rel (0) target = $region53
    $region52: #{mesh_renderer_forward.1} parent=1 // pred_region
      _
    $region53: #{mesh_renderer_forward.1} parent=1 // pred_fallthru
      _
    // Predicated region
    $region54: #{mesh_renderer_forward.1} parent=1 // pred_check
      _
    $region55: #{mesh_renderer_forward.1} parent=1 // pred_check_branch
      %59 = sbr.rel (0) target = $region57
    $region56: #{mesh_renderer_forward.1} parent=1 // pred_region
      _
    $region57: #{mesh_renderer_forward.1} parent=1 // pred_fallthru
      _
    // Predicated region
    $region58: #{mesh_renderer_forward.1} parent=1 // pred_check
      _
    $region59: #{mesh_renderer_forward.1} parent=1 // pred_check_branch
      %61 = sbr.rel (0) target = $region61
    $region60: #{mesh_renderer_forward.1} parent=1 // pred_region
      %62 = dma.done [#allocation8], 16384
    $region61: #{mesh_renderer_forward.1} parent=1 // pred_fallthru
      _
    // Predicated region
    $region62: #{mesh_renderer_forward.1} parent=1 // pred_check
      _
    $region63: #{mesh_renderer_forward.1} parent=1 // pred_check_branch
      %65 = sbr.rel target = $region65
    $region64: #{mesh_renderer_forward.1} parent=1 // pred_region
      %66 = sst [smem:[#allocation11]] [#allocation10]
      %67 = sst [smem:[#allocation12]] [#allocation9]
    $region65: #{mesh_renderer_forward.1} parent=1 // pred_fallthru
      _
    %69 = shalt.err (0)
    %s71 = sshll.u32 [#allocation2], 4
    %s72 = int_to_ptr.vmem [resolvable:$true] %s71
    %74 = dma.hbm_to_vmem [thread:$0]  %s10, 16384, %s72, [#allocation6]
    %s75 = scalar_lea.sflag [#allocation6], 1
    // Predicated region
    $region66: #{mesh_renderer_forward.1} parent=1 // pred_check
      _
    $region67: #{mesh_renderer_forward.1} parent=1 // pred_check_branch
      %77 = sbr.rel target = $region69
    $region68: #{mesh_renderer_forward.1} parent=1 // pred_region
      %78 = sst [smem:[#allocation11]] [#allocation14]
      %79 = sst [smem:[#allocation12]] [#allocation13]
    $region69: #{mesh_renderer_forward.1} parent=1 // pred_fallthru
      _
    %81 = shalt.err (0)
    %s83 = sshll.u32 [#allocation3], 4
    %s84 = int_to_ptr.vmem [resolvable:$true] %s83
    %86 = dma.hbm_to_vmem [thread:$0]  %s11, 24576, %s84, %s75
    %v87 = vld [vmem:[%s1] sm:$0xf]
    %v88 = vld [vmem:[%s1 + $0x4] sm:$0xf]
    %v89 = vld [vmem:[%s1 + $0x8] sm:$0xf]
    %v90 = vld [vmem:[%s1 + $0xc] sm:$0xf]
    %v91 = vld [vmem:[%s1 + $0x10] sm:$0xf]
    %v92 = vld [vmem:[%s1 + $0x14] sm:$0xf]
    %v93 = vld [vmem:[%s1 + $0x18] sm:$0xf]
    %v94 = vld [vmem:[%s1 + $0x1c] sm:$0xf]
    %v95 = vld [vmem:[%s2] sm:$0xff]
    %v96 = vld [vmem:[%s2 + $0x8] sm:$0xff]
    %v97 = vld [vmem:[%s2 + $0x10] sm:$0xff]
    %v98 = vld [vmem:[%s2 + $0x18] sm:$0xff]
    %v99 = vld [vmem:[%s2 + $0x20] sm:$0xff]
    %v100 = vld [vmem:[%s2 + $0x28] sm:$0xff]
    %v101 = vld [vmem:[%s2 + $0x30] sm:$0xff]
    %v102 = vld [vmem:[%s2 + $0x38] sm:$0xff]
    %v103 = vld [vmem:[%s0] sm:$0xff]
    %v104 = vld [vmem:[%s0 + $0x8] sm:$0xff]
    %v105 = vld [vmem:[%s0 + $0x10] sm:$0xff]
    %v106 = vld [vmem:[%s0 + $0x18] sm:$0xff]
    %v107 = vld [vmem:[%s0 + $0x20] sm:$0xff]
    %v108 = vld [vmem:[%s0 + $0x28] sm:$0xff]
    %v109 = vld [vmem:[%s0 + $0x30] sm:$0xff]
    %v110 = vld [vmem:[%s0 + $0x38] sm:$0xff]
    %v111 = vpack.c.bf16 %v104, %v103
    %v112 = vpack.c.bf16 %v106, %v105
    %v113 = vpack.c.bf16 %v108, %v107
    %v114 = vpack.c.bf16 %v110, %v109
    %v123 = vunpack.c.l.b16 %v87
    %v124 = vunpack.c.l.b16 %v88
    %v125 = vunpack.c.l.b16 %v89
    %v126 = vunpack.c.l.b16 %v90
    %v127 = vunpack.c.l.b16 %v91
    %v128 = vunpack.c.l.b16 %v92
    %v129 = vunpack.c.l.b16 %v93
    %v130 = vunpack.c.l.b16 %v94
    %v131 = vpack.c.b16 %v124, %v123
    %v132 = vpack.c.b16 %v126, %v125
    %v133 = vpack.c.b16 %v128, %v127
    %v134 = vpack.c.b16 %v130, %v129
    %vm135 = vcmask 523264
    %v137 = vsel %vm135, %v131, 0
    %v140 = vsel %vm135, %v132, 0
    %v143 = vsel %vm135, %v133, 0
    %v146 = vsel %vm135, %v134, 0
    %148 = vmatprep.subr.bf16.mxu0 0
    %149 = vmatpush1.bf16.msra.mxu0 0
    %150 = vmatprep.subr.bf16.mxu0 0
    %151 = vmatpush1.bf16.msra.mxu0 0
    %152 = vmatprep.subr.bf16.mxu0 0
    %153 = vmatpush1.bf16.msra.mxu0 0
    %154 = vmatprep.subr.bf16.mxu0 0
    %155 = vmatpush1.bf16.msra.mxu0 0
    %156 = vmatprep.subr.bf16.mxu0 0
    %157 = vmatpush1.bf16.msra.mxu0 %v114
    %158 = vmatprep.subr.bf16.mxu0 0
    %159 = vmatpush1.bf16.msra.mxu0 %v113
    %160 = vmatprep.subr.bf16.mxu0 0
    %161 = vmatpush1.bf16.msra.mxu0 %v112
    %162 = vmatprep.subr.bf16.mxu0 0
    %163 = vmatpush1.bf16.msra.mxu0 %v111
    %164 = vmatprep.subr.bf16.mxu0 0
    %165 = vmatpush2.bf16.msra.mxu0 0
    %166 = vmatprep.subr.bf16.mxu0 0
    %167 = vmatpush2.bf16.msra.mxu0 0
    %168 = vmatprep.subr.bf16.mxu0 0
    %169 = vmatpush2.bf16.msra.mxu0 0
    %170 = vmatprep.subr.bf16.mxu0 0
    %171 = vmatpush2.bf16.msra.mxu0 0
    %172 = vmatprep.subr.bf16.mxu0 0
    %173 = vmatpush2.bf16.msra.mxu0 0
    %174 = vmatprep.subr.bf16.mxu0 0
    %175 = vmatpush2.bf16.msra.mxu0 0
    %176 = vmatprep.subr.bf16.mxu0 0
    %177 = vmatpush2.bf16.msra.mxu0 0
    %178 = vmatprep.subr.bf16.mxu0 0
    %179 = vmatpush2.bf16.msra.mxu0 0
    %180 = vmatprep.mubr.bf16.mxu0 0
    %181 = vmatmul.mubr.bf16.gmra.mxu0 %v137
    %v182 = vpop.f32.mrf.mxu0
    %v183 = vadd.f32 0.0, %v182
    %v184 = vpop.f32.mrf.mxu0
    %v185 = vpop.f32.mrf.mxu0
    %v186 = vadd.f32 0.0, %v185
    %v187 = vpop.f32.mrf.mxu0
    %188 = vmatprep.mubr.bf16.mxu0 0
    %189 = vmatmul.mubr.bf16.gmra.mxu0 %v140
    %v190 = vpop.f32.mrf.mxu0
    %v191 = vadd.f32 0.0, %v190
    %v192 = vpop.f32.mrf.mxu0
    %v193 = vpop.f32.mrf.mxu0
    %v194 = vadd.f32 0.0, %v193
    %v195 = vpop.f32.mrf.mxu0
    %196 = vmatprep.mubr.bf16.mxu0 0
    %197 = vmatmul.mubr.bf16.gmra.mxu0 %v143
    %v198 = vpop.f32.mrf.mxu0
    %v199 = vadd.f32 0.0, %v198
    %v200 = vpop.f32.mrf.mxu0
    %v201 = vpop.f32.mrf.mxu0
    %v202 = vadd.f32 0.0, %v201
    %v203 = vpop.f32.mrf.mxu0
    %204 = vmatprep.mubr.bf16.mxu0 0
    %205 = vmatmul.mubr.bf16.gmra.mxu0 %v146
    %v206 = vpop.f32.mrf.mxu0
    %v207 = vadd.f32 0.0, %v206
    %v208 = vpop.f32.mrf.mxu0
    %v209 = vpop.f32.mrf.mxu0
    %v210 = vadd.f32 0.0, %v209
    %v211 = vpop.f32.mrf.mxu0
    %212 = vdwg.mxu0
    %v213 = vld [vmem:[%s3] sm:$0xff]
    %v214 = vpack.c.bf16 %v186, %v183
    %v215 = vpack.c.bf16 %v194, %v191
    %v216 = vpack.c.bf16 %v202, %v199
    %v217 = vpack.c.bf16 %v210, %v207
    %v218 = vld [vmem:[%s4] sm:$0xff]
    %v220 = vunpack.c.l.b16 %v218
    %v221 = vunpack.c.h.b16 %v218
    %v222 = vpack.c.b16 %v220, %v220
    %v223 = vpack.c.b16 %v221, %v221
    %vm224 = vcmask 64512
    %v226 = vsel %vm224, %v214, 0
    %v229 = vsel %vm224, %v215, 0
    %v232 = vsel %vm224, %v216, 0
    %v235 = vsel %vm224, %v217, 0
    %vm237 = vcmask 1043456
    %v239 = vsel %vm237, %v222, 0
    %v242 = vsel %vm237, %v223, 0
    %244 = vmatprep.subr.bf16.mxu0 0
    %245 = vmatpush1.bf16.msra.mxu0 0
    %246 = vmatprep.subr.bf16.mxu0 0
    %247 = vmatpush1.bf16.msra.mxu0 0
    %248 = vmatprep.subr.bf16.mxu0 0
    %249 = vmatpush1.bf16.msra.mxu0 0
    %250 = vmatprep.subr.bf16.mxu0 0
    %251 = vmatpush1.bf16.msra.mxu0 0
    %252 = vmatprep.subr.bf16.mxu0 0
    %253 = vmatpush1.bf16.msra.mxu0 0
    %254 = vmatprep.subr.bf16.mxu0 0
    %255 = vmatpush1.bf16.msra.mxu0 0
    %256 = vmatprep.subr.bf16.mxu0 0
    %257 = vmatpush1.bf16.msra.mxu0 0
    %258 = vmatprep.subr.bf16.mxu0 %v242
    %259 = vmatpush1.bf16.msra.mxu0 %v239
    %260 = vmatprep.subr.bf16.mxu0 0
    %261 = vmatpush2.bf16.msra.mxu0 0
    %262 = vmatprep.subr.bf16.mxu0 0
    %263 = vmatpush2.bf16.msra.mxu0 0
    %264 = vmatprep.subr.bf16.mxu0 0
    %265 = vmatpush2.bf16.msra.mxu0 0
    %266 = vmatprep.subr.bf16.mxu0 0
    %267 = vmatpush2.bf16.msra.mxu0 0
    %268 = vmatprep.subr.bf16.mxu0 0
    %269 = vmatpush2.bf16.msra.mxu0 0
    %270 = vmatprep.subr.bf16.mxu0 0
    %271 = vmatpush2.bf16.msra.mxu0 0
    %272 = vmatprep.subr.bf16.mxu0 0
    %273 = vmatpush2.bf16.msra.mxu0 0
    %274 = vmatprep.subr.bf16.mxu0 0
    %275 = vmatpush2.bf16.msra.mxu0 0
    %276 = vmatprep.mubr.bf16.mxu0 0
    %277 = vmatmul.mubr.bf16.gmra.mxu0 %v226
    %v278 = vpop.f32.mrf.mxu0
    %v279 = vadd.f32 0.0, %v278
    %v280 = vpop.f32.mrf.mxu0
    %v281 = vadd.f32 0.0, %v280
    %v282 = vpop.f32.mrf.mxu0
    %v283 = vadd.f32 0.0, %v282
    %v284 = vpop.f32.mrf.mxu0
    %v285 = vadd.f32 0.0, %v284
    %286 = vmatprep.mubr.bf16.mxu0 0
    %287 = vmatmul.mubr.bf16.gmra.mxu0 %v229
    %v288 = vpop.f32.mrf.mxu0
    %v289 = vadd.f32 0.0, %v288
    %v290 = vpop.f32.mrf.mxu0
    %v291 = vadd.f32 0.0, %v290
    %v292 = vpop.f32.mrf.mxu0
    %v293 = vadd.f32 0.0, %v292
    %v294 = vpop.f32.mrf.mxu0
    %v295 = vadd.f32 0.0, %v294
    %296 = vmatprep.mubr.bf16.mxu0 0
    %297 = vmatmul.mubr.bf16.gmra.mxu0 %v232
    %v298 = vpop.f32.mrf.mxu0
    %v299 = vadd.f32 0.0, %v298
    %v300 = vpop.f32.mrf.mxu0
    %v301 = vadd.f32 0.0, %v300
    %v302 = vpop.f32.mrf.mxu0
    %v303 = vadd.f32 0.0, %v302
    %v304 = vpop.f32.mrf.mxu0
    %v305 = vadd.f32 0.0, %v304
    %306 = vmatprep.mubr.bf16.mxu0 0
    %307 = vmatmul.mubr.bf16.gmra.mxu0 %v235
    %v308 = vpop.f32.mrf.mxu0
    %v309 = vadd.f32 0.0, %v308
    %v310 = vpop.f32.mrf.mxu0
    %v311 = vadd.f32 0.0, %v310
    %v312 = vpop.f32.mrf.mxu0
    %v313 = vadd.f32 0.0, %v312
    %v314 = vpop.f32.mrf.mxu0
    %v315 = vadd.f32 0.0, %v314
    %316 = vdwg.mxu0
    %v318 = vunpack.c.l.b16 %v213
    %v319 = vunpack.c.h.b16 %v213
    %v320 = vpack.c.b16 %v318, %v318
    %v321 = vpack.c.b16 %v319, %v319
    %v323 = vsel %vm224, %v111, 0
    %v326 = vsel %vm224, %v112, 0
    %v329 = vsel %vm224, %v113, 0
    %v332 = vsel %vm224, %v114, 0
    %v335 = vsel %vm237, %v320, 0
    %v338 = vsel %vm237, %v321, 0
    %340 = vmatprep.subr.bf16.mxu0 0
    %341 = vmatpush1.bf16.msra.mxu0 0
    %342 = vmatprep.subr.bf16.mxu0 0
    %343 = vmatpush1.bf16.msra.mxu0 0
    %344 = vmatprep.subr.bf16.mxu0 0
    %345 = vmatpush1.bf16.msra.mxu0 0
    %346 = vmatprep.subr.bf16.mxu0 0
    %347 = vmatpush1.bf16.msra.mxu0 0
    %348 = vmatprep.subr.bf16.mxu0 0
    %349 = vmatpush1.bf16.msra.mxu0 0
    %350 = vmatprep.subr.bf16.mxu0 0
    %351 = vmatpush1.bf16.msra.mxu0 0
    %352 = vmatprep.subr.bf16.mxu0 0
    %353 = vmatpush1.bf16.msra.mxu0 0
    %354 = vmatprep.subr.bf16.mxu0 %v338
    %355 = vmatpush1.bf16.msra.mxu0 %v335
    %356 = vmatprep.subr.bf16.mxu0 0
    %357 = vmatpush2.bf16.msra.mxu0 0
    %358 = vmatprep.subr.bf16.mxu0 0
    %359 = vmatpush2.bf16.msra.mxu0 0
    %360 = vmatprep.subr.bf16.mxu0 0
    %361 = vmatpush2.bf16.msra.mxu0 0
    %362 = vmatprep.subr.bf16.mxu0 0
    %363 = vmatpush2.bf16.msra.mxu0 0
    %364 = vmatprep.subr.bf16.mxu0 0
    %365 = vmatpush2.bf16.msra.mxu0 0
    %366 = vmatprep.subr.bf16.mxu0 0
    %367 = vmatpush2.bf16.msra.mxu0 0
    %368 = vmatprep.subr.bf16.mxu0 0
    %369 = vmatpush2.bf16.msra.mxu0 0
    %370 = vmatprep.subr.bf16.mxu0 0
    %371 = vmatpush2.bf16.msra.mxu0 0
    %372 = vmatprep.mubr.bf16.mxu0 0
    %373 = vmatmul.mubr.bf16.gmra.mxu0 %v323
    %v374 = vpop.f32.mrf.mxu0
    %v375 = vadd.f32 %v279, %v374
    %v376 = vpop.f32.mrf.mxu0
    %v377 = vadd.f32 %v281, %v376
    %v378 = vpop.f32.mrf.mxu0
    %v379 = vadd.f32 %v283, %v378
    %v380 = vpop.f32.mrf.mxu0
    %v381 = vadd.f32 %v285, %v380
    %382 = vmatprep.mubr.bf16.mxu0 0
    %383 = vmatmul.mubr.bf16.gmra.mxu0 %v326
    %v384 = vpop.f32.mrf.mxu0
    %v385 = vadd.f32 %v289, %v384
    %v386 = vpop.f32.mrf.mxu0
    %v387 = vadd.f32 %v291, %v386
    %v388 = vpop.f32.mrf.mxu0
    %v389 = vadd.f32 %v293, %v388
    %v390 = vpop.f32.mrf.mxu0
    %v391 = vadd.f32 %v295, %v390
    %392 = vmatprep.mubr.bf16.mxu0 0
    %393 = vmatmul.mubr.bf16.gmra.mxu0 %v329
    %v394 = vpop.f32.mrf.mxu0
    %v395 = vadd.f32 %v299, %v394
    %v396 = vpop.f32.mrf.mxu0
    %v397 = vadd.f32 %v301, %v396
    %v398 = vpop.f32.mrf.mxu0
    %v399 = vadd.f32 %v303, %v398
    %v400 = vpop.f32.mrf.mxu0
    %v401 = vadd.f32 %v305, %v400
    %402 = vmatprep.mubr.bf16.mxu0 0
    %403 = vmatmul.mubr.bf16.gmra.mxu0 %v332
    %v404 = vpop.f32.mrf.mxu0
    %v405 = vadd.f32 %v309, %v404
    %v406 = vpop.f32.mrf.mxu0
    %v407 = vadd.f32 %v311, %v406
    %v408 = vpop.f32.mrf.mxu0
    %v409 = vadd.f32 %v313, %v408
    %v410 = vpop.f32.mrf.mxu0
    %v411 = vadd.f32 %v315, %v410
    %412 = vdwg.mxu0
    %v413 = vld [vmem:[%s5] sm:$0x3]
    %v415 = vlaneseq
    %v416 = vshrl.u32 %v415, 7
    %v417 = vsub.s32 0, %v416
    %v418 = vrot.slane %v413, %v417
    %v419 = vlaneseq
    %v420 = vshrl.u32 %v419, 7
    %v421 = vsub.s32 1, %v420
    %v422 = vrot.slane %v413, %v421
    %v425 = vadd.f32 %v375, %v418
    %v426 = vadd.f32 %v377, %v422
    %v427 = vadd.f32 %v379, %v418
    %v428 = vadd.f32 %v381, %v422
    %v429 = vadd.f32 %v385, %v418
    %v430 = vadd.f32 %v387, %v422
    %v431 = vadd.f32 %v389, %v418
    %v432 = vadd.f32 %v391, %v422
    %v433 = vadd.f32 %v395, %v418
    %v434 = vadd.f32 %v397, %v422
    %v435 = vadd.f32 %v399, %v418
    %v436 = vadd.f32 %v401, %v422
    %v437 = vadd.f32 %v405, %v418
    %v438 = vadd.f32 %v407, %v422
    %v439 = vadd.f32 %v409, %v418
    %v440 = vadd.f32 %v411, %v422
    %v441 = vld [vmem:[%s6] sm:$0x3]
    %443 = vset.pattern.permute.xlu0 0
    %444 = vperm.xlu0 %443, %v95
    %v445 = vpop.permute.xlu0 %444
    %448 = vset.pattern.permute.xlu0 0
    %449 = vperm.xlu0 %448, %v96
    %v450 = vpop.permute.xlu0 %449
    %453 = vset.pattern.permute.xlu0 0
    %454 = vperm.xlu0 %453, %v97
    %v455 = vpop.permute.xlu0 %454
    %458 = vset.pattern.permute.xlu0 0
    %459 = vperm.xlu0 %458, %v98
    %v460 = vpop.permute.xlu0 %459
    %463 = vset.pattern.permute.xlu0 0
    %464 = vperm.xlu0 %463, %v99
    %v465 = vpop.permute.xlu0 %464
    %468 = vset.pattern.permute.xlu0 0
    %469 = vperm.xlu0 %468, %v100
    %v470 = vpop.permute.xlu0 %469
    %473 = vset.pattern.permute.xlu0 0
    %474 = vperm.xlu0 %473, %v101
    %v475 = vpop.permute.xlu0 %474
    %478 = vset.pattern.permute.xlu0 0
    %479 = vperm.xlu0 %478, %v102
    %v480 = vpop.permute.xlu0 %479
    %v483 = vlaneseq
    %v484 = vshrl.u32 %v483, 7
    %v485 = vsub.s32 0, %v484
    %v486 = vrot.slane %v441, %v485
    %v487 = vlaneseq
    %v488 = vshrl.u32 %v487, 7
    %v489 = vsub.s32 1, %v488
    %v490 = vrot.slane %v441, %v489
    %v493 = vmul.f32 %v445, %v486
    %v494 = vmul.f32 %v445, %v490
    %v495 = vmul.f32 %v450, %v486
    %v496 = vmul.f32 %v450, %v490
    %v497 = vmul.f32 %v455, %v486
    %v498 = vmul.f32 %v455, %v490
    %v499 = vmul.f32 %v460, %v486
    %v500 = vmul.f32 %v460, %v490
    %v501 = vmul.f32 %v465, %v486
    %v502 = vmul.f32 %v465, %v490
    %v503 = vmul.f32 %v470, %v486
    %v504 = vmul.f32 %v470, %v490
    %v505 = vmul.f32 %v475, %v486
    %v506 = vmul.f32 %v475, %v490
    %v507 = vmul.f32 %v480, %v486
    %v508 = vmul.f32 %v480, %v490
    %v509 = vadd.f32 %v425, %v493
    %v510 = vadd.f32 %v426, %v494
    %v511 = vadd.f32 %v427, %v495
    %v512 = vadd.f32 %v428, %v496
    %v513 = vadd.f32 %v429, %v497
    %v514 = vadd.f32 %v430, %v498
    %v515 = vadd.f32 %v431, %v499
    %v516 = vadd.f32 %v432, %v500
    %v517 = vadd.f32 %v433, %v501
    %v518 = vadd.f32 %v434, %v502
    %v519 = vadd.f32 %v435, %v503
    %v520 = vadd.f32 %v436, %v504
    %v521 = vadd.f32 %v437, %v505
    %v522 = vadd.f32 %v438, %v506
    %v523 = vadd.f32 %v439, %v507
    %v524 = vadd.f32 %v440, %v508
    %v525 = vmax.f32 %v509, 0.0
    %v526 = vmax.f32 %v510, 0.0
    %v527 = vmax.f32 %v511, 0.0
    %v528 = vmax.f32 %v512, 0.0
    %v529 = vmax.f32 %v513, 0.0
    %v530 = vmax.f32 %v514, 0.0
    %v531 = vmax.f32 %v515, 0.0
    %v532 = vmax.f32 %v516, 0.0
    %v533 = vmax.f32 %v517, 0.0
    %v534 = vmax.f32 %v518, 0.0
    %v535 = vmax.f32 %v519, 0.0
    %v536 = vmax.f32 %v520, 0.0
    %v537 = vmax.f32 %v521, 0.0
    %v538 = vmax.f32 %v522, 0.0
    %v539 = vmax.f32 %v523, 0.0
    %v540 = vmax.f32 %v524, 0.0
    %v541 = vpack.c.bf16 %v527, %v525
    %v542 = vpack.c.bf16 %v528, %v526
    %v543 = vpack.c.bf16 %v531, %v529
    %v544 = vpack.c.bf16 %v532, %v530
    %v545 = vpack.c.bf16 %v535, %v533
    %v546 = vpack.c.bf16 %v536, %v534
    %v547 = vpack.c.bf16 %v539, %v537
    %v548 = vpack.c.bf16 %v540, %v538
    %549 = vmatprep.subr.bf16.mxu0 0
    %550 = vmatpush1.bf16.msra.mxu0 0
    %551 = vmatprep.subr.bf16.mxu0 0
    %552 = vmatpush1.bf16.msra.mxu0 0
    %553 = vmatprep.subr.bf16.mxu0 0
    %554 = vmatpush1.bf16.msra.mxu0 0
    %555 = vmatprep.subr.bf16.mxu0 0
    %556 = vmatpush1.bf16.msra.mxu0 0
    %557 = vmatprep.subr.bf16.mxu0 %v548
    %558 = vmatpush1.bf16.msra.mxu0 %v547
    %559 = vmatprep.subr.bf16.mxu0 %v546
    %560 = vmatpush1.bf16.msra.mxu0 %v545
    %561 = vmatprep.subr.bf16.mxu0 %v544
    %562 = vmatpush1.bf16.msra.mxu0 %v543
    %563 = vmatprep.subr.bf16.mxu0 %v542
    %564 = vmatpush1.bf16.msra.mxu0 %v541
    %565 = vmatprep.subr.bf16.mxu0 0
    %566 = vmatpush2.bf16.msra.mxu0 0
    %567 = vmatprep.subr.bf16.mxu0 0
    %568 = vmatpush2.bf16.msra.mxu0 0
    %569 = vmatprep.subr.bf16.mxu0 0
    %570 = vmatpush2.bf16.msra.mxu0 0
    %571 = vmatprep.subr.bf16.mxu0 0
    %572 = vmatpush2.bf16.msra.mxu0 0
    %573 = vmatprep.subr.bf16.mxu0 0
    %574 = vmatpush2.bf16.msra.mxu0 0
    %575 = vmatprep.subr.bf16.mxu0 0
    %576 = vmatpush2.bf16.msra.mxu0 0
    %577 = vmatprep.subr.bf16.mxu0 0
    %578 = vmatpush2.bf16.msra.mxu0 0
    %579 = vmatprep.subr.bf16.mxu0 0
    %580 = vmatpush2.bf16.msra.mxu0 0
    %581 = vmatprep.mubr.bf16.mxu0 0
    %582 = vmatmul.mubr.bf16.gmra.mxu0 %v137
    %v583 = vpop.f32.mrf.mxu0
    %v584 = vadd.f32 0.0, %v583
    %v585 = vpop.f32.mrf.mxu0
    %v586 = vadd.f32 0.0, %v585
    %v587 = vpop.f32.mrf.mxu0
    %v588 = vadd.f32 0.0, %v587
    %v589 = vpop.f32.mrf.mxu0
    %v590 = vadd.f32 0.0, %v589
    %591 = vmatprep.mubr.bf16.mxu0 0
    %592 = vmatmul.mubr.bf16.gmra.mxu0 %v140
    %v593 = vpop.f32.mrf.mxu0
    %v594 = vadd.f32 0.0, %v593
    %v595 = vpop.f32.mrf.mxu0
    %v596 = vadd.f32 0.0, %v595
    %v597 = vpop.f32.mrf.mxu0
    %v598 = vadd.f32 0.0, %v597
    %v599 = vpop.f32.mrf.mxu0
    %v600 = vadd.f32 0.0, %v599
    %601 = vmatprep.mubr.bf16.mxu0 0
    %602 = vmatmul.mubr.bf16.gmra.mxu0 %v143
    %v603 = vpop.f32.mrf.mxu0
    %v604 = vadd.f32 0.0, %v603
    %v605 = vpop.f32.mrf.mxu0
    %v606 = vadd.f32 0.0, %v605
    %v607 = vpop.f32.mrf.mxu0
    %v608 = vadd.f32 0.0, %v607
    %v609 = vpop.f32.mrf.mxu0
    %v610 = vadd.f32 0.0, %v609
    %611 = vmatprep.mubr.bf16.mxu0 0
    %612 = vmatmul.mubr.bf16.gmra.mxu0 %v146
    %v613 = vpop.f32.mrf.mxu0
    %v614 = vadd.f32 0.0, %v613
    %v615 = vpop.f32.mrf.mxu0
    %v616 = vadd.f32 0.0, %v615
    %v617 = vpop.f32.mrf.mxu0
    %v618 = vadd.f32 0.0, %v617
    %v619 = vpop.f32.mrf.mxu0
    %v620 = vadd.f32 0.0, %v619
    %621 = vdwg.mxu0
    %v622 = vld [vmem:[#allocation7] sm:$0xff]
    %v623 = vld [vmem:[#allocation7 + $0x8] sm:$0xff]
    %v624 = vld [vmem:[#allocation7 + $0x10] sm:$0xff]
    %v625 = vld [vmem:[#allocation7 + $0x18] sm:$0xff]
    %v626 = vld [vmem:[#allocation7 + $0x20] sm:$0xff]
    %v627 = vld [vmem:[#allocation7 + $0x28] sm:$0xff]
    %v628 = vld [vmem:[#allocation7 + $0x30] sm:$0xff]
    %v629 = vld [vmem:[#allocation7 + $0x38] sm:$0xff]
    %v630 = vld [vmem:[#allocation7 + $0x40] sm:$0xff]
    %v631 = vld [vmem:[#allocation7 + $0x48] sm:$0xff]
    %v632 = vld [vmem:[#allocation7 + $0x50] sm:$0xff]
    %v633 = vld [vmem:[#allocation7 + $0x58] sm:$0xff]
    %v634 = vld [vmem:[#allocation7 + $0x60] sm:$0xff]
    %v635 = vld [vmem:[#allocation7 + $0x68] sm:$0xff]
    %v636 = vld [vmem:[#allocation7 + $0x70] sm:$0xff]
    %v637 = vld [vmem:[#allocation7 + $0x78] sm:$0xff]
    %v638 = vld [vmem:[#allocation7 + $0x80] sm:$0xff]
    %v639 = vld [vmem:[#allocation7 + $0x88] sm:$0xff]
    %v640 = vld [vmem:[#allocation7 + $0x90] sm:$0xff]
    %v641 = vld [vmem:[#allocation7 + $0x98] sm:$0xff]
    %v642 = vld [vmem:[#allocation7 + $0xa0] sm:$0xff]
    %v643 = vld [vmem:[#allocation7 + $0xa8] sm:$0xff]
    %v644 = vld [vmem:[#allocation7 + $0xb0] sm:$0xff]
    %v645 = vld [vmem:[#allocation7 + $0xb8] sm:$0xff]
    %v646 = vld [vmem:[#allocation7 + $0xc0] sm:$0xff]
    %v647 = vld [vmem:[#allocation7 + $0xc8] sm:$0xff]
    %v648 = vld [vmem:[#allocation7 + $0xd0] sm:$0xff]
    %v649 = vld [vmem:[#allocation7 + $0xd8] sm:$0xff]
    %v650 = vld [vmem:[#allocation7 + $0xe0] sm:$0xff]
    %v651 = vld [vmem:[#allocation7 + $0xe8] sm:$0xff]
    %v652 = vld [vmem:[#allocation7 + $0xf0] sm:$0xff]
    %v653 = vld [vmem:[#allocation7 + $0xf8] sm:$0xff]
    %v654 = vld [vmem:[#allocation7 + $0x100] sm:$0xff]
    %v655 = vld [vmem:[#allocation7 + $0x108] sm:$0xff]
    %v656 = vld [vmem:[#allocation7 + $0x110] sm:$0xff]
    %v657 = vld [vmem:[#allocation7 + $0x118] sm:$0xff]
    %v658 = vld [vmem:[#allocation7 + $0x120] sm:$0xff]
    %v659 = vld [vmem:[#allocation7 + $0x128] sm:$0xff]
    %v660 = vld [vmem:[#allocation7 + $0x130] sm:$0xff]
    %v661 = vld [vmem:[#allocation7 + $0x138] sm:$0xff]
    %v662 = vld [vmem:[#allocation7 + $0x140] sm:$0xff]
    %v663 = vld [vmem:[#allocation7 + $0x148] sm:$0xff]
    %v664 = vld [vmem:[#allocation7 + $0x150] sm:$0xff]
    %v665 = vld [vmem:[#allocation7 + $0x158] sm:$0xff]
    %v666 = vld [vmem:[#allocation7 + $0x160] sm:$0xff]
    %v667 = vld [vmem:[#allocation7 + $0x168] sm:$0xff]
    %v668 = vld [vmem:[#allocation7 + $0x170] sm:$0xff]
    %v669 = vld [vmem:[#allocation7 + $0x178] sm:$0xff]
    %v670 = vld [vmem:[#allocation7 + $0x180] sm:$0xff]
    %v671 = vld [vmem:[#allocation7 + $0x188] sm:$0xff]
    %v672 = vld [vmem:[#allocation7 + $0x190] sm:$0xff]
    %v673 = vld [vmem:[#allocation7 + $0x198] sm:$0xff]
    %v674 = vld [vmem:[#allocation7 + $0x1a0] sm:$0xff]
    %v675 = vld [vmem:[#allocation7 + $0x1a8] sm:$0xff]
    %v676 = vld [vmem:[#allocation7 + $0x1b0] sm:$0xff]
    %v677 = vld [vmem:[#allocation7 + $0x1b8] sm:$0xff]
    %v678 = vld [vmem:[#allocation7 + $0x1c0] sm:$0xff]
    %v679 = vld [vmem:[#allocation7 + $0x1c8] sm:$0xff]
    %v680 = vld [vmem:[#allocation7 + $0x1d0] sm:$0xff]
    %v681 = vld [vmem:[#allocation7 + $0x1d8] sm:$0xff]
    %v682 = vld [vmem:[#allocation7 + $0x1e0] sm:$0xff]
    %v683 = vld [vmem:[#allocation7 + $0x1e8] sm:$0xff]
    %v684 = vld [vmem:[#allocation7 + $0x1f0] sm:$0xff]
    %v685 = vld [vmem:[#allocation7 + $0x1f8] sm:$0xff]
    %v686 = vpack.c.bf16 %v588, %v584
    %v687 = vpack.c.bf16 %v590, %v586
    %v688 = vpack.c.bf16 %v598, %v594
    %v689 = vpack.c.bf16 %v600, %v596
    %v690 = vpack.c.bf16 %v608, %v604
    %v691 = vpack.c.bf16 %v610, %v606
    %v692 = vpack.c.bf16 %v618, %v614
    %v693 = vpack.c.bf16 %v620, %v616
    %v694 = vld [vmem:[#allocation7 + $0x200] sm:$0xff]
    %v695 = vld [vmem:[#allocation7 + $0x208] sm:$0xff]
    %v696 = vld [vmem:[#allocation7 + $0x210] sm:$0xff]
    %v697 = vld [vmem:[#allocation7 + $0x218] sm:$0xff]
    %v698 = vld [vmem:[#allocation7 + $0x220] sm:$0xff]
    %v699 = vld [vmem:[#allocation7 + $0x228] sm:$0xff]
    %v700 = vld [vmem:[#allocation7 + $0x230] sm:$0xff]
    %v701 = vld [vmem:[#allocation7 + $0x238] sm:$0xff]
    %v702 = vld [vmem:[#allocation7 + $0x240] sm:$0xff]
    %v703 = vld [vmem:[#allocation7 + $0x248] sm:$0xff]
    %v704 = vld [vmem:[#allocation7 + $0x250] sm:$0xff]
    %v705 = vld [vmem:[#allocation7 + $0x258] sm:$0xff]
    %v706 = vld [vmem:[#allocation7 + $0x260] sm:$0xff]
    %v707 = vld [vmem:[#allocation7 + $0x268] sm:$0xff]
    %v708 = vld [vmem:[#allocation7 + $0x270] sm:$0xff]
    %v709 = vld [vmem:[#allocation7 + $0x278] sm:$0xff]
    %v710 = vld [vmem:[#allocation7 + $0x280] sm:$0xff]
    %v711 = vld [vmem:[#allocation7 + $0x288] sm:$0xff]
    %v712 = vld [vmem:[#allocation7 + $0x290] sm:$0xff]
    %v713 = vld [vmem:[#allocation7 + $0x298] sm:$0xff]
    %v714 = vld [vmem:[#allocation7 + $0x2a0] sm:$0xff]
    %v715 = vld [vmem:[#allocation7 + $0x2a8] sm:$0xff]
    %v716 = vld [vmem:[#allocation7 + $0x2b0] sm:$0xff]
    %v717 = vld [vmem:[#allocation7 + $0x2b8] sm:$0xff]
    %v718 = vld [vmem:[#allocation7 + $0x2c0] sm:$0xff]
    %v719 = vld [vmem:[#allocation7 + $0x2c8] sm:$0xff]
    %v720 = vld [vmem:[#allocation7 + $0x2d0] sm:$0xff]
    %v721 = vld [vmem:[#allocation7 + $0x2d8] sm:$0xff]
    %v722 = vld [vmem:[#allocation7 + $0x2e0] sm:$0xff]
    %v723 = vld [vmem:[#allocation7 + $0x2e8] sm:$0xff]
    %v724 = vld [vmem:[#allocation7 + $0x2f0] sm:$0xff]
    %v725 = vld [vmem:[#allocation7 + $0x2f8] sm:$0xff]
    %v726 = vld [vmem:[#allocation7 + $0x300] sm:$0xff]
    %v727 = vld [vmem:[#allocation7 + $0x308] sm:$0xff]
    %v728 = vld [vmem:[#allocation7 + $0x310] sm:$0xff]
    %v729 = vld [vmem:[#allocation7 + $0x318] sm:$0xff]
    %v730 = vld [vmem:[#allocation7 + $0x320] sm:$0xff]
    %v731 = vld [vmem:[#allocation7 + $0x328] sm:$0xff]
    %v732 = vld [vmem:[#allocation7 + $0x330] sm:$0xff]
    %v733 = vld [vmem:[#allocation7 + $0x338] sm:$0xff]
    %v734 = vld [vmem:[#allocation7 + $0x340] sm:$0xff]
    %v735 = vld [vmem:[#allocation7 + $0x348] sm:$0xff]
    %v736 = vld [vmem:[#allocation7 + $0x350] sm:$0xff]
    %v737 = vld [vmem:[#allocation7 + $0x358] sm:$0xff]
    %v738 = vld [vmem:[#allocation7 + $0x360] sm:$0xff]
    %v739 = vld [vmem:[#allocation7 + $0x368] sm:$0xff]
    %v740 = vld [vmem:[#allocation7 + $0x370] sm:$0xff]
    %v741 = vld [vmem:[#allocation7 + $0x378] sm:$0xff]
    %v742 = vld [vmem:[#allocation7 + $0x380] sm:$0xff]
    %v743 = vld [vmem:[#allocation7 + $0x388] sm:$0xff]
    %v744 = vld [vmem:[#allocation7 + $0x390] sm:$0xff]
    %v745 = vld [vmem:[#allocation7 + $0x398] sm:$0xff]
    %v746 = vld [vmem:[#allocation7 + $0x3a0] sm:$0xff]
    %v747 = vld [vmem:[#allocation7 + $0x3a8] sm:$0xff]
    %v748 = vld [vmem:[#allocation7 + $0x3b0] sm:$0xff]
    %v749 = vld [vmem:[#allocation7 + $0x3b8] sm:$0xff]
    %v750 = vld [vmem:[#allocation7 + $0x3c0] sm:$0xff]
    %v751 = vld [vmem:[#allocation7 + $0x3c8] sm:$0xff]
    %v752 = vld [vmem:[#allocation7 + $0x3d0] sm:$0xff]
    %v753 = vld [vmem:[#allocation7 + $0x3d8] sm:$0xff]
    %v754 = vld [vmem:[#allocation7 + $0x3e0] sm:$0xff]
    %v755 = vld [vmem:[#allocation7 + $0x3e8] sm:$0xff]
    %v756 = vld [vmem:[#allocation7 + $0x3f0] sm:$0xff]
    %v757 = vld [vmem:[#allocation7 + $0x3f8] sm:$0xff]
    %v822 = vunpack.c.l.b16 %v694
    %v823 = vunpack.c.h.b16 %v694
    %v824 = vunpack.c.l.b16 %v695
    %v825 = vunpack.c.h.b16 %v695
    %v826 = vunpack.c.l.b16 %v696
    %v827 = vunpack.c.h.b16 %v696
    %v828 = vunpack.c.l.b16 %v697
    %v829 = vunpack.c.h.b16 %v697
    %v830 = vunpack.c.l.b16 %v698
    %v831 = vunpack.c.h.b16 %v698
    %v832 = vunpack.c.l.b16 %v699
    %v833 = vunpack.c.h.b16 %v699
    %v834 = vunpack.c.l.b16 %v700
    %v835 = vunpack.c.h.b16 %v700
    %v836 = vunpack.c.l.b16 %v701
    %v837 = vunpack.c.h.b16 %v701
    %v838 = vunpack.c.l.b16 %v702
    %v839 = vunpack.c.h.b16 %v702
    %v840 = vunpack.c.l.b16 %v703
    %v841 = vunpack.c.h.b16 %v703
    %v842 = vunpack.c.l.b16 %v704
    %v843 = vunpack.c.h.b16 %v704
    %v844 = vunpack.c.l.b16 %v705
    %v845 = vunpack.c.h.b16 %v705
    %v846 = vunpack.c.l.b16 %v706
    %v847 = vunpack.c.h.b16 %v706
    %v848 = vunpack.c.l.b16 %v707
    %v849 = vunpack.c.h.b16 %v707
    %v850 = vunpack.c.l.b16 %v708
    %v851 = vunpack.c.h.b16 %v708
    %v852 = vunpack.c.l.b16 %v709
    %v853 = vunpack.c.h.b16 %v709
    %v854 = vunpack.c.l.b16 %v710
    %v855 = vunpack.c.h.b16 %v710
    %v856 = vunpack.c.l.b16 %v711
    %v857 = vunpack.c.h.b16 %v711
    %v858 = vunpack.c.l.b16 %v712
    %v859 = vunpack.c.h.b16 %v712
    %v860 = vunpack.c.l.b16 %v713
    %v861 = vunpack.c.h.b16 %v713
    %v862 = vunpack.c.l.b16 %v714
    %v863 = vunpack.c.h.b16 %v714
    %v864 = vunpack.c.l.b16 %v715
    %v865 = vunpack.c.h.b16 %v715
    %v866 = vunpack.c.l.b16 %v716
    %v867 = vunpack.c.h.b16 %v716
    %v868 = vunpack.c.l.b16 %v717
    %v869 = vunpack.c.h.b16 %v717
    %v870 = vunpack.c.l.b16 %v718
    %v871 = vunpack.c.h.b16 %v718
    %v872 = vunpack.c.l.b16 %v719
    %v873 = vunpack.c.h.b16 %v719
    %v874 = vunpack.c.l.b16 %v720
    %v875 = vunpack.c.h.b16 %v720
    %v876 = vunpack.c.l.b16 %v721
    %v877 = vunpack.c.h.b16 %v721
    %v878 = vunpack.c.l.b16 %v722
    %v879 = vunpack.c.h.b16 %v722
    %v880 = vunpack.c.l.b16 %v723
    %v881 = vunpack.c.h.b16 %v723
    %v882 = vunpack.c.l.b16 %v724
    %v883 = vunpack.c.h.b16 %v724
    %v884 = vunpack.c.l.b16 %v725
    %v885 = vunpack.c.h.b16 %v725
    %v886 = vunpack.c.l.b16 %v726
    %v887 = vunpack.c.h.b16 %v726
    %v888 = vunpack.c.l.b16 %v727
    %v889 = vunpack.c.h.b16 %v727
    %v890 = vunpack.c.l.b16 %v728
    %v891 = vunpack.c.h.b16 %v728
    %v892 = vunpack.c.l.b16 %v729
    %v893 = vunpack.c.h.b16 %v729
    %v894 = vunpack.c.l.b16 %v730
    %v895 = vunpack.c.h.b16 %v730
    %v896 = vunpack.c.l.b16 %v731
    %v897 = vunpack.c.h.b16 %v731
    %v898 = vunpack.c.l.b16 %v732
    %v899 = vunpack.c.h.b16 %v732
    %v900 = vunpack.c.l.b16 %v733
    %v901 = vunpack.c.h.b16 %v733
    %v902 = vunpack.c.l.b16 %v734
    %v903 = vunpack.c.h.b16 %v734
    %v904 = vunpack.c.l.b16 %v735
    %v905 = vunpack.c.h.b16 %v735
    %v906 = vunpack.c.l.b16 %v736
    %v907 = vunpack.c.h.b16 %v736
    %v908 = vunpack.c.l.b16 %v737
    %v909 = vunpack.c.h.b16 %v737
    %v910 = vunpack.c.l.b16 %v738
    %v911 = vunpack.c.h.b16 %v738
    %v912 = vunpack.c.l.b16 %v739
    %v913 = vunpack.c.h.b16 %v739
    %v914 = vunpack.c.l.b16 %v740
    %v915 = vunpack.c.h.b16 %v740
    %v916 = vunpack.c.l.b16 %v741
    %v917 = vunpack.c.h.b16 %v741
    %v918 = vunpack.c.l.b16 %v742
    %v919 = vunpack.c.h.b16 %v742
    %v920 = vunpack.c.l.b16 %v743
    %v921 = vunpack.c.h.b16 %v743
    %v922 = vunpack.c.l.b16 %v744
    %v923 = vunpack.c.h.b16 %v744
    %v924 = vunpack.c.l.b16 %v745
    %v925 = vunpack.c.h.b16 %v745
    %v926 = vunpack.c.l.b16 %v746
    %v927 = vunpack.c.h.b16 %v746
    %v928 = vunpack.c.l.b16 %v747
    %v929 = vunpack.c.h.b16 %v747
    %v930 = vunpack.c.l.b16 %v748
    %v931 = vunpack.c.h.b16 %v748
    %v932 = vunpack.c.l.b16 %v749
    %v933 = vunpack.c.h.b16 %v749
    %v934 = vunpack.c.l.b16 %v750
    %v935 = vunpack.c.h.b16 %v750
    %v936 = vunpack.c.l.b16 %v751
    %v937 = vunpack.c.h.b16 %v751
    %v938 = vunpack.c.l.b16 %v752
    %v939 = vunpack.c.h.b16 %v752
    %v940 = vunpack.c.l.b16 %v753
    %v941 = vunpack.c.h.b16 %v753
    %v942 = vunpack.c.l.b16 %v754
    %v943 = vunpack.c.h.b16 %v754
    %v944 = vunpack.c.l.b16 %v755
    %v945 = vunpack.c.h.b16 %v755
    %v946 = vunpack.c.l.b16 %v756
    %v947 = vunpack.c.h.b16 %v756
    %v948 = vunpack.c.l.b16 %v757
    %v949 = vunpack.c.h.b16 %v757
    %v950 = vpack.c.b16 %v826, %v822
    %v951 = vpack.c.b16 %v827, %v823
    %v952 = vpack.c.b16 %v828, %v824
    %v953 = vpack.c.b16 %v829, %v825
    %v954 = vpack.c.b16 %v834, %v830
    %v955 = vpack.c.b16 %v835, %v831
    %v956 = vpack.c.b16 %v836, %v832
    %v957 = vpack.c.b16 %v837, %v833
    %v958 = vpack.c.b16 %v842, %v838
    %v959 = vpack.c.b16 %v843, %v839
    %v960 = vpack.c.b16 %v844, %v840
    %v961 = vpack.c.b16 %v845, %v841
    %v962 = vpack.c.b16 %v850, %v846
    %v963 = vpack.c.b16 %v851, %v847
    %v964 = vpack.c.b16 %v852, %v848
    %v965 = vpack.c.b16 %v853, %v849
    %v966 = vpack.c.b16 %v858, %v854
    %v967 = vpack.c.b16 %v859, %v855
    %v968 = vpack.c.b16 %v860, %v856
    %v969 = vpack.c.b16 %v861, %v857
    %v970 = vpack.c.b16 %v866, %v862
    %v971 = vpack.c.b16 %v867, %v863
    %v972 = vpack.c.b16 %v868, %v864
    %v973 = vpack.c.b16 %v869, %v865
    %v974 = vpack.c.b16 %v874, %v870
    %v975 = vpack.c.b16 %v875, %v871
    %v976 = vpack.c.b16 %v876, %v872
    %v977 = vpack.c.b16 %v877, %v873
    %v978 = vpack.c.b16 %v882, %v878
    %v979 = vpack.c.b16 %v883, %v879
    %v980 = vpack.c.b16 %v884, %v880
    %v981 = vpack.c.b16 %v885, %v881
    %v982 = vpack.c.b16 %v890, %v886
    %v983 = vpack.c.b16 %v891, %v887
    %v984 = vpack.c.b16 %v892, %v888
    %v985 = vpack.c.b16 %v893, %v889
    %v986 = vpack.c.b16 %v898, %v894
    %v987 = vpack.c.b16 %v899, %v895
    %v988 = vpack.c.b16 %v900, %v896
    %v989 = vpack.c.b16 %v901, %v897
    %v990 = vpack.c.b16 %v906, %v902
    %v991 = vpack.c.b16 %v907, %v903
    %v992 = vpack.c.b16 %v908, %v904
    %v993 = vpack.c.b16 %v909, %v905
    %v994 = vpack.c.b16 %v914, %v910
    %v995 = vpack.c.b16 %v915, %v911
    %v996 = vpack.c.b16 %v916, %v912
    %v997 = vpack.c.b16 %v917, %v913
    %v998 = vpack.c.b16 %v922, %v918
    %v999 = vpack.c.b16 %v923, %v919
    %v1000 = vpack.c.b16 %v924, %v920
    %v1001 = vpack.c.b16 %v925, %v921
    %v1002 = vpack.c.b16 %v930, %v926
    %v1003 = vpack.c.b16 %v931, %v927
    %v1004 = vpack.c.b16 %v932, %v928
    %v1005 = vpack.c.b16 %v933, %v929
    %v1006 = vpack.c.b16 %v938, %v934
    %v1007 = vpack.c.b16 %v939, %v935
    %v1008 = vpack.c.b16 %v940, %v936
    %v1009 = vpack.c.b16 %v941, %v937
    %v1010 = vpack.c.b16 %v946, %v942
    %v1011 = vpack.c.b16 %v947, %v943
    %v1012 = vpack.c.b16 %v948, %v944
    %v1013 = vpack.c.b16 %v949, %v945
    %1078 = vmatprep.subr.bf16.mxu0 %v979
    %1079 = vmatpush1.bf16.msra.mxu0 %v978
    %1080 = vmatprep.subr.bf16.mxu0 %v975
    %1081 = vmatpush1.bf16.msra.mxu0 %v974
    %1082 = vmatprep.subr.bf16.mxu0 %v971
    %1083 = vmatpush1.bf16.msra.mxu0 %v970
    %1084 = vmatprep.subr.bf16.mxu0 %v967
    %1085 = vmatpush1.bf16.msra.mxu0 %v966
    %1086 = vmatprep.subr.bf16.mxu0 %v963
    %1087 = vmatpush1.bf16.msra.mxu0 %v962
    %1088 = vmatprep.subr.bf16.mxu0 %v959
    %1089 = vmatpush1.bf16.msra.mxu0 %v958
    %1090 = vmatprep.subr.bf16.mxu0 %v955
    %1091 = vmatpush1.bf16.msra.mxu0 %v954
    %1092 = vmatprep.subr.bf16.mxu0 %v951
    %1093 = vmatpush1.bf16.msra.mxu0 %v950
    %1094 = vmatprep.subr.bf16.mxu0 %v1011
    %1095 = vmatpush2.bf16.msra.mxu0 %v1010
    %1096 = vmatprep.subr.bf16.mxu0 %v1007
    %1097 = vmatpush2.bf16.msra.mxu0 %v1006
    %1098 = vmatprep.subr.bf16.mxu0 %v1003
    %1099 = vmatpush2.bf16.msra.mxu0 %v1002
    %1100 = vmatprep.subr.bf16.mxu0 %v999
    %1101 = vmatpush2.bf16.msra.mxu0 %v998
    %1102 = vmatprep.subr.bf16.mxu0 %v995
    %1103 = vmatpush2.bf16.msra.mxu0 %v994
    %1104 = vmatprep.subr.bf16.mxu0 %v991
    %1105 = vmatpush2.bf16.msra.mxu0 %v990
    %1106 = vmatprep.subr.bf16.mxu0 %v987
    %1107 = vmatpush2.bf16.msra.mxu0 %v986
    %1108 = vmatprep.subr.bf16.mxu0 %v983
    %1109 = vmatpush2.bf16.msra.mxu0 %v982
    %1110 = vmatprep.mubr.bf16.mxu0 %v687
    %1111 = vmatmul.mubr.bf16.gmra.mxu0 %v686
    %v1112 = vpop.f32.mrf.mxu0
    %v1113 = vadd.f32 0.0, %v1112
    %v1114 = vpop.f32.mrf.mxu0
    %v1115 = vadd.f32 0.0, %v1114
    %v1116 = vpop.f32.mrf.mxu0
    %v1117 = vadd.f32 0.0, %v1116
    %v1118 = vpop.f32.mrf.mxu0
    %v1119 = vadd.f32 0.0, %v1118
    %1120 = vmatprep.mubr.bf16.mxu0 %v689
    %1121 = vmatmul.mubr.bf16.gmra.mxu0 %v688
    %v1122 = vpop.f32.mrf.mxu0
    %v1123 = vadd.f32 0.0, %v1122
    %v1124 = vpop.f32.mrf.mxu0
    %v1125 = vadd.f32 0.0, %v1124
    %v1126 = vpop.f32.mrf.mxu0
    %v1127 = vadd.f32 0.0, %v1126
    %v1128 = vpop.f32.mrf.mxu0
    %v1129 = vadd.f32 0.0, %v1128
    %1130 = vmatprep.mubr.bf16.mxu0 %v691
    %1131 = vmatmul.mubr.bf16.gmra.mxu0 %v690
    %v1132 = vpop.f32.mrf.mxu0
    %v1133 = vadd.f32 0.0, %v1132
    %v1134 = vpop.f32.mrf.mxu0
    %v1135 = vadd.f32 0.0, %v1134
    %v1136 = vpop.f32.mrf.mxu0
    %v1137 = vadd.f32 0.0, %v1136
    %v1138 = vpop.f32.mrf.mxu0
    %v1139 = vadd.f32 0.0, %v1138
    %1140 = vmatprep.mubr.bf16.mxu0 %v693
    %1141 = vmatmul.mubr.bf16.gmra.mxu0 %v692
    %v1142 = vpop.f32.mrf.mxu0
    %v1143 = vadd.f32 0.0, %v1142
    %v1144 = vpop.f32.mrf.mxu0
    %v1145 = vadd.f32 0.0, %v1144
    %v1146 = vpop.f32.mrf.mxu0
    %v1147 = vadd.f32 0.0, %v1146
    %v1148 = vpop.f32.mrf.mxu0
    %v1149 = vadd.f32 0.0, %v1148
    %1150 = vdwg.mxu0
    %1151 = vmatprep.subr.bf16.mxu0 %v981
    %1152 = vmatpush1.bf16.msra.mxu0 %v980
    %1153 = vmatprep.subr.bf16.mxu0 %v977
    %1154 = vmatpush1.bf16.msra.mxu0 %v976
    %1155 = vmatprep.subr.bf16.mxu0 %v973
    %1156 = vmatpush1.bf16.msra.mxu0 %v972
    %1157 = vmatprep.subr.bf16.mxu0 %v969
    %1158 = vmatpush1.bf16.msra.mxu0 %v968
    %1159 = vmatprep.subr.bf16.mxu0 %v965
    %1160 = vmatpush1.bf16.msra.mxu0 %v964
    %1161 = vmatprep.subr.bf16.mxu0 %v961
    %1162 = vmatpush1.bf16.msra.mxu0 %v960
    %1163 = vmatprep.subr.bf16.mxu0 %v957
    %1164 = vmatpush1.bf16.msra.mxu0 %v956
    %1165 = vmatprep.subr.bf16.mxu0 %v953
    %1166 = vmatpush1.bf16.msra.mxu0 %v952
    %1167 = vmatprep.subr.bf16.mxu0 %v1013
    %1168 = vmatpush2.bf16.msra.mxu0 %v1012
    %1169 = vmatprep.subr.bf16.mxu0 %v1009
    %1170 = vmatpush2.bf16.msra.mxu0 %v1008
    %1171 = vmatprep.subr.bf16.mxu0 %v1005
    %1172 = vmatpush2.bf16.msra.mxu0 %v1004
    %1173 = vmatprep.subr.bf16.mxu0 %v1001
    %1174 = vmatpush2.bf16.msra.mxu0 %v1000
    %1175 = vmatprep.subr.bf16.mxu0 %v997
    %1176 = vmatpush2.bf16.msra.mxu0 %v996
    %1177 = vmatprep.subr.bf16.mxu0 %v993
    %1178 = vmatpush2.bf16.msra.mxu0 %v992
    %1179 = vmatprep.subr.bf16.mxu0 %v989
    %1180 = vmatpush2.bf16.msra.mxu0 %v988
    %1181 = vmatprep.subr.bf16.mxu0 %v985
    %1182 = vmatpush2.bf16.msra.mxu0 %v984
    %1183 = vmatprep.mubr.bf16.mxu0 %v687
    %1184 = vmatmul.mubr.bf16.gmra.mxu0 %v686
    %v1185 = vpop.f32.mrf.mxu0
    %v1186 = vadd.f32 0.0, %v1185
    %v1187 = vpop.f32.mrf.mxu0
    %v1188 = vadd.f32 0.0, %v1187
    %v1189 = vpop.f32.mrf.mxu0
    %v1190 = vadd.f32 0.0, %v1189
    %v1191 = vpop.f32.mrf.mxu0
    %v1192 = vadd.f32 0.0, %v1191
    %1193 = vmatprep.mubr.bf16.mxu0 %v689
    %1194 = vmatmul.mubr.bf16.gmra.mxu0 %v688
    %v1195 = vpop.f32.mrf.mxu0
    %v1196 = vadd.f32 0.0, %v1195
    %v1197 = vpop.f32.mrf.mxu0
    %v1198 = vadd.f32 0.0, %v1197
    %v1199 = vpop.f32.mrf.mxu0
    %v1200 = vadd.f32 0.0, %v1199
    %v1201 = vpop.f32.mrf.mxu0
    %v1202 = vadd.f32 0.0, %v1201
    %1203 = vmatprep.mubr.bf16.mxu0 %v691
    %1204 = vmatmul.mubr.bf16.gmra.mxu0 %v690
    %v1205 = vpop.f32.mrf.mxu0
    %v1206 = vadd.f32 0.0, %v1205
    %v1207 = vpop.f32.mrf.mxu0
    %v1208 = vadd.f32 0.0, %v1207
    %v1209 = vpop.f32.mrf.mxu0
    %v1210 = vadd.f32 0.0, %v1209
    %v1211 = vpop.f32.mrf.mxu0
    %v1212 = vadd.f32 0.0, %v1211
    %1213 = vmatprep.mubr.bf16.mxu0 %v693
    %1214 = vmatmul.mubr.bf16.gmra.mxu0 %v692
    %v1215 = vpop.f32.mrf.mxu0
    %v1216 = vadd.f32 0.0, %v1215
    %v1217 = vpop.f32.mrf.mxu0
    %v1218 = vadd.f32 0.0, %v1217
    %v1219 = vpop.f32.mrf.mxu0
    %v1220 = vadd.f32 0.0, %v1219
    %v1221 = vpop.f32.mrf.mxu0
    %v1222 = vadd.f32 0.0, %v1221
    %1223 = vdwg.mxu0
    %v1288 = vunpack.c.l.b16 %v622
    %v1289 = vunpack.c.h.b16 %v622
    %v1290 = vunpack.c.l.b16 %v623
    %v1291 = vunpack.c.h.b16 %v623
    %v1292 = vunpack.c.l.b16 %v624
    %v1293 = vunpack.c.h.b16 %v624
    %v1294 = vunpack.c.l.b16 %v625
    %v1295 = vunpack.c.h.b16 %v625
    %v1296 = vunpack.c.l.b16 %v626
    %v1297 = vunpack.c.h.b16 %v626
    %v1298 = vunpack.c.l.b16 %v627
    %v1299 = vunpack.c.h.b16 %v627
    %v1300 = vunpack.c.l.b16 %v628
    %v1301 = vunpack.c.h.b16 %v628
    %v1302 = vunpack.c.l.b16 %v629
    %v1303 = vunpack.c.h.b16 %v629
    %v1304 = vunpack.c.l.b16 %v630
    %v1305 = vunpack.c.h.b16 %v630
    %v1306 = vunpack.c.l.b16 %v631
    %v1307 = vunpack.c.h.b16 %v631
    %v1308 = vunpack.c.l.b16 %v632
    %v1309 = vunpack.c.h.b16 %v632
    %v1310 = vunpack.c.l.b16 %v633
    %v1311 = vunpack.c.h.b16 %v633
    %v1312 = vunpack.c.l.b16 %v634
    %v1313 = vunpack.c.h.b16 %v634
    %v1314 = vunpack.c.l.b16 %v635
    %v1315 = vunpack.c.h.b16 %v635
    %v1316 = vunpack.c.l.b16 %v636
    %v1317 = vunpack.c.h.b16 %v636
    %v1318 = vunpack.c.l.b16 %v637
    %v1319 = vunpack.c.h.b16 %v637
    %v1320 = vunpack.c.l.b16 %v638
    %v1321 = vunpack.c.h.b16 %v638
    %v1322 = vunpack.c.l.b16 %v639
    %v1323 = vunpack.c.h.b16 %v639
    %v1324 = vunpack.c.l.b16 %v640
    %v1325 = vunpack.c.h.b16 %v640
    %v1326 = vunpack.c.l.b16 %v641
    %v1327 = vunpack.c.h.b16 %v641
    %v1328 = vunpack.c.l.b16 %v642
    %v1329 = vunpack.c.h.b16 %v642
    %v1330 = vunpack.c.l.b16 %v643
    %v1331 = vunpack.c.h.b16 %v643
    %v1332 = vunpack.c.l.b16 %v644
    %v1333 = vunpack.c.h.b16 %v644
    %v1334 = vunpack.c.l.b16 %v645
    %v1335 = vunpack.c.h.b16 %v645
    %v1336 = vunpack.c.l.b16 %v646
    %v1337 = vunpack.c.h.b16 %v646
    %v1338 = vunpack.c.l.b16 %v647
    %v1339 = vunpack.c.h.b16 %v647
    %v1340 = vunpack.c.l.b16 %v648
    %v1341 = vunpack.c.h.b16 %v648
    %v1342 = vunpack.c.l.b16 %v649
    %v1343 = vunpack.c.h.b16 %v649
    %v1344 = vunpack.c.l.b16 %v650
    %v1345 = vunpack.c.h.b16 %v650
    %v1346 = vunpack.c.l.b16 %v651
    %v1347 = vunpack.c.h.b16 %v651
    %v1348 = vunpack.c.l.b16 %v652
    %v1349 = vunpack.c.h.b16 %v652
    %v1350 = vunpack.c.l.b16 %v653
    %v1351 = vunpack.c.h.b16 %v653
    %v1352 = vunpack.c.l.b16 %v654
    %v1353 = vunpack.c.h.b16 %v654
    %v1354 = vunpack.c.l.b16 %v655
    %v1355 = vunpack.c.h.b16 %v655
    %v1356 = vunpack.c.l.b16 %v656
    %v1357 = vunpack.c.h.b16 %v656
    %v1358 = vunpack.c.l.b16 %v657
    %v1359 = vunpack.c.h.b16 %v657
    %v1360 = vunpack.c.l.b16 %v658
    %v1361 = vunpack.c.h.b16 %v658
    %v1362 = vunpack.c.l.b16 %v659
    %v1363 = vunpack.c.h.b16 %v659
    %v1364 = vunpack.c.l.b16 %v660
    %v1365 = vunpack.c.h.b16 %v660
    %v1366 = vunpack.c.l.b16 %v661
    %v1367 = vunpack.c.h.b16 %v661
    %v1368 = vunpack.c.l.b16 %v662
    %v1369 = vunpack.c.h.b16 %v662
    %v1370 = vunpack.c.l.b16 %v663
    %v1371 = vunpack.c.h.b16 %v663
    %v1372 = vunpack.c.l.b16 %v664
    %v1373 = vunpack.c.h.b16 %v664
    %v1374 = vunpack.c.l.b16 %v665
    %v1375 = vunpack.c.h.b16 %v665
    %v1376 = vunpack.c.l.b16 %v666
    %v1377 = vunpack.c.h.b16 %v666
    %v1378 = vunpack.c.l.b16 %v667
    %v1379 = vunpack.c.h.b16 %v667
    %v1380 = vunpack.c.l.b16 %v668
    %v1381 = vunpack.c.h.b16 %v668
    %v1382 = vunpack.c.l.b16 %v669
    %v1383 = vunpack.c.h.b16 %v669
    %v1384 = vunpack.c.l.b16 %v670
    %v1385 = vunpack.c.h.b16 %v670
    %v1386 = vunpack.c.l.b16 %v671
    %v1387 = vunpack.c.h.b16 %v671
    %v1388 = vunpack.c.l.b16 %v672
    %v1389 = vunpack.c.h.b16 %v672
    %v1390 = vunpack.c.l.b16 %v673
    %v1391 = vunpack.c.h.b16 %v673
    %v1392 = vunpack.c.l.b16 %v674
    %v1393 = vunpack.c.h.b16 %v674
    %v1394 = vunpack.c.l.b16 %v675
    %v1395 = vunpack.c.h.b16 %v675
    %v1396 = vunpack.c.l.b16 %v676
    %v1397 = vunpack.c.h.b16 %v676
    %v1398 = vunpack.c.l.b16 %v677
    %v1399 = vunpack.c.h.b16 %v677
    %v1400 = vunpack.c.l.b16 %v678
    %v1401 = vunpack.c.h.b16 %v678
    %v1402 = vunpack.c.l.b16 %v679
    %v1403 = vunpack.c.h.b16 %v679
    %v1404 = vunpack.c.l.b16 %v680
    %v1405 = vunpack.c.h.b16 %v680
    %v1406 = vunpack.c.l.b16 %v681
    %v1407 = vunpack.c.h.b16 %v681
    %v1408 = vunpack.c.l.b16 %v682
    %v1409 = vunpack.c.h.b16 %v682
    %v1410 = vunpack.c.l.b16 %v683
    %v1411 = vunpack.c.h.b16 %v683
    %v1412 = vunpack.c.l.b16 %v684
    %v1413 = vunpack.c.h.b16 %v684
    %v1414 = vunpack.c.l.b16 %v685
    %v1415 = vunpack.c.h.b16 %v685
    %v1416 = vpack.c.b16 %v1292, %v1288
    %v1417 = vpack.c.b16 %v1293, %v1289
    %v1418 = vpack.c.b16 %v1294, %v1290
    %v1419 = vpack.c.b16 %v1295, %v1291
    %v1420 = vpack.c.b16 %v1300, %v1296
    %v1421 = vpack.c.b16 %v1301, %v1297
    %v1422 = vpack.c.b16 %v1302, %v1298
    %v1423 = vpack.c.b16 %v1303, %v1299
    %v1424 = vpack.c.b16 %v1308, %v1304
    %v1425 = vpack.c.b16 %v1309, %v1305
    %v1426 = vpack.c.b16 %v1310, %v1306
    %v1427 = vpack.c.b16 %v1311, %v1307
    %v1428 = vpack.c.b16 %v1316, %v1312
    %v1429 = vpack.c.b16 %v1317, %v1313
    %v1430 = vpack.c.b16 %v1318, %v1314
    %v1431 = vpack.c.b16 %v1319, %v1315
    %v1432 = vpack.c.b16 %v1324, %v1320
    %v1433 = vpack.c.b16 %v1325, %v1321
    %v1434 = vpack.c.b16 %v1326, %v1322
    %v1435 = vpack.c.b16 %v1327, %v1323
    %v1436 = vpack.c.b16 %v1332, %v1328
    %v1437 = vpack.c.b16 %v1333, %v1329
    %v1438 = vpack.c.b16 %v1334, %v1330
    %v1439 = vpack.c.b16 %v1335, %v1331
    %v1440 = vpack.c.b16 %v1340, %v1336
    %v1441 = vpack.c.b16 %v1341, %v1337
    %v1442 = vpack.c.b16 %v1342, %v1338
    %v1443 = vpack.c.b16 %v1343, %v1339
    %v1444 = vpack.c.b16 %v1348, %v1344
    %v1445 = vpack.c.b16 %v1349, %v1345
    %v1446 = vpack.c.b16 %v1350, %v1346
    %v1447 = vpack.c.b16 %v1351, %v1347
    %v1448 = vpack.c.b16 %v1356, %v1352
    %v1449 = vpack.c.b16 %v1357, %v1353
    %v1450 = vpack.c.b16 %v1358, %v1354
    %v1451 = vpack.c.b16 %v1359, %v1355
    %v1452 = vpack.c.b16 %v1364, %v1360
    %v1453 = vpack.c.b16 %v1365, %v1361
    %v1454 = vpack.c.b16 %v1366, %v1362
    %v1455 = vpack.c.b16 %v1367, %v1363
    %v1456 = vpack.c.b16 %v1372, %v1368
    %v1457 = vpack.c.b16 %v1373, %v1369
    %v1458 = vpack.c.b16 %v1374, %v1370
    %v1459 = vpack.c.b16 %v1375, %v1371
    %v1460 = vpack.c.b16 %v1380, %v1376
    %v1461 = vpack.c.b16 %v1381, %v1377
    %v1462 = vpack.c.b16 %v1382, %v1378
    %v1463 = vpack.c.b16 %v1383, %v1379
    %v1464 = vpack.c.b16 %v1388, %v1384
    %v1465 = vpack.c.b16 %v1389, %v1385
    %v1466 = vpack.c.b16 %v1390, %v1386
    %v1467 = vpack.c.b16 %v1391, %v1387
    %v1468 = vpack.c.b16 %v1396, %v1392
    %v1469 = vpack.c.b16 %v1397, %v1393
    %v1470 = vpack.c.b16 %v1398, %v1394
    %v1471 = vpack.c.b16 %v1399, %v1395
    %v1472 = vpack.c.b16 %v1404, %v1400
    %v1473 = vpack.c.b16 %v1405, %v1401
    %v1474 = vpack.c.b16 %v1406, %v1402
    %v1475 = vpack.c.b16 %v1407, %v1403
    %v1476 = vpack.c.b16 %v1412, %v1408
    %v1477 = vpack.c.b16 %v1413, %v1409
    %v1478 = vpack.c.b16 %v1414, %v1410
    %v1479 = vpack.c.b16 %v1415, %v1411
    %1544 = vmatprep.subr.bf16.mxu0 %v1445
    %1545 = vmatpush1.bf16.msra.mxu0 %v1444
    %1546 = vmatprep.subr.bf16.mxu0 %v1441
    %1547 = vmatpush1.bf16.msra.mxu0 %v1440
    %1548 = vmatprep.subr.bf16.mxu0 %v1437
    %1549 = vmatpush1.bf16.msra.mxu0 %v1436
    %1550 = vmatprep.subr.bf16.mxu0 %v1433
    %1551 = vmatpush1.bf16.msra.mxu0 %v1432
    %1552 = vmatprep.subr.bf16.mxu0 %v1429
    %1553 = vmatpush1.bf16.msra.mxu0 %v1428
    %1554 = vmatprep.subr.bf16.mxu0 %v1425
    %1555 = vmatpush1.bf16.msra.mxu0 %v1424
    %1556 = vmatprep.subr.bf16.mxu0 %v1421
    %1557 = vmatpush1.bf16.msra.mxu0 %v1420
    %1558 = vmatprep.subr.bf16.mxu0 %v1417
    %1559 = vmatpush1.bf16.msra.mxu0 %v1416
    %1560 = vmatprep.subr.bf16.mxu0 %v1477
    %1561 = vmatpush2.bf16.msra.mxu0 %v1476
    %1562 = vmatprep.subr.bf16.mxu0 %v1473
    %1563 = vmatpush2.bf16.msra.mxu0 %v1472
    %1564 = vmatprep.subr.bf16.mxu0 %v1469
    %1565 = vmatpush2.bf16.msra.mxu0 %v1468
    %1566 = vmatprep.subr.bf16.mxu0 %v1465
    %1567 = vmatpush2.bf16.msra.mxu0 %v1464
    %1568 = vmatprep.subr.bf16.mxu0 %v1461
    %1569 = vmatpush2.bf16.msra.mxu0 %v1460
    %1570 = vmatprep.subr.bf16.mxu0 %v1457
    %1571 = vmatpush2.bf16.msra.mxu0 %v1456
    %1572 = vmatprep.subr.bf16.mxu0 %v1453
    %1573 = vmatpush2.bf16.msra.mxu0 %v1452
    %1574 = vmatprep.subr.bf16.mxu0 %v1449
    %1575 = vmatpush2.bf16.msra.mxu0 %v1448
    %1576 = vmatprep.mubr.bf16.mxu0 %v542
    %1577 = vmatmul.mubr.bf16.gmra.mxu0 %v541
    %v1578 = vpop.f32.mrf.mxu0
    %v1579 = vadd.f32 %v1113, %v1578
    %v1580 = vpop.f32.mrf.mxu0
    %v1581 = vadd.f32 %v1115, %v1580
    %v1582 = vpop.f32.mrf.mxu0
    %v1583 = vadd.f32 %v1117, %v1582
    %v1584 = vpop.f32.mrf.mxu0
    %v1585 = vadd.f32 %v1119, %v1584
    %1586 = vmatprep.mubr.bf16.mxu0 %v544
    %1587 = vmatmul.mubr.bf16.gmra.mxu0 %v543
    %v1588 = vpop.f32.mrf.mxu0
    %v1589 = vadd.f32 %v1123, %v1588
    %v1590 = vpop.f32.mrf.mxu0
    %v1591 = vadd.f32 %v1125, %v1590
    %v1592 = vpop.f32.mrf.mxu0
    %v1593 = vadd.f32 %v1127, %v1592
    %v1594 = vpop.f32.mrf.mxu0
    %v1595 = vadd.f32 %v1129, %v1594
    %1596 = vmatprep.mubr.bf16.mxu0 %v546
    %1597 = vmatmul.mubr.bf16.gmra.mxu0 %v545
    %v1598 = vpop.f32.mrf.mxu0
    %v1599 = vadd.f32 %v1133, %v1598
    %v1600 = vpop.f32.mrf.mxu0
    %v1601 = vadd.f32 %v1135, %v1600
    %v1602 = vpop.f32.mrf.mxu0
    %v1603 = vadd.f32 %v1137, %v1602
    %v1604 = vpop.f32.mrf.mxu0
    %v1605 = vadd.f32 %v1139, %v1604
    %1606 = vmatprep.mubr.bf16.mxu0 %v548
    %1607 = vmatmul.mubr.bf16.gmra.mxu0 %v547
    %v1608 = vpop.f32.mrf.mxu0
    %v1609 = vadd.f32 %v1143, %v1608
    %v1610 = vpop.f32.mrf.mxu0
    %v1611 = vadd.f32 %v1145, %v1610
    %v1612 = vpop.f32.mrf.mxu0
    %v1613 = vadd.f32 %v1147, %v1612
    %v1614 = vpop.f32.mrf.mxu0
    %v1615 = vadd.f32 %v1149, %v1614
    %1616 = vdwg.mxu0
    %1617 = vmatprep.subr.bf16.mxu0 %v1447
    %1618 = vmatpush1.bf16.msra.mxu0 %v1446
    %1619 = vmatprep.subr.bf16.mxu0 %v1443
    %1620 = vmatpush1.bf16.msra.mxu0 %v1442
    %1621 = vmatprep.subr.bf16.mxu0 %v1439
    %1622 = vmatpush1.bf16.msra.mxu0 %v1438
    %1623 = vmatprep.subr.bf16.mxu0 %v1435
    %1624 = vmatpush1.bf16.msra.mxu0 %v1434
    %1625 = vmatprep.subr.bf16.mxu0 %v1431
    %1626 = vmatpush1.bf16.msra.mxu0 %v1430
    %1627 = vmatprep.subr.bf16.mxu0 %v1427
    %1628 = vmatpush1.bf16.msra.mxu0 %v1426
    %1629 = vmatprep.subr.bf16.mxu0 %v1423
    %1630 = vmatpush1.bf16.msra.mxu0 %v1422
    %1631 = vmatprep.subr.bf16.mxu0 %v1419
    %1632 = vmatpush1.bf16.msra.mxu0 %v1418
    %1633 = vmatprep.subr.bf16.mxu0 %v1479
    %1634 = vmatpush2.bf16.msra.mxu0 %v1478
    %1635 = vmatprep.subr.bf16.mxu0 %v1475
    %1636 = vmatpush2.bf16.msra.mxu0 %v1474
    %1637 = vmatprep.subr.bf16.mxu0 %v1471
    %1638 = vmatpush2.bf16.msra.mxu0 %v1470
    %1639 = vmatprep.subr.bf16.mxu0 %v1467
    %1640 = vmatpush2.bf16.msra.mxu0 %v1466
    %1641 = vmatprep.subr.bf16.mxu0 %v1463
    %1642 = vmatpush2.bf16.msra.mxu0 %v1462
    %1643 = vmatprep.subr.bf16.mxu0 %v1459
    %1644 = vmatpush2.bf16.msra.mxu0 %v1458
    %1645 = vmatprep.subr.bf16.mxu0 %v1455
    %1646 = vmatpush2.bf16.msra.mxu0 %v1454
    %1647 = vmatprep.subr.bf16.mxu0 %v1451
    %1648 = vmatpush2.bf16.msra.mxu0 %v1450
    %1649 = vmatprep.mubr.bf16.mxu0 %v542
    %1650 = vmatmul.mubr.bf16.gmra.mxu0 %v541
    %v1651 = vpop.f32.mrf.mxu0
    %v1652 = vadd.f32 %v1186, %v1651
    %v1653 = vpop.f32.mrf.mxu0
    %v1654 = vadd.f32 %v1188, %v1653
    %v1655 = vpop.f32.mrf.mxu0
    %v1656 = vadd.f32 %v1190, %v1655
    %v1657 = vpop.f32.mrf.mxu0
    %v1658 = vadd.f32 %v1192, %v1657
    %1659 = vmatprep.mubr.bf16.mxu0 %v544
    %1660 = vmatmul.mubr.bf16.gmra.mxu0 %v543
    %v1661 = vpop.f32.mrf.mxu0
    %v1662 = vadd.f32 %v1196, %v1661
    %v1663 = vpop.f32.mrf.mxu0
    %v1664 = vadd.f32 %v1198, %v1663
    %v1665 = vpop.f32.mrf.mxu0
    %v1666 = vadd.f32 %v1200, %v1665
    %v1667 = vpop.f32.mrf.mxu0
    %v1668 = vadd.f32 %v1202, %v1667
    %1669 = vmatprep.mubr.bf16.mxu0 %v546
    %1670 = vmatmul.mubr.bf16.gmra.mxu0 %v545
    %v1671 = vpop.f32.mrf.mxu0
    %v1672 = vadd.f32 %v1206, %v1671
    %v1673 = vpop.f32.mrf.mxu0
    %v1674 = vadd.f32 %v1208, %v1673
    %v1675 = vpop.f32.mrf.mxu0
    %v1676 = vadd.f32 %v1210, %v1675
    %v1677 = vpop.f32.mrf.mxu0
    %v1678 = vadd.f32 %v1212, %v1677
    %1679 = vmatprep.mubr.bf16.mxu0 %v548
    %1680 = vmatmul.mubr.bf16.gmra.mxu0 %v547
    %v1681 = vpop.f32.mrf.mxu0
    %v1682 = vadd.f32 %v1216, %v1681
    %v1683 = vpop.f32.mrf.mxu0
    %v1684 = vadd.f32 %v1218, %v1683
    %v1685 = vpop.f32.mrf.mxu0
    %v1686 = vadd.f32 %v1220, %v1685
    %v1687 = vpop.f32.mrf.mxu0
    %v1688 = vadd.f32 %v1222, %v1687
    %1689 = vdwg.mxu0
    %v1690 = vld [vmem:[%s8] sm:$0xf]
    %v1692 = vlaneseq
    %v1693 = vshrl.u32 %v1692, 7
    %v1694 = vsub.s32 0, %v1693
    %v1695 = vrot.slane %v1690, %v1694
    %v1696 = vlaneseq
    %v1697 = vshrl.u32 %v1696, 7
    %v1698 = vsub.s32 1, %v1697
    %v1699 = vrot.slane %v1690, %v1698
    %v1700 = vlaneseq
    %v1701 = vshrl.u32 %v1700, 7
    %v1702 = vsub.s32 2, %v1701
    %v1703 = vrot.slane %v1690, %v1702
    %v1704 = vlaneseq
    %v1705 = vshrl.u32 %v1704, 7
    %v1706 = vsub.s32 3, %v1705
    %v1707 = vrot.slane %v1690, %v1706
    %v1712 = vadd.f32 %v1579, %v1695
    %v1713 = vadd.f32 %v1581, %v1699
    %v1714 = vadd.f32 %v1652, %v1703
    %v1715 = vadd.f32 %v1654, %v1707
    %v1716 = vadd.f32 %v1583, %v1695
    %v1717 = vadd.f32 %v1585, %v1699
    %v1718 = vadd.f32 %v1656, %v1703
    %v1719 = vadd.f32 %v1658, %v1707
    %v1720 = vadd.f32 %v1589, %v1695
    %v1721 = vadd.f32 %v1591, %v1699
    %v1722 = vadd.f32 %v1662, %v1703
    %v1723 = vadd.f32 %v1664, %v1707
    %v1724 = vadd.f32 %v1593, %v1695
    %v1725 = vadd.f32 %v1595, %v1699
    %v1726 = vadd.f32 %v1666, %v1703
    %v1727 = vadd.f32 %v1668, %v1707
    %v1728 = vadd.f32 %v1599, %v1695
    %v1729 = vadd.f32 %v1601, %v1699
    %v1730 = vadd.f32 %v1672, %v1703
    %v1731 = vadd.f32 %v1674, %v1707
    %v1732 = vadd.f32 %v1603, %v1695
    %v1733 = vadd.f32 %v1605, %v1699
    %v1734 = vadd.f32 %v1676, %v1703
    %v1735 = vadd.f32 %v1678, %v1707
    %v1736 = vadd.f32 %v1609, %v1695
    %v1737 = vadd.f32 %v1611, %v1699
    %v1738 = vadd.f32 %v1682, %v1703
    %v1739 = vadd.f32 %v1684, %v1707
    %v1740 = vadd.f32 %v1613, %v1695
    %v1741 = vadd.f32 %v1615, %v1699
    %v1742 = vadd.f32 %v1686, %v1703
    %v1743 = vadd.f32 %v1688, %v1707
    %v1744 = vld [vmem:[%s9] sm:$0xf]
    %v1746 = vlaneseq
    %v1747 = vshrl.u32 %v1746, 7
    %v1748 = vsub.s32 0, %v1747
    %v1749 = vrot.slane %v1744, %v1748
    %v1750 = vlaneseq
    %v1751 = vshrl.u32 %v1750, 7
    %v1752 = vsub.s32 1, %v1751
    %v1753 = vrot.slane %v1744, %v1752
    %v1754 = vlaneseq
    %v1755 = vshrl.u32 %v1754, 7
    %v1756 = vsub.s32 2, %v1755
    %v1757 = vrot.slane %v1744, %v1756
    %v1758 = vlaneseq
    %v1759 = vshrl.u32 %v1758, 7
    %v1760 = vsub.s32 3, %v1759
    %v1761 = vrot.slane %v1744, %v1760
    %v1766 = vmul.f32 %v445, %v1749
    %v1767 = vmul.f32 %v445, %v1753
    %v1768 = vmul.f32 %v445, %v1757
    %v1769 = vmul.f32 %v445, %v1761
    %v1770 = vmul.f32 %v450, %v1749
    %v1771 = vmul.f32 %v450, %v1753
    %v1772 = vmul.f32 %v450, %v1757
    %v1773 = vmul.f32 %v450, %v1761
    %v1774 = vmul.f32 %v455, %v1749
    %v1775 = vmul.f32 %v455, %v1753
    %v1776 = vmul.f32 %v455, %v1757
    %v1777 = vmul.f32 %v455, %v1761
    %v1778 = vmul.f32 %v460, %v1749
    %v1779 = vmul.f32 %v460, %v1753
    %v1780 = vmul.f32 %v460, %v1757
    %v1781 = vmul.f32 %v460, %v1761
    %v1782 = vmul.f32 %v465, %v1749
    %v1783 = vmul.f32 %v465, %v1753
    %v1784 = vmul.f32 %v465, %v1757
    %v1785 = vmul.f32 %v465, %v1761
    %v1786 = vmul.f32 %v470, %v1749
    %v1787 = vmul.f32 %v470, %v1753
    %v1788 = vmul.f32 %v470, %v1757
    %v1789 = vmul.f32 %v470, %v1761
    %v1790 = vmul.f32 %v475, %v1749
    %v1791 = vmul.f32 %v475, %v1753
    %v1792 = vmul.f32 %v475, %v1757
    %v1793 = vmul.f32 %v475, %v1761
    %v1794 = vmul.f32 %v480, %v1749
    %v1795 = vmul.f32 %v480, %v1753
    %v1796 = vmul.f32 %v480, %v1757
    %v1797 = vmul.f32 %v480, %v1761
    %v1798 = vadd.f32 %v1712, %v1766
    %v1799 = vadd.f32 %v1713, %v1767
    %v1800 = vadd.f32 %v1714, %v1768
    %v1801 = vadd.f32 %v1715, %v1769
    %v1802 = vadd.f32 %v1716, %v1770
    %v1803 = vadd.f32 %v1717, %v1771
    %v1804 = vadd.f32 %v1718, %v1772
    %v1805 = vadd.f32 %v1719, %v1773
    %v1806 = vadd.f32 %v1720, %v1774
    %v1807 = vadd.f32 %v1721, %v1775
    %v1808 = vadd.f32 %v1722, %v1776
    %v1809 = vadd.f32 %v1723, %v1777
    %v1810 = vadd.f32 %v1724, %v1778
    %v1811 = vadd.f32 %v1725, %v1779
    %v1812 = vadd.f32 %v1726, %v1780
    %v1813 = vadd.f32 %v1727, %v1781
    %v1814 = vadd.f32 %v1728, %v1782
    %v1815 = vadd.f32 %v1729, %v1783
    %v1816 = vadd.f32 %v1730, %v1784
    %v1817 = vadd.f32 %v1731, %v1785
    %v1818 = vadd.f32 %v1732, %v1786
    %v1819 = vadd.f32 %v1733, %v1787
    %v1820 = vadd.f32 %v1734, %v1788
    %v1821 = vadd.f32 %v1735, %v1789
    %v1822 = vadd.f32 %v1736, %v1790
    %v1823 = vadd.f32 %v1737, %v1791
    %v1824 = vadd.f32 %v1738, %v1792
    %v1825 = vadd.f32 %v1739, %v1793
    %v1826 = vadd.f32 %v1740, %v1794
    %v1827 = vadd.f32 %v1741, %v1795
    %v1828 = vadd.f32 %v1742, %v1796
    %v1829 = vadd.f32 %v1743, %v1797
    %v1830 = vmax.f32 %v1798, 0.0
    %v1831 = vmax.f32 %v1799, 0.0
    %v1832 = vmax.f32 %v1800, 0.0
    %v1833 = vmax.f32 %v1801, 0.0
    %v1834 = vmax.f32 %v1802, 0.0
    %v1835 = vmax.f32 %v1803, 0.0
    %v1836 = vmax.f32 %v1804, 0.0
    %v1837 = vmax.f32 %v1805, 0.0
    %v1838 = vmax.f32 %v1806, 0.0
    %v1839 = vmax.f32 %v1807, 0.0
    %v1840 = vmax.f32 %v1808, 0.0
    %v1841 = vmax.f32 %v1809, 0.0
    %v1842 = vmax.f32 %v1810, 0.0
    %v1843 = vmax.f32 %v1811, 0.0
    %v1844 = vmax.f32 %v1812, 0.0
    %v1845 = vmax.f32 %v1813, 0.0
    %v1846 = vmax.f32 %v1814, 0.0
    %v1847 = vmax.f32 %v1815, 0.0
    %v1848 = vmax.f32 %v1816, 0.0
    %v1849 = vmax.f32 %v1817, 0.0
    %v1850 = vmax.f32 %v1818, 0.0
    %v1851 = vmax.f32 %v1819, 0.0
    %v1852 = vmax.f32 %v1820, 0.0
    %v1853 = vmax.f32 %v1821, 0.0
    %v1854 = vmax.f32 %v1822, 0.0
    %v1855 = vmax.f32 %v1823, 0.0
    %v1856 = vmax.f32 %v1824, 0.0
    %v1857 = vmax.f32 %v1825, 0.0
    %v1858 = vmax.f32 %v1826, 0.0
    %v1859 = vmax.f32 %v1827, 0.0
    %v1860 = vmax.f32 %v1828, 0.0
    %v1861 = vmax.f32 %v1829, 0.0
    %v1862 = vmax.f32 %v1830, %v1834
    %v1863 = vmax.f32 %v1862, %v1838
    %v1864 = vmax.f32 %v1863, %v1842
    %v1865 = vmax.f32 %v1864, %v1846
    %v1866 = vmax.f32 %v1865, %v1850
    %v1867 = vmax.f32 %v1866, %v1854
    %v1868 = vmax.f32 %v1867, %v1858
    %v1869 = vrot.slane %v1868, 4
    %v1870 = vmax.f32 %v1868, %v1869
    %v1871 = vrot.slane %v1870, 2
    %v1872 = vmax.f32 %v1870, %v1871
    %v1873 = vrot.slane %v1872, 1
    %v1874 = vmax.f32 %v1872, %v1873
    %v1875 = vmax.f32 %v1831, %v1835
    %v1876 = vmax.f32 %v1875, %v1839
    %v1877 = vmax.f32 %v1876, %v1843
    %v1878 = vmax.f32 %v1877, %v1847
    %v1879 = vmax.f32 %v1878, %v1851
    %v1880 = vmax.f32 %v1879, %v1855
    %v1881 = vmax.f32 %v1880, %v1859
    %v1882 = vrot.slane %v1881, 4
    %v1883 = vmax.f32 %v1881, %v1882
    %v1884 = vrot.slane %v1883, 2
    %v1885 = vmax.f32 %v1883, %v1884
    %v1886 = vrot.slane %v1885, 1
    %v1887 = vmax.f32 %v1885, %v1886
    %v1888 = vmax.f32 %v1832, %v1836
    %v1889 = vmax.f32 %v1888, %v1840
    %v1890 = vmax.f32 %v1889, %v1844
    %v1891 = vmax.f32 %v1890, %v1848
    %v1892 = vmax.f32 %v1891, %v1852
    %v1893 = vmax.f32 %v1892, %v1856
    %v1894 = vmax.f32 %v1893, %v1860
    %v1895 = vrot.slane %v1894, 4
    %v1896 = vmax.f32 %v1894, %v1895
    %v1897 = vrot.slane %v1896, 2
    %v1898 = vmax.f32 %v1896, %v1897
    %v1899 = vrot.slane %v1898, 1
    %v1900 = vmax.f32 %v1898, %v1899
    %v1901 = vmax.f32 %v1833, %v1837
    %v1902 = vmax.f32 %v1901, %v1841
    %v1903 = vmax.f32 %v1902, %v1845
    %v1904 = vmax.f32 %v1903, %v1849
    %v1905 = vmax.f32 %v1904, %v1853
    %v1906 = vmax.f32 %v1905, %v1857
    %v1907 = vmax.f32 %v1906, %v1861
    %v1908 = vrot.slane %v1907, 4
    %v1909 = vmax.f32 %v1907, %v1908
    %v1910 = vrot.slane %v1909, 2
    %v1911 = vmax.f32 %v1909, %v1910
    %v1912 = vrot.slane %v1911, 1
    %v1913 = vmax.f32 %v1911, %v1912
    %v1914 = vpack.c.bf16 %v1874, %v1874
    %v1915 = vpack.c.bf16 %v1887, %v1887
    %v1916 = vpack.c.bf16 %v1900, %v1900
    %v1917 = vpack.c.bf16 %v1913, %v1913
    %s1918 = smul.u32 2, 64
    %s1919 = smul.u32 %s1918, 8
    %s1920 = sshll.u32 %s1919, 4
    %1921 = dma.done [#allocation6], %s1920
    %v1922 = vld [vmem:[#allocation2] sm:$0xff]
    %v1923 = vld [vmem:[#allocation2 + $0x8] sm:$0xff]
    %v1924 = vld [vmem:[#allocation2 + $0x10] sm:$0xff]
    %v1925 = vld [vmem:[#allocation2 + $0x18] sm:$0xff]
    %v1926 = vld [vmem:[#allocation2 + $0x20] sm:$0xff]
    %v1927 = vld [vmem:[#allocation2 + $0x28] sm:$0xff]
    %v1928 = vld [vmem:[#allocation2 + $0x30] sm:$0xff]
    %v1929 = vld [vmem:[#allocation2 + $0x38] sm:$0xff]
    %v1930 = vld [vmem:[#allocation2 + $0x40] sm:$0xff]
    %v1931 = vld [vmem:[#allocation2 + $0x48] sm:$0xff]
    %v1932 = vld [vmem:[#allocation2 + $0x50] sm:$0xff]
    %v1933 = vld [vmem:[#allocation2 + $0x58] sm:$0xff]
    %v1934 = vld [vmem:[#allocation2 + $0x60] sm:$0xff]
    %v1935 = vld [vmem:[#allocation2 + $0x68] sm:$0xff]
    %v1936 = vld [vmem:[#allocation2 + $0x70] sm:$0xff]
    %v1937 = vld [vmem:[#allocation2 + $0x78] sm:$0xff]
    %v1938 = vld [vmem:[#allocation2 + $0x80] sm:$0xff]
    %v1939 = vld [vmem:[#allocation2 + $0x88] sm:$0xff]
    %v1940 = vld [vmem:[#allocation2 + $0x90] sm:$0xff]
    %v1941 = vld [vmem:[#allocation2 + $0x98] sm:$0xff]
    %v1942 = vld [vmem:[#allocation2 + $0xa0] sm:$0xff]
    %v1943 = vld [vmem:[#allocation2 + $0xa8] sm:$0xff]
    %v1944 = vld [vmem:[#allocation2 + $0xb0] sm:$0xff]
    %v1945 = vld [vmem:[#allocation2 + $0xb8] sm:$0xff]
    %v1946 = vld [vmem:[#allocation2 + $0xc0] sm:$0xff]
    %v1947 = vld [vmem:[#allocation2 + $0xc8] sm:$0xff]
    %v1948 = vld [vmem:[#allocation2 + $0xd0] sm:$0xff]
    %v1949 = vld [vmem:[#allocation2 + $0xd8] sm:$0xff]
    %v1950 = vld [vmem:[#allocation2 + $0xe0] sm:$0xff]
    %v1951 = vld [vmem:[#allocation2 + $0xe8] sm:$0xff]
    %v1952 = vld [vmem:[#allocation2 + $0xf0] sm:$0xff]
    %v1953 = vld [vmem:[#allocation2 + $0xf8] sm:$0xff]
    %v1954 = vld [vmem:[#allocation2 + $0x100] sm:$0xff]
    %v1955 = vld [vmem:[#allocation2 + $0x108] sm:$0xff]
    %v1956 = vld [vmem:[#allocation2 + $0x110] sm:$0xff]
    %v1957 = vld [vmem:[#allocation2 + $0x118] sm:$0xff]
    %v1958 = vld [vmem:[#allocation2 + $0x120] sm:$0xff]
    %v1959 = vld [vmem:[#allocation2 + $0x128] sm:$0xff]
    %v1960 = vld [vmem:[#allocation2 + $0x130] sm:$0xff]
    %v1961 = vld [vmem:[#allocation2 + $0x138] sm:$0xff]
    %v1962 = vld [vmem:[#allocation2 + $0x140] sm:$0xff]
    %v1963 = vld [vmem:[#allocation2 + $0x148] sm:$0xff]
    %v1964 = vld [vmem:[#allocation2 + $0x150] sm:$0xff]
    %v1965 = vld [vmem:[#allocation2 + $0x158] sm:$0xff]
    %v1966 = vld [vmem:[#allocation2 + $0x160] sm:$0xff]
    %v1967 = vld [vmem:[#allocation2 + $0x168] sm:$0xff]
    %v1968 = vld [vmem:[#allocation2 + $0x170] sm:$0xff]
    %v1969 = vld [vmem:[#allocation2 + $0x178] sm:$0xff]
    %v1970 = vld [vmem:[#allocation2 + $0x180] sm:$0xff]
    %v1971 = vld [vmem:[#allocation2 + $0x188] sm:$0xff]
    %v1972 = vld [vmem:[#allocation2 + $0x190] sm:$0xff]
    %v1973 = vld [vmem:[#allocation2 + $0x198] sm:$0xff]
    %v1974 = vld [vmem:[#allocation2 + $0x1a0] sm:$0xff]
    %v1975 = vld [vmem:[#allocation2 + $0x1a8] sm:$0xff]
    %v1976 = vld [vmem:[#allocation2 + $0x1b0] sm:$0xff]
    %v1977 = vld [vmem:[#allocation2 + $0x1b8] sm:$0xff]
    %v1978 = vld [vmem:[#allocation2 + $0x1c0] sm:$0xff]
    %v1979 = vld [vmem:[#allocation2 + $0x1c8] sm:$0xff]
    %v1980 = vld [vmem:[#allocation2 + $0x1d0] sm:$0xff]
    %v1981 = vld [vmem:[#allocation2 + $0x1d8] sm:$0xff]
    %v1982 = vld [vmem:[#allocation2 + $0x1e0] sm:$0xff]
    %v1983 = vld [vmem:[#allocation2 + $0x1e8] sm:$0xff]
    %v1984 = vld [vmem:[#allocation2 + $0x1f0] sm:$0xff]
    %v1985 = vld [vmem:[#allocation2 + $0x1f8] sm:$0xff]
    %v1986 = vld [vmem:[#allocation2 + $0x200] sm:$0xff]
    %v1987 = vld [vmem:[#allocation2 + $0x208] sm:$0xff]
    %v1988 = vld [vmem:[#allocation2 + $0x210] sm:$0xff]
    %v1989 = vld [vmem:[#allocation2 + $0x218] sm:$0xff]
    %v1990 = vld [vmem:[#allocation2 + $0x220] sm:$0xff]
    %v1991 = vld [vmem:[#allocation2 + $0x228] sm:$0xff]
    %v1992 = vld [vmem:[#allocation2 + $0x230] sm:$0xff]
    %v1993 = vld [vmem:[#allocation2 + $0x238] sm:$0xff]
    %v1994 = vld [vmem:[#allocation2 + $0x240] sm:$0xff]
    %v1995 = vld [vmem:[#allocation2 + $0x248] sm:$0xff]
    %v1996 = vld [vmem:[#allocation2 + $0x250] sm:$0xff]
    %v1997 = vld [vmem:[#allocation2 + $0x258] sm:$0xff]
    %v1998 = vld [vmem:[#allocation2 + $0x260] sm:$0xff]
    %v1999 = vld [vmem:[#allocation2 + $0x268] sm:$0xff]
    %v2000 = vld [vmem:[#allocation2 + $0x270] sm:$0xff]
    %v2001 = vld [vmem:[#allocation2 + $0x278] sm:$0xff]
    %v2002 = vld [vmem:[#allocation2 + $0x280] sm:$0xff]
    %v2003 = vld [vmem:[#allocation2 + $0x288] sm:$0xff]
    %v2004 = vld [vmem:[#allocation2 + $0x290] sm:$0xff]
    %v2005 = vld [vmem:[#allocation2 + $0x298] sm:$0xff]
    %v2006 = vld [vmem:[#allocation2 + $0x2a0] sm:$0xff]
    %v2007 = vld [vmem:[#allocation2 + $0x2a8] sm:$0xff]
    %v2008 = vld [vmem:[#allocation2 + $0x2b0] sm:$0xff]
    %v2009 = vld [vmem:[#allocation2 + $0x2b8] sm:$0xff]
    %v2010 = vld [vmem:[#allocation2 + $0x2c0] sm:$0xff]
    %v2011 = vld [vmem:[#allocation2 + $0x2c8] sm:$0xff]
    %v2012 = vld [vmem:[#allocation2 + $0x2d0] sm:$0xff]
    %v2013 = vld [vmem:[#allocation2 + $0x2d8] sm:$0xff]
    %v2014 = vld [vmem:[#allocation2 + $0x2e0] sm:$0xff]
    %v2015 = vld [vmem:[#allocation2 + $0x2e8] sm:$0xff]
    %v2016 = vld [vmem:[#allocation2 + $0x2f0] sm:$0xff]
    %v2017 = vld [vmem:[#allocation2 + $0x2f8] sm:$0xff]
    %v2018 = vld [vmem:[#allocation2 + $0x300] sm:$0xff]
    %v2019 = vld [vmem:[#allocation2 + $0x308] sm:$0xff]
    %v2020 = vld [vmem:[#allocation2 + $0x310] sm:$0xff]
    %v2021 = vld [vmem:[#allocation2 + $0x318] sm:$0xff]
    %v2022 = vld [vmem:[#allocation2 + $0x320] sm:$0xff]
    %v2023 = vld [vmem:[#allocation2 + $0x328] sm:$0xff]
    %v2024 = vld [vmem:[#allocation2 + $0x330] sm:$0xff]
    %v2025 = vld [vmem:[#allocation2 + $0x338] sm:$0xff]
    %v2026 = vld [vmem:[#allocation2 + $0x340] sm:$0xff]
    %v2027 = vld [vmem:[#allocation2 + $0x348] sm:$0xff]
    %v2028 = vld [vmem:[#allocation2 + $0x350] sm:$0xff]
    %v2029 = vld [vmem:[#allocation2 + $0x358] sm:$0xff]
    %v2030 = vld [vmem:[#allocation2 + $0x360] sm:$0xff]
    %v2031 = vld [vmem:[#allocation2 + $0x368] sm:$0xff]
    %v2032 = vld [vmem:[#allocation2 + $0x370] sm:$0xff]
    %v2033 = vld [vmem:[#allocation2 + $0x378] sm:$0xff]
    %v2034 = vld [vmem:[#allocation2 + $0x380] sm:$0xff]
    %v2035 = vld [vmem:[#allocation2 + $0x388] sm:$0xff]
    %v2036 = vld [vmem:[#allocation2 + $0x390] sm:$0xff]
    %v2037 = vld [vmem:[#allocation2 + $0x398] sm:$0xff]
    %v2038 = vld [vmem:[#allocation2 + $0x3a0] sm:$0xff]
    %v2039 = vld [vmem:[#allocation2 + $0x3a8] sm:$0xff]
    %v2040 = vld [vmem:[#allocation2 + $0x3b0] sm:$0xff]
    %v2041 = vld [vmem:[#allocation2 + $0x3b8] sm:$0xff]
    %v2042 = vld [vmem:[#allocation2 + $0x3c0] sm:$0xff]
    %v2043 = vld [vmem:[#allocation2 + $0x3c8] sm:$0xff]
    %v2044 = vld [vmem:[#allocation2 + $0x3d0] sm:$0xff]
    %v2045 = vld [vmem:[#allocation2 + $0x3d8] sm:$0xff]
    %v2046 = vld [vmem:[#allocation2 + $0x3e0] sm:$0xff]
    %v2047 = vld [vmem:[#allocation2 + $0x3e8] sm:$0xff]
    %v2048 = vld [vmem:[#allocation2 + $0x3f0] sm:$0xff]
    %v2049 = vld [vmem:[#allocation2 + $0x3f8] sm:$0xff]
    %v2050 = vunpack.c.l.s8.bf16 %v1922
    %v2051 = vunpack.c.l.s8.bf16 %v1923
    %v2052 = vunpack.c.l.s8.bf16 %v1924
    %v2053 = vunpack.c.l.s8.bf16 %v1925
    %v2054 = vunpack.c.l.s8.bf16 %v1926
    %v2055 = vunpack.c.l.s8.bf16 %v1927
    %v2056 = vunpack.c.l.s8.bf16 %v1928
    %v2057 = vunpack.c.l.s8.bf16 %v1929
    %v2058 = vunpack.c.h.s8.bf16 %v1922
    %v2059 = vunpack.c.h.s8.bf16 %v1923
    %v2060 = vunpack.c.h.s8.bf16 %v1924
    %v2061 = vunpack.c.h.s8.bf16 %v1925
    %v2062 = vunpack.c.h.s8.bf16 %v1926
    %v2063 = vunpack.c.h.s8.bf16 %v1927
    %v2064 = vunpack.c.h.s8.bf16 %v1928
    %v2065 = vunpack.c.h.s8.bf16 %v1929
    %v2066 = vunpack.c.l.s8.bf16 %v1930
    %v2067 = vunpack.c.l.s8.bf16 %v1931
    %v2068 = vunpack.c.l.s8.bf16 %v1932
    %v2069 = vunpack.c.l.s8.bf16 %v1933
    %v2070 = vunpack.c.l.s8.bf16 %v1934
    %v2071 = vunpack.c.l.s8.bf16 %v1935
    %v2072 = vunpack.c.l.s8.bf16 %v1936
    %v2073 = vunpack.c.l.s8.bf16 %v1937
    %v2074 = vunpack.c.h.s8.bf16 %v1930
    %v2075 = vunpack.c.h.s8.bf16 %v1931
    %v2076 = vunpack.c.h.s8.bf16 %v1932
    %v2077 = vunpack.c.h.s8.bf16 %v1933
    %v2078 = vunpack.c.h.s8.bf16 %v1934
    %v2079 = vunpack.c.h.s8.bf16 %v1935
    %v2080 = vunpack.c.h.s8.bf16 %v1936
    %v2081 = vunpack.c.h.s8.bf16 %v1937
    %v2082 = vunpack.c.l.s8.bf16 %v1938
    %v2083 = vunpack.c.l.s8.bf16 %v1939
    %v2084 = vunpack.c.l.s8.bf16 %v1940
    %v2085 = vunpack.c.l.s8.bf16 %v1941
    %v2086 = vunpack.c.l.s8.bf16 %v1942
    %v2087 = vunpack.c.l.s8.bf16 %v1943
    %v2088 = vunpack.c.l.s8.bf16 %v1944
    %v2089 = vunpack.c.l.s8.bf16 %v1945
    %v2090 = vunpack.c.h.s8.bf16 %v1938
    %v2091 = vunpack.c.h.s8.bf16 %v1939
    %v2092 = vunpack.c.h.s8.bf16 %v1940
    %v2093 = vunpack.c.h.s8.bf16 %v1941
    %v2094 = vunpack.c.h.s8.bf16 %v1942
    %v2095 = vunpack.c.h.s8.bf16 %v1943
    %v2096 = vunpack.c.h.s8.bf16 %v1944
    %v2097 = vunpack.c.h.s8.bf16 %v1945
    %v2098 = vunpack.c.l.s8.bf16 %v1946
    %v2099 = vunpack.c.l.s8.bf16 %v1947
    %v2100 = vunpack.c.l.s8.bf16 %v1948
    %v2101 = vunpack.c.l.s8.bf16 %v1949
    %v2102 = vunpack.c.l.s8.bf16 %v1950
    %v2103 = vunpack.c.l.s8.bf16 %v1951
    %v2104 = vunpack.c.l.s8.bf16 %v1952
    %v2105 = vunpack.c.l.s8.bf16 %v1953
    %v2106 = vunpack.c.h.s8.bf16 %v1946
    %v2107 = vunpack.c.h.s8.bf16 %v1947
    %v2108 = vunpack.c.h.s8.bf16 %v1948
    %v2109 = vunpack.c.h.s8.bf16 %v1949
    %v2110 = vunpack.c.h.s8.bf16 %v1950
    %v2111 = vunpack.c.h.s8.bf16 %v1951
    %v2112 = vunpack.c.h.s8.bf16 %v1952
    %v2113 = vunpack.c.h.s8.bf16 %v1953
    %v2114 = vunpack.c.l.s8.bf16 %v1954
    %v2115 = vunpack.c.l.s8.bf16 %v1955
    %v2116 = vunpack.c.l.s8.bf16 %v1956
    %v2117 = vunpack.c.l.s8.bf16 %v1957
    %v2118 = vunpack.c.l.s8.bf16 %v1958
    %v2119 = vunpack.c.l.s8.bf16 %v1959
    %v2120 = vunpack.c.l.s8.bf16 %v1960
    %v2121 = vunpack.c.l.s8.bf16 %v1961
    %v2122 = vunpack.c.h.s8.bf16 %v1954
    %v2123 = vunpack.c.h.s8.bf16 %v1955
    %v2124 = vunpack.c.h.s8.bf16 %v1956
    %v2125 = vunpack.c.h.s8.bf16 %v1957
    %v2126 = vunpack.c.h.s8.bf16 %v1958
    %v2127 = vunpack.c.h.s8.bf16 %v1959
    %v2128 = vunpack.c.h.s8.bf16 %v1960
    %v2129 = vunpack.c.h.s8.bf16 %v1961
    %v2130 = vunpack.c.l.s8.bf16 %v1962
    %v2131 = vunpack.c.l.s8.bf16 %v1963
    %v2132 = vunpack.c.l.s8.bf16 %v1964
    %v2133 = vunpack.c.l.s8.bf16 %v1965
    %v2134 = vunpack.c.l.s8.bf16 %v1966
    %v2135 = vunpack.c.l.s8.bf16 %v1967
    %v2136 = vunpack.c.l.s8.bf16 %v1968
    %v2137 = vunpack.c.l.s8.bf16 %v1969
    %v2138 = vunpack.c.h.s8.bf16 %v1962
    %v2139 = vunpack.c.h.s8.bf16 %v1963
    %v2140 = vunpack.c.h.s8.bf16 %v1964
    %v2141 = vunpack.c.h.s8.bf16 %v1965
    %v2142 = vunpack.c.h.s8.bf16 %v1966
    %v2143 = vunpack.c.h.s8.bf16 %v1967
    %v2144 = vunpack.c.h.s8.bf16 %v1968
    %v2145 = vunpack.c.h.s8.bf16 %v1969
    %v2146 = vunpack.c.l.s8.bf16 %v1970
    %v2147 = vunpack.c.l.s8.bf16 %v1971
    %v2148 = vunpack.c.l.s8.bf16 %v1972
    %v2149 = vunpack.c.l.s8.bf16 %v1973
    %v2150 = vunpack.c.l.s8.bf16 %v1974
    %v2151 = vunpack.c.l.s8.bf16 %v1975
    %v2152 = vunpack.c.l.s8.bf16 %v1976
    %v2153 = vunpack.c.l.s8.bf16 %v1977
    %v2154 = vunpack.c.h.s8.bf16 %v1970
    %v2155 = vunpack.c.h.s8.bf16 %v1971
    %v2156 = vunpack.c.h.s8.bf16 %v1972
    %v2157 = vunpack.c.h.s8.bf16 %v1973
    %v2158 = vunpack.c.h.s8.bf16 %v1974
    %v2159 = vunpack.c.h.s8.bf16 %v1975
    %v2160 = vunpack.c.h.s8.bf16 %v1976
    %v2161 = vunpack.c.h.s8.bf16 %v1977
    %v2162 = vunpack.c.l.s8.bf16 %v1978
    %v2163 = vunpack.c.l.s8.bf16 %v1979
    %v2164 = vunpack.c.l.s8.bf16 %v1980
    %v2165 = vunpack.c.l.s8.bf16 %v1981
    %v2166 = vunpack.c.l.s8.bf16 %v1982
    %v2167 = vunpack.c.l.s8.bf16 %v1983
    %v2168 = vunpack.c.l.s8.bf16 %v1984
    %v2169 = vunpack.c.l.s8.bf16 %v1985
    %v2170 = vunpack.c.h.s8.bf16 %v1978
    %v2171 = vunpack.c.h.s8.bf16 %v1979
    %v2172 = vunpack.c.h.s8.bf16 %v1980
    %v2173 = vunpack.c.h.s8.bf16 %v1981
    %v2174 = vunpack.c.h.s8.bf16 %v1982
    %v2175 = vunpack.c.h.s8.bf16 %v1983
    %v2176 = vunpack.c.h.s8.bf16 %v1984
    %v2177 = vunpack.c.h.s8.bf16 %v1985
    %v2178 = vunpack.c.l.s8.bf16 %v1986
    %v2179 = vunpack.c.l.s8.bf16 %v1987
    %v2180 = vunpack.c.l.s8.bf16 %v1988
    %v2181 = vunpack.c.l.s8.bf16 %v1989
    %v2182 = vunpack.c.l.s8.bf16 %v1990
    %v2183 = vunpack.c.l.s8.bf16 %v1991
    %v2184 = vunpack.c.l.s8.bf16 %v1992
    %v2185 = vunpack.c.l.s8.bf16 %v1993
    %v2186 = vunpack.c.h.s8.bf16 %v1986
    %v2187 = vunpack.c.h.s8.bf16 %v1987
    %v2188 = vunpack.c.h.s8.bf16 %v1988
    %v2189 = vunpack.c.h.s8.bf16 %v1989
    %v2190 = vunpack.c.h.s8.bf16 %v1990
    %v2191 = vunpack.c.h.s8.bf16 %v1991
    %v2192 = vunpack.c.h.s8.bf16 %v1992
    %v2193 = vunpack.c.h.s8.bf16 %v1993
    %v2194 = vunpack.c.l.s8.bf16 %v1994
    %v2195 = vunpack.c.l.s8.bf16 %v1995
    %v2196 = vunpack.c.l.s8.bf16 %v1996
    %v2197 = vunpack.c.l.s8.bf16 %v1997
    %v2198 = vunpack.c.l.s8.bf16 %v1998
    %v2199 = vunpack.c.l.s8.bf16 %v1999
    %v2200 = vunpack.c.l.s8.bf16 %v2000
    %v2201 = vunpack.c.l.s8.bf16 %v2001
    %v2202 = vunpack.c.h.s8.bf16 %v1994
    %v2203 = vunpack.c.h.s8.bf16 %v1995
    %v2204 = vunpack.c.h.s8.bf16 %v1996
    %v2205 = vunpack.c.h.s8.bf16 %v1997
    %v2206 = vunpack.c.h.s8.bf16 %v1998
    %v2207 = vunpack.c.h.s8.bf16 %v1999
    %v2208 = vunpack.c.h.s8.bf16 %v2000
    %v2209 = vunpack.c.h.s8.bf16 %v2001
    %v2210 = vunpack.c.l.s8.bf16 %v2002
    %v2211 = vunpack.c.l.s8.bf16 %v2003
    %v2212 = vunpack.c.l.s8.bf16 %v2004
    %v2213 = vunpack.c.l.s8.bf16 %v2005
    %v2214 = vunpack.c.l.s8.bf16 %v2006
    %v2215 = vunpack.c.l.s8.bf16 %v2007
    %v2216 = vunpack.c.l.s8.bf16 %v2008
    %v2217 = vunpack.c.l.s8.bf16 %v2009
    %v2218 = vunpack.c.h.s8.bf16 %v2002
    %v2219 = vunpack.c.h.s8.bf16 %v2003
    %v2220 = vunpack.c.h.s8.bf16 %v2004
    %v2221 = vunpack.c.h.s8.bf16 %v2005
    %v2222 = vunpack.c.h.s8.bf16 %v2006
    %v2223 = vunpack.c.h.s8.bf16 %v2007
    %v2224 = vunpack.c.h.s8.bf16 %v2008
    %v2225 = vunpack.c.h.s8.bf16 %v2009
    %v2226 = vunpack.c.l.s8.bf16 %v2010
    %v2227 = vunpack.c.l.s8.bf16 %v2011
    %v2228 = vunpack.c.l.s8.bf16 %v2012
    %v2229 = vunpack.c.l.s8.bf16 %v2013
    %v2230 = vunpack.c.l.s8.bf16 %v2014
    %v2231 = vunpack.c.l.s8.bf16 %v2015
    %v2232 = vunpack.c.l.s8.bf16 %v2016
    %v2233 = vunpack.c.l.s8.bf16 %v2017
    %v2234 = vunpack.c.h.s8.bf16 %v2010
    %v2235 = vunpack.c.h.s8.bf16 %v2011
    %v2236 = vunpack.c.h.s8.bf16 %v2012
    %v2237 = vunpack.c.h.s8.bf16 %v2013
    %v2238 = vunpack.c.h.s8.bf16 %v2014
    %v2239 = vunpack.c.h.s8.bf16 %v2015
    %v2240 = vunpack.c.h.s8.bf16 %v2016
    %v2241 = vunpack.c.h.s8.bf16 %v2017
    %v2242 = vunpack.c.l.s8.bf16 %v2018
    %v2243 = vunpack.c.l.s8.bf16 %v2019
    %v2244 = vunpack.c.l.s8.bf16 %v2020
    %v2245 = vunpack.c.l.s8.bf16 %v2021
    %v2246 = vunpack.c.l.s8.bf16 %v2022
    %v2247 = vunpack.c.l.s8.bf16 %v2023
    %v2248 = vunpack.c.l.s8.bf16 %v2024
    %v2249 = vunpack.c.l.s8.bf16 %v2025
    %v2250 = vunpack.c.h.s8.bf16 %v2018
    %v2251 = vunpack.c.h.s8.bf16 %v2019
    %v2252 = vunpack.c.h.s8.bf16 %v2020
    %v2253 = vunpack.c.h.s8.bf16 %v2021
    %v2254 = vunpack.c.h.s8.bf16 %v2022
    %v2255 = vunpack.c.h.s8.bf16 %v2023
    %v2256 = vunpack.c.h.s8.bf16 %v2024
    %v2257 = vunpack.c.h.s8.bf16 %v2025
    %v2258 = vunpack.c.l.s8.bf16 %v2026
    %v2259 = vunpack.c.l.s8.bf16 %v2027
    %v2260 = vunpack.c.l.s8.bf16 %v2028
    %v2261 = vunpack.c.l.s8.bf16 %v2029
    %v2262 = vunpack.c.l.s8.bf16 %v2030
    %v2263 = vunpack.c.l.s8.bf16 %v2031
    %v2264 = vunpack.c.l.s8.bf16 %v2032
    %v2265 = vunpack.c.l.s8.bf16 %v2033
    %v2266 = vunpack.c.h.s8.bf16 %v2026
    %v2267 = vunpack.c.h.s8.bf16 %v2027
    %v2268 = vunpack.c.h.s8.bf16 %v2028
    %v2269 = vunpack.c.h.s8.bf16 %v2029
    %v2270 = vunpack.c.h.s8.bf16 %v2030
    %v2271 = vunpack.c.h.s8.bf16 %v2031
    %v2272 = vunpack.c.h.s8.bf16 %v2032
    %v2273 = vunpack.c.h.s8.bf16 %v2033
    %v2274 = vunpack.c.l.s8.bf16 %v2034
    %v2275 = vunpack.c.l.s8.bf16 %v2035
    %v2276 = vunpack.c.l.s8.bf16 %v2036
    %v2277 = vunpack.c.l.s8.bf16 %v2037
    %v2278 = vunpack.c.l.s8.bf16 %v2038
    %v2279 = vunpack.c.l.s8.bf16 %v2039
    %v2280 = vunpack.c.l.s8.bf16 %v2040
    %v2281 = vunpack.c.l.s8.bf16 %v2041
    %v2282 = vunpack.c.h.s8.bf16 %v2034
    %v2283 = vunpack.c.h.s8.bf16 %v2035
    %v2284 = vunpack.c.h.s8.bf16 %v2036
    %v2285 = vunpack.c.h.s8.bf16 %v2037
    %v2286 = vunpack.c.h.s8.bf16 %v2038
    %v2287 = vunpack.c.h.s8.bf16 %v2039
    %v2288 = vunpack.c.h.s8.bf16 %v2040
    %v2289 = vunpack.c.h.s8.bf16 %v2041
    %v2290 = vunpack.c.l.s8.bf16 %v2042
    %v2291 = vunpack.c.l.s8.bf16 %v2043
    %v2292 = vunpack.c.l.s8.bf16 %v2044
    %v2293 = vunpack.c.l.s8.bf16 %v2045
    %v2294 = vunpack.c.l.s8.bf16 %v2046
    %v2295 = vunpack.c.l.s8.bf16 %v2047
    %v2296 = vunpack.c.l.s8.bf16 %v2048
    %v2297 = vunpack.c.l.s8.bf16 %v2049
    %v2298 = vunpack.c.h.s8.bf16 %v2042
    %v2299 = vunpack.c.h.s8.bf16 %v2043
    %v2300 = vunpack.c.h.s8.bf16 %v2044
    %v2301 = vunpack.c.h.s8.bf16 %v2045
    %v2302 = vunpack.c.h.s8.bf16 %v2046
    %v2303 = vunpack.c.h.s8.bf16 %v2047
    %v2304 = vunpack.c.h.s8.bf16 %v2048
    %v2305 = vunpack.c.h.s8.bf16 %v2049
    %v2562 = vunpack.c.l.b16 %v2050
    %v2563 = vunpack.c.l.b16 %v2051
    %v2564 = vunpack.c.l.b16 %v2052
    %v2565 = vunpack.c.l.b16 %v2053
    %v2566 = vunpack.c.l.b16 %v2054
    %v2567 = vunpack.c.l.b16 %v2055
    %v2568 = vunpack.c.l.b16 %v2056
    %v2569 = vunpack.c.l.b16 %v2057
    %v2570 = vunpack.c.h.b16 %v2050
    %v2571 = vunpack.c.h.b16 %v2051
    %v2572 = vunpack.c.h.b16 %v2052
    %v2573 = vunpack.c.h.b16 %v2053
    %v2574 = vunpack.c.h.b16 %v2054
    %v2575 = vunpack.c.h.b16 %v2055
    %v2576 = vunpack.c.h.b16 %v2056
    %v2577 = vunpack.c.h.b16 %v2057
    %v2578 = vunpack.c.l.b16 %v2058
    %v2579 = vunpack.c.l.b16 %v2059
    %v2580 = vunpack.c.l.b16 %v2060
    %v2581 = vunpack.c.l.b16 %v2061
    %v2582 = vunpack.c.l.b16 %v2062
    %v2583 = vunpack.c.l.b16 %v2063
    %v2584 = vunpack.c.l.b16 %v2064
    %v2585 = vunpack.c.l.b16 %v2065
    %v2586 = vunpack.c.h.b16 %v2058
    %v2587 = vunpack.c.h.b16 %v2059
    %v2588 = vunpack.c.h.b16 %v2060
    %v2589 = vunpack.c.h.b16 %v2061
    %v2590 = vunpack.c.h.b16 %v2062
    %v2591 = vunpack.c.h.b16 %v2063
    %v2592 = vunpack.c.h.b16 %v2064
    %v2593 = vunpack.c.h.b16 %v2065
    %v2594 = vunpack.c.l.b16 %v2066
    %v2595 = vunpack.c.l.b16 %v2067
    %v2596 = vunpack.c.l.b16 %v2068
    %v2597 = vunpack.c.l.b16 %v2069
    %v2598 = vunpack.c.l.b16 %v2070
    %v2599 = vunpack.c.l.b16 %v2071
    %v2600 = vunpack.c.l.b16 %v2072
    %v2601 = vunpack.c.l.b16 %v2073
    %v2602 = vunpack.c.h.b16 %v2066
    %v2603 = vunpack.c.h.b16 %v2067
    %v2604 = vunpack.c.h.b16 %v2068
    %v2605 = vunpack.c.h.b16 %v2069
    %v2606 = vunpack.c.h.b16 %v2070
    %v2607 = vunpack.c.h.b16 %v2071
    %v2608 = vunpack.c.h.b16 %v2072
    %v2609 = vunpack.c.h.b16 %v2073
    %v2610 = vunpack.c.l.b16 %v2074
    %v2611 = vunpack.c.l.b16 %v2075
    %v2612 = vunpack.c.l.b16 %v2076
    %v2613 = vunpack.c.l.b16 %v2077
    %v2614 = vunpack.c.l.b16 %v2078
    %v2615 = vunpack.c.l.b16 %v2079
    %v2616 = vunpack.c.l.b16 %v2080
    %v2617 = vunpack.c.l.b16 %v2081
    %v2618 = vunpack.c.h.b16 %v2074
    %v2619 = vunpack.c.h.b16 %v2075
    %v2620 = vunpack.c.h.b16 %v2076
    %v2621 = vunpack.c.h.b16 %v2077
    %v2622 = vunpack.c.h.b16 %v2078
    %v2623 = vunpack.c.h.b16 %v2079
    %v2624 = vunpack.c.h.b16 %v2080
    %v2625 = vunpack.c.h.b16 %v2081
    %v2626 = vunpack.c.l.b16 %v2082
    %v2627 = vunpack.c.l.b16 %v2083
    %v2628 = vunpack.c.l.b16 %v2084
    %v2629 = vunpack.c.l.b16 %v2085
    %v2630 = vunpack.c.l.b16 %v2086
    %v2631 = vunpack.c.l.b16 %v2087
    %v2632 = vunpack.c.l.b16 %v2088
    %v2633 = vunpack.c.l.b16 %v2089
    %v2634 = vunpack.c.h.b16 %v2082
    %v2635 = vunpack.c.h.b16 %v2083
    %v2636 = vunpack.c.h.b16 %v2084
    %v2637 = vunpack.c.h.b16 %v2085
    %v2638 = vunpack.c.h.b16 %v2086
    %v2639 = vunpack.c.h.b16 %v2087
    %v2640 = vunpack.c.h.b16 %v2088
    %v2641 = vunpack.c.h.b16 %v2089
    %v2642 = vunpack.c.l.b16 %v2090
    %v2643 = vunpack.c.l.b16 %v2091
    %v2644 = vunpack.c.l.b16 %v2092
    %v2645 = vunpack.c.l.b16 %v2093
    %v2646 = vunpack.c.l.b16 %v2094
    %v2647 = vunpack.c.l.b16 %v2095
    %v2648 = vunpack.c.l.b16 %v2096
    %v2649 = vunpack.c.l.b16 %v2097
    %v2650 = vunpack.c.h.b16 %v2090
    %v2651 = vunpack.c.h.b16 %v2091
    %v2652 = vunpack.c.h.b16 %v2092
    %v2653 = vunpack.c.h.b16 %v2093
    %v2654 = vunpack.c.h.b16 %v2094
    %v2655 = vunpack.c.h.b16 %v2095
    %v2656 = vunpack.c.h.b16 %v2096
    %v2657 = vunpack.c.h.b16 %v2097
    %v2658 = vunpack.c.l.b16 %v2098
    %v2659 = vunpack.c.l.b16 %v2099
    %v2660 = vunpack.c.l.b16 %v2100
    %v2661 = vunpack.c.l.b16 %v2101
    %v2662 = vunpack.c.l.b16 %v2102
    %v2663 = vunpack.c.l.b16 %v2103
    %v2664 = vunpack.c.l.b16 %v2104
    %v2665 = vunpack.c.l.b16 %v2105
    %v2666 = vunpack.c.h.b16 %v2098
    %v2667 = vunpack.c.h.b16 %v2099
    %v2668 = vunpack.c.h.b16 %v2100
    %v2669 = vunpack.c.h.b16 %v2101
    %v2670 = vunpack.c.h.b16 %v2102
    %v2671 = vunpack.c.h.b16 %v2103
    %v2672 = vunpack.c.h.b16 %v2104
    %v2673 = vunpack.c.h.b16 %v2105
    %v2674 = vunpack.c.l.b16 %v2106
    %v2675 = vunpack.c.l.b16 %v2107
    %v2676 = vunpack.c.l.b16 %v2108
    %v2677 = vunpack.c.l.b16 %v2109
    %v2678 = vunpack.c.l.b16 %v2110
    %v2679 = vunpack.c.l.b16 %v2111
    %v2680 = vunpack.c.l.b16 %v2112
    %v2681 = vunpack.c.l.b16 %v2113
    %v2682 = vunpack.c.h.b16 %v2106
    %v2683 = vunpack.c.h.b16 %v2107
    %v2684 = vunpack.c.h.b16 %v2108
    %v2685 = vunpack.c.h.b16 %v2109
    %v2686 = vunpack.c.h.b16 %v2110
    %v2687 = vunpack.c.h.b16 %v2111
    %v2688 = vunpack.c.h.b16 %v2112
    %v2689 = vunpack.c.h.b16 %v2113
    %v2690 = vunpack.c.l.b16 %v2114
    %v2691 = vunpack.c.l.b16 %v2115
    %v2692 = vunpack.c.l.b16 %v2116
    %v2693 = vunpack.c.l.b16 %v2117
    %v2694 = vunpack.c.l.b16 %v2118
    %v2695 = vunpack.c.l.b16 %v2119
    %v2696 = vunpack.c.l.b16 %v2120
    %v2697 = vunpack.c.l.b16 %v2121
    %v2698 = vunpack.c.h.b16 %v2114
    %v2699 = vunpack.c.h.b16 %v2115
    %v2700 = vunpack.c.h.b16 %v2116
    %v2701 = vunpack.c.h.b16 %v2117
    %v2702 = vunpack.c.h.b16 %v2118
    %v2703 = vunpack.c.h.b16 %v2119
    %v2704 = vunpack.c.h.b16 %v2120
    %v2705 = vunpack.c.h.b16 %v2121
    %v2706 = vunpack.c.l.b16 %v2122
    %v2707 = vunpack.c.l.b16 %v2123
    %v2708 = vunpack.c.l.b16 %v2124
    %v2709 = vunpack.c.l.b16 %v2125
    %v2710 = vunpack.c.l.b16 %v2126
    %v2711 = vunpack.c.l.b16 %v2127
    %v2712 = vunpack.c.l.b16 %v2128
    %v2713 = vunpack.c.l.b16 %v2129
    %v2714 = vunpack.c.h.b16 %v2122
    %v2715 = vunpack.c.h.b16 %v2123
    %v2716 = vunpack.c.h.b16 %v2124
    %v2717 = vunpack.c.h.b16 %v2125
    %v2718 = vunpack.c.h.b16 %v2126
    %v2719 = vunpack.c.h.b16 %v2127
    %v2720 = vunpack.c.h.b16 %v2128
    %v2721 = vunpack.c.h.b16 %v2129
    %v2722 = vunpack.c.l.b16 %v2130
    %v2723 = vunpack.c.l.b16 %v2131
    %v2724 = vunpack.c.l.b16 %v2132
    %v2725 = vunpack.c.l.b16 %v2133
    %v2726 = vunpack.c.l.b16 %v2134
    %v2727 = vunpack.c.l.b16 %v2135
    %v2728 = vunpack.c.l.b16 %v2136
    %v2729 = vunpack.c.l.b16 %v2137
    %v2730 = vunpack.c.h.b16 %v2130
    %v2731 = vunpack.c.h.b16 %v2131
    %v2732 = vunpack.c.h.b16 %v2132
    %v2733 = vunpack.c.h.b16 %v2133
    %v2734 = vunpack.c.h.b16 %v2134
    %v2735 = vunpack.c.h.b16 %v2135
    %v2736 = vunpack.c.h.b16 %v2136
    %v2737 = vunpack.c.h.b16 %v2137
    %v2738 = vunpack.c.l.b16 %v2138
    %v2739 = vunpack.c.l.b16 %v2139
    %v2740 = vunpack.c.l.b16 %v2140
    %v2741 = vunpack.c.l.b16 %v2141
    %v2742 = vunpack.c.l.b16 %v2142
    %v2743 = vunpack.c.l.b16 %v2143
    %v2744 = vunpack.c.l.b16 %v2144
    %v2745 = vunpack.c.l.b16 %v2145
    %v2746 = vunpack.c.h.b16 %v2138
    %v2747 = vunpack.c.h.b16 %v2139
    %v2748 = vunpack.c.h.b16 %v2140
    %v2749 = vunpack.c.h.b16 %v2141
    %v2750 = vunpack.c.h.b16 %v2142
    %v2751 = vunpack.c.h.b16 %v2143
    %v2752 = vunpack.c.h.b16 %v2144
    %v2753 = vunpack.c.h.b16 %v2145
    %v2754 = vunpack.c.l.b16 %v2146
    %v2755 = vunpack.c.l.b16 %v2147
    %v2756 = vunpack.c.l.b16 %v2148
    %v2757 = vunpack.c.l.b16 %v2149
    %v2758 = vunpack.c.l.b16 %v2150
    %v2759 = vunpack.c.l.b16 %v2151
    %v2760 = vunpack.c.l.b16 %v2152
    %v2761 = vunpack.c.l.b16 %v2153
    %v2762 = vunpack.c.h.b16 %v2146
    %v2763 = vunpack.c.h.b16 %v2147
    %v2764 = vunpack.c.h.b16 %v2148
    %v2765 = vunpack.c.h.b16 %v2149
    %v2766 = vunpack.c.h.b16 %v2150
    %v2767 = vunpack.c.h.b16 %v2151
    %v2768 = vunpack.c.h.b16 %v2152
    %v2769 = vunpack.c.h.b16 %v2153
    %v2770 = vunpack.c.l.b16 %v2154
    %v2771 = vunpack.c.l.b16 %v2155
    %v2772 = vunpack.c.l.b16 %v2156
    %v2773 = vunpack.c.l.b16 %v2157
    %v2774 = vunpack.c.l.b16 %v2158
    %v2775 = vunpack.c.l.b16 %v2159
    %v2776 = vunpack.c.l.b16 %v2160
    %v2777 = vunpack.c.l.b16 %v2161
    %v2778 = vunpack.c.h.b16 %v2154
    %v2779 = vunpack.c.h.b16 %v2155
    %v2780 = vunpack.c.h.b16 %v2156
    %v2781 = vunpack.c.h.b16 %v2157
    %v2782 = vunpack.c.h.b16 %v2158
    %v2783 = vunpack.c.h.b16 %v2159
    %v2784 = vunpack.c.h.b16 %v2160
    %v2785 = vunpack.c.h.b16 %v2161
    %v2786 = vunpack.c.l.b16 %v2162
    %v2787 = vunpack.c.l.b16 %v2163
    %v2788 = vunpack.c.l.b16 %v2164
    %v2789 = vunpack.c.l.b16 %v2165
    %v2790 = vunpack.c.l.b16 %v2166
    %v2791 = vunpack.c.l.b16 %v2167
    %v2792 = vunpack.c.l.b16 %v2168
    %v2793 = vunpack.c.l.b16 %v2169
    %v2794 = vunpack.c.h.b16 %v2162
    %v2795 = vunpack.c.h.b16 %v2163
    %v2796 = vunpack.c.h.b16 %v2164
    %v2797 = vunpack.c.h.b16 %v2165
    %v2798 = vunpack.c.h.b16 %v2166
    %v2799 = vunpack.c.h.b16 %v2167
    %v2800 = vunpack.c.h.b16 %v2168
    %v2801 = vunpack.c.h.b16 %v2169
    %v2802 = vunpack.c.l.b16 %v2170
    %v2803 = vunpack.c.l.b16 %v2171
    %v2804 = vunpack.c.l.b16 %v2172
    %v2805 = vunpack.c.l.b16 %v2173
    %v2806 = vunpack.c.l.b16 %v2174
    %v2807 = vunpack.c.l.b16 %v2175
    %v2808 = vunpack.c.l.b16 %v2176
    %v2809 = vunpack.c.l.b16 %v2177
    %v2810 = vunpack.c.h.b16 %v2170
    %v2811 = vunpack.c.h.b16 %v2171
    %v2812 = vunpack.c.h.b16 %v2172
    %v2813 = vunpack.c.h.b16 %v2173
    %v2814 = vunpack.c.h.b16 %v2174
    %v2815 = vunpack.c.h.b16 %v2175
    %v2816 = vunpack.c.h.b16 %v2176
    %v2817 = vunpack.c.h.b16 %v2177
    %v2818 = vunpack.c.l.b16 %v2178
    %v2819 = vunpack.c.l.b16 %v2179
    %v2820 = vunpack.c.l.b16 %v2180
    %v2821 = vunpack.c.l.b16 %v2181
    %v2822 = vunpack.c.l.b16 %v2182
    %v2823 = vunpack.c.l.b16 %v2183
    %v2824 = vunpack.c.l.b16 %v2184
    %v2825 = vunpack.c.l.b16 %v2185
    %v2826 = vunpack.c.h.b16 %v2178
    %v2827 = vunpack.c.h.b16 %v2179
    %v2828 = vunpack.c.h.b16 %v2180
    %v2829 = vunpack.c.h.b16 %v2181
    %v2830 = vunpack.c.h.b16 %v2182
    %v2831 = vunpack.c.h.b16 %v2183
    %v2832 = vunpack.c.h.b16 %v2184
    %v2833 = vunpack.c.h.b16 %v2185
    %v2834 = vunpack.c.l.b16 %v2186
    %v2835 = vunpack.c.l.b16 %v2187
    %v2836 = vunpack.c.l.b16 %v2188
    %v2837 = vunpack.c.l.b16 %v2189
    %v2838 = vunpack.c.l.b16 %v2190
    %v2839 = vunpack.c.l.b16 %v2191
    %v2840 = vunpack.c.l.b16 %v2192
    %v2841 = vunpack.c.l.b16 %v2193
    %v2842 = vunpack.c.h.b16 %v2186
    %v2843 = vunpack.c.h.b16 %v2187
    %v2844 = vunpack.c.h.b16 %v2188
    %v2845 = vunpack.c.h.b16 %v2189
    %v2846 = vunpack.c.h.b16 %v2190
    %v2847 = vunpack.c.h.b16 %v2191
    %v2848 = vunpack.c.h.b16 %v2192
    %v2849 = vunpack.c.h.b16 %v2193
    %v2850 = vunpack.c.l.b16 %v2194
    %v2851 = vunpack.c.l.b16 %v2195
    %v2852 = vunpack.c.l.b16 %v2196
    %v2853 = vunpack.c.l.b16 %v2197
    %v2854 = vunpack.c.l.b16 %v2198
    %v2855 = vunpack.c.l.b16 %v2199
    %v2856 = vunpack.c.l.b16 %v2200
    %v2857 = vunpack.c.l.b16 %v2201
    %v2858 = vunpack.c.h.b16 %v2194
    %v2859 = vunpack.c.h.b16 %v2195
    %v2860 = vunpack.c.h.b16 %v2196
    %v2861 = vunpack.c.h.b16 %v2197
    %v2862 = vunpack.c.h.b16 %v2198
    %v2863 = vunpack.c.h.b16 %v2199
    %v2864 = vunpack.c.h.b16 %v2200
    %v2865 = vunpack.c.h.b16 %v2201
    %v2866 = vunpack.c.l.b16 %v2202
    %v2867 = vunpack.c.l.b16 %v2203
    %v2868 = vunpack.c.l.b16 %v2204
    %v2869 = vunpack.c.l.b16 %v2205
    %v2870 = vunpack.c.l.b16 %v2206
    %v2871 = vunpack.c.l.b16 %v2207
    %v2872 = vunpack.c.l.b16 %v2208
    %v2873 = vunpack.c.l.b16 %v2209
    %v2874 = vunpack.c.h.b16 %v2202
    %v2875 = vunpack.c.h.b16 %v2203
    %v2876 = vunpack.c.h.b16 %v2204
    %v2877 = vunpack.c.h.b16 %v2205
    %v2878 = vunpack.c.h.b16 %v2206
    %v2879 = vunpack.c.h.b16 %v2207
    %v2880 = vunpack.c.h.b16 %v2208
    %v2881 = vunpack.c.h.b16 %v2209
    %v2882 = vunpack.c.l.b16 %v2210
    %v2883 = vunpack.c.l.b16 %v2211
    %v2884 = vunpack.c.l.b16 %v2212
    %v2885 = vunpack.c.l.b16 %v2213
    %v2886 = vunpack.c.l.b16 %v2214
    %v2887 = vunpack.c.l.b16 %v2215
    %v2888 = vunpack.c.l.b16 %v2216
    %v2889 = vunpack.c.l.b16 %v2217
    %v2890 = vunpack.c.h.b16 %v2210
    %v2891 = vunpack.c.h.b16 %v2211
    %v2892 = vunpack.c.h.b16 %v2212
    %v2893 = vunpack.c.h.b16 %v2213
    %v2894 = vunpack.c.h.b16 %v2214
    %v2895 = vunpack.c.h.b16 %v2215
    %v2896 = vunpack.c.h.b16 %v2216
    %v2897 = vunpack.c.h.b16 %v2217
    %v2898 = vunpack.c.l.b16 %v2218
    %v2899 = vunpack.c.l.b16 %v2219
    %v2900 = vunpack.c.l.b16 %v2220
    %v2901 = vunpack.c.l.b16 %v2221
    %v2902 = vunpack.c.l.b16 %v2222
    %v2903 = vunpack.c.l.b16 %v2223
    %v2904 = vunpack.c.l.b16 %v2224
    %v2905 = vunpack.c.l.b16 %v2225
    %v2906 = vunpack.c.h.b16 %v2218
    %v2907 = vunpack.c.h.b16 %v2219
    %v2908 = vunpack.c.h.b16 %v2220
    %v2909 = vunpack.c.h.b16 %v2221
    %v2910 = vunpack.c.h.b16 %v2222
    %v2911 = vunpack.c.h.b16 %v2223
    %v2912 = vunpack.c.h.b16 %v2224
    %v2913 = vunpack.c.h.b16 %v2225
    %v2914 = vunpack.c.l.b16 %v2226
    %v2915 = vunpack.c.l.b16 %v2227
    %v2916 = vunpack.c.l.b16 %v2228
    %v2917 = vunpack.c.l.b16 %v2229
    %v2918 = vunpack.c.l.b16 %v2230
    %v2919 = vunpack.c.l.b16 %v2231
    %v2920 = vunpack.c.l.b16 %v2232
    %v2921 = vunpack.c.l.b16 %v2233
    %v2922 = vunpack.c.h.b16 %v2226
    %v2923 = vunpack.c.h.b16 %v2227
    %v2924 = vunpack.c.h.b16 %v2228
    %v2925 = vunpack.c.h.b16 %v2229
    %v2926 = vunpack.c.h.b16 %v2230
    %v2927 = vunpack.c.h.b16 %v2231
    %v2928 = vunpack.c.h.b16 %v2232
    %v2929 = vunpack.c.h.b16 %v2233
    %v2930 = vunpack.c.l.b16 %v2234
    %v2931 = vunpack.c.l.b16 %v2235
    %v2932 = vunpack.c.l.b16 %v2236
    %v2933 = vunpack.c.l.b16 %v2237
    %v2934 = vunpack.c.l.b16 %v2238
    %v2935 = vunpack.c.l.b16 %v2239
    %v2936 = vunpack.c.l.b16 %v2240
    %v2937 = vunpack.c.l.b16 %v2241
    %v2938 = vunpack.c.h.b16 %v2234
    %v2939 = vunpack.c.h.b16 %v2235
    %v2940 = vunpack.c.h.b16 %v2236
    %v2941 = vunpack.c.h.b16 %v2237
    %v2942 = vunpack.c.h.b16 %v2238
    %v2943 = vunpack.c.h.b16 %v2239
    %v2944 = vunpack.c.h.b16 %v2240
    %v2945 = vunpack.c.h.b16 %v2241
    %v2946 = vunpack.c.l.b16 %v2242
    %v2947 = vunpack.c.l.b16 %v2243
    %v2948 = vunpack.c.l.b16 %v2244
    %v2949 = vunpack.c.l.b16 %v2245
    %v2950 = vunpack.c.l.b16 %v2246
    %v2951 = vunpack.c.l.b16 %v2247
    %v2952 = vunpack.c.l.b16 %v2248
    %v2953 = vunpack.c.l.b16 %v2249
    %v2954 = vunpack.c.h.b16 %v2242
    %v2955 = vunpack.c.h.b16 %v2243
    %v2956 = vunpack.c.h.b16 %v2244
    %v2957 = vunpack.c.h.b16 %v2245
    %v2958 = vunpack.c.h.b16 %v2246
    %v2959 = vunpack.c.h.b16 %v2247
    %v2960 = vunpack.c.h.b16 %v2248
    %v2961 = vunpack.c.h.b16 %v2249
    %v2962 = vunpack.c.l.b16 %v2250
    %v2963 = vunpack.c.l.b16 %v2251
    %v2964 = vunpack.c.l.b16 %v2252
    %v2965 = vunpack.c.l.b16 %v2253
    %v2966 = vunpack.c.l.b16 %v2254
    %v2967 = vunpack.c.l.b16 %v2255
    %v2968 = vunpack.c.l.b16 %v2256
    %v2969 = vunpack.c.l.b16 %v2257
    %v2970 = vunpack.c.h.b16 %v2250
    %v2971 = vunpack.c.h.b16 %v2251
    %v2972 = vunpack.c.h.b16 %v2252
    %v2973 = vunpack.c.h.b16 %v2253
    %v2974 = vunpack.c.h.b16 %v2254
    %v2975 = vunpack.c.h.b16 %v2255
    %v2976 = vunpack.c.h.b16 %v2256
    %v2977 = vunpack.c.h.b16 %v2257
    %v2978 = vunpack.c.l.b16 %v2258
    %v2979 = vunpack.c.l.b16 %v2259
    %v2980 = vunpack.c.l.b16 %v2260
    %v2981 = vunpack.c.l.b16 %v2261
    %v2982 = vunpack.c.l.b16 %v2262
    %v2983 = vunpack.c.l.b16 %v2263
    %v2984 = vunpack.c.l.b16 %v2264
    %v2985 = vunpack.c.l.b16 %v2265
    %v2986 = vunpack.c.h.b16 %v2258
    %v2987 = vunpack.c.h.b16 %v2259
    %v2988 = vunpack.c.h.b16 %v2260
    %v2989 = vunpack.c.h.b16 %v2261
    %v2990 = vunpack.c.h.b16 %v2262
    %v2991 = vunpack.c.h.b16 %v2263
    %v2992 = vunpack.c.h.b16 %v2264
    %v2993 = vunpack.c.h.b16 %v2265
    %v2994 = vunpack.c.l.b16 %v2266
    %v2995 = vunpack.c.l.b16 %v2267
    %v2996 = vunpack.c.l.b16 %v2268
    %v2997 = vunpack.c.l.b16 %v2269
    %v2998 = vunpack.c.l.b16 %v2270
    %v2999 = vunpack.c.l.b16 %v2271
    %v3000 = vunpack.c.l.b16 %v2272
    %v3001 = vunpack.c.l.b16 %v2273
    %v3002 = vunpack.c.h.b16 %v2266
    %v3003 = vunpack.c.h.b16 %v2267
    %v3004 = vunpack.c.h.b16 %v2268
    %v3005 = vunpack.c.h.b16 %v2269
    %v3006 = vunpack.c.h.b16 %v2270
    %v3007 = vunpack.c.h.b16 %v2271
    %v3008 = vunpack.c.h.b16 %v2272
    %v3009 = vunpack.c.h.b16 %v2273
    %v3010 = vunpack.c.l.b16 %v2274
    %v3011 = vunpack.c.l.b16 %v2275
    %v3012 = vunpack.c.l.b16 %v2276
    %v3013 = vunpack.c.l.b16 %v2277
    %v3014 = vunpack.c.l.b16 %v2278
    %v3015 = vunpack.c.l.b16 %v2279
    %v3016 = vunpack.c.l.b16 %v2280
    %v3017 = vunpack.c.l.b16 %v2281
    %v3018 = vunpack.c.h.b16 %v2274
    %v3019 = vunpack.c.h.b16 %v2275
    %v3020 = vunpack.c.h.b16 %v2276
    %v3021 = vunpack.c.h.b16 %v2277
    %v3022 = vunpack.c.h.b16 %v2278
    %v3023 = vunpack.c.h.b16 %v2279
    %v3024 = vunpack.c.h.b16 %v2280
    %v3025 = vunpack.c.h.b16 %v2281
    %v3026 = vunpack.c.l.b16 %v2282
    %v3027 = vunpack.c.l.b16 %v2283
    %v3028 = vunpack.c.l.b16 %v2284
    %v3029 = vunpack.c.l.b16 %v2285
    %v3030 = vunpack.c.l.b16 %v2286
    %v3031 = vunpack.c.l.b16 %v2287
    %v3032 = vunpack.c.l.b16 %v2288
    %v3033 = vunpack.c.l.b16 %v2289
    %v3034 = vunpack.c.h.b16 %v2282
    %v3035 = vunpack.c.h.b16 %v2283
    %v3036 = vunpack.c.h.b16 %v2284
    %v3037 = vunpack.c.h.b16 %v2285
    %v3038 = vunpack.c.h.b16 %v2286
    %v3039 = vunpack.c.h.b16 %v2287
    %v3040 = vunpack.c.h.b16 %v2288
    %v3041 = vunpack.c.h.b16 %v2289
    %v3042 = vunpack.c.l.b16 %v2290
    %v3043 = vunpack.c.l.b16 %v2291
    %v3044 = vunpack.c.l.b16 %v2292
    %v3045 = vunpack.c.l.b16 %v2293
    %v3046 = vunpack.c.l.b16 %v2294
    %v3047 = vunpack.c.l.b16 %v2295
    %v3048 = vunpack.c.l.b16 %v2296
    %v3049 = vunpack.c.l.b16 %v2297
    %v3050 = vunpack.c.h.b16 %v2290
    %v3051 = vunpack.c.h.b16 %v2291
    %v3052 = vunpack.c.h.b16 %v2292
    %v3053 = vunpack.c.h.b16 %v2293
    %v3054 = vunpack.c.h.b16 %v2294
    %v3055 = vunpack.c.h.b16 %v2295
    %v3056 = vunpack.c.h.b16 %v2296
    %v3057 = vunpack.c.h.b16 %v2297
    %v3058 = vunpack.c.l.b16 %v2298
    %v3059 = vunpack.c.l.b16 %v2299
    %v3060 = vunpack.c.l.b16 %v2300
    %v3061 = vunpack.c.l.b16 %v2301
    %v3062 = vunpack.c.l.b16 %v2302
    %v3063 = vunpack.c.l.b16 %v2303
    %v3064 = vunpack.c.l.b16 %v2304
    %v3065 = vunpack.c.l.b16 %v2305
    %v3066 = vunpack.c.h.b16 %v2298
    %v3067 = vunpack.c.h.b16 %v2299
    %v3068 = vunpack.c.h.b16 %v2300
    %v3069 = vunpack.c.h.b16 %v2301
    %v3070 = vunpack.c.h.b16 %v2302
    %v3071 = vunpack.c.h.b16 %v2303
    %v3072 = vunpack.c.h.b16 %v2304
    %v3073 = vunpack.c.h.b16 %v2305
    %v3074 = vpack.c.b16 %v2563, %v2562
    %v3075 = vpack.c.b16 %v2565, %v2564
    %v3076 = vpack.c.b16 %v2567, %v2566
    %v3077 = vpack.c.b16 %v2569, %v2568
    %v3078 = vpack.c.b16 %v2571, %v2570
    %v3079 = vpack.c.b16 %v2573, %v2572
    %v3080 = vpack.c.b16 %v2575, %v2574
    %v3081 = vpack.c.b16 %v2577, %v2576
    %v3082 = vpack.c.b16 %v2579, %v2578
    %v3083 = vpack.c.b16 %v2581, %v2580
    %v3084 = vpack.c.b16 %v2583, %v2582
    %v3085 = vpack.c.b16 %v2585, %v2584
    %v3086 = vpack.c.b16 %v2587, %v2586
    %v3087 = vpack.c.b16 %v2589, %v2588
    %v3088 = vpack.c.b16 %v2591, %v2590
    %v3089 = vpack.c.b16 %v2593, %v2592
    %v3090 = vpack.c.b16 %v2595, %v2594
    %v3091 = vpack.c.b16 %v2597, %v2596
    %v3092 = vpack.c.b16 %v2599, %v2598
    %v3093 = vpack.c.b16 %v2601, %v2600
    %v3094 = vpack.c.b16 %v2603, %v2602
    %v3095 = vpack.c.b16 %v2605, %v2604
    %v3096 = vpack.c.b16 %v2607, %v2606
    %v3097 = vpack.c.b16 %v2609, %v2608
    %v3098 = vpack.c.b16 %v2611, %v2610
    %v3099 = vpack.c.b16 %v2613, %v2612
    %v3100 = vpack.c.b16 %v2615, %v2614
    %v3101 = vpack.c.b16 %v2617, %v2616
    %v3102 = vpack.c.b16 %v2619, %v2618
    %v3103 = vpack.c.b16 %v2621, %v2620
    %v3104 = vpack.c.b16 %v2623, %v2622
    %v3105 = vpack.c.b16 %v2625, %v2624
    %v3106 = vpack.c.b16 %v2627, %v2626
    %v3107 = vpack.c.b16 %v2629, %v2628
    %v3108 = vpack.c.b16 %v2631, %v2630
    %v3109 = vpack.c.b16 %v2633, %v2632
    %v3110 = vpack.c.b16 %v2635, %v2634
    %v3111 = vpack.c.b16 %v2637, %v2636
    %v3112 = vpack.c.b16 %v2639, %v2638
    %v3113 = vpack.c.b16 %v2641, %v2640
    %v3114 = vpack.c.b16 %v2643, %v2642
    %v3115 = vpack.c.b16 %v2645, %v2644
    %v3116 = vpack.c.b16 %v2647, %v2646
    %v3117 = vpack.c.b16 %v2649, %v2648
    %v3118 = vpack.c.b16 %v2651, %v2650
    %v3119 = vpack.c.b16 %v2653, %v2652
    %v3120 = vpack.c.b16 %v2655, %v2654
    %v3121 = vpack.c.b16 %v2657, %v2656
    %v3122 = vpack.c.b16 %v2659, %v2658
    %v3123 = vpack.c.b16 %v2661, %v2660
    %v3124 = vpack.c.b16 %v2663, %v2662
    %v3125 = vpack.c.b16 %v2665, %v2664
    %v3126 = vpack.c.b16 %v2667, %v2666
    %v3127 = vpack.c.b16 %v2669, %v2668
    %v3128 = vpack.c.b16 %v2671, %v2670
    %v3129 = vpack.c.b16 %v2673, %v2672
    %v3130 = vpack.c.b16 %v2675, %v2674
    %v3131 = vpack.c.b16 %v2677, %v2676
    %v3132 = vpack.c.b16 %v2679, %v2678
    %v3133 = vpack.c.b16 %v2681, %v2680
    %v3134 = vpack.c.b16 %v2683, %v2682
    %v3135 = vpack.c.b16 %v2685, %v2684
    %v3136 = vpack.c.b16 %v2687, %v2686
    %v3137 = vpack.c.b16 %v2689, %v2688
    %v3138 = vpack.c.b16 %v2691, %v2690
    %v3139 = vpack.c.b16 %v2693, %v2692
    %v3140 = vpack.c.b16 %v2695, %v2694
    %v3141 = vpack.c.b16 %v2697, %v2696
    %v3142 = vpack.c.b16 %v2699, %v2698
    %v3143 = vpack.c.b16 %v2701, %v2700
    %v3144 = vpack.c.b16 %v2703, %v2702
    %v3145 = vpack.c.b16 %v2705, %v2704
    %v3146 = vpack.c.b16 %v2707, %v2706
    %v3147 = vpack.c.b16 %v2709, %v2708
    %v3148 = vpack.c.b16 %v2711, %v2710
    %v3149 = vpack.c.b16 %v2713, %v2712
    %v3150 = vpack.c.b16 %v2715, %v2714
    %v3151 = vpack.c.b16 %v2717, %v2716
    %v3152 = vpack.c.b16 %v2719, %v2718
    %v3153 = vpack.c.b16 %v2721, %v2720
    %v3154 = vpack.c.b16 %v2723, %v2722
    %v3155 = vpack.c.b16 %v2725, %v2724
    %v3156 = vpack.c.b16 %v2727, %v2726
    %v3157 = vpack.c.b16 %v2729, %v2728
    %v3158 = vpack.c.b16 %v2731, %v2730
    %v3159 = vpack.c.b16 %v2733, %v2732
    %v3160 = vpack.c.b16 %v2735, %v2734
    %v3161 = vpack.c.b16 %v2737, %v2736
    %v3162 = vpack.c.b16 %v2739, %v2738
    %v3163 = vpack.c.b16 %v2741, %v2740
    %v3164 = vpack.c.b16 %v2743, %v2742
    %v3165 = vpack.c.b16 %v2745, %v2744
    %v3166 = vpack.c.b16 %v2747, %v2746
    %v3167 = vpack.c.b16 %v2749, %v2748
    %v3168 = vpack.c.b16 %v2751, %v2750
    %v3169 = vpack.c.b16 %v2753, %v2752
    %v3170 = vpack.c.b16 %v2755, %v2754
    %v3171 = vpack.c.b16 %v2757, %v2756
    %v3172 = vpack.c.b16 %v2759, %v2758
    %v3173 = vpack.c.b16 %v2761, %v2760
    %v3174 = vpack.c.b16 %v2763, %v2762
    %v3175 = vpack.c.b16 %v2765, %v2764
    %v3176 = vpack.c.b16 %v2767, %v2766
    %v3177 = vpack.c.b16 %v2769, %v2768
    %v3178 = vpack.c.b16 %v2771, %v2770
    %v3179 = vpack.c.b16 %v2773, %v2772
    %v3180 = vpack.c.b16 %v2775, %v2774
    %v3181 = vpack.c.b16 %v2777, %v2776
    %v3182 = vpack.c.b16 %v2779, %v2778
    %v3183 = vpack.c.b16 %v2781, %v2780
    %v3184 = vpack.c.b16 %v2783, %v2782
    %v3185 = vpack.c.b16 %v2785, %v2784
    %v3186 = vpack.c.b16 %v2787, %v2786
    %v3187 = vpack.c.b16 %v2789, %v2788
    %v3188 = vpack.c.b16 %v2791, %v2790
    %v3189 = vpack.c.b16 %v2793, %v2792
    %v3190 = vpack.c.b16 %v2795, %v2794
    %v3191 = vpack.c.b16 %v2797, %v2796
    %v3192 = vpack.c.b16 %v2799, %v2798
    %v3193 = vpack.c.b16 %v2801, %v2800
    %v3194 = vpack.c.b16 %v2803, %v2802
    %v3195 = vpack.c.b16 %v2805, %v2804
    %v3196 = vpack.c.b16 %v2807, %v2806
    %v3197 = vpack.c.b16 %v2809, %v2808
    %v3198 = vpack.c.b16 %v2811, %v2810
    %v3199 = vpack.c.b16 %v2813, %v2812
    %v3200 = vpack.c.b16 %v2815, %v2814
    %v3201 = vpack.c.b16 %v2817, %v2816
    %v3202 = vpack.c.b16 %v2819, %v2818
    %v3203 = vpack.c.b16 %v2821, %v2820
    %v3204 = vpack.c.b16 %v2823, %v2822
    %v3205 = vpack.c.b16 %v2825, %v2824
    %v3206 = vpack.c.b16 %v2827, %v2826
    %v3207 = vpack.c.b16 %v2829, %v2828
    %v3208 = vpack.c.b16 %v2831, %v2830
    %v3209 = vpack.c.b16 %v2833, %v2832
    %v3210 = vpack.c.b16 %v2835, %v2834
    %v3211 = vpack.c.b16 %v2837, %v2836
    %v3212 = vpack.c.b16 %v2839, %v2838
    %v3213 = vpack.c.b16 %v2841, %v2840
    %v3214 = vpack.c.b16 %v2843, %v2842
    %v3215 = vpack.c.b16 %v2845, %v2844
    %v3216 = vpack.c.b16 %v2847, %v2846
    %v3217 = vpack.c.b16 %v2849, %v2848
    %v3218 = vpack.c.b16 %v2851, %v2850
    %v3219 = vpack.c.b16 %v2853, %v2852
    %v3220 = vpack.c.b16 %v2855, %v2854
    %v3221 = vpack.c.b16 %v2857, %v2856
    %v3222 = vpack.c.b16 %v2859, %v2858
    %v3223 = vpack.c.b16 %v2861, %v2860
    %v3224 = vpack.c.b16 %v2863, %v2862
    %v3225 = vpack.c.b16 %v2865, %v2864
    %v3226 = vpack.c.b16 %v2867, %v2866
    %v3227 = vpack.c.b16 %v2869, %v2868
    %v3228 = vpack.c.b16 %v2871, %v2870
    %v3229 = vpack.c.b16 %v2873, %v2872
    %v3230 = vpack.c.b16 %v2875, %v2874
    %v3231 = vpack.c.b16 %v2877, %v2876
    %v3232 = vpack.c.b16 %v2879, %v2878
    %v3233 = vpack.c.b16 %v2881, %v2880
    %v3234 = vpack.c.b16 %v2883, %v2882
    %v3235 = vpack.c.b16 %v2885, %v2884
    %v3236 = vpack.c.b16 %v2887, %v2886
    %v3237 = vpack.c.b16 %v2889, %v2888
    %v3238 = vpack.c.b16 %v2891, %v2890
    %v3239 = vpack.c.b16 %v2893, %v2892
    %v3240 = vpack.c.b16 %v2895, %v2894
    %v3241 = vpack.c.b16 %v2897, %v2896
    %v3242 = vpack.c.b16 %v2899, %v2898
    %v3243 = vpack.c.b16 %v2901, %v2900
    %v3244 = vpack.c.b16 %v2903, %v2902
    %v3245 = vpack.c.b16 %v2905, %v2904
    %v3246 = vpack.c.b16 %v2907, %v2906
    %v3247 = vpack.c.b16 %v2909, %v2908
    %v3248 = vpack.c.b16 %v2911, %v2910
    %v3249 = vpack.c.b16 %v2913, %v2912
    %v3250 = vpack.c.b16 %v2915, %v2914
    %v3251 = vpack.c.b16 %v2917, %v2916
    %v3252 = vpack.c.b16 %v2919, %v2918
    %v3253 = vpack.c.b16 %v2921, %v2920
    %v3254 = vpack.c.b16 %v2923, %v2922
    %v3255 = vpack.c.b16 %v2925, %v2924
    %v3256 = vpack.c.b16 %v2927, %v2926
    %v3257 = vpack.c.b16 %v2929, %v2928
    %v3258 = vpack.c.b16 %v2931, %v2930
    %v3259 = vpack.c.b16 %v2933, %v2932
    %v3260 = vpack.c.b16 %v2935, %v2934
    %v3261 = vpack.c.b16 %v2937, %v2936
    %v3262 = vpack.c.b16 %v2939, %v2938
    %v3263 = vpack.c.b16 %v2941, %v2940
    %v3264 = vpack.c.b16 %v2943, %v2942
    %v3265 = vpack.c.b16 %v2945, %v2944
    %v3266 = vpack.c.b16 %v2947, %v2946
    %v3267 = vpack.c.b16 %v2949, %v2948
    %v3268 = vpack.c.b16 %v2951, %v2950
    %v3269 = vpack.c.b16 %v2953, %v2952
    %v3270 = vpack.c.b16 %v2955, %v2954
    %v3271 = vpack.c.b16 %v2957, %v2956
    %v3272 = vpack.c.b16 %v2959, %v2958
    %v3273 = vpack.c.b16 %v2961, %v2960
    %v3274 = vpack.c.b16 %v2963, %v2962
    %v3275 = vpack.c.b16 %v2965, %v2964
    %v3276 = vpack.c.b16 %v2967, %v2966
    %v3277 = vpack.c.b16 %v2969, %v2968
    %v3278 = vpack.c.b16 %v2971, %v2970
    %v3279 = vpack.c.b16 %v2973, %v2972
    %v3280 = vpack.c.b16 %v2975, %v2974
    %v3281 = vpack.c.b16 %v2977, %v2976
    %v3282 = vpack.c.b16 %v2979, %v2978
    %v3283 = vpack.c.b16 %v2981, %v2980
    %v3284 = vpack.c.b16 %v2983, %v2982
    %v3285 = vpack.c.b16 %v2985, %v2984
    %v3286 = vpack.c.b16 %v2987, %v2986
    %v3287 = vpack.c.b16 %v2989, %v2988
    %v3288 = vpack.c.b16 %v2991, %v2990
    %v3289 = vpack.c.b16 %v2993, %v2992
    %v3290 = vpack.c.b16 %v2995, %v2994
    %v3291 = vpack.c.b16 %v2997, %v2996
    %v3292 = vpack.c.b16 %v2999, %v2998
    %v3293 = vpack.c.b16 %v3001, %v3000
    %v3294 = vpack.c.b16 %v3003, %v3002
    %v3295 = vpack.c.b16 %v3005, %v3004
    %v3296 = vpack.c.b16 %v3007, %v3006
    %v3297 = vpack.c.b16 %v3009, %v3008
    %v3298 = vpack.c.b16 %v3011, %v3010
    %v3299 = vpack.c.b16 %v3013, %v3012
    %v3300 = vpack.c.b16 %v3015, %v3014
    %v3301 = vpack.c.b16 %v3017, %v3016
    %v3302 = vpack.c.b16 %v3019, %v3018
    %v3303 = vpack.c.b16 %v3021, %v3020
    %v3304 = vpack.c.b16 %v3023, %v3022
    %v3305 = vpack.c.b16 %v3025, %v3024
    %v3306 = vpack.c.b16 %v3027, %v3026
    %v3307 = vpack.c.b16 %v3029, %v3028
    %v3308 = vpack.c.b16 %v3031, %v3030
    %v3309 = vpack.c.b16 %v3033, %v3032
    %v3310 = vpack.c.b16 %v3035, %v3034
    %v3311 = vpack.c.b16 %v3037, %v3036
    %v3312 = vpack.c.b16 %v3039, %v3038
    %v3313 = vpack.c.b16 %v3041, %v3040
    %v3314 = vpack.c.b16 %v3043, %v3042
    %v3315 = vpack.c.b16 %v3045, %v3044
    %v3316 = vpack.c.b16 %v3047, %v3046
    %v3317 = vpack.c.b16 %v3049, %v3048
    %v3318 = vpack.c.b16 %v3051, %v3050
    %v3319 = vpack.c.b16 %v3053, %v3052
    %v3320 = vpack.c.b16 %v3055, %v3054
    %v3321 = vpack.c.b16 %v3057, %v3056
    %v3322 = vpack.c.b16 %v3059, %v3058
    %v3323 = vpack.c.b16 %v3061, %v3060
    %v3324 = vpack.c.b16 %v3063, %v3062
    %v3325 = vpack.c.b16 %v3065, %v3064
    %v3326 = vpack.c.b16 %v3067, %v3066
    %v3327 = vpack.c.b16 %v3069, %v3068
    %v3328 = vpack.c.b16 %v3071, %v3070
    %v3329 = vpack.c.b16 %v3073, %v3072
    %3586 = vst [vmem:[#allocation4] sm:$0xff] %v3074
    %3587 = vst [vmem:[#allocation4 + $0x8] sm:$0xff] %v3075
    %3588 = vst [vmem:[#allocation4 + $0x10] sm:$0xff] %v3076
    %3589 = vst [vmem:[#allocation4 + $0x18] sm:$0xff] %v3077
    %3590 = vst [vmem:[#allocation4 + $0x20] sm:$0xff] %v3078
    %3591 = vst [vmem:[#allocation4 + $0x28] sm:$0xff] %v3079
    %3592 = vst [vmem:[#allocation4 + $0x30] sm:$0xff] %v3080
    %3593 = vst [vmem:[#allocation4 + $0x38] sm:$0xff] %v3081
    %3594 = vst [vmem:[#allocation4 + $0x40] sm:$0xff] %v3082
    %3595 = vst [vmem:[#allocation4 + $0x48] sm:$0xff] %v3083
    %3596 = vst [vmem:[#allocation4 + $0x50] sm:$0xff] %v3084
    %3597 = vst [vmem:[#allocation4 + $0x58] sm:$0xff] %v3085
    %3598 = vst [vmem:[#allocation4 + $0x60] sm:$0xff] %v3086
    %3599 = vst [vmem:[#allocation4 + $0x68] sm:$0xff] %v3087
    %3600 = vst [vmem:[#allocation4 + $0x70] sm:$0xff] %v3088
    %3601 = vst [vmem:[#allocation4 + $0x78] sm:$0xff] %v3089
    %3602 = vst [vmem:[#allocation4 + $0x80] sm:$0xff] %v3090
    %3603 = vst [vmem:[#allocation4 + $0x88] sm:$0xff] %v3091
    %3604 = vst [vmem:[#allocation4 + $0x90] sm:$0xff] %v3092
    %3605 = vst [vmem:[#allocation4 + $0x98] sm:$0xff] %v3093
    %3606 = vst [vmem:[#allocation4 + $0xa0] sm:$0xff] %v3094
    %3607 = vst [vmem:[#allocation4 + $0xa8] sm:$0xff] %v3095
    %3608 = vst [vmem:[#allocation4 + $0xb0] sm:$0xff] %v3096
    %3609 = vst [vmem:[#allocation4 + $0xb8] sm:$0xff] %v3097
    %3610 = vst [vmem:[#allocation4 + $0xc0] sm:$0xff] %v3098
    %3611 = vst [vmem:[#allocation4 + $0xc8] sm:$0xff] %v3099
    %3612 = vst [vmem:[#allocation4 + $0xd0] sm:$0xff] %v3100
    %3613 = vst [vmem:[#allocation4 + $0xd8] sm:$0xff] %v3101
    %3614 = vst [vmem:[#allocation4 + $0xe0] sm:$0xff] %v3102
    %3615 = vst [vmem:[#allocation4 + $0xe8] sm:$0xff] %v3103
    %3616 = vst [vmem:[#allocation4 + $0xf0] sm:$0xff] %v3104
    %3617 = vst [vmem:[#allocation4 + $0xf8] sm:$0xff] %v3105
    %3618 = vst [vmem:[#allocation4 + $0x100] sm:$0xff] %v3106
    %3619 = vst [vmem:[#allocation4 + $0x108] sm:$0xff] %v3107
    %3620 = vst [vmem:[#allocation4 + $0x110] sm:$0xff] %v3108
    %3621 = vst [vmem:[#allocation4 + $0x118] sm:$0xff] %v3109
    %3622 = vst [vmem:[#allocation4 + $0x120] sm:$0xff] %v3110
    %3623 = vst [vmem:[#allocation4 + $0x128] sm:$0xff] %v3111
    %3624 = vst [vmem:[#allocation4 + $0x130] sm:$0xff] %v3112
    %3625 = vst [vmem:[#allocation4 + $0x138] sm:$0xff] %v3113
    %3626 = vst [vmem:[#allocation4 + $0x140] sm:$0xff] %v3114
    %3627 = vst [vmem:[#allocation4 + $0x148] sm:$0xff] %v3115
    %3628 = vst [vmem:[#allocation4 + $0x150] sm:$0xff] %v3116
    %3629 = vst [vmem:[#allocation4 + $0x158] sm:$0xff] %v3117
    %3630 = vst [vmem:[#allocation4 + $0x160] sm:$0xff] %v3118
    %3631 = vst [vmem:[#allocation4 + $0x168] sm:$0xff] %v3119
    %3632 = vst [vmem:[#allocation4 + $0x170] sm:$0xff] %v3120
    %3633 = vst [vmem:[#allocation4 + $0x178] sm:$0xff] %v3121
    %3634 = vst [vmem:[#allocation4 + $0x180] sm:$0xff] %v3122
    %3635 = vst [vmem:[#allocation4 + $0x188] sm:$0xff] %v3123
    %3636 = vst [vmem:[#allocation4 + $0x190] sm:$0xff] %v3124
    %3637 = vst [vmem:[#allocation4 + $0x198] sm:$0xff] %v3125
    %3638 = vst [vmem:[#allocation4 + $0x1a0] sm:$0xff] %v3126
    %3639 = vst [vmem:[#allocation4 + $0x1a8] sm:$0xff] %v3127
    %3640 = vst [vmem:[#allocation4 + $0x1b0] sm:$0xff] %v3128
    %3641 = vst [vmem:[#allocation4 + $0x1b8] sm:$0xff] %v3129
    %3642 = vst [vmem:[#allocation4 + $0x1c0] sm:$0xff] %v3130
    %3643 = vst [vmem:[#allocation4 + $0x1c8] sm:$0xff] %v3131
    %3644 = vst [vmem:[#allocation4 + $0x1d0] sm:$0xff] %v3132
    %3645 = vst [vmem:[#allocation4 + $0x1d8] sm:$0xff] %v3133
    %3646 = vst [vmem:[#allocation4 + $0x1e0] sm:$0xff] %v3134
    %3647 = vst [vmem:[#allocation4 + $0x1e8] sm:$0xff] %v3135
    %3648 = vst [vmem:[#allocation4 + $0x1f0] sm:$0xff] %v3136
    %3649 = vst [vmem:[#allocation4 + $0x1f8] sm:$0xff] %v3137
    %3650 = vst [vmem:[#allocation4 + $0x200] sm:$0xff] %v3138
    %3651 = vst [vmem:[#allocation4 + $0x208] sm:$0xff] %v3139
    %3652 = vst [vmem:[#allocation4 + $0x210] sm:$0xff] %v3140
    %3653 = vst [vmem:[#allocation4 + $0x218] sm:$0xff] %v3141
    %3654 = vst [vmem:[#allocation4 + $0x220] sm:$0xff] %v3142
    %3655 = vst [vmem:[#allocation4 + $0x228] sm:$0xff] %v3143
    %3656 = vst [vmem:[#allocation4 + $0x230] sm:$0xff] %v3144
    %3657 = vst [vmem:[#allocation4 + $0x238] sm:$0xff] %v3145
    %3658 = vst [vmem:[#allocation4 + $0x240] sm:$0xff] %v3146
    %3659 = vst [vmem:[#allocation4 + $0x248] sm:$0xff] %v3147
    %3660 = vst [vmem:[#allocation4 + $0x250] sm:$0xff] %v3148
    %3661 = vst [vmem:[#allocation4 + $0x258] sm:$0xff] %v3149
    %3662 = vst [vmem:[#allocation4 + $0x260] sm:$0xff] %v3150
    %3663 = vst [vmem:[#allocation4 + $0x268] sm:$0xff] %v3151
    %3664 = vst [vmem:[#allocation4 + $0x270] sm:$0xff] %v3152
    %3665 = vst [vmem:[#allocation4 + $0x278] sm:$0xff] %v3153
    %3666 = vst [vmem:[#allocation4 + $0x280] sm:$0xff] %v3154
    %3667 = vst [vmem:[#allocation4 + $0x288] sm:$0xff] %v3155
    %3668 = vst [vmem:[#allocation4 + $0x290] sm:$0xff] %v3156
    %3669 = vst [vmem:[#allocation4 + $0x298] sm:$0xff] %v3157
    %3670 = vst [vmem:[#allocation4 + $0x2a0] sm:$0xff] %v3158
    %3671 = vst [vmem:[#allocation4 + $0x2a8] sm:$0xff] %v3159
    %3672 = vst [vmem:[#allocation4 + $0x2b0] sm:$0xff] %v3160
    %3673 = vst [vmem:[#allocation4 + $0x2b8] sm:$0xff] %v3161
    %3674 = vst [vmem:[#allocation4 + $0x2c0] sm:$0xff] %v3162
    %3675 = vst [vmem:[#allocation4 + $0x2c8] sm:$0xff] %v3163
    %3676 = vst [vmem:[#allocation4 + $0x2d0] sm:$0xff] %v3164
    %3677 = vst [vmem:[#allocation4 + $0x2d8] sm:$0xff] %v3165
    %3678 = vst [vmem:[#allocation4 + $0x2e0] sm:$0xff] %v3166
    %3679 = vst [vmem:[#allocation4 + $0x2e8] sm:$0xff] %v3167
    %3680 = vst [vmem:[#allocation4 + $0x2f0] sm:$0xff] %v3168
    %3681 = vst [vmem:[#allocation4 + $0x2f8] sm:$0xff] %v3169
    %3682 = vst [vmem:[#allocation4 + $0x300] sm:$0xff] %v3170
    %3683 = vst [vmem:[#allocation4 + $0x308] sm:$0xff] %v3171
    %3684 = vst [vmem:[#allocation4 + $0x310] sm:$0xff] %v3172
    %3685 = vst [vmem:[#allocation4 + $0x318] sm:$0xff] %v3173
    %3686 = vst [vmem:[#allocation4 + $0x320] sm:$0xff] %v3174
    %3687 = vst [vmem:[#allocation4 + $0x328] sm:$0xff] %v3175
    %3688 = vst [vmem:[#allocation4 + $0x330] sm:$0xff] %v3176
    %3689 = vst [vmem:[#allocation4 + $0x338] sm:$0xff] %v3177
    %3690 = vst [vmem:[#allocation4 + $0x340] sm:$0xff] %v3178
    %3691 = vst [vmem:[#allocation4 + $0x348] sm:$0xff] %v3179
    %3692 = vst [vmem:[#allocation4 + $0x350] sm:$0xff] %v3180
    %3693 = vst [vmem:[#allocation4 + $0x358] sm:$0xff] %v3181
    %3694 = vst [vmem:[#allocation4 + $0x360] sm:$0xff] %v3182
    %3695 = vst [vmem:[#allocation4 + $0x368] sm:$0xff] %v3183
    %3696 = vst [vmem:[#allocation4 + $0x370] sm:$0xff] %v3184
    %3697 = vst [vmem:[#allocation4 + $0x378] sm:$0xff] %v3185
    %3698 = vst [vmem:[#allocation4 + $0x380] sm:$0xff] %v3186
    %3699 = vst [vmem:[#allocation4 + $0x388] sm:$0xff] %v3187
    %3700 = vst [vmem:[#allocation4 + $0x390] sm:$0xff] %v3188
    %3701 = vst [vmem:[#allocation4 + $0x398] sm:$0xff] %v3189
    %3702 = vst [vmem:[#allocation4 + $0x3a0] sm:$0xff] %v3190
    %3703 = vst [vmem:[#allocation4 + $0x3a8] sm:$0xff] %v3191
    %3704 = vst [vmem:[#allocation4 + $0x3b0] sm:$0xff] %v3192
    %3705 = vst [vmem:[#allocation4 + $0x3b8] sm:$0xff] %v3193
    %3706 = vst [vmem:[#allocation4 + $0x3c0] sm:$0xff] %v3194
    %3707 = vst [vmem:[#allocation4 + $0x3c8] sm:$0xff] %v3195
    %3708 = vst [vmem:[#allocation4 + $0x3d0] sm:$0xff] %v3196
    %3709 = vst [vmem:[#allocation4 + $0x3d8] sm:$0xff] %v3197
    %3710 = vst [vmem:[#allocation4 + $0x3e0] sm:$0xff] %v3198
    %3711 = vst [vmem:[#allocation4 + $0x3e8] sm:$0xff] %v3199
    %3712 = vst [vmem:[#allocation4 + $0x3f0] sm:$0xff] %v3200
    %3713 = vst [vmem:[#allocation4 + $0x3f8] sm:$0xff] %v3201
    %3714 = vst [vmem:[#allocation4 + $0x400] sm:$0xff] %v3202
    %3715 = vst [vmem:[#allocation4 + $0x408] sm:$0xff] %v3203
    %3716 = vst [vmem:[#allocation4 + $0x410] sm:$0xff] %v3204
    %3717 = vst [vmem:[#allocation4 + $0x418] sm:$0xff] %v3205
    %3718 = vst [vmem:[#allocation4 + $0x420] sm:$0xff] %v3206
    %3719 = vst [vmem:[#allocation4 + $0x428] sm:$0xff] %v3207
    %3720 = vst [vmem:[#allocation4 + $0x430] sm:$0xff] %v3208
    %3721 = vst [vmem:[#allocation4 + $0x438] sm:$0xff] %v3209
    %3722 = vst [vmem:[#allocation4 + $0x440] sm:$0xff] %v3210
    %3723 = vst [vmem:[#allocation4 + $0x448] sm:$0xff] %v3211
    %3724 = vst [vmem:[#allocation4 + $0x450] sm:$0xff] %v3212
    %3725 = vst [vmem:[#allocation4 + $0x458] sm:$0xff] %v3213
    %3726 = vst [vmem:[#allocation4 + $0x460] sm:$0xff] %v3214
    %3727 = vst [vmem:[#allocation4 + $0x468] sm:$0xff] %v3215
    %3728 = vst [vmem:[#allocation4 + $0x470] sm:$0xff] %v3216
    %3729 = vst [vmem:[#allocation4 + $0x478] sm:$0xff] %v3217
    %3730 = vst [vmem:[#allocation4 + $0x480] sm:$0xff] %v3218
    %3731 = vst [vmem:[#allocation4 + $0x488] sm:$0xff] %v3219
    %3732 = vst [vmem:[#allocation4 + $0x490] sm:$0xff] %v3220
    %3733 = vst [vmem:[#allocation4 + $0x498] sm:$0xff] %v3221
    %3734 = vst [vmem:[#allocation4 + $0x4a0] sm:$0xff] %v3222
    %3735 = vst [vmem:[#allocation4 + $0x4a8] sm:$0xff] %v3223
    %3736 = vst [vmem:[#allocation4 + $0x4b0] sm:$0xff] %v3224
    %3737 = vst [vmem:[#allocation4 + $0x4b8] sm:$0xff] %v3225
    %3738 = vst [vmem:[#allocation4 + $0x4c0] sm:$0xff] %v3226
    %3739 = vst [vmem:[#allocation4 + $0x4c8] sm:$0xff] %v3227
    %3740 = vst [vmem:[#allocation4 + $0x4d0] sm:$0xff] %v3228
    %3741 = vst [vmem:[#allocation4 + $0x4d8] sm:$0xff] %v3229
    %3742 = vst [vmem:[#allocation4 + $0x4e0] sm:$0xff] %v3230
    %3743 = vst [vmem:[#allocation4 + $0x4e8] sm:$0xff] %v3231
    %3744 = vst [vmem:[#allocation4 + $0x4f0] sm:$0xff] %v3232
    %3745 = vst [vmem:[#allocation4 + $0x4f8] sm:$0xff] %v3233
    %3746 = vst [vmem:[#allocation4 + $0x500] sm:$0xff] %v3234
    %3747 = vst [vmem:[#allocation4 + $0x508] sm:$0xff] %v3235
    %3748 = vst [vmem:[#allocation4 + $0x510] sm:$0xff] %v3236
    %3749 = vst [vmem:[#allocation4 + $0x518] sm:$0xff] %v3237
    %3750 = vst [vmem:[#allocation4 + $0x520] sm:$0xff] %v3238
    %3751 = vst [vmem:[#allocation4 + $0x528] sm:$0xff] %v3239
    %3752 = vst [vmem:[#allocation4 + $0x530] sm:$0xff] %v3240
    %3753 = vst [vmem:[#allocation4 + $0x538] sm:$0xff] %v3241
    %3754 = vst [vmem:[#allocation4 + $0x540] sm:$0xff] %v3242
    %3755 = vst [vmem:[#allocation4 + $0x548] sm:$0xff] %v3243
    %3756 = vst [vmem:[#allocation4 + $0x550] sm:$0xff] %v3244
    %3757 = vst [vmem:[#allocation4 + $0x558] sm:$0xff] %v3245
    %3758 = vst [vmem:[#allocation4 + $0x560] sm:$0xff] %v3246
    %3759 = vst [vmem:[#allocation4 + $0x568] sm:$0xff] %v3247
    %3760 = vst [vmem:[#allocation4 + $0x570] sm:$0xff] %v3248
    %3761 = vst [vmem:[#allocation4 + $0x578] sm:$0xff] %v3249
    %3762 = vst [vmem:[#allocation4 + $0x580] sm:$0xff] %v3250
    %3763 = vst [vmem:[#allocation4 + $0x588] sm:$0xff] %v3251
    %3764 = vst [vmem:[#allocation4 + $0x590] sm:$0xff] %v3252
    %3765 = vst [vmem:[#allocation4 + $0x598] sm:$0xff] %v3253
    %3766 = vst [vmem:[#allocation4 + $0x5a0] sm:$0xff] %v3254
    %3767 = vst [vmem:[#allocation4 + $0x5a8] sm:$0xff] %v3255
    %3768 = vst [vmem:[#allocation4 + $0x5b0] sm:$0xff] %v3256
    %3769 = vst [vmem:[#allocation4 + $0x5b8] sm:$0xff] %v3257
    %3770 = vst [vmem:[#allocation4 + $0x5c0] sm:$0xff] %v3258
    %3771 = vst [vmem:[#allocation4 + $0x5c8] sm:$0xff] %v3259
    %3772 = vst [vmem:[#allocation4 + $0x5d0] sm:$0xff] %v3260
    %3773 = vst [vmem:[#allocation4 + $0x5d8] sm:$0xff] %v3261
    %3774 = vst [vmem:[#allocation4 + $0x5e0] sm:$0xff] %v3262
    %3775 = vst [vmem:[#allocation4 + $0x5e8] sm:$0xff] %v3263
    %3776 = vst [vmem:[#allocation4 + $0x5f0] sm:$0xff] %v3264
    %3777 = vst [vmem:[#allocation4 + $0x5f8] sm:$0xff] %v3265
    %3778 = vst [vmem:[#allocation4 + $0x600] sm:$0xff] %v3266
    %3779 = vst [vmem:[#allocation4 + $0x608] sm:$0xff] %v3267
    %3780 = vst [vmem:[#allocation4 + $0x610] sm:$0xff] %v3268
    %3781 = vst [vmem:[#allocation4 + $0x618] sm:$0xff] %v3269
    %3782 = vst [vmem:[#allocation4 + $0x620] sm:$0xff] %v3270
    %3783 = vst [vmem:[#allocation4 + $0x628] sm:$0xff] %v3271
    %3784 = vst [vmem:[#allocation4 + $0x630] sm:$0xff] %v3272
    %3785 = vst [vmem:[#allocation4 + $0x638] sm:$0xff] %v3273
    %3786 = vst [vmem:[#allocation4 + $0x640] sm:$0xff] %v3274
    %3787 = vst [vmem:[#allocation4 + $0x648] sm:$0xff] %v3275
    %3788 = vst [vmem:[#allocation4 + $0x650] sm:$0xff] %v3276
    %3789 = vst [vmem:[#allocation4 + $0x658] sm:$0xff] %v3277
    %3790 = vst [vmem:[#allocation4 + $0x660] sm:$0xff] %v3278
    %3791 = vst [vmem:[#allocation4 + $0x668] sm:$0xff] %v3279
    %3792 = vst [vmem:[#allocation4 + $0x670] sm:$0xff] %v3280
    %3793 = vst [vmem:[#allocation4 + $0x678] sm:$0xff] %v3281
    %3794 = vst [vmem:[#allocation4 + $0x680] sm:$0xff] %v3282
    %3795 = vst [vmem:[#allocation4 + $0x688] sm:$0xff] %v3283
    %3796 = vst [vmem:[#allocation4 + $0x690] sm:$0xff] %v3284
    %3797 = vst [vmem:[#allocation4 + $0x698] sm:$0xff] %v3285
    %3798 = vst [vmem:[#allocation4 + $0x6a0] sm:$0xff] %v3286
    %3799 = vst [vmem:[#allocation4 + $0x6a8] sm:$0xff] %v3287
    %3800 = vst [vmem:[#allocation4 + $0x6b0] sm:$0xff] %v3288
    %3801 = vst [vmem:[#allocation4 + $0x6b8] sm:$0xff] %v3289
    %3802 = vst [vmem:[#allocation4 + $0x6c0] sm:$0xff] %v3290
    %3803 = vst [vmem:[#allocation4 + $0x6c8] sm:$0xff] %v3291
    %3804 = vst [vmem:[#allocation4 + $0x6d0] sm:$0xff] %v3292
    %3805 = vst [vmem:[#allocation4 + $0x6d8] sm:$0xff] %v3293
    %3806 = vst [vmem:[#allocation4 + $0x6e0] sm:$0xff] %v3294
    %3807 = vst [vmem:[#allocation4 + $0x6e8] sm:$0xff] %v3295
    %3808 = vst [vmem:[#allocation4 + $0x6f0] sm:$0xff] %v3296
    %3809 = vst [vmem:[#allocation4 + $0x6f8] sm:$0xff] %v3297
    %3810 = vst [vmem:[#allocation4 + $0x700] sm:$0xff] %v3298
    %3811 = vst [vmem:[#allocation4 + $0x708] sm:$0xff] %v3299
    %3812 = vst [vmem:[#allocation4 + $0x710] sm:$0xff] %v3300
    %3813 = vst [vmem:[#allocation4 + $0x718] sm:$0xff] %v3301
    %3814 = vst [vmem:[#allocation4 + $0x720] sm:$0xff] %v3302
    %3815 = vst [vmem:[#allocation4 + $0x728] sm:$0xff] %v3303
    %3816 = vst [vmem:[#allocation4 + $0x730] sm:$0xff] %v3304
    %3817 = vst [vmem:[#allocation4 + $0x738] sm:$0xff] %v3305
    %3818 = vst [vmem:[#allocation4 + $0x740] sm:$0xff] %v3306
    %3819 = vst [vmem:[#allocation4 + $0x748] sm:$0xff] %v3307
    %3820 = vst [vmem:[#allocation4 + $0x750] sm:$0xff] %v3308
    %3821 = vst [vmem:[#allocation4 + $0x758] sm:$0xff] %v3309
    %3822 = vst [vmem:[#allocation4 + $0x760] sm:$0xff] %v3310
    %3823 = vst [vmem:[#allocation4 + $0x768] sm:$0xff] %v3311
    %3824 = vst [vmem:[#allocation4 + $0x770] sm:$0xff] %v3312
    %3825 = vst [vmem:[#allocation4 + $0x778] sm:$0xff] %v3313
    %3826 = vst [vmem:[#allocation4 + $0x780] sm:$0xff] %v3314
    %3827 = vst [vmem:[#allocation4 + $0x788] sm:$0xff] %v3315
    %3828 = vst [vmem:[#allocation4 + $0x790] sm:$0xff] %v3316
    %3829 = vst [vmem:[#allocation4 + $0x798] sm:$0xff] %v3317
    %3830 = vst [vmem:[#allocation4 + $0x7a0] sm:$0xff] %v3318
    %3831 = vst [vmem:[#allocation4 + $0x7a8] sm:$0xff] %v3319
    %3832 = vst [vmem:[#allocation4 + $0x7b0] sm:$0xff] %v3320
    %3833 = vst [vmem:[#allocation4 + $0x7b8] sm:$0xff] %v3321
    %3834 = vst [vmem:[#allocation4 + $0x7c0] sm:$0xff] %v3322
    %3835 = vst [vmem:[#allocation4 + $0x7c8] sm:$0xff] %v3323
    %3836 = vst [vmem:[#allocation4 + $0x7d0] sm:$0xff] %v3324
    %3837 = vst [vmem:[#allocation4 + $0x7d8] sm:$0xff] %v3325
    %3838 = vst [vmem:[#allocation4 + $0x7e0] sm:$0xff] %v3326
    %3839 = vst [vmem:[#allocation4 + $0x7e8] sm:$0xff] %v3327
    %3840 = vst [vmem:[#allocation4 + $0x7f0] sm:$0xff] %v3328
    %3841 = vst [vmem:[#allocation4 + $0x7f8] sm:$0xff] %v3329
    %v3842 = vld [vmem:[#allocation4] sm:$0xff]
    %v3843 = vld [vmem:[#allocation4 + $0x8] sm:$0xff]
    %v3844 = vld [vmem:[#allocation4 + $0x10] sm:$0xff]
    %v3845 = vld [vmem:[#allocation4 + $0x18] sm:$0xff]
    %v3846 = vld [vmem:[#allocation4 + $0x20] sm:$0xff]
    %v3847 = vld [vmem:[#allocation4 + $0x28] sm:$0xff]
    %v3848 = vld [vmem:[#allocation4 + $0x30] sm:$0xff]
    %v3849 = vld [vmem:[#allocation4 + $0x38] sm:$0xff]
    %v3850 = vld [vmem:[#allocation4 + $0x40] sm:$0xff]
    %v3851 = vld [vmem:[#allocation4 + $0x48] sm:$0xff]
    %v3852 = vld [vmem:[#allocation4 + $0x50] sm:$0xff]
    %v3853 = vld [vmem:[#allocation4 + $0x58] sm:$0xff]
    %v3854 = vld [vmem:[#allocation4 + $0x60] sm:$0xff]
    %v3855 = vld [vmem:[#allocation4 + $0x68] sm:$0xff]
    %v3856 = vld [vmem:[#allocation4 + $0x70] sm:$0xff]
    %v3857 = vld [vmem:[#allocation4 + $0x78] sm:$0xff]
    %v3858 = vld [vmem:[#allocation4 + $0x80] sm:$0xff]
    %v3859 = vld [vmem:[#allocation4 + $0x88] sm:$0xff]
    %v3860 = vld [vmem:[#allocation4 + $0x90] sm:$0xff]
    %v3861 = vld [vmem:[#allocation4 + $0x98] sm:$0xff]
    %v3862 = vld [vmem:[#allocation4 + $0xa0] sm:$0xff]
    %v3863 = vld [vmem:[#allocation4 + $0xa8] sm:$0xff]
    %v3864 = vld [vmem:[#allocation4 + $0xb0] sm:$0xff]
    %v3865 = vld [vmem:[#allocation4 + $0xb8] sm:$0xff]
    %v3866 = vld [vmem:[#allocation4 + $0xc0] sm:$0xff]
    %v3867 = vld [vmem:[#allocation4 + $0xc8] sm:$0xff]
    %v3868 = vld [vmem:[#allocation4 + $0xd0] sm:$0xff]
    %v3869 = vld [vmem:[#allocation4 + $0xd8] sm:$0xff]
    %v3870 = vld [vmem:[#allocation4 + $0xe0] sm:$0xff]
    %v3871 = vld [vmem:[#allocation4 + $0xe8] sm:$0xff]
    %v3872 = vld [vmem:[#allocation4 + $0xf0] sm:$0xff]
    %v3873 = vld [vmem:[#allocation4 + $0xf8] sm:$0xff]
    %v3874 = vld [vmem:[#allocation4 + $0x100] sm:$0xff]
    %v3875 = vld [vmem:[#allocation4 + $0x108] sm:$0xff]
    %v3876 = vld [vmem:[#allocation4 + $0x110] sm:$0xff]
    %v3877 = vld [vmem:[#allocation4 + $0x118] sm:$0xff]
    %v3878 = vld [vmem:[#allocation4 + $0x120] sm:$0xff]
    %v3879 = vld [vmem:[#allocation4 + $0x128] sm:$0xff]
    %v3880 = vld [vmem:[#allocation4 + $0x130] sm:$0xff]
    %v3881 = vld [vmem:[#allocation4 + $0x138] sm:$0xff]
    %v3882 = vld [vmem:[#allocation4 + $0x140] sm:$0xff]
    %v3883 = vld [vmem:[#allocation4 + $0x148] sm:$0xff]
    %v3884 = vld [vmem:[#allocation4 + $0x150] sm:$0xff]
    %v3885 = vld [vmem:[#allocation4 + $0x158] sm:$0xff]
    %v3886 = vld [vmem:[#allocation4 + $0x160] sm:$0xff]
    %v3887 = vld [vmem:[#allocation4 + $0x168] sm:$0xff]
    %v3888 = vld [vmem:[#allocation4 + $0x170] sm:$0xff]
    %v3889 = vld [vmem:[#allocation4 + $0x178] sm:$0xff]
    %v3890 = vld [vmem:[#allocation4 + $0x180] sm:$0xff]
    %v3891 = vld [vmem:[#allocation4 + $0x188] sm:$0xff]
    %v3892 = vld [vmem:[#allocation4 + $0x190] sm:$0xff]
    %v3893 = vld [vmem:[#allocation4 + $0x198] sm:$0xff]
    %v3894 = vld [vmem:[#allocation4 + $0x1a0] sm:$0xff]
    %v3895 = vld [vmem:[#allocation4 + $0x1a8] sm:$0xff]
    %v3896 = vld [vmem:[#allocation4 + $0x1b0] sm:$0xff]
    %v3897 = vld [vmem:[#allocation4 + $0x1b8] sm:$0xff]
    %v3898 = vld [vmem:[#allocation4 + $0x1c0] sm:$0xff]
    %v3899 = vld [vmem:[#allocation4 + $0x1c8] sm:$0xff]
    %v3900 = vld [vmem:[#allocation4 + $0x1d0] sm:$0xff]
    %v3901 = vld [vmem:[#allocation4 + $0x1d8] sm:$0xff]
    %v3902 = vld [vmem:[#allocation4 + $0x1e0] sm:$0xff]
    %v3903 = vld [vmem:[#allocation4 + $0x1e8] sm:$0xff]
    %v3904 = vld [vmem:[#allocation4 + $0x1f0] sm:$0xff]
    %v3905 = vld [vmem:[#allocation4 + $0x1f8] sm:$0xff]
    %v3906 = vld [vmem:[#allocation4 + $0x200] sm:$0xff]
    %v3907 = vld [vmem:[#allocation4 + $0x208] sm:$0xff]
    %v3908 = vld [vmem:[#allocation4 + $0x210] sm:$0xff]
    %v3909 = vld [vmem:[#allocation4 + $0x218] sm:$0xff]
    %v3910 = vld [vmem:[#allocation4 + $0x220] sm:$0xff]
    %v3911 = vld [vmem:[#allocation4 + $0x228] sm:$0xff]
    %v3912 = vld [vmem:[#allocation4 + $0x230] sm:$0xff]
    %v3913 = vld [vmem:[#allocation4 + $0x238] sm:$0xff]
    %v3914 = vld [vmem:[#allocation4 + $0x240] sm:$0xff]
    %v3915 = vld [vmem:[#allocation4 + $0x248] sm:$0xff]
    %v3916 = vld [vmem:[#allocation4 + $0x250] sm:$0xff]
    %v3917 = vld [vmem:[#allocation4 + $0x258] sm:$0xff]
    %v3918 = vld [vmem:[#allocation4 + $0x260] sm:$0xff]
    %v3919 = vld [vmem:[#allocation4 + $0x268] sm:$0xff]
    %v3920 = vld [vmem:[#allocation4 + $0x270] sm:$0xff]
    %v3921 = vld [vmem:[#allocation4 + $0x278] sm:$0xff]
    %v3922 = vld [vmem:[#allocation4 + $0x280] sm:$0xff]
    %v3923 = vld [vmem:[#allocation4 + $0x288] sm:$0xff]
    %v3924 = vld [vmem:[#allocation4 + $0x290] sm:$0xff]
    %v3925 = vld [vmem:[#allocation4 + $0x298] sm:$0xff]
    %v3926 = vld [vmem:[#allocation4 + $0x2a0] sm:$0xff]
    %v3927 = vld [vmem:[#allocation4 + $0x2a8] sm:$0xff]
    %v3928 = vld [vmem:[#allocation4 + $0x2b0] sm:$0xff]
    %v3929 = vld [vmem:[#allocation4 + $0x2b8] sm:$0xff]
    %v3930 = vld [vmem:[#allocation4 + $0x2c0] sm:$0xff]
    %v3931 = vld [vmem:[#allocation4 + $0x2c8] sm:$0xff]
    %v3932 = vld [vmem:[#allocation4 + $0x2d0] sm:$0xff]
    %v3933 = vld [vmem:[#allocation4 + $0x2d8] sm:$0xff]
    %v3934 = vld [vmem:[#allocation4 + $0x2e0] sm:$0xff]
    %v3935 = vld [vmem:[#allocation4 + $0x2e8] sm:$0xff]
    %v3936 = vld [vmem:[#allocation4 + $0x2f0] sm:$0xff]
    %v3937 = vld [vmem:[#allocation4 + $0x2f8] sm:$0xff]
    %v3938 = vld [vmem:[#allocation4 + $0x300] sm:$0xff]
    %v3939 = vld [vmem:[#allocation4 + $0x308] sm:$0xff]
    %v3940 = vld [vmem:[#allocation4 + $0x310] sm:$0xff]
    %v3941 = vld [vmem:[#allocation4 + $0x318] sm:$0xff]
    %v3942 = vld [vmem:[#allocation4 + $0x320] sm:$0xff]
    %v3943 = vld [vmem:[#allocation4 + $0x328] sm:$0xff]
    %v3944 = vld [vmem:[#allocation4 + $0x330] sm:$0xff]
    %v3945 = vld [vmem:[#allocation4 + $0x338] sm:$0xff]
    %v3946 = vld [vmem:[#allocation4 + $0x340] sm:$0xff]
    %v3947 = vld [vmem:[#allocation4 + $0x348] sm:$0xff]
    %v3948 = vld [vmem:[#allocation4 + $0x350] sm:$0xff]
    %v3949 = vld [vmem:[#allocation4 + $0x358] sm:$0xff]
    %v3950 = vld [vmem:[#allocation4 + $0x360] sm:$0xff]
    %v3951 = vld [vmem:[#allocation4 + $0x368] sm:$0xff]
    %v3952 = vld [vmem:[#allocation4 + $0x370] sm:$0xff]
    %v3953 = vld [vmem:[#allocation4 + $0x378] sm:$0xff]
    %v3954 = vld [vmem:[#allocation4 + $0x380] sm:$0xff]
    %v3955 = vld [vmem:[#allocation4 + $0x388] sm:$0xff]
    %v3956 = vld [vmem:[#allocation4 + $0x390] sm:$0xff]
    %v3957 = vld [vmem:[#allocation4 + $0x398] sm:$0xff]
    %v3958 = vld [vmem:[#allocation4 + $0x3a0] sm:$0xff]
    %v3959 = vld [vmem:[#allocation4 + $0x3a8] sm:$0xff]
    %v3960 = vld [vmem:[#allocation4 + $0x3b0] sm:$0xff]
    %v3961 = vld [vmem:[#allocation4 + $0x3b8] sm:$0xff]
    %v3962 = vld [vmem:[#allocation4 + $0x3c0] sm:$0xff]
    %v3963 = vld [vmem:[#allocation4 + $0x3c8] sm:$0xff]
    %v3964 = vld [vmem:[#allocation4 + $0x3d0] sm:$0xff]
    %v3965 = vld [vmem:[#allocation4 + $0x3d8] sm:$0xff]
    %v3966 = vld [vmem:[#allocation4 + $0x3e0] sm:$0xff]
    %v3967 = vld [vmem:[#allocation4 + $0x3e8] sm:$0xff]
    %v3968 = vld [vmem:[#allocation4 + $0x3f0] sm:$0xff]
    %v3969 = vld [vmem:[#allocation4 + $0x3f8] sm:$0xff]
    %v3970 = vld [vmem:[#allocation4 + $0x400] sm:$0xff]
    %v3971 = vld [vmem:[#allocation4 + $0x408] sm:$0xff]
    %v3972 = vld [vmem:[#allocation4 + $0x410] sm:$0xff]
    %v3973 = vld [vmem:[#allocation4 + $0x418] sm:$0xff]
    %v3974 = vld [vmem:[#allocation4 + $0x420] sm:$0xff]
    %v3975 = vld [vmem:[#allocation4 + $0x428] sm:$0xff]
    %v3976 = vld [vmem:[#allocation4 + $0x430] sm:$0xff]
    %v3977 = vld [vmem:[#allocation4 + $0x438] sm:$0xff]
    %v3978 = vld [vmem:[#allocation4 + $0x440] sm:$0xff]
    %v3979 = vld [vmem:[#allocation4 + $0x448] sm:$0xff]
    %v3980 = vld [vmem:[#allocation4 + $0x450] sm:$0xff]
    %v3981 = vld [vmem:[#allocation4 + $0x458] sm:$0xff]
    %v3982 = vld [vmem:[#allocation4 + $0x460] sm:$0xff]
    %v3983 = vld [vmem:[#allocation4 + $0x468] sm:$0xff]
    %v3984 = vld [vmem:[#allocation4 + $0x470] sm:$0xff]
    %v3985 = vld [vmem:[#allocation4 + $0x478] sm:$0xff]
    %v3986 = vld [vmem:[#allocation4 + $0x480] sm:$0xff]
    %v3987 = vld [vmem:[#allocation4 + $0x488] sm:$0xff]
    %v3988 = vld [vmem:[#allocation4 + $0x490] sm:$0xff]
    %v3989 = vld [vmem:[#allocation4 + $0x498] sm:$0xff]
    %v3990 = vld [vmem:[#allocation4 + $0x4a0] sm:$0xff]
    %v3991 = vld [vmem:[#allocation4 + $0x4a8] sm:$0xff]
    %v3992 = vld [vmem:[#allocation4 + $0x4b0] sm:$0xff]
    %v3993 = vld [vmem:[#allocation4 + $0x4b8] sm:$0xff]
    %v3994 = vld [vmem:[#allocation4 + $0x4c0] sm:$0xff]
    %v3995 = vld [vmem:[#allocation4 + $0x4c8] sm:$0xff]
    %v3996 = vld [vmem:[#allocation4 + $0x4d0] sm:$0xff]
    %v3997 = vld [vmem:[#allocation4 + $0x4d8] sm:$0xff]
    %v3998 = vld [vmem:[#allocation4 + $0x4e0] sm:$0xff]
    %v3999 = vld [vmem:[#allocation4 + $0x4e8] sm:$0xff]
    %v4000 = vld [vmem:[#allocation4 + $0x4f0] sm:$0xff]
    %v4001 = vld [vmem:[#allocation4 + $0x4f8] sm:$0xff]
    %v4002 = vld [vmem:[#allocation4 + $0x500] sm:$0xff]
    %v4003 = vld [vmem:[#allocation4 + $0x508] sm:$0xff]
    %v4004 = vld [vmem:[#allocation4 + $0x510] sm:$0xff]
    %v4005 = vld [vmem:[#allocation4 + $0x518] sm:$0xff]
    %v4006 = vld [vmem:[#allocation4 + $0x520] sm:$0xff]
    %v4007 = vld [vmem:[#allocation4 + $0x528] sm:$0xff]
    %v4008 = vld [vmem:[#allocation4 + $0x530] sm:$0xff]
    %v4009 = vld [vmem:[#allocation4 + $0x538] sm:$0xff]
    %v4010 = vld [vmem:[#allocation4 + $0x540] sm:$0xff]
    %v4011 = vld [vmem:[#allocation4 + $0x548] sm:$0xff]
    %v4012 = vld [vmem:[#allocation4 + $0x550] sm:$0xff]
    %v4013 = vld [vmem:[#allocation4 + $0x558] sm:$0xff]
    %v4014 = vld [vmem:[#allocation4 + $0x560] sm:$0xff]
    %v4015 = vld [vmem:[#allocation4 + $0x568] sm:$0xff]
    %v4016 = vld [vmem:[#allocation4 + $0x570] sm:$0xff]
    %v4017 = vld [vmem:[#allocation4 + $0x578] sm:$0xff]
    %v4018 = vld [vmem:[#allocation4 + $0x580] sm:$0xff]
    %v4019 = vld [vmem:[#allocation4 + $0x588] sm:$0xff]
    %v4020 = vld [vmem:[#allocation4 + $0x590] sm:$0xff]
    %v4021 = vld [vmem:[#allocation4 + $0x598] sm:$0xff]
    %v4022 = vld [vmem:[#allocation4 + $0x5a0] sm:$0xff]
    %v4023 = vld [vmem:[#allocation4 + $0x5a8] sm:$0xff]
    %v4024 = vld [vmem:[#allocation4 + $0x5b0] sm:$0xff]
    %v4025 = vld [vmem:[#allocation4 + $0x5b8] sm:$0xff]
    %v4026 = vld [vmem:[#allocation4 + $0x5c0] sm:$0xff]
    %v4027 = vld [vmem:[#allocation4 + $0x5c8] sm:$0xff]
    %v4028 = vld [vmem:[#allocation4 + $0x5d0] sm:$0xff]
    %v4029 = vld [vmem:[#allocation4 + $0x5d8] sm:$0xff]
    %v4030 = vld [vmem:[#allocation4 + $0x5e0] sm:$0xff]
    %v4031 = vld [vmem:[#allocation4 + $0x5e8] sm:$0xff]
    %v4032 = vld [vmem:[#allocation4 + $0x5f0] sm:$0xff]
    %v4033 = vld [vmem:[#allocation4 + $0x5f8] sm:$0xff]
    %v4034 = vld [vmem:[#allocation4 + $0x600] sm:$0xff]
    %v4035 = vld [vmem:[#allocation4 + $0x608] sm:$0xff]
    %v4036 = vld [vmem:[#allocation4 + $0x610] sm:$0xff]
    %v4037 = vld [vmem:[#allocation4 + $0x618] sm:$0xff]
    %v4038 = vld [vmem:[#allocation4 + $0x620] sm:$0xff]
    %v4039 = vld [vmem:[#allocation4 + $0x628] sm:$0xff]
    %v4040 = vld [vmem:[#allocation4 + $0x630] sm:$0xff]
    %v4041 = vld [vmem:[#allocation4 + $0x638] sm:$0xff]
    %v4042 = vld [vmem:[#allocation4 + $0x640] sm:$0xff]
    %v4043 = vld [vmem:[#allocation4 + $0x648] sm:$0xff]
    %v4044 = vld [vmem:[#allocation4 + $0x650] sm:$0xff]
    %v4045 = vld [vmem:[#allocation4 + $0x658] sm:$0xff]
    %v4046 = vld [vmem:[#allocation4 + $0x660] sm:$0xff]
    %v4047 = vld [vmem:[#allocation4 + $0x668] sm:$0xff]
    %v4048 = vld [vmem:[#allocation4 + $0x670] sm:$0xff]
    %v4049 = vld [vmem:[#allocation4 + $0x678] sm:$0xff]
    %v4050 = vld [vmem:[#allocation4 + $0x680] sm:$0xff]
    %v4051 = vld [vmem:[#allocation4 + $0x688] sm:$0xff]
    %v4052 = vld [vmem:[#allocation4 + $0x690] sm:$0xff]
    %v4053 = vld [vmem:[#allocation4 + $0x698] sm:$0xff]
    %v4054 = vld [vmem:[#allocation4 + $0x6a0] sm:$0xff]
    %v4055 = vld [vmem:[#allocation4 + $0x6a8] sm:$0xff]
    %v4056 = vld [vmem:[#allocation4 + $0x6b0] sm:$0xff]
    %v4057 = vld [vmem:[#allocation4 + $0x6b8] sm:$0xff]
    %v4058 = vld [vmem:[#allocation4 + $0x6c0] sm:$0xff]
    %v4059 = vld [vmem:[#allocation4 + $0x6c8] sm:$0xff]
    %v4060 = vld [vmem:[#allocation4 + $0x6d0] sm:$0xff]
    %v4061 = vld [vmem:[#allocation4 + $0x6d8] sm:$0xff]
    %v4062 = vld [vmem:[#allocation4 + $0x6e0] sm:$0xff]
    %v4063 = vld [vmem:[#allocation4 + $0x6e8] sm:$0xff]
    %v4064 = vld [vmem:[#allocation4 + $0x6f0] sm:$0xff]
    %v4065 = vld [vmem:[#allocation4 + $0x6f8] sm:$0xff]
    %v4066 = vld [vmem:[#allocation4 + $0x700] sm:$0xff]
    %v4067 = vld [vmem:[#allocation4 + $0x708] sm:$0xff]
    %v4068 = vld [vmem:[#allocation4 + $0x710] sm:$0xff]
    %v4069 = vld [vmem:[#allocation4 + $0x718] sm:$0xff]
    %v4070 = vld [vmem:[#allocation4 + $0x720] sm:$0xff]
    %v4071 = vld [vmem:[#allocation4 + $0x728] sm:$0xff]
    %v4072 = vld [vmem:[#allocation4 + $0x730] sm:$0xff]
    %v4073 = vld [vmem:[#allocation4 + $0x738] sm:$0xff]
    %v4074 = vld [vmem:[#allocation4 + $0x740] sm:$0xff]
    %v4075 = vld [vmem:[#allocation4 + $0x748] sm:$0xff]
    %v4076 = vld [vmem:[#allocation4 + $0x750] sm:$0xff]
    %v4077 = vld [vmem:[#allocation4 + $0x758] sm:$0xff]
    %v4078 = vld [vmem:[#allocation4 + $0x760] sm:$0xff]
    %v4079 = vld [vmem:[#allocation4 + $0x768] sm:$0xff]
    %v4080 = vld [vmem:[#allocation4 + $0x770] sm:$0xff]
    %v4081 = vld [vmem:[#allocation4 + $0x778] sm:$0xff]
    %v4082 = vld [vmem:[#allocation4 + $0x780] sm:$0xff]
    %v4083 = vld [vmem:[#allocation4 + $0x788] sm:$0xff]
    %v4084 = vld [vmem:[#allocation4 + $0x790] sm:$0xff]
    %v4085 = vld [vmem:[#allocation4 + $0x798] sm:$0xff]
    %v4086 = vld [vmem:[#allocation4 + $0x7a0] sm:$0xff]
    %v4087 = vld [vmem:[#allocation4 + $0x7a8] sm:$0xff]
    %v4088 = vld [vmem:[#allocation4 + $0x7b0] sm:$0xff]
    %v4089 = vld [vmem:[#allocation4 + $0x7b8] sm:$0xff]
    %v4090 = vld [vmem:[#allocation4 + $0x7c0] sm:$0xff]
    %v4091 = vld [vmem:[#allocation4 + $0x7c8] sm:$0xff]
    %v4092 = vld [vmem:[#allocation4 + $0x7d0] sm:$0xff]
    %v4093 = vld [vmem:[#allocation4 + $0x7d8] sm:$0xff]
    %v4094 = vld [vmem:[#allocation4 + $0x7e0] sm:$0xff]
    %v4095 = vld [vmem:[#allocation4 + $0x7e8] sm:$0xff]
    %v4096 = vld [vmem:[#allocation4 + $0x7f0] sm:$0xff]
    %v4097 = vld [vmem:[#allocation4 + $0x7f8] sm:$0xff]
    %v4354 = vunpack.c.l.b16 %v3842
    %v4355 = vunpack.c.h.b16 %v3842
    %v4356 = vunpack.c.l.b16 %v3843
    %v4357 = vunpack.c.h.b16 %v3843
    %v4358 = vunpack.c.l.b16 %v3844
    %v4359 = vunpack.c.h.b16 %v3844
    %v4360 = vunpack.c.l.b16 %v3845
    %v4361 = vunpack.c.h.b16 %v3845
    %v4362 = vunpack.c.l.b16 %v3846
    %v4363 = vunpack.c.h.b16 %v3846
    %v4364 = vunpack.c.l.b16 %v3847
    %v4365 = vunpack.c.h.b16 %v3847
    %v4366 = vunpack.c.l.b16 %v3848
    %v4367 = vunpack.c.h.b16 %v3848
    %v4368 = vunpack.c.l.b16 %v3849
    %v4369 = vunpack.c.h.b16 %v3849
    %v4370 = vunpack.c.l.b16 %v3850
    %v4371 = vunpack.c.h.b16 %v3850
    %v4372 = vunpack.c.l.b16 %v3851
    %v4373 = vunpack.c.h.b16 %v3851
    %v4374 = vunpack.c.l.b16 %v3852
    %v4375 = vunpack.c.h.b16 %v3852
    %v4376 = vunpack.c.l.b16 %v3853
    %v4377 = vunpack.c.h.b16 %v3853
    %v4378 = vunpack.c.l.b16 %v3854
    %v4379 = vunpack.c.h.b16 %v3854
    %v4380 = vunpack.c.l.b16 %v3855
    %v4381 = vunpack.c.h.b16 %v3855
    %v4382 = vunpack.c.l.b16 %v3856
    %v4383 = vunpack.c.h.b16 %v3856
    %v4384 = vunpack.c.l.b16 %v3857
    %v4385 = vunpack.c.h.b16 %v3857
    %v4386 = vunpack.c.l.b16 %v3858
    %v4387 = vunpack.c.h.b16 %v3858
    %v4388 = vunpack.c.l.b16 %v3859
    %v4389 = vunpack.c.h.b16 %v3859
    %v4390 = vunpack.c.l.b16 %v3860
    %v4391 = vunpack.c.h.b16 %v3860
    %v4392 = vunpack.c.l.b16 %v3861
    %v4393 = vunpack.c.h.b16 %v3861
    %v4394 = vunpack.c.l.b16 %v3862
    %v4395 = vunpack.c.h.b16 %v3862
    %v4396 = vunpack.c.l.b16 %v3863
    %v4397 = vunpack.c.h.b16 %v3863
    %v4398 = vunpack.c.l.b16 %v3864
    %v4399 = vunpack.c.h.b16 %v3864
    %v4400 = vunpack.c.l.b16 %v3865
    %v4401 = vunpack.c.h.b16 %v3865
    %v4402 = vunpack.c.l.b16 %v3866
    %v4403 = vunpack.c.h.b16 %v3866
    %v4404 = vunpack.c.l.b16 %v3867
    %v4405 = vunpack.c.h.b16 %v3867
    %v4406 = vunpack.c.l.b16 %v3868
    %v4407 = vunpack.c.h.b16 %v3868
    %v4408 = vunpack.c.l.b16 %v3869
    %v4409 = vunpack.c.h.b16 %v3869
    %v4410 = vunpack.c.l.b16 %v3870
    %v4411 = vunpack.c.h.b16 %v3870
    %v4412 = vunpack.c.l.b16 %v3871
    %v4413 = vunpack.c.h.b16 %v3871
    %v4414 = vunpack.c.l.b16 %v3872
    %v4415 = vunpack.c.h.b16 %v3872
    %v4416 = vunpack.c.l.b16 %v3873
    %v4417 = vunpack.c.h.b16 %v3873
    %v4418 = vunpack.c.l.b16 %v3874
    %v4419 = vunpack.c.h.b16 %v3874
    %v4420 = vunpack.c.l.b16 %v3875
    %v4421 = vunpack.c.h.b16 %v3875
    %v4422 = vunpack.c.l.b16 %v3876
    %v4423 = vunpack.c.h.b16 %v3876
    %v4424 = vunpack.c.l.b16 %v3877
    %v4425 = vunpack.c.h.b16 %v3877
    %v4426 = vunpack.c.l.b16 %v3878
    %v4427 = vunpack.c.h.b16 %v3878
    %v4428 = vunpack.c.l.b16 %v3879
    %v4429 = vunpack.c.h.b16 %v3879
    %v4430 = vunpack.c.l.b16 %v3880
    %v4431 = vunpack.c.h.b16 %v3880
    %v4432 = vunpack.c.l.b16 %v3881
    %v4433 = vunpack.c.h.b16 %v3881
    %v4434 = vunpack.c.l.b16 %v3882
    %v4435 = vunpack.c.h.b16 %v3882
    %v4436 = vunpack.c.l.b16 %v3883
    %v4437 = vunpack.c.h.b16 %v3883
    %v4438 = vunpack.c.l.b16 %v3884
    %v4439 = vunpack.c.h.b16 %v3884
    %v4440 = vunpack.c.l.b16 %v3885
    %v4441 = vunpack.c.h.b16 %v3885
    %v4442 = vunpack.c.l.b16 %v3886
    %v4443 = vunpack.c.h.b16 %v3886
    %v4444 = vunpack.c.l.b16 %v3887
    %v4445 = vunpack.c.h.b16 %v3887
    %v4446 = vunpack.c.l.b16 %v3888
    %v4447 = vunpack.c.h.b16 %v3888
    %v4448 = vunpack.c.l.b16 %v3889
    %v4449 = vunpack.c.h.b16 %v3889
    %v4450 = vunpack.c.l.b16 %v3890
    %v4451 = vunpack.c.h.b16 %v3890
    %v4452 = vunpack.c.l.b16 %v3891
    %v4453 = vunpack.c.h.b16 %v3891
    %v4454 = vunpack.c.l.b16 %v3892
    %v4455 = vunpack.c.h.b16 %v3892
    %v4456 = vunpack.c.l.b16 %v3893
    %v4457 = vunpack.c.h.b16 %v3893
    %v4458 = vunpack.c.l.b16 %v3894
    %v4459 = vunpack.c.h.b16 %v3894
    %v4460 = vunpack.c.l.b16 %v3895
    %v4461 = vunpack.c.h.b16 %v3895
    %v4462 = vunpack.c.l.b16 %v3896
    %v4463 = vunpack.c.h.b16 %v3896
    %v4464 = vunpack.c.l.b16 %v3897
    %v4465 = vunpack.c.h.b16 %v3897
    %v4466 = vunpack.c.l.b16 %v3898
    %v4467 = vunpack.c.h.b16 %v3898
    %v4468 = vunpack.c.l.b16 %v3899
    %v4469 = vunpack.c.h.b16 %v3899
    %v4470 = vunpack.c.l.b16 %v3900
    %v4471 = vunpack.c.h.b16 %v3900
    %v4472 = vunpack.c.l.b16 %v3901
    %v4473 = vunpack.c.h.b16 %v3901
    %v4474 = vunpack.c.l.b16 %v3902
    %v4475 = vunpack.c.h.b16 %v3902
    %v4476 = vunpack.c.l.b16 %v3903
    %v4477 = vunpack.c.h.b16 %v3903
    %v4478 = vunpack.c.l.b16 %v3904
    %v4479 = vunpack.c.h.b16 %v3904
    %v4480 = vunpack.c.l.b16 %v3905
    %v4481 = vunpack.c.h.b16 %v3905
    %v4482 = vunpack.c.l.b16 %v3906
    %v4483 = vunpack.c.h.b16 %v3906
    %v4484 = vunpack.c.l.b16 %v3907
    %v4485 = vunpack.c.h.b16 %v3907
    %v4486 = vunpack.c.l.b16 %v3908
    %v4487 = vunpack.c.h.b16 %v3908
    %v4488 = vunpack.c.l.b16 %v3909
    %v4489 = vunpack.c.h.b16 %v3909
    %v4490 = vunpack.c.l.b16 %v3910
    %v4491 = vunpack.c.h.b16 %v3910
    %v4492 = vunpack.c.l.b16 %v3911
    %v4493 = vunpack.c.h.b16 %v3911
    %v4494 = vunpack.c.l.b16 %v3912
    %v4495 = vunpack.c.h.b16 %v3912
    %v4496 = vunpack.c.l.b16 %v3913
    %v4497 = vunpack.c.h.b16 %v3913
    %v4498 = vunpack.c.l.b16 %v3914
    %v4499 = vunpack.c.h.b16 %v3914
    %v4500 = vunpack.c.l.b16 %v3915
    %v4501 = vunpack.c.h.b16 %v3915
    %v4502 = vunpack.c.l.b16 %v3916
    %v4503 = vunpack.c.h.b16 %v3916
    %v4504 = vunpack.c.l.b16 %v3917
    %v4505 = vunpack.c.h.b16 %v3917
    %v4506 = vunpack.c.l.b16 %v3918
    %v4507 = vunpack.c.h.b16 %v3918
    %v4508 = vunpack.c.l.b16 %v3919
    %v4509 = vunpack.c.h.b16 %v3919
    %v4510 = vunpack.c.l.b16 %v3920
    %v4511 = vunpack.c.h.b16 %v3920
    %v4512 = vunpack.c.l.b16 %v3921
    %v4513 = vunpack.c.h.b16 %v3921
    %v4514 = vunpack.c.l.b16 %v3922
    %v4515 = vunpack.c.h.b16 %v3922
    %v4516 = vunpack.c.l.b16 %v3923
    %v4517 = vunpack.c.h.b16 %v3923
    %v4518 = vunpack.c.l.b16 %v3924
    %v4519 = vunpack.c.h.b16 %v3924
    %v4520 = vunpack.c.l.b16 %v3925
    %v4521 = vunpack.c.h.b16 %v3925
    %v4522 = vunpack.c.l.b16 %v3926
    %v4523 = vunpack.c.h.b16 %v3926
    %v4524 = vunpack.c.l.b16 %v3927
    %v4525 = vunpack.c.h.b16 %v3927
    %v4526 = vunpack.c.l.b16 %v3928
    %v4527 = vunpack.c.h.b16 %v3928
    %v4528 = vunpack.c.l.b16 %v3929
    %v4529 = vunpack.c.h.b16 %v3929
    %v4530 = vunpack.c.l.b16 %v3930
    %v4531 = vunpack.c.h.b16 %v3930
    %v4532 = vunpack.c.l.b16 %v3931
    %v4533 = vunpack.c.h.b16 %v3931
    %v4534 = vunpack.c.l.b16 %v3932
    %v4535 = vunpack.c.h.b16 %v3932
    %v4536 = vunpack.c.l.b16 %v3933
    %v4537 = vunpack.c.h.b16 %v3933
    %v4538 = vunpack.c.l.b16 %v3934
    %v4539 = vunpack.c.h.b16 %v3934
    %v4540 = vunpack.c.l.b16 %v3935
    %v4541 = vunpack.c.h.b16 %v3935
    %v4542 = vunpack.c.l.b16 %v3936
    %v4543 = vunpack.c.h.b16 %v3936
    %v4544 = vunpack.c.l.b16 %v3937
    %v4545 = vunpack.c.h.b16 %v3937
    %v4546 = vunpack.c.l.b16 %v3938
    %v4547 = vunpack.c.h.b16 %v3938
    %v4548 = vunpack.c.l.b16 %v3939
    %v4549 = vunpack.c.h.b16 %v3939
    %v4550 = vunpack.c.l.b16 %v3940
    %v4551 = vunpack.c.h.b16 %v3940
    %v4552 = vunpack.c.l.b16 %v3941
    %v4553 = vunpack.c.h.b16 %v3941
    %v4554 = vunpack.c.l.b16 %v3942
    %v4555 = vunpack.c.h.b16 %v3942
    %v4556 = vunpack.c.l.b16 %v3943
    %v4557 = vunpack.c.h.b16 %v3943
    %v4558 = vunpack.c.l.b16 %v3944
    %v4559 = vunpack.c.h.b16 %v3944
    %v4560 = vunpack.c.l.b16 %v3945
    %v4561 = vunpack.c.h.b16 %v3945
    %v4562 = vunpack.c.l.b16 %v3946
    %v4563 = vunpack.c.h.b16 %v3946
    %v4564 = vunpack.c.l.b16 %v3947
    %v4565 = vunpack.c.h.b16 %v3947
    %v4566 = vunpack.c.l.b16 %v3948
    %v4567 = vunpack.c.h.b16 %v3948
    %v4568 = vunpack.c.l.b16 %v3949
    %v4569 = vunpack.c.h.b16 %v3949
    %v4570 = vunpack.c.l.b16 %v3950
    %v4571 = vunpack.c.h.b16 %v3950
    %v4572 = vunpack.c.l.b16 %v3951
    %v4573 = vunpack.c.h.b16 %v3951
    %v4574 = vunpack.c.l.b16 %v3952
    %v4575 = vunpack.c.h.b16 %v3952
    %v4576 = vunpack.c.l.b16 %v3953
    %v4577 = vunpack.c.h.b16 %v3953
    %v4578 = vunpack.c.l.b16 %v3954
    %v4579 = vunpack.c.h.b16 %v3954
    %v4580 = vunpack.c.l.b16 %v3955
    %v4581 = vunpack.c.h.b16 %v3955
    %v4582 = vunpack.c.l.b16 %v3956
    %v4583 = vunpack.c.h.b16 %v3956
    %v4584 = vunpack.c.l.b16 %v3957
    %v4585 = vunpack.c.h.b16 %v3957
    %v4586 = vunpack.c.l.b16 %v3958
    %v4587 = vunpack.c.h.b16 %v3958
    %v4588 = vunpack.c.l.b16 %v3959
    %v4589 = vunpack.c.h.b16 %v3959
    %v4590 = vunpack.c.l.b16 %v3960
    %v4591 = vunpack.c.h.b16 %v3960
    %v4592 = vunpack.c.l.b16 %v3961
    %v4593 = vunpack.c.h.b16 %v3961
    %v4594 = vunpack.c.l.b16 %v3962
    %v4595 = vunpack.c.h.b16 %v3962
    %v4596 = vunpack.c.l.b16 %v3963
    %v4597 = vunpack.c.h.b16 %v3963
    %v4598 = vunpack.c.l.b16 %v3964
    %v4599 = vunpack.c.h.b16 %v3964
    %v4600 = vunpack.c.l.b16 %v3965
    %v4601 = vunpack.c.h.b16 %v3965
    %v4602 = vunpack.c.l.b16 %v3966
    %v4603 = vunpack.c.h.b16 %v3966
    %v4604 = vunpack.c.l.b16 %v3967
    %v4605 = vunpack.c.h.b16 %v3967
    %v4606 = vunpack.c.l.b16 %v3968
    %v4607 = vunpack.c.h.b16 %v3968
    %v4608 = vunpack.c.l.b16 %v3969
    %v4609 = vunpack.c.h.b16 %v3969
    %v4610 = vunpack.c.l.b16 %v3970
    %v4611 = vunpack.c.h.b16 %v3970
    %v4612 = vunpack.c.l.b16 %v3971
    %v4613 = vunpack.c.h.b16 %v3971
    %v4614 = vunpack.c.l.b16 %v3972
    %v4615 = vunpack.c.h.b16 %v3972
    %v4616 = vunpack.c.l.b16 %v3973
    %v4617 = vunpack.c.h.b16 %v3973
    %v4618 = vunpack.c.l.b16 %v3974
    %v4619 = vunpack.c.h.b16 %v3974
    %v4620 = vunpack.c.l.b16 %v3975
    %v4621 = vunpack.c.h.b16 %v3975
    %v4622 = vunpack.c.l.b16 %v3976
    %v4623 = vunpack.c.h.b16 %v3976
    %v4624 = vunpack.c.l.b16 %v3977
    %v4625 = vunpack.c.h.b16 %v3977
    %v4626 = vunpack.c.l.b16 %v3978
    %v4627 = vunpack.c.h.b16 %v3978
    %v4628 = vunpack.c.l.b16 %v3979
    %v4629 = vunpack.c.h.b16 %v3979
    %v4630 = vunpack.c.l.b16 %v3980
    %v4631 = vunpack.c.h.b16 %v3980
    %v4632 = vunpack.c.l.b16 %v3981
    %v4633 = vunpack.c.h.b16 %v3981
    %v4634 = vunpack.c.l.b16 %v3982
    %v4635 = vunpack.c.h.b16 %v3982
    %v4636 = vunpack.c.l.b16 %v3983
    %v4637 = vunpack.c.h.b16 %v3983
    %v4638 = vunpack.c.l.b16 %v3984
    %v4639 = vunpack.c.h.b16 %v3984
    %v4640 = vunpack.c.l.b16 %v3985
    %v4641 = vunpack.c.h.b16 %v3985
    %v4642 = vunpack.c.l.b16 %v3986
    %v4643 = vunpack.c.h.b16 %v3986
    %v4644 = vunpack.c.l.b16 %v3987
    %v4645 = vunpack.c.h.b16 %v3987
    %v4646 = vunpack.c.l.b16 %v3988
    %v4647 = vunpack.c.h.b16 %v3988
    %v4648 = vunpack.c.l.b16 %v3989
    %v4649 = vunpack.c.h.b16 %v3989
    %v4650 = vunpack.c.l.b16 %v3990
    %v4651 = vunpack.c.h.b16 %v3990
    %v4652 = vunpack.c.l.b16 %v3991
    %v4653 = vunpack.c.h.b16 %v3991
    %v4654 = vunpack.c.l.b16 %v3992
    %v4655 = vunpack.c.h.b16 %v3992
    %v4656 = vunpack.c.l.b16 %v3993
    %v4657 = vunpack.c.h.b16 %v3993
    %v4658 = vunpack.c.l.b16 %v3994
    %v4659 = vunpack.c.h.b16 %v3994
    %v4660 = vunpack.c.l.b16 %v3995
    %v4661 = vunpack.c.h.b16 %v3995
    %v4662 = vunpack.c.l.b16 %v3996
    %v4663 = vunpack.c.h.b16 %v3996
    %v4664 = vunpack.c.l.b16 %v3997
    %v4665 = vunpack.c.h.b16 %v3997
    %v4666 = vunpack.c.l.b16 %v3998
    %v4667 = vunpack.c.h.b16 %v3998
    %v4668 = vunpack.c.l.b16 %v3999
    %v4669 = vunpack.c.h.b16 %v3999
    %v4670 = vunpack.c.l.b16 %v4000
    %v4671 = vunpack.c.h.b16 %v4000
    %v4672 = vunpack.c.l.b16 %v4001
    %v4673 = vunpack.c.h.b16 %v4001
    %v4674 = vunpack.c.l.b16 %v4002
    %v4675 = vunpack.c.h.b16 %v4002
    %v4676 = vunpack.c.l.b16 %v4003
    %v4677 = vunpack.c.h.b16 %v4003
    %v4678 = vunpack.c.l.b16 %v4004
    %v4679 = vunpack.c.h.b16 %v4004
    %v4680 = vunpack.c.l.b16 %v4005
    %v4681 = vunpack.c.h.b16 %v4005
    %v4682 = vunpack.c.l.b16 %v4006
    %v4683 = vunpack.c.h.b16 %v4006
    %v4684 = vunpack.c.l.b16 %v4007
    %v4685 = vunpack.c.h.b16 %v4007
    %v4686 = vunpack.c.l.b16 %v4008
    %v4687 = vunpack.c.h.b16 %v4008
    %v4688 = vunpack.c.l.b16 %v4009
    %v4689 = vunpack.c.h.b16 %v4009
    %v4690 = vunpack.c.l.b16 %v4010
    %v4691 = vunpack.c.h.b16 %v4010
    %v4692 = vunpack.c.l.b16 %v4011
    %v4693 = vunpack.c.h.b16 %v4011
    %v4694 = vunpack.c.l.b16 %v4012
    %v4695 = vunpack.c.h.b16 %v4012
    %v4696 = vunpack.c.l.b16 %v4013
    %v4697 = vunpack.c.h.b16 %v4013
    %v4698 = vunpack.c.l.b16 %v4014
    %v4699 = vunpack.c.h.b16 %v4014
    %v4700 = vunpack.c.l.b16 %v4015
    %v4701 = vunpack.c.h.b16 %v4015
    %v4702 = vunpack.c.l.b16 %v4016
    %v4703 = vunpack.c.h.b16 %v4016
    %v4704 = vunpack.c.l.b16 %v4017
    %v4705 = vunpack.c.h.b16 %v4017
    %v4706 = vunpack.c.l.b16 %v4018
    %v4707 = vunpack.c.h.b16 %v4018
    %v4708 = vunpack.c.l.b16 %v4019
    %v4709 = vunpack.c.h.b16 %v4019
    %v4710 = vunpack.c.l.b16 %v4020
    %v4711 = vunpack.c.h.b16 %v4020
    %v4712 = vunpack.c.l.b16 %v4021
    %v4713 = vunpack.c.h.b16 %v4021
    %v4714 = vunpack.c.l.b16 %v4022
    %v4715 = vunpack.c.h.b16 %v4022
    %v4716 = vunpack.c.l.b16 %v4023
    %v4717 = vunpack.c.h.b16 %v4023
    %v4718 = vunpack.c.l.b16 %v4024
    %v4719 = vunpack.c.h.b16 %v4024
    %v4720 = vunpack.c.l.b16 %v4025
    %v4721 = vunpack.c.h.b16 %v4025
    %v4722 = vunpack.c.l.b16 %v4026
    %v4723 = vunpack.c.h.b16 %v4026
    %v4724 = vunpack.c.l.b16 %v4027
    %v4725 = vunpack.c.h.b16 %v4027
    %v4726 = vunpack.c.l.b16 %v4028
    %v4727 = vunpack.c.h.b16 %v4028
    %v4728 = vunpack.c.l.b16 %v4029
    %v4729 = vunpack.c.h.b16 %v4029
    %v4730 = vunpack.c.l.b16 %v4030
    %v4731 = vunpack.c.h.b16 %v4030
    %v4732 = vunpack.c.l.b16 %v4031
    %v4733 = vunpack.c.h.b16 %v4031
    %v4734 = vunpack.c.l.b16 %v4032
    %v4735 = vunpack.c.h.b16 %v4032
    %v4736 = vunpack.c.l.b16 %v4033
    %v4737 = vunpack.c.h.b16 %v4033
    %v4738 = vunpack.c.l.b16 %v4034
    %v4739 = vunpack.c.h.b16 %v4034
    %v4740 = vunpack.c.l.b16 %v4035
    %v4741 = vunpack.c.h.b16 %v4035
    %v4742 = vunpack.c.l.b16 %v4036
    %v4743 = vunpack.c.h.b16 %v4036
    %v4744 = vunpack.c.l.b16 %v4037
    %v4745 = vunpack.c.h.b16 %v4037
    %v4746 = vunpack.c.l.b16 %v4038
    %v4747 = vunpack.c.h.b16 %v4038
    %v4748 = vunpack.c.l.b16 %v4039
    %v4749 = vunpack.c.h.b16 %v4039
    %v4750 = vunpack.c.l.b16 %v4040
    %v4751 = vunpack.c.h.b16 %v4040
    %v4752 = vunpack.c.l.b16 %v4041
    %v4753 = vunpack.c.h.b16 %v4041
    %v4754 = vunpack.c.l.b16 %v4042
    %v4755 = vunpack.c.h.b16 %v4042
    %v4756 = vunpack.c.l.b16 %v4043
    %v4757 = vunpack.c.h.b16 %v4043
    %v4758 = vunpack.c.l.b16 %v4044
    %v4759 = vunpack.c.h.b16 %v4044
    %v4760 = vunpack.c.l.b16 %v4045
    %v4761 = vunpack.c.h.b16 %v4045
    %v4762 = vunpack.c.l.b16 %v4046
    %v4763 = vunpack.c.h.b16 %v4046
    %v4764 = vunpack.c.l.b16 %v4047
    %v4765 = vunpack.c.h.b16 %v4047
    %v4766 = vunpack.c.l.b16 %v4048
    %v4767 = vunpack.c.h.b16 %v4048
    %v4768 = vunpack.c.l.b16 %v4049
    %v4769 = vunpack.c.h.b16 %v4049
    %v4770 = vunpack.c.l.b16 %v4050
    %v4771 = vunpack.c.h.b16 %v4050
    %v4772 = vunpack.c.l.b16 %v4051
    %v4773 = vunpack.c.h.b16 %v4051
    %v4774 = vunpack.c.l.b16 %v4052
    %v4775 = vunpack.c.h.b16 %v4052
    %v4776 = vunpack.c.l.b16 %v4053
    %v4777 = vunpack.c.h.b16 %v4053
    %v4778 = vunpack.c.l.b16 %v4054
    %v4779 = vunpack.c.h.b16 %v4054
    %v4780 = vunpack.c.l.b16 %v4055
    %v4781 = vunpack.c.h.b16 %v4055
    %v4782 = vunpack.c.l.b16 %v4056
    %v4783 = vunpack.c.h.b16 %v4056
    %v4784 = vunpack.c.l.b16 %v4057
    %v4785 = vunpack.c.h.b16 %v4057
    %v4786 = vunpack.c.l.b16 %v4058
    %v4787 = vunpack.c.h.b16 %v4058
    %v4788 = vunpack.c.l.b16 %v4059
    %v4789 = vunpack.c.h.b16 %v4059
    %v4790 = vunpack.c.l.b16 %v4060
    %v4791 = vunpack.c.h.b16 %v4060
    %v4792 = vunpack.c.l.b16 %v4061
    %v4793 = vunpack.c.h.b16 %v4061
    %v4794 = vunpack.c.l.b16 %v4062
    %v4795 = vunpack.c.h.b16 %v4062
    %v4796 = vunpack.c.l.b16 %v4063
    %v4797 = vunpack.c.h.b16 %v4063
    %v4798 = vunpack.c.l.b16 %v4064
    %v4799 = vunpack.c.h.b16 %v4064
    %v4800 = vunpack.c.l.b16 %v4065
    %v4801 = vunpack.c.h.b16 %v4065
    %v4802 = vunpack.c.l.b16 %v4066
    %v4803 = vunpack.c.h.b16 %v4066
    %v4804 = vunpack.c.l.b16 %v4067
    %v4805 = vunpack.c.h.b16 %v4067
    %v4806 = vunpack.c.l.b16 %v4068
    %v4807 = vunpack.c.h.b16 %v4068
    %v4808 = vunpack.c.l.b16 %v4069
    %v4809 = vunpack.c.h.b16 %v4069
    %v4810 = vunpack.c.l.b16 %v4070
    %v4811 = vunpack.c.h.b16 %v4070
    %v4812 = vunpack.c.l.b16 %v4071
    %v4813 = vunpack.c.h.b16 %v4071
    %v4814 = vunpack.c.l.b16 %v4072
    %v4815 = vunpack.c.h.b16 %v4072
    %v4816 = vunpack.c.l.b16 %v4073
    %v4817 = vunpack.c.h.b16 %v4073
    %v4818 = vunpack.c.l.b16 %v4074
    %v4819 = vunpack.c.h.b16 %v4074
    %v4820 = vunpack.c.l.b16 %v4075
    %v4821 = vunpack.c.h.b16 %v4075
    %v4822 = vunpack.c.l.b16 %v4076
    %v4823 = vunpack.c.h.b16 %v4076
    %v4824 = vunpack.c.l.b16 %v4077
    %v4825 = vunpack.c.h.b16 %v4077
    %v4826 = vunpack.c.l.b16 %v4078
    %v4827 = vunpack.c.h.b16 %v4078
    %v4828 = vunpack.c.l.b16 %v4079
    %v4829 = vunpack.c.h.b16 %v4079
    %v4830 = vunpack.c.l.b16 %v4080
    %v4831 = vunpack.c.h.b16 %v4080
    %v4832 = vunpack.c.l.b16 %v4081
    %v4833 = vunpack.c.h.b16 %v4081
    %v4834 = vunpack.c.l.b16 %v4082
    %v4835 = vunpack.c.h.b16 %v4082
    %v4836 = vunpack.c.l.b16 %v4083
    %v4837 = vunpack.c.h.b16 %v4083
    %v4838 = vunpack.c.l.b16 %v4084
    %v4839 = vunpack.c.h.b16 %v4084
    %v4840 = vunpack.c.l.b16 %v4085
    %v4841 = vunpack.c.h.b16 %v4085
    %v4842 = vunpack.c.l.b16 %v4086
    %v4843 = vunpack.c.h.b16 %v4086
    %v4844 = vunpack.c.l.b16 %v4087
    %v4845 = vunpack.c.h.b16 %v4087
    %v4846 = vunpack.c.l.b16 %v4088
    %v4847 = vunpack.c.h.b16 %v4088
    %v4848 = vunpack.c.l.b16 %v4089
    %v4849 = vunpack.c.h.b16 %v4089
    %v4850 = vunpack.c.l.b16 %v4090
    %v4851 = vunpack.c.h.b16 %v4090
    %v4852 = vunpack.c.l.b16 %v4091
    %v4853 = vunpack.c.h.b16 %v4091
    %v4854 = vunpack.c.l.b16 %v4092
    %v4855 = vunpack.c.h.b16 %v4092
    %v4856 = vunpack.c.l.b16 %v4093
    %v4857 = vunpack.c.h.b16 %v4093
    %v4858 = vunpack.c.l.b16 %v4094
    %v4859 = vunpack.c.h.b16 %v4094
    %v4860 = vunpack.c.l.b16 %v4095
    %v4861 = vunpack.c.h.b16 %v4095
    %v4862 = vunpack.c.l.b16 %v4096
    %v4863 = vunpack.c.h.b16 %v4096
    %v4864 = vunpack.c.l.b16 %v4097
    %v4865 = vunpack.c.h.b16 %v4097
    %v4866 = vpack.c.b16 %v4362, %v4354
    %v4867 = vpack.c.b16 %v4363, %v4355
    %v4868 = vpack.c.b16 %v4364, %v4356
    %v4869 = vpack.c.b16 %v4365, %v4357
    %v4870 = vpack.c.b16 %v4366, %v4358
    %v4871 = vpack.c.b16 %v4367, %v4359
    %v4872 = vpack.c.b16 %v4368, %v4360
    %v4873 = vpack.c.b16 %v4369, %v4361
    %v4874 = vpack.c.b16 %v4378, %v4370
    %v4875 = vpack.c.b16 %v4379, %v4371
    %v4876 = vpack.c.b16 %v4380, %v4372
    %v4877 = vpack.c.b16 %v4381, %v4373
    %v4878 = vpack.c.b16 %v4382, %v4374
    %v4879 = vpack.c.b16 %v4383, %v4375
    %v4880 = vpack.c.b16 %v4384, %v4376
    %v4881 = vpack.c.b16 %v4385, %v4377
    %v4882 = vpack.c.b16 %v4394, %v4386
    %v4883 = vpack.c.b16 %v4395, %v4387
    %v4884 = vpack.c.b16 %v4396, %v4388
    %v4885 = vpack.c.b16 %v4397, %v4389
    %v4886 = vpack.c.b16 %v4398, %v4390
    %v4887 = vpack.c.b16 %v4399, %v4391
    %v4888 = vpack.c.b16 %v4400, %v4392
    %v4889 = vpack.c.b16 %v4401, %v4393
    %v4890 = vpack.c.b16 %v4410, %v4402
    %v4891 = vpack.c.b16 %v4411, %v4403
    %v4892 = vpack.c.b16 %v4412, %v4404
    %v4893 = vpack.c.b16 %v4413, %v4405
    %v4894 = vpack.c.b16 %v4414, %v4406
    %v4895 = vpack.c.b16 %v4415, %v4407
    %v4896 = vpack.c.b16 %v4416, %v4408
    %v4897 = vpack.c.b16 %v4417, %v4409
    %v4898 = vpack.c.b16 %v4426, %v4418
    %v4899 = vpack.c.b16 %v4427, %v4419
    %v4900 = vpack.c.b16 %v4428, %v4420
    %v4901 = vpack.c.b16 %v4429, %v4421
    %v4902 = vpack.c.b16 %v4430, %v4422
    %v4903 = vpack.c.b16 %v4431, %v4423
    %v4904 = vpack.c.b16 %v4432, %v4424
    %v4905 = vpack.c.b16 %v4433, %v4425
    %v4906 = vpack.c.b16 %v4442, %v4434
    %v4907 = vpack.c.b16 %v4443, %v4435
    %v4908 = vpack.c.b16 %v4444, %v4436
    %v4909 = vpack.c.b16 %v4445, %v4437
    %v4910 = vpack.c.b16 %v4446, %v4438
    %v4911 = vpack.c.b16 %v4447, %v4439
    %v4912 = vpack.c.b16 %v4448, %v4440
    %v4913 = vpack.c.b16 %v4449, %v4441
    %v4914 = vpack.c.b16 %v4458, %v4450
    %v4915 = vpack.c.b16 %v4459, %v4451
    %v4916 = vpack.c.b16 %v4460, %v4452
    %v4917 = vpack.c.b16 %v4461, %v4453
    %v4918 = vpack.c.b16 %v4462, %v4454
    %v4919 = vpack.c.b16 %v4463, %v4455
    %v4920 = vpack.c.b16 %v4464, %v4456
    %v4921 = vpack.c.b16 %v4465, %v4457
    %v4922 = vpack.c.b16 %v4474, %v4466
    %v4923 = vpack.c.b16 %v4475, %v4467
    %v4924 = vpack.c.b16 %v4476, %v4468
    %v4925 = vpack.c.b16 %v4477, %v4469
    %v4926 = vpack.c.b16 %v4478, %v4470
    %v4927 = vpack.c.b16 %v4479, %v4471
    %v4928 = vpack.c.b16 %v4480, %v4472
    %v4929 = vpack.c.b16 %v4481, %v4473
    %v4930 = vpack.c.b16 %v4490, %v4482
    %v4931 = vpack.c.b16 %v4491, %v4483
    %v4932 = vpack.c.b16 %v4492, %v4484
    %v4933 = vpack.c.b16 %v4493, %v4485
    %v4934 = vpack.c.b16 %v4494, %v4486
    %v4935 = vpack.c.b16 %v4495, %v4487
    %v4936 = vpack.c.b16 %v4496, %v4488
    %v4937 = vpack.c.b16 %v4497, %v4489
    %v4938 = vpack.c.b16 %v4506, %v4498
    %v4939 = vpack.c.b16 %v4507, %v4499
    %v4940 = vpack.c.b16 %v4508, %v4500
    %v4941 = vpack.c.b16 %v4509, %v4501
    %v4942 = vpack.c.b16 %v4510, %v4502
    %v4943 = vpack.c.b16 %v4511, %v4503
    %v4944 = vpack.c.b16 %v4512, %v4504
    %v4945 = vpack.c.b16 %v4513, %v4505
    %v4946 = vpack.c.b16 %v4522, %v4514
    %v4947 = vpack.c.b16 %v4523, %v4515
    %v4948 = vpack.c.b16 %v4524, %v4516
    %v4949 = vpack.c.b16 %v4525, %v4517
    %v4950 = vpack.c.b16 %v4526, %v4518
    %v4951 = vpack.c.b16 %v4527, %v4519
    %v4952 = vpack.c.b16 %v4528, %v4520
    %v4953 = vpack.c.b16 %v4529, %v4521
    %v4954 = vpack.c.b16 %v4538, %v4530
    %v4955 = vpack.c.b16 %v4539, %v4531
    %v4956 = vpack.c.b16 %v4540, %v4532
    %v4957 = vpack.c.b16 %v4541, %v4533
    %v4958 = vpack.c.b16 %v4542, %v4534
    %v4959 = vpack.c.b16 %v4543, %v4535
    %v4960 = vpack.c.b16 %v4544, %v4536
    %v4961 = vpack.c.b16 %v4545, %v4537
    %v4962 = vpack.c.b16 %v4554, %v4546
    %v4963 = vpack.c.b16 %v4555, %v4547
    %v4964 = vpack.c.b16 %v4556, %v4548
    %v4965 = vpack.c.b16 %v4557, %v4549
    %v4966 = vpack.c.b16 %v4558, %v4550
    %v4967 = vpack.c.b16 %v4559, %v4551
    %v4968 = vpack.c.b16 %v4560, %v4552
    %v4969 = vpack.c.b16 %v4561, %v4553
    %v4970 = vpack.c.b16 %v4570, %v4562
    %v4971 = vpack.c.b16 %v4571, %v4563
    %v4972 = vpack.c.b16 %v4572, %v4564
    %v4973 = vpack.c.b16 %v4573, %v4565
    %v4974 = vpack.c.b16 %v4574, %v4566
    %v4975 = vpack.c.b16 %v4575, %v4567
    %v4976 = vpack.c.b16 %v4576, %v4568
    %v4977 = vpack.c.b16 %v4577, %v4569
    %v4978 = vpack.c.b16 %v4586, %v4578
    %v4979 = vpack.c.b16 %v4587, %v4579
    %v4980 = vpack.c.b16 %v4588, %v4580
    %v4981 = vpack.c.b16 %v4589, %v4581
    %v4982 = vpack.c.b16 %v4590, %v4582
    %v4983 = vpack.c.b16 %v4591, %v4583
    %v4984 = vpack.c.b16 %v4592, %v4584
    %v4985 = vpack.c.b16 %v4593, %v4585
    %v4986 = vpack.c.b16 %v4602, %v4594
    %v4987 = vpack.c.b16 %v4603, %v4595
    %v4988 = vpack.c.b16 %v4604, %v4596
    %v4989 = vpack.c.b16 %v4605, %v4597
    %v4990 = vpack.c.b16 %v4606, %v4598
    %v4991 = vpack.c.b16 %v4607, %v4599
    %v4992 = vpack.c.b16 %v4608, %v4600
    %v4993 = vpack.c.b16 %v4609, %v4601
    %v4994 = vpack.c.b16 %v4618, %v4610
    %v4995 = vpack.c.b16 %v4619, %v4611
    %v4996 = vpack.c.b16 %v4620, %v4612
    %v4997 = vpack.c.b16 %v4621, %v4613
    %v4998 = vpack.c.b16 %v4622, %v4614
    %v4999 = vpack.c.b16 %v4623, %v4615
    %v5000 = vpack.c.b16 %v4624, %v4616
    %v5001 = vpack.c.b16 %v4625, %v4617
    %v5002 = vpack.c.b16 %v4634, %v4626
    %v5003 = vpack.c.b16 %v4635, %v4627
    %v5004 = vpack.c.b16 %v4636, %v4628
    %v5005 = vpack.c.b16 %v4637, %v4629
    %v5006 = vpack.c.b16 %v4638, %v4630
    %v5007 = vpack.c.b16 %v4639, %v4631
    %v5008 = vpack.c.b16 %v4640, %v4632
    %v5009 = vpack.c.b16 %v4641, %v4633
    %v5010 = vpack.c.b16 %v4650, %v4642
    %v5011 = vpack.c.b16 %v4651, %v4643
    %v5012 = vpack.c.b16 %v4652, %v4644
    %v5013 = vpack.c.b16 %v4653, %v4645
    %v5014 = vpack.c.b16 %v4654, %v4646
    %v5015 = vpack.c.b16 %v4655, %v4647
    %v5016 = vpack.c.b16 %v4656, %v4648
    %v5017 = vpack.c.b16 %v4657, %v4649
    %v5018 = vpack.c.b16 %v4666, %v4658
    %v5019 = vpack.c.b16 %v4667, %v4659
    %v5020 = vpack.c.b16 %v4668, %v4660
    %v5021 = vpack.c.b16 %v4669, %v4661
    %v5022 = vpack.c.b16 %v4670, %v4662
    %v5023 = vpack.c.b16 %v4671, %v4663
    %v5024 = vpack.c.b16 %v4672, %v4664
    %v5025 = vpack.c.b16 %v4673, %v4665
    %v5026 = vpack.c.b16 %v4682, %v4674
    %v5027 = vpack.c.b16 %v4683, %v4675
    %v5028 = vpack.c.b16 %v4684, %v4676
    %v5029 = vpack.c.b16 %v4685, %v4677
    %v5030 = vpack.c.b16 %v4686, %v4678
    %v5031 = vpack.c.b16 %v4687, %v4679
    %v5032 = vpack.c.b16 %v4688, %v4680
    %v5033 = vpack.c.b16 %v4689, %v4681
    %v5034 = vpack.c.b16 %v4698, %v4690
    %v5035 = vpack.c.b16 %v4699, %v4691
    %v5036 = vpack.c.b16 %v4700, %v4692
    %v5037 = vpack.c.b16 %v4701, %v4693
    %v5038 = vpack.c.b16 %v4702, %v4694
    %v5039 = vpack.c.b16 %v4703, %v4695
    %v5040 = vpack.c.b16 %v4704, %v4696
    %v5041 = vpack.c.b16 %v4705, %v4697
    %v5042 = vpack.c.b16 %v4714, %v4706
    %v5043 = vpack.c.b16 %v4715, %v4707
    %v5044 = vpack.c.b16 %v4716, %v4708
    %v5045 = vpack.c.b16 %v4717, %v4709
    %v5046 = vpack.c.b16 %v4718, %v4710
    %v5047 = vpack.c.b16 %v4719, %v4711
    %v5048 = vpack.c.b16 %v4720, %v4712
    %v5049 = vpack.c.b16 %v4721, %v4713
    %v5050 = vpack.c.b16 %v4730, %v4722
    %v5051 = vpack.c.b16 %v4731, %v4723
    %v5052 = vpack.c.b16 %v4732, %v4724
    %v5053 = vpack.c.b16 %v4733, %v4725
    %v5054 = vpack.c.b16 %v4734, %v4726
    %v5055 = vpack.c.b16 %v4735, %v4727
    %v5056 = vpack.c.b16 %v4736, %v4728
    %v5057 = vpack.c.b16 %v4737, %v4729
    %v5058 = vpack.c.b16 %v4746, %v4738
    %v5059 = vpack.c.b16 %v4747, %v4739
    %v5060 = vpack.c.b16 %v4748, %v4740
    %v5061 = vpack.c.b16 %v4749, %v4741
    %v5062 = vpack.c.b16 %v4750, %v4742
    %v5063 = vpack.c.b16 %v4751, %v4743
    %v5064 = vpack.c.b16 %v4752, %v4744
    %v5065 = vpack.c.b16 %v4753, %v4745
    %v5066 = vpack.c.b16 %v4762, %v4754
    %v5067 = vpack.c.b16 %v4763, %v4755
    %v5068 = vpack.c.b16 %v4764, %v4756
    %v5069 = vpack.c.b16 %v4765, %v4757
    %v5070 = vpack.c.b16 %v4766, %v4758
    %v5071 = vpack.c.b16 %v4767, %v4759
    %v5072 = vpack.c.b16 %v4768, %v4760
    %v5073 = vpack.c.b16 %v4769, %v4761
    %v5074 = vpack.c.b16 %v4778, %v4770
    %v5075 = vpack.c.b16 %v4779, %v4771
    %v5076 = vpack.c.b16 %v4780, %v4772
    %v5077 = vpack.c.b16 %v4781, %v4773
    %v5078 = vpack.c.b16 %v4782, %v4774
    %v5079 = vpack.c.b16 %v4783, %v4775
    %v5080 = vpack.c.b16 %v4784, %v4776
    %v5081 = vpack.c.b16 %v4785, %v4777
    %v5082 = vpack.c.b16 %v4794, %v4786
    %v5083 = vpack.c.b16 %v4795, %v4787
    %v5084 = vpack.c.b16 %v4796, %v4788
    %v5085 = vpack.c.b16 %v4797, %v4789
    %v5086 = vpack.c.b16 %v4798, %v4790
    %v5087 = vpack.c.b16 %v4799, %v4791
    %v5088 = vpack.c.b16 %v4800, %v4792
    %v5089 = vpack.c.b16 %v4801, %v4793
    %v5090 = vpack.c.b16 %v4810, %v4802
    %v5091 = vpack.c.b16 %v4811, %v4803
    %v5092 = vpack.c.b16 %v4812, %v4804
    %v5093 = vpack.c.b16 %v4813, %v4805
    %v5094 = vpack.c.b16 %v4814, %v4806
    %v5095 = vpack.c.b16 %v4815, %v4807
    %v5096 = vpack.c.b16 %v4816, %v4808
    %v5097 = vpack.c.b16 %v4817, %v4809
    %v5098 = vpack.c.b16 %v4826, %v4818
    %v5099 = vpack.c.b16 %v4827, %v4819
    %v5100 = vpack.c.b16 %v4828, %v4820
    %v5101 = vpack.c.b16 %v4829, %v4821
    %v5102 = vpack.c.b16 %v4830, %v4822
    %v5103 = vpack.c.b16 %v4831, %v4823
    %v5104 = vpack.c.b16 %v4832, %v4824
    %v5105 = vpack.c.b16 %v4833, %v4825
    %v5106 = vpack.c.b16 %v4842, %v4834
    %v5107 = vpack.c.b16 %v4843, %v4835
    %v5108 = vpack.c.b16 %v4844, %v4836
    %v5109 = vpack.c.b16 %v4845, %v4837
    %v5110 = vpack.c.b16 %v4846, %v4838
    %v5111 = vpack.c.b16 %v4847, %v4839
    %v5112 = vpack.c.b16 %v4848, %v4840
    %v5113 = vpack.c.b16 %v4849, %v4841
    %v5114 = vpack.c.b16 %v4858, %v4850
    %v5115 = vpack.c.b16 %v4859, %v4851
    %v5116 = vpack.c.b16 %v4860, %v4852
    %v5117 = vpack.c.b16 %v4861, %v4853
    %v5118 = vpack.c.b16 %v4862, %v4854
    %v5119 = vpack.c.b16 %v4863, %v4855
    %v5120 = vpack.c.b16 %v4864, %v4856
    %v5121 = vpack.c.b16 %v4865, %v4857
    %5378 = vmatprep.subr.bf16.mxu0 %v4923
    %5379 = vmatpush1.bf16.msra.mxu0 %v4922
    %5380 = vmatprep.subr.bf16.mxu0 %v4915
    %5381 = vmatpush1.bf16.msra.mxu0 %v4914
    %5382 = vmatprep.subr.bf16.mxu0 %v4907
    %5383 = vmatpush1.bf16.msra.mxu0 %v4906
    %5384 = vmatprep.subr.bf16.mxu0 %v4899
    %5385 = vmatpush1.bf16.msra.mxu0 %v4898
    %5386 = vmatprep.subr.bf16.mxu0 %v4891
    %5387 = vmatpush1.bf16.msra.mxu0 %v4890
    %5388 = vmatprep.subr.bf16.mxu0 %v4883
    %5389 = vmatpush1.bf16.msra.mxu0 %v4882
    %5390 = vmatprep.subr.bf16.mxu0 %v4875
    %5391 = vmatpush1.bf16.msra.mxu0 %v4874
    %5392 = vmatprep.subr.bf16.mxu0 %v4867
    %5393 = vmatpush1.bf16.msra.mxu0 %v4866
    %5394 = vmatprep.subr.bf16.mxu0 %v4987
    %5395 = vmatpush2.bf16.msra.mxu0 %v4986
    %5396 = vmatprep.subr.bf16.mxu0 %v4979
    %5397 = vmatpush2.bf16.msra.mxu0 %v4978
    %5398 = vmatprep.subr.bf16.mxu0 %v4971
    %5399 = vmatpush2.bf16.msra.mxu0 %v4970
    %5400 = vmatprep.subr.bf16.mxu0 %v4963
    %5401 = vmatpush2.bf16.msra.mxu0 %v4962
    %5402 = vmatprep.subr.bf16.mxu0 %v4955
    %5403 = vmatpush2.bf16.msra.mxu0 %v4954
    %5404 = vmatprep.subr.bf16.mxu0 %v4947
    %5405 = vmatpush2.bf16.msra.mxu0 %v4946
    %5406 = vmatprep.subr.bf16.mxu0 %v4939
    %5407 = vmatpush2.bf16.msra.mxu0 %v4938
    %5408 = vmatprep.subr.bf16.mxu0 %v4931
    %5409 = vmatpush2.bf16.msra.mxu0 %v4930
    %5410 = vmatprep.mubr.bf16.mxu0 %v1915
    %5411 = vmatmul.mubr.bf16.gmra.mxu0 %v1914
    %v5412 = vpop.f32.mrf.mxu0
    %v5413 = vadd.f32 0.0, %v5412
    %v5414 = vpop.f32.mrf.mxu0
    %v5415 = vadd.f32 0.0, %v5414
    %v5416 = vpop.f32.mrf.mxu0
    %v5417 = vpop.f32.mrf.mxu0
    %5418 = vdwg.mxu0
    %5419 = vmatprep.subr.bf16.mxu0 %v5051
    %5420 = vmatpush1.bf16.msra.mxu0 %v5050
    %5421 = vmatprep.subr.bf16.mxu0 %v5043
    %5422 = vmatpush1.bf16.msra.mxu0 %v5042
    %5423 = vmatprep.subr.bf16.mxu0 %v5035
    %5424 = vmatpush1.bf16.msra.mxu0 %v5034
    %5425 = vmatprep.subr.bf16.mxu0 %v5027
    %5426 = vmatpush1.bf16.msra.mxu0 %v5026
    %5427 = vmatprep.subr.bf16.mxu0 %v5019
    %5428 = vmatpush1.bf16.msra.mxu0 %v5018
    %5429 = vmatprep.subr.bf16.mxu0 %v5011
    %5430 = vmatpush1.bf16.msra.mxu0 %v5010
    %5431 = vmatprep.subr.bf16.mxu0 %v5003
    %5432 = vmatpush1.bf16.msra.mxu0 %v5002
    %5433 = vmatprep.subr.bf16.mxu0 %v4995
    %5434 = vmatpush1.bf16.msra.mxu0 %v4994
    %5435 = vmatprep.subr.bf16.mxu0 %v5115
    %5436 = vmatpush2.bf16.msra.mxu0 %v5114
    %5437 = vmatprep.subr.bf16.mxu0 %v5107
    %5438 = vmatpush2.bf16.msra.mxu0 %v5106
    %5439 = vmatprep.subr.bf16.mxu0 %v5099
    %5440 = vmatpush2.bf16.msra.mxu0 %v5098
    %5441 = vmatprep.subr.bf16.mxu0 %v5091
    %5442 = vmatpush2.bf16.msra.mxu0 %v5090
    %5443 = vmatprep.subr.bf16.mxu0 %v5083
    %5444 = vmatpush2.bf16.msra.mxu0 %v5082
    %5445 = vmatprep.subr.bf16.mxu0 %v5075
    %5446 = vmatpush2.bf16.msra.mxu0 %v5074
    %5447 = vmatprep.subr.bf16.mxu0 %v5067
    %5448 = vmatpush2.bf16.msra.mxu0 %v5066
    %5449 = vmatprep.subr.bf16.mxu0 %v5059
    %5450 = vmatpush2.bf16.msra.mxu0 %v5058
    %5451 = vmatprep.mubr.bf16.mxu0 %v1917
    %5452 = vmatmul.mubr.bf16.gmra.mxu0 %v1916
    %v5453 = vpop.f32.mrf.mxu0
    %v5454 = vadd.f32 %v5413, %v5453
    %v5455 = vpop.f32.mrf.mxu0
    %v5456 = vadd.f32 %v5415, %v5455
    %v5457 = vpop.f32.mrf.mxu0
    %v5458 = vpop.f32.mrf.mxu0
    %5459 = vdwg.mxu0
    %5460 = vmatprep.subr.bf16.mxu0 %v4925
    %5461 = vmatpush1.bf16.msra.mxu0 %v4924
    %5462 = vmatprep.subr.bf16.mxu0 %v4917
    %5463 = vmatpush1.bf16.msra.mxu0 %v4916
    %5464 = vmatprep.subr.bf16.mxu0 %v4909
    %5465 = vmatpush1.bf16.msra.mxu0 %v4908
    %5466 = vmatprep.subr.bf16.mxu0 %v4901
    %5467 = vmatpush1.bf16.msra.mxu0 %v4900
    %5468 = vmatprep.subr.bf16.mxu0 %v4893
    %5469 = vmatpush1.bf16.msra.mxu0 %v4892
    %5470 = vmatprep.subr.bf16.mxu0 %v4885
    %5471 = vmatpush1.bf16.msra.mxu0 %v4884
    %5472 = vmatprep.subr.bf16.mxu0 %v4877
    %5473 = vmatpush1.bf16.msra.mxu0 %v4876
    %5474 = vmatprep.subr.bf16.mxu0 %v4869
    %5475 = vmatpush1.bf16.msra.mxu0 %v4868
    %5476 = vmatprep.subr.bf16.mxu0 %v4989
    %5477 = vmatpush2.bf16.msra.mxu0 %v4988
    %5478 = vmatprep.subr.bf16.mxu0 %v4981
    %5479 = vmatpush2.bf16.msra.mxu0 %v4980
    %5480 = vmatprep.subr.bf16.mxu0 %v4973
    %5481 = vmatpush2.bf16.msra.mxu0 %v4972
    %5482 = vmatprep.subr.bf16.mxu0 %v4965
    %5483 = vmatpush2.bf16.msra.mxu0 %v4964
    %5484 = vmatprep.subr.bf16.mxu0 %v4957
    %5485 = vmatpush2.bf16.msra.mxu0 %v4956
    %5486 = vmatprep.subr.bf16.mxu0 %v4949
    %5487 = vmatpush2.bf16.msra.mxu0 %v4948
    %5488 = vmatprep.subr.bf16.mxu0 %v4941
    %5489 = vmatpush2.bf16.msra.mxu0 %v4940
    %5490 = vmatprep.subr.bf16.mxu0 %v4933
    %5491 = vmatpush2.bf16.msra.mxu0 %v4932
    %5492 = vmatprep.mubr.bf16.mxu0 %v1915
    %5493 = vmatmul.mubr.bf16.gmra.mxu0 %v1914
    %v5494 = vpop.f32.mrf.mxu0
    %v5495 = vadd.f32 0.0, %v5494
    %v5496 = vpop.f32.mrf.mxu0
    %v5497 = vadd.f32 0.0, %v5496
    %v5498 = vpop.f32.mrf.mxu0
    %v5499 = vpop.f32.mrf.mxu0
    %5500 = vdwg.mxu0
    %5501 = vmatprep.subr.bf16.mxu0 %v5053
    %5502 = vmatpush1.bf16.msra.mxu0 %v5052
    %5503 = vmatprep.subr.bf16.mxu0 %v5045
    %5504 = vmatpush1.bf16.msra.mxu0 %v5044
    %5505 = vmatprep.subr.bf16.mxu0 %v5037
    %5506 = vmatpush1.bf16.msra.mxu0 %v5036
    %5507 = vmatprep.subr.bf16.mxu0 %v5029
    %5508 = vmatpush1.bf16.msra.mxu0 %v5028
    %5509 = vmatprep.subr.bf16.mxu0 %v5021
    %5510 = vmatpush1.bf16.msra.mxu0 %v5020
    %5511 = vmatprep.subr.bf16.mxu0 %v5013
    %5512 = vmatpush1.bf16.msra.mxu0 %v5012
    %5513 = vmatprep.subr.bf16.mxu0 %v5005
    %5514 = vmatpush1.bf16.msra.mxu0 %v5004
    %5515 = vmatprep.subr.bf16.mxu0 %v4997
    %5516 = vmatpush1.bf16.msra.mxu0 %v4996
    %5517 = vmatprep.subr.bf16.mxu0 %v5117
    %5518 = vmatpush2.bf16.msra.mxu0 %v5116
    %5519 = vmatprep.subr.bf16.mxu0 %v5109
    %5520 = vmatpush2.bf16.msra.mxu0 %v5108
    %5521 = vmatprep.subr.bf16.mxu0 %v5101
    %5522 = vmatpush2.bf16.msra.mxu0 %v5100
    %5523 = vmatprep.subr.bf16.mxu0 %v5093
    %5524 = vmatpush2.bf16.msra.mxu0 %v5092
    %5525 = vmatprep.subr.bf16.mxu0 %v5085
    %5526 = vmatpush2.bf16.msra.mxu0 %v5084
    %5527 = vmatprep.subr.bf16.mxu0 %v5077
    %5528 = vmatpush2.bf16.msra.mxu0 %v5076
    %5529 = vmatprep.subr.bf16.mxu0 %v5069
    %5530 = vmatpush2.bf16.msra.mxu0 %v5068
    %5531 = vmatprep.subr.bf16.mxu0 %v5061
    %5532 = vmatpush2.bf16.msra.mxu0 %v5060
    %5533 = vmatprep.mubr.bf16.mxu0 %v1917
    %5534 = vmatmul.mubr.bf16.gmra.mxu0 %v1916
    %v5535 = vpop.f32.mrf.mxu0
    %v5536 = vadd.f32 %v5495, %v5535
    %v5537 = vpop.f32.mrf.mxu0
    %v5538 = vadd.f32 %v5497, %v5537
    %v5539 = vpop.f32.mrf.mxu0
    %v5540 = vpop.f32.mrf.mxu0
    %5541 = vdwg.mxu0
    %5542 = vmatprep.subr.bf16.mxu0 %v4927
    %5543 = vmatpush1.bf16.msra.mxu0 %v4926
    %5544 = vmatprep.subr.bf16.mxu0 %v4919
    %5545 = vmatpush1.bf16.msra.mxu0 %v4918
    %5546 = vmatprep.subr.bf16.mxu0 %v4911
    %5547 = vmatpush1.bf16.msra.mxu0 %v4910
    %5548 = vmatprep.subr.bf16.mxu0 %v4903
    %5549 = vmatpush1.bf16.msra.mxu0 %v4902
    %5550 = vmatprep.subr.bf16.mxu0 %v4895
    %5551 = vmatpush1.bf16.msra.mxu0 %v4894
    %5552 = vmatprep.subr.bf16.mxu0 %v4887
    %5553 = vmatpush1.bf16.msra.mxu0 %v4886
    %5554 = vmatprep.subr.bf16.mxu0 %v4879
    %5555 = vmatpush1.bf16.msra.mxu0 %v4878
    %5556 = vmatprep.subr.bf16.mxu0 %v4871
    %5557 = vmatpush1.bf16.msra.mxu0 %v4870
    %5558 = vmatprep.subr.bf16.mxu0 %v4991
    %5559 = vmatpush2.bf16.msra.mxu0 %v4990
    %5560 = vmatprep.subr.bf16.mxu0 %v4983
    %5561 = vmatpush2.bf16.msra.mxu0 %v4982
    %5562 = vmatprep.subr.bf16.mxu0 %v4975
    %5563 = vmatpush2.bf16.msra.mxu0 %v4974
    %5564 = vmatprep.subr.bf16.mxu0 %v4967
    %5565 = vmatpush2.bf16.msra.mxu0 %v4966
    %5566 = vmatprep.subr.bf16.mxu0 %v4959
    %5567 = vmatpush2.bf16.msra.mxu0 %v4958
    %5568 = vmatprep.subr.bf16.mxu0 %v4951
    %5569 = vmatpush2.bf16.msra.mxu0 %v4950
    %5570 = vmatprep.subr.bf16.mxu0 %v4943
    %5571 = vmatpush2.bf16.msra.mxu0 %v4942
    %5572 = vmatprep.subr.bf16.mxu0 %v4935
    %5573 = vmatpush2.bf16.msra.mxu0 %v4934
    %5574 = vmatprep.mubr.bf16.mxu0 %v1915
    %5575 = vmatmul.mubr.bf16.gmra.mxu0 %v1914
    %v5576 = vpop.f32.mrf.mxu0
    %v5577 = vadd.f32 0.0, %v5576
    %v5578 = vpop.f32.mrf.mxu0
    %v5579 = vadd.f32 0.0, %v5578
    %v5580 = vpop.f32.mrf.mxu0
    %v5581 = vpop.f32.mrf.mxu0
    %5582 = vdwg.mxu0
    %5583 = vmatprep.subr.bf16.mxu0 %v5055
    %5584 = vmatpush1.bf16.msra.mxu0 %v5054
    %5585 = vmatprep.subr.bf16.mxu0 %v5047
    %5586 = vmatpush1.bf16.msra.mxu0 %v5046
    %5587 = vmatprep.subr.bf16.mxu0 %v5039
    %5588 = vmatpush1.bf16.msra.mxu0 %v5038
    %5589 = vmatprep.subr.bf16.mxu0 %v5031
    %5590 = vmatpush1.bf16.msra.mxu0 %v5030
    %5591 = vmatprep.subr.bf16.mxu0 %v5023
    %5592 = vmatpush1.bf16.msra.mxu0 %v5022
    %5593 = vmatprep.subr.bf16.mxu0 %v5015
    %5594 = vmatpush1.bf16.msra.mxu0 %v5014
    %5595 = vmatprep.subr.bf16.mxu0 %v5007
    %5596 = vmatpush1.bf16.msra.mxu0 %v5006
    %5597 = vmatprep.subr.bf16.mxu0 %v4999
    %5598 = vmatpush1.bf16.msra.mxu0 %v4998
    %5599 = vmatprep.subr.bf16.mxu0 %v5119
    %5600 = vmatpush2.bf16.msra.mxu0 %v5118
    %5601 = vmatprep.subr.bf16.mxu0 %v5111
    %5602 = vmatpush2.bf16.msra.mxu0 %v5110
    %5603 = vmatprep.subr.bf16.mxu0 %v5103
    %5604 = vmatpush2.bf16.msra.mxu0 %v5102
    %5605 = vmatprep.subr.bf16.mxu0 %v5095
    %5606 = vmatpush2.bf16.msra.mxu0 %v5094
    %5607 = vmatprep.subr.bf16.mxu0 %v5087
    %5608 = vmatpush2.bf16.msra.mxu0 %v5086
    %5609 = vmatprep.subr.bf16.mxu0 %v5079
    %5610 = vmatpush2.bf16.msra.mxu0 %v5078
    %5611 = vmatprep.subr.bf16.mxu0 %v5071
    %5612 = vmatpush2.bf16.msra.mxu0 %v5070
    %5613 = vmatprep.subr.bf16.mxu0 %v5063
    %5614 = vmatpush2.bf16.msra.mxu0 %v5062
    %5615 = vmatprep.mubr.bf16.mxu0 %v1917
    %5616 = vmatmul.mubr.bf16.gmra.mxu0 %v1916
    %v5617 = vpop.f32.mrf.mxu0
    %v5618 = vadd.f32 %v5577, %v5617
    %v5619 = vpop.f32.mrf.mxu0
    %v5620 = vadd.f32 %v5579, %v5619
    %v5621 = vpop.f32.mrf.mxu0
    %v5622 = vpop.f32.mrf.mxu0
    %5623 = vdwg.mxu0
    %5624 = vmatprep.subr.bf16.mxu0 %v4929
    %5625 = vmatpush1.bf16.msra.mxu0 %v4928
    %5626 = vmatprep.subr.bf16.mxu0 %v4921
    %5627 = vmatpush1.bf16.msra.mxu0 %v4920
    %5628 = vmatprep.subr.bf16.mxu0 %v4913
    %5629 = vmatpush1.bf16.msra.mxu0 %v4912
    %5630 = vmatprep.subr.bf16.mxu0 %v4905
    %5631 = vmatpush1.bf16.msra.mxu0 %v4904
    %5632 = vmatprep.subr.bf16.mxu0 %v4897
    %5633 = vmatpush1.bf16.msra.mxu0 %v4896
    %5634 = vmatprep.subr.bf16.mxu0 %v4889
    %5635 = vmatpush1.bf16.msra.mxu0 %v4888
    %5636 = vmatprep.subr.bf16.mxu0 %v4881
    %5637 = vmatpush1.bf16.msra.mxu0 %v4880
    %5638 = vmatprep.subr.bf16.mxu0 %v4873
    %5639 = vmatpush1.bf16.msra.mxu0 %v4872
    %5640 = vmatprep.subr.bf16.mxu0 %v4993
    %5641 = vmatpush2.bf16.msra.mxu0 %v4992
    %5642 = vmatprep.subr.bf16.mxu0 %v4985
    %5643 = vmatpush2.bf16.msra.mxu0 %v4984
    %5644 = vmatprep.subr.bf16.mxu0 %v4977
    %5645 = vmatpush2.bf16.msra.mxu0 %v4976
    %5646 = vmatprep.subr.bf16.mxu0 %v4969
    %5647 = vmatpush2.bf16.msra.mxu0 %v4968
    %5648 = vmatprep.subr.bf16.mxu0 %v4961
    %5649 = vmatpush2.bf16.msra.mxu0 %v4960
    %5650 = vmatprep.subr.bf16.mxu0 %v4953
    %5651 = vmatpush2.bf16.msra.mxu0 %v4952
    %5652 = vmatprep.subr.bf16.mxu0 %v4945
    %5653 = vmatpush2.bf16.msra.mxu0 %v4944
    %5654 = vmatprep.subr.bf16.mxu0 %v4937
    %5655 = vmatpush2.bf16.msra.mxu0 %v4936
    %5656 = vmatprep.mubr.bf16.mxu0 %v1915
    %5657 = vmatmul.mubr.bf16.gmra.mxu0 %v1914
    %v5658 = vpop.f32.mrf.mxu0
    %v5659 = vadd.f32 0.0, %v5658
    %v5660 = vpop.f32.mrf.mxu0
    %v5661 = vadd.f32 0.0, %v5660
    %v5662 = vpop.f32.mrf.mxu0
    %v5663 = vpop.f32.mrf.mxu0
    %5664 = vdwg.mxu0
    %5665 = vmatprep.subr.bf16.mxu0 %v5057
    %5666 = vmatpush1.bf16.msra.mxu0 %v5056
    %5667 = vmatprep.subr.bf16.mxu0 %v5049
    %5668 = vmatpush1.bf16.msra.mxu0 %v5048
    %5669 = vmatprep.subr.bf16.mxu0 %v5041
    %5670 = vmatpush1.bf16.msra.mxu0 %v5040
    %5671 = vmatprep.subr.bf16.mxu0 %v5033
    %5672 = vmatpush1.bf16.msra.mxu0 %v5032
    %5673 = vmatprep.subr.bf16.mxu0 %v5025
    %5674 = vmatpush1.bf16.msra.mxu0 %v5024
    %5675 = vmatprep.subr.bf16.mxu0 %v5017
    %5676 = vmatpush1.bf16.msra.mxu0 %v5016
    %5677 = vmatprep.subr.bf16.mxu0 %v5009
    %5678 = vmatpush1.bf16.msra.mxu0 %v5008
    %5679 = vmatprep.subr.bf16.mxu0 %v5001
    %5680 = vmatpush1.bf16.msra.mxu0 %v5000
    %5681 = vmatprep.subr.bf16.mxu0 %v5121
    %5682 = vmatpush2.bf16.msra.mxu0 %v5120
    %5683 = vmatprep.subr.bf16.mxu0 %v5113
    %5684 = vmatpush2.bf16.msra.mxu0 %v5112
    %5685 = vmatprep.subr.bf16.mxu0 %v5105
    %5686 = vmatpush2.bf16.msra.mxu0 %v5104
    %5687 = vmatprep.subr.bf16.mxu0 %v5097
    %5688 = vmatpush2.bf16.msra.mxu0 %v5096
    %5689 = vmatprep.subr.bf16.mxu0 %v5089
    %5690 = vmatpush2.bf16.msra.mxu0 %v5088
    %5691 = vmatprep.subr.bf16.mxu0 %v5081
    %5692 = vmatpush2.bf16.msra.mxu0 %v5080
    %5693 = vmatprep.subr.bf16.mxu0 %v5073
    %5694 = vmatpush2.bf16.msra.mxu0 %v5072
    %5695 = vmatprep.subr.bf16.mxu0 %v5065
    %5696 = vmatpush2.bf16.msra.mxu0 %v5064
    %5697 = vmatprep.mubr.bf16.mxu0 %v1917
    %5698 = vmatmul.mubr.bf16.gmra.mxu0 %v1916
    %v5699 = vpop.f32.mrf.mxu0
    %v5700 = vadd.f32 %v5659, %v5699
    %v5701 = vpop.f32.mrf.mxu0
    %v5702 = vadd.f32 %v5661, %v5701
    %v5703 = vpop.f32.mrf.mxu0
    %v5704 = vpop.f32.mrf.mxu0
    %5705 = vdwg.mxu0
    %v5706 = vld [vmem:[%s12] sm:$0xff]
    %v5708 = vlaneseq
    %v5709 = vshrl.u32 %v5708, 7
    %v5710 = vsub.s32 0, %v5709
    %v5711 = vrot.slane %v5706, %v5710
    %v5712 = vlaneseq
    %v5713 = vshrl.u32 %v5712, 7
    %v5714 = vsub.s32 1, %v5713
    %v5715 = vrot.slane %v5706, %v5714
    %v5716 = vlaneseq
    %v5717 = vshrl.u32 %v5716, 7
    %v5718 = vsub.s32 2, %v5717
    %v5719 = vrot.slane %v5706, %v5718
    %v5720 = vlaneseq
    %v5721 = vshrl.u32 %v5720, 7
    %v5722 = vsub.s32 3, %v5721
    %v5723 = vrot.slane %v5706, %v5722
    %v5724 = vlaneseq
    %v5725 = vshrl.u32 %v5724, 7
    %v5726 = vsub.s32 4, %v5725
    %v5727 = vrot.slane %v5706, %v5726
    %v5728 = vlaneseq
    %v5729 = vshrl.u32 %v5728, 7
    %v5730 = vsub.s32 5, %v5729
    %v5731 = vrot.slane %v5706, %v5730
    %v5732 = vlaneseq
    %v5733 = vshrl.u32 %v5732, 7
    %v5734 = vsub.s32 6, %v5733
    %v5735 = vrot.slane %v5706, %v5734
    %v5736 = vlaneseq
    %v5737 = vshrl.u32 %v5736, 7
    %v5738 = vsub.s32 7, %v5737
    %v5739 = vrot.slane %v5706, %v5738
    %v5748 = vmul.f32 %v5454, %v5711
    %v5749 = vmul.f32 %v5456, %v5715
    %v5750 = vmul.f32 %v5536, %v5719
    %v5751 = vmul.f32 %v5538, %v5723
    %v5752 = vmul.f32 %v5618, %v5727
    %v5753 = vmul.f32 %v5620, %v5731
    %v5754 = vmul.f32 %v5700, %v5735
    %v5755 = vmul.f32 %v5702, %v5739
    %v5756 = vld [vmem:[%s13] sm:$0xff]
    %v5758 = vlaneseq
    %v5759 = vshrl.u32 %v5758, 7
    %v5760 = vsub.s32 0, %v5759
    %v5761 = vrot.slane %v5756, %v5760
    %v5762 = vlaneseq
    %v5763 = vshrl.u32 %v5762, 7
    %v5764 = vsub.s32 1, %v5763
    %v5765 = vrot.slane %v5756, %v5764
    %v5766 = vlaneseq
    %v5767 = vshrl.u32 %v5766, 7
    %v5768 = vsub.s32 2, %v5767
    %v5769 = vrot.slane %v5756, %v5768
    %v5770 = vlaneseq
    %v5771 = vshrl.u32 %v5770, 7
    %v5772 = vsub.s32 3, %v5771
    %v5773 = vrot.slane %v5756, %v5772
    %v5774 = vlaneseq
    %v5775 = vshrl.u32 %v5774, 7
    %v5776 = vsub.s32 4, %v5775
    %v5777 = vrot.slane %v5756, %v5776
    %v5778 = vlaneseq
    %v5779 = vshrl.u32 %v5778, 7
    %v5780 = vsub.s32 5, %v5779
    %v5781 = vrot.slane %v5756, %v5780
    %v5782 = vlaneseq
    %v5783 = vshrl.u32 %v5782, 7
    %v5784 = vsub.s32 6, %v5783
    %v5785 = vrot.slane %v5756, %v5784
    %v5786 = vlaneseq
    %v5787 = vshrl.u32 %v5786, 7
    %v5788 = vsub.s32 7, %v5787
    %v5789 = vrot.slane %v5756, %v5788
    %v5798 = vadd.f32 %v5748, %v5761
    %v5799 = vadd.f32 %v5749, %v5765
    %v5800 = vadd.f32 %v5750, %v5769
    %v5801 = vadd.f32 %v5751, %v5773
    %v5802 = vadd.f32 %v5752, %v5777
    %v5803 = vadd.f32 %v5753, %v5781
    %v5804 = vadd.f32 %v5754, %v5785
    %v5805 = vadd.f32 %v5755, %v5789
    %v5806 = vmax.f32 %v5798, 0.0
    %v5807 = vmax.f32 %v5799, 0.0
    %v5808 = vmax.f32 %v5800, 0.0
    %v5809 = vmax.f32 %v5801, 0.0
    %v5810 = vmax.f32 %v5802, 0.0
    %v5811 = vmax.f32 %v5803, 0.0
    %v5812 = vmax.f32 %v5804, 0.0
    %v5813 = vmax.f32 %v5805, 0.0
    %v5814 = vpack.c.bf16 %v5806, %v5806
    %v5815 = vpack.c.bf16 %v5807, %v5807
    %v5816 = vpack.c.bf16 %v5808, %v5808
    %v5817 = vpack.c.bf16 %v5809, %v5809
    %v5818 = vpack.c.bf16 %v5810, %v5810
    %v5819 = vpack.c.bf16 %v5811, %v5811
    %v5820 = vpack.c.bf16 %v5812, %v5812
    %v5821 = vpack.c.bf16 %v5813, %v5813
    %s5822 = smul.u32 2, 128
    %s5823 = smul.u32 %s5822, 6
    %s5824 = sshll.u32 %s5823, 4
    %5825 = dma.done %s75, %s5824
    %v5826 = vld [vmem:[#allocation3] sm:$0xff]
    %v5827 = vld [vmem:[#allocation3 + $0x8] sm:$0xff]
    %v5828 = vld [vmem:[#allocation3 + $0x10] sm:$0xff]
    %v5829 = vld [vmem:[#allocation3 + $0x18] sm:$0xff]
    %v5830 = vld [vmem:[#allocation3 + $0x20] sm:$0xff]
    %v5831 = vld [vmem:[#allocation3 + $0x28] sm:$0xff]
    %v5832 = vld [vmem:[#allocation3 + $0x30] sm:$0xff]
    %v5833 = vld [vmem:[#allocation3 + $0x38] sm:$0xff]
    %v5834 = vld [vmem:[#allocation3 + $0x40] sm:$0xff]
    %v5835 = vld [vmem:[#allocation3 + $0x48] sm:$0xff]
    %v5836 = vld [vmem:[#allocation3 + $0x50] sm:$0xff]
    %v5837 = vld [vmem:[#allocation3 + $0x58] sm:$0xff]
    %v5838 = vld [vmem:[#allocation3 + $0x60] sm:$0xff]
    %v5839 = vld [vmem:[#allocation3 + $0x68] sm:$0xff]
    %v5840 = vld [vmem:[#allocation3 + $0x70] sm:$0xff]
    %v5841 = vld [vmem:[#allocation3 + $0x78] sm:$0xff]
    %v5842 = vld [vmem:[#allocation3 + $0x80] sm:$0xff]
    %v5843 = vld [vmem:[#allocation3 + $0x88] sm:$0xff]
    %v5844 = vld [vmem:[#allocation3 + $0x90] sm:$0xff]
    %v5845 = vld [vmem:[#allocation3 + $0x98] sm:$0xff]
    %v5846 = vld [vmem:[#allocation3 + $0xa0] sm:$0xff]
    %v5847 = vld [vmem:[#allocation3 + $0xa8] sm:$0xff]
    %v5848 = vld [vmem:[#allocation3 + $0xb0] sm:$0xff]
    %v5849 = vld [vmem:[#allocation3 + $0xb8] sm:$0xff]
    %v5850 = vld [vmem:[#allocation3 + $0xc0] sm:$0xff]
    %v5851 = vld [vmem:[#allocation3 + $0xc8] sm:$0xff]
    %v5852 = vld [vmem:[#allocation3 + $0xd0] sm:$0xff]
    %v5853 = vld [vmem:[#allocation3 + $0xd8] sm:$0xff]
    %v5854 = vld [vmem:[#allocation3 + $0xe0] sm:$0xff]
    %v5855 = vld [vmem:[#allocation3 + $0xe8] sm:$0xff]
    %v5856 = vld [vmem:[#allocation3 + $0xf0] sm:$0xff]
    %v5857 = vld [vmem:[#allocation3 + $0xf8] sm:$0xff]
    %v5858 = vld [vmem:[#allocation3 + $0x100] sm:$0xff]
    %v5859 = vld [vmem:[#allocation3 + $0x108] sm:$0xff]
    %v5860 = vld [vmem:[#allocation3 + $0x110] sm:$0xff]
    %v5861 = vld [vmem:[#allocation3 + $0x118] sm:$0xff]
    %v5862 = vld [vmem:[#allocation3 + $0x120] sm:$0xff]
    %v5863 = vld [vmem:[#allocation3 + $0x128] sm:$0xff]
    %v5864 = vld [vmem:[#allocation3 + $0x130] sm:$0xff]
    %v5865 = vld [vmem:[#allocation3 + $0x138] sm:$0xff]
    %v5866 = vld [vmem:[#allocation3 + $0x140] sm:$0xff]
    %v5867 = vld [vmem:[#allocation3 + $0x148] sm:$0xff]
    %v5868 = vld [vmem:[#allocation3 + $0x150] sm:$0xff]
    %v5869 = vld [vmem:[#allocation3 + $0x158] sm:$0xff]
    %v5870 = vld [vmem:[#allocation3 + $0x160] sm:$0xff]
    %v5871 = vld [vmem:[#allocation3 + $0x168] sm:$0xff]
    %v5872 = vld [vmem:[#allocation3 + $0x170] sm:$0xff]
    %v5873 = vld [vmem:[#allocation3 + $0x178] sm:$0xff]
    %v5874 = vld [vmem:[#allocation3 + $0x180] sm:$0xff]
    %v5875 = vld [vmem:[#allocation3 + $0x188] sm:$0xff]
    %v5876 = vld [vmem:[#allocation3 + $0x190] sm:$0xff]
    %v5877 = vld [vmem:[#allocation3 + $0x198] sm:$0xff]
    %v5878 = vld [vmem:[#allocation3 + $0x1a0] sm:$0xff]
    %v5879 = vld [vmem:[#allocation3 + $0x1a8] sm:$0xff]
    %v5880 = vld [vmem:[#allocation3 + $0x1b0] sm:$0xff]
    %v5881 = vld [vmem:[#allocation3 + $0x1b8] sm:$0xff]
    %v5882 = vld [vmem:[#allocation3 + $0x1c0] sm:$0xff]
    %v5883 = vld [vmem:[#allocation3 + $0x1c8] sm:$0xff]
    %v5884 = vld [vmem:[#allocation3 + $0x1d0] sm:$0xff]
    %v5885 = vld [vmem:[#allocation3 + $0x1d8] sm:$0xff]
    %v5886 = vld [vmem:[#allocation3 + $0x1e0] sm:$0xff]
    %v5887 = vld [vmem:[#allocation3 + $0x1e8] sm:$0xff]
    %v5888 = vld [vmem:[#allocation3 + $0x1f0] sm:$0xff]
    %v5889 = vld [vmem:[#allocation3 + $0x1f8] sm:$0xff]
    %v5890 = vld [vmem:[#allocation3 + $0x200] sm:$0xff]
    %v5891 = vld [vmem:[#allocation3 + $0x208] sm:$0xff]
    %v5892 = vld [vmem:[#allocation3 + $0x210] sm:$0xff]
    %v5893 = vld [vmem:[#allocation3 + $0x218] sm:$0xff]
    %v5894 = vld [vmem:[#allocation3 + $0x220] sm:$0xff]
    %v5895 = vld [vmem:[#allocation3 + $0x228] sm:$0xff]
    %v5896 = vld [vmem:[#allocation3 + $0x230] sm:$0xff]
    %v5897 = vld [vmem:[#allocation3 + $0x238] sm:$0xff]
    %v5898 = vld [vmem:[#allocation3 + $0x240] sm:$0xff]
    %v5899 = vld [vmem:[#allocation3 + $0x248] sm:$0xff]
    %v5900 = vld [vmem:[#allocation3 + $0x250] sm:$0xff]
    %v5901 = vld [vmem:[#allocation3 + $0x258] sm:$0xff]
    %v5902 = vld [vmem:[#allocation3 + $0x260] sm:$0xff]
    %v5903 = vld [vmem:[#allocation3 + $0x268] sm:$0xff]
    %v5904 = vld [vmem:[#allocation3 + $0x270] sm:$0xff]
    %v5905 = vld [vmem:[#allocation3 + $0x278] sm:$0xff]
    %v5906 = vld [vmem:[#allocation3 + $0x280] sm:$0xff]
    %v5907 = vld [vmem:[#allocation3 + $0x288] sm:$0xff]
    %v5908 = vld [vmem:[#allocation3 + $0x290] sm:$0xff]
    %v5909 = vld [vmem:[#allocation3 + $0x298] sm:$0xff]
    %v5910 = vld [vmem:[#allocation3 + $0x2a0] sm:$0xff]
    %v5911 = vld [vmem:[#allocation3 + $0x2a8] sm:$0xff]
    %v5912 = vld [vmem:[#allocation3 + $0x2b0] sm:$0xff]
    %v5913 = vld [vmem:[#allocation3 + $0x2b8] sm:$0xff]
    %v5914 = vld [vmem:[#allocation3 + $0x2c0] sm:$0xff]
    %v5915 = vld [vmem:[#allocation3 + $0x2c8] sm:$0xff]
    %v5916 = vld [vmem:[#allocation3 + $0x2d0] sm:$0xff]
    %v5917 = vld [vmem:[#allocation3 + $0x2d8] sm:$0xff]
    %v5918 = vld [vmem:[#allocation3 + $0x2e0] sm:$0xff]
    %v5919 = vld [vmem:[#allocation3 + $0x2e8] sm:$0xff]
    %v5920 = vld [vmem:[#allocation3 + $0x2f0] sm:$0xff]
    %v5921 = vld [vmem:[#allocation3 + $0x2f8] sm:$0xff]
    %v5922 = vld [vmem:[#allocation3 + $0x300] sm:$0xff]
    %v5923 = vld [vmem:[#allocation3 + $0x308] sm:$0xff]
    %v5924 = vld [vmem:[#allocation3 + $0x310] sm:$0xff]
    %v5925 = vld [vmem:[#allocation3 + $0x318] sm:$0xff]
    %v5926 = vld [vmem:[#allocation3 + $0x320] sm:$0xff]
    %v5927 = vld [vmem:[#allocation3 + $0x328] sm:$0xff]
    %v5928 = vld [vmem:[#allocation3 + $0x330] sm:$0xff]
    %v5929 = vld [vmem:[#allocation3 + $0x338] sm:$0xff]
    %v5930 = vld [vmem:[#allocation3 + $0x340] sm:$0xff]
    %v5931 = vld [vmem:[#allocation3 + $0x348] sm:$0xff]
    %v5932 = vld [vmem:[#allocation3 + $0x350] sm:$0xff]
    %v5933 = vld [vmem:[#allocation3 + $0x358] sm:$0xff]
    %v5934 = vld [vmem:[#allocation3 + $0x360] sm:$0xff]
    %v5935 = vld [vmem:[#allocation3 + $0x368] sm:$0xff]
    %v5936 = vld [vmem:[#allocation3 + $0x370] sm:$0xff]
    %v5937 = vld [vmem:[#allocation3 + $0x378] sm:$0xff]
    %v5938 = vld [vmem:[#allocation3 + $0x380] sm:$0xff]
    %v5939 = vld [vmem:[#allocation3 + $0x388] sm:$0xff]
    %v5940 = vld [vmem:[#allocation3 + $0x390] sm:$0xff]
    %v5941 = vld [vmem:[#allocation3 + $0x398] sm:$0xff]
    %v5942 = vld [vmem:[#allocation3 + $0x3a0] sm:$0xff]
    %v5943 = vld [vmem:[#allocation3 + $0x3a8] sm:$0xff]
    %v5944 = vld [vmem:[#allocation3 + $0x3b0] sm:$0xff]
    %v5945 = vld [vmem:[#allocation3 + $0x3b8] sm:$0xff]
    %v5946 = vld [vmem:[#allocation3 + $0x3c0] sm:$0xff]
    %v5947 = vld [vmem:[#allocation3 + $0x3c8] sm:$0xff]
    %v5948 = vld [vmem:[#allocation3 + $0x3d0] sm:$0xff]
    %v5949 = vld [vmem:[#allocation3 + $0x3d8] sm:$0xff]
    %v5950 = vld [vmem:[#allocation3 + $0x3e0] sm:$0xff]
    %v5951 = vld [vmem:[#allocation3 + $0x3e8] sm:$0xff]
    %v5952 = vld [vmem:[#allocation3 + $0x3f0] sm:$0xff]
    %v5953 = vld [vmem:[#allocation3 + $0x3f8] sm:$0xff]
    %v5954 = vld [vmem:[#allocation3 + $0x400] sm:$0xff]
    %v5955 = vld [vmem:[#allocation3 + $0x408] sm:$0xff]
    %v5956 = vld [vmem:[#allocation3 + $0x410] sm:$0xff]
    %v5957 = vld [vmem:[#allocation3 + $0x418] sm:$0xff]
    %v5958 = vld [vmem:[#allocation3 + $0x420] sm:$0xff]
    %v5959 = vld [vmem:[#allocation3 + $0x428] sm:$0xff]
    %v5960 = vld [vmem:[#allocation3 + $0x430] sm:$0xff]
    %v5961 = vld [vmem:[#allocation3 + $0x438] sm:$0xff]
    %v5962 = vld [vmem:[#allocation3 + $0x440] sm:$0xff]
    %v5963 = vld [vmem:[#allocation3 + $0x448] sm:$0xff]
    %v5964 = vld [vmem:[#allocation3 + $0x450] sm:$0xff]
    %v5965 = vld [vmem:[#allocation3 + $0x458] sm:$0xff]
    %v5966 = vld [vmem:[#allocation3 + $0x460] sm:$0xff]
    %v5967 = vld [vmem:[#allocation3 + $0x468] sm:$0xff]
    %v5968 = vld [vmem:[#allocation3 + $0x470] sm:$0xff]
    %v5969 = vld [vmem:[#allocation3 + $0x478] sm:$0xff]
    %v5970 = vld [vmem:[#allocation3 + $0x480] sm:$0xff]
    %v5971 = vld [vmem:[#allocation3 + $0x488] sm:$0xff]
    %v5972 = vld [vmem:[#allocation3 + $0x490] sm:$0xff]
    %v5973 = vld [vmem:[#allocation3 + $0x498] sm:$0xff]
    %v5974 = vld [vmem:[#allocation3 + $0x4a0] sm:$0xff]
    %v5975 = vld [vmem:[#allocation3 + $0x4a8] sm:$0xff]
    %v5976 = vld [vmem:[#allocation3 + $0x4b0] sm:$0xff]
    %v5977 = vld [vmem:[#allocation3 + $0x4b8] sm:$0xff]
    %v5978 = vld [vmem:[#allocation3 + $0x4c0] sm:$0xff]
    %v5979 = vld [vmem:[#allocation3 + $0x4c8] sm:$0xff]
    %v5980 = vld [vmem:[#allocation3 + $0x4d0] sm:$0xff]
    %v5981 = vld [vmem:[#allocation3 + $0x4d8] sm:$0xff]
    %v5982 = vld [vmem:[#allocation3 + $0x4e0] sm:$0xff]
    %v5983 = vld [vmem:[#allocation3 + $0x4e8] sm:$0xff]
    %v5984 = vld [vmem:[#allocation3 + $0x4f0] sm:$0xff]
    %v5985 = vld [vmem:[#allocation3 + $0x4f8] sm:$0xff]
    %v5986 = vld [vmem:[#allocation3 + $0x500] sm:$0xff]
    %v5987 = vld [vmem:[#allocation3 + $0x508] sm:$0xff]
    %v5988 = vld [vmem:[#allocation3 + $0x510] sm:$0xff]
    %v5989 = vld [vmem:[#allocation3 + $0x518] sm:$0xff]
    %v5990 = vld [vmem:[#allocation3 + $0x520] sm:$0xff]
    %v5991 = vld [vmem:[#allocation3 + $0x528] sm:$0xff]
    %v5992 = vld [vmem:[#allocation3 + $0x530] sm:$0xff]
    %v5993 = vld [vmem:[#allocation3 + $0x538] sm:$0xff]
    %v5994 = vld [vmem:[#allocation3 + $0x540] sm:$0xff]
    %v5995 = vld [vmem:[#allocation3 + $0x548] sm:$0xff]
    %v5996 = vld [vmem:[#allocation3 + $0x550] sm:$0xff]
    %v5997 = vld [vmem:[#allocation3 + $0x558] sm:$0xff]
    %v5998 = vld [vmem:[#allocation3 + $0x560] sm:$0xff]
    %v5999 = vld [vmem:[#allocation3 + $0x568] sm:$0xff]
    %v6000 = vld [vmem:[#allocation3 + $0x570] sm:$0xff]
    %v6001 = vld [vmem:[#allocation3 + $0x578] sm:$0xff]
    %v6002 = vld [vmem:[#allocation3 + $0x580] sm:$0xff]
    %v6003 = vld [vmem:[#allocation3 + $0x588] sm:$0xff]
    %v6004 = vld [vmem:[#allocation3 + $0x590] sm:$0xff]
    %v6005 = vld [vmem:[#allocation3 + $0x598] sm:$0xff]
    %v6006 = vld [vmem:[#allocation3 + $0x5a0] sm:$0xff]
    %v6007 = vld [vmem:[#allocation3 + $0x5a8] sm:$0xff]
    %v6008 = vld [vmem:[#allocation3 + $0x5b0] sm:$0xff]
    %v6009 = vld [vmem:[#allocation3 + $0x5b8] sm:$0xff]
    %v6010 = vld [vmem:[#allocation3 + $0x5c0] sm:$0xff]
    %v6011 = vld [vmem:[#allocation3 + $0x5c8] sm:$0xff]
    %v6012 = vld [vmem:[#allocation3 + $0x5d0] sm:$0xff]
    %v6013 = vld [vmem:[#allocation3 + $0x5d8] sm:$0xff]
    %v6014 = vld [vmem:[#allocation3 + $0x5e0] sm:$0xff]
    %v6015 = vld [vmem:[#allocation3 + $0x5e8] sm:$0xff]
    %v6016 = vld [vmem:[#allocation3 + $0x5f0] sm:$0xff]
    %v6017 = vld [vmem:[#allocation3 + $0x5f8] sm:$0xff]
    %v6018 = vunpack.c.l.s8.bf16 %v5826
    %v6019 = vunpack.c.l.s8.bf16 %v5827
    %v6020 = vunpack.c.l.s8.bf16 %v5828
    %v6021 = vunpack.c.l.s8.bf16 %v5829
    %v6022 = vunpack.c.l.s8.bf16 %v5830
    %v6023 = vunpack.c.l.s8.bf16 %v5831
    %v6024 = vunpack.c.h.s8.bf16 %v5826
    %v6025 = vunpack.c.h.s8.bf16 %v5827
    %v6026 = vunpack.c.h.s8.bf16 %v5828
    %v6027 = vunpack.c.h.s8.bf16 %v5829
    %v6028 = vunpack.c.h.s8.bf16 %v5830
    %v6029 = vunpack.c.h.s8.bf16 %v5831
    %v6030 = vunpack.c.l.s8.bf16 %v5832
    %v6031 = vunpack.c.l.s8.bf16 %v5833
    %v6032 = vunpack.c.l.s8.bf16 %v5834
    %v6033 = vunpack.c.l.s8.bf16 %v5835
    %v6034 = vunpack.c.l.s8.bf16 %v5836
    %v6035 = vunpack.c.l.s8.bf16 %v5837
    %v6036 = vunpack.c.h.s8.bf16 %v5832
    %v6037 = vunpack.c.h.s8.bf16 %v5833
    %v6038 = vunpack.c.h.s8.bf16 %v5834
    %v6039 = vunpack.c.h.s8.bf16 %v5835
    %v6040 = vunpack.c.h.s8.bf16 %v5836
    %v6041 = vunpack.c.h.s8.bf16 %v5837
    %v6042 = vunpack.c.l.s8.bf16 %v5838
    %v6043 = vunpack.c.l.s8.bf16 %v5839
    %v6044 = vunpack.c.l.s8.bf16 %v5840
    %v6045 = vunpack.c.l.s8.bf16 %v5841
    %v6046 = vunpack.c.l.s8.bf16 %v5842
    %v6047 = vunpack.c.l.s8.bf16 %v5843
    %v6048 = vunpack.c.h.s8.bf16 %v5838
    %v6049 = vunpack.c.h.s8.bf16 %v5839
    %v6050 = vunpack.c.h.s8.bf16 %v5840
    %v6051 = vunpack.c.h.s8.bf16 %v5841
    %v6052 = vunpack.c.h.s8.bf16 %v5842
    %v6053 = vunpack.c.h.s8.bf16 %v5843
    %v6054 = vunpack.c.l.s8.bf16 %v5844
    %v6055 = vunpack.c.l.s8.bf16 %v5845
    %v6056 = vunpack.c.l.s8.bf16 %v5846
    %v6057 = vunpack.c.l.s8.bf16 %v5847
    %v6058 = vunpack.c.l.s8.bf16 %v5848
    %v6059 = vunpack.c.l.s8.bf16 %v5849
    %v6060 = vunpack.c.h.s8.bf16 %v5844
    %v6061 = vunpack.c.h.s8.bf16 %v5845
    %v6062 = vunpack.c.h.s8.bf16 %v5846
    %v6063 = vunpack.c.h.s8.bf16 %v5847
    %v6064 = vunpack.c.h.s8.bf16 %v5848
    %v6065 = vunpack.c.h.s8.bf16 %v5849
    %v6066 = vunpack.c.l.s8.bf16 %v5850
    %v6067 = vunpack.c.l.s8.bf16 %v5851
    %v6068 = vunpack.c.l.s8.bf16 %v5852
    %v6069 = vunpack.c.l.s8.bf16 %v5853
    %v6070 = vunpack.c.l.s8.bf16 %v5854
    %v6071 = vunpack.c.l.s8.bf16 %v5855
    %v6072 = vunpack.c.h.s8.bf16 %v5850
    %v6073 = vunpack.c.h.s8.bf16 %v5851
    %v6074 = vunpack.c.h.s8.bf16 %v5852
    %v6075 = vunpack.c.h.s8.bf16 %v5853
    %v6076 = vunpack.c.h.s8.bf16 %v5854
    %v6077 = vunpack.c.h.s8.bf16 %v5855
    %v6078 = vunpack.c.l.s8.bf16 %v5856
    %v6079 = vunpack.c.l.s8.bf16 %v5857
    %v6080 = vunpack.c.l.s8.bf16 %v5858
    %v6081 = vunpack.c.l.s8.bf16 %v5859
    %v6082 = vunpack.c.l.s8.bf16 %v5860
    %v6083 = vunpack.c.l.s8.bf16 %v5861
    %v6084 = vunpack.c.h.s8.bf16 %v5856
    %v6085 = vunpack.c.h.s8.bf16 %v5857
    %v6086 = vunpack.c.h.s8.bf16 %v5858
    %v6087 = vunpack.c.h.s8.bf16 %v5859
    %v6088 = vunpack.c.h.s8.bf16 %v5860
    %v6089 = vunpack.c.h.s8.bf16 %v5861
    %v6090 = vunpack.c.l.s8.bf16 %v5862
    %v6091 = vunpack.c.l.s8.bf16 %v5863
    %v6092 = vunpack.c.l.s8.bf16 %v5864
    %v6093 = vunpack.c.l.s8.bf16 %v5865
    %v6094 = vunpack.c.l.s8.bf16 %v5866
    %v6095 = vunpack.c.l.s8.bf16 %v5867
    %v6096 = vunpack.c.h.s8.bf16 %v5862
    %v6097 = vunpack.c.h.s8.bf16 %v5863
    %v6098 = vunpack.c.h.s8.bf16 %v5864
    %v6099 = vunpack.c.h.s8.bf16 %v5865
    %v6100 = vunpack.c.h.s8.bf16 %v5866
    %v6101 = vunpack.c.h.s8.bf16 %v5867
    %v6102 = vunpack.c.l.s8.bf16 %v5868
    %v6103 = vunpack.c.l.s8.bf16 %v5869
    %v6104 = vunpack.c.l.s8.bf16 %v5870
    %v6105 = vunpack.c.l.s8.bf16 %v5871
    %v6106 = vunpack.c.l.s8.bf16 %v5872
    %v6107 = vunpack.c.l.s8.bf16 %v5873
    %v6108 = vunpack.c.h.s8.bf16 %v5868
    %v6109 = vunpack.c.h.s8.bf16 %v5869
    %v6110 = vunpack.c.h.s8.bf16 %v5870
    %v6111 = vunpack.c.h.s8.bf16 %v5871
    %v6112 = vunpack.c.h.s8.bf16 %v5872
    %v6113 = vunpack.c.h.s8.bf16 %v5873
    %v6114 = vunpack.c.l.s8.bf16 %v5874
    %v6115 = vunpack.c.l.s8.bf16 %v5875
    %v6116 = vunpack.c.l.s8.bf16 %v5876
    %v6117 = vunpack.c.l.s8.bf16 %v5877
    %v6118 = vunpack.c.l.s8.bf16 %v5878
    %v6119 = vunpack.c.l.s8.bf16 %v5879
    %v6120 = vunpack.c.h.s8.bf16 %v5874
    %v6121 = vunpack.c.h.s8.bf16 %v5875
    %v6122 = vunpack.c.h.s8.bf16 %v5876
    %v6123 = vunpack.c.h.s8.bf16 %v5877
    %v6124 = vunpack.c.h.s8.bf16 %v5878
    %v6125 = vunpack.c.h.s8.bf16 %v5879
    %v6126 = vunpack.c.l.s8.bf16 %v5880
    %v6127 = vunpack.c.l.s8.bf16 %v5881
    %v6128 = vunpack.c.l.s8.bf16 %v5882
    %v6129 = vunpack.c.l.s8.bf16 %v5883
    %v6130 = vunpack.c.l.s8.bf16 %v5884
    %v6131 = vunpack.c.l.s8.bf16 %v5885
    %v6132 = vunpack.c.h.s8.bf16 %v5880
    %v6133 = vunpack.c.h.s8.bf16 %v5881
    %v6134 = vunpack.c.h.s8.bf16 %v5882
    %v6135 = vunpack.c.h.s8.bf16 %v5883
    %v6136 = vunpack.c.h.s8.bf16 %v5884
    %v6137 = vunpack.c.h.s8.bf16 %v5885
    %v6138 = vunpack.c.l.s8.bf16 %v5886
    %v6139 = vunpack.c.l.s8.bf16 %v5887
    %v6140 = vunpack.c.l.s8.bf16 %v5888
    %v6141 = vunpack.c.l.s8.bf16 %v5889
    %v6142 = vunpack.c.l.s8.bf16 %v5890
    %v6143 = vunpack.c.l.s8.bf16 %v5891
    %v6144 = vunpack.c.h.s8.bf16 %v5886
    %v6145 = vunpack.c.h.s8.bf16 %v5887
    %v6146 = vunpack.c.h.s8.bf16 %v5888
    %v6147 = vunpack.c.h.s8.bf16 %v5889
    %v6148 = vunpack.c.h.s8.bf16 %v5890
    %v6149 = vunpack.c.h.s8.bf16 %v5891
    %v6150 = vunpack.c.l.s8.bf16 %v5892
    %v6151 = vunpack.c.l.s8.bf16 %v5893
    %v6152 = vunpack.c.l.s8.bf16 %v5894
    %v6153 = vunpack.c.l.s8.bf16 %v5895
    %v6154 = vunpack.c.l.s8.bf16 %v5896
    %v6155 = vunpack.c.l.s8.bf16 %v5897
    %v6156 = vunpack.c.h.s8.bf16 %v5892
    %v6157 = vunpack.c.h.s8.bf16 %v5893
    %v6158 = vunpack.c.h.s8.bf16 %v5894
    %v6159 = vunpack.c.h.s8.bf16 %v5895
    %v6160 = vunpack.c.h.s8.bf16 %v5896
    %v6161 = vunpack.c.h.s8.bf16 %v5897
    %v6162 = vunpack.c.l.s8.bf16 %v5898
    %v6163 = vunpack.c.l.s8.bf16 %v5899
    %v6164 = vunpack.c.l.s8.bf16 %v5900
    %v6165 = vunpack.c.l.s8.bf16 %v5901
    %v6166 = vunpack.c.l.s8.bf16 %v5902
    %v6167 = vunpack.c.l.s8.bf16 %v5903
    %v6168 = vunpack.c.h.s8.bf16 %v5898
    %v6169 = vunpack.c.h.s8.bf16 %v5899
    %v6170 = vunpack.c.h.s8.bf16 %v5900
    %v6171 = vunpack.c.h.s8.bf16 %v5901
    %v6172 = vunpack.c.h.s8.bf16 %v5902
    %v6173 = vunpack.c.h.s8.bf16 %v5903
    %v6174 = vunpack.c.l.s8.bf16 %v5904
    %v6175 = vunpack.c.l.s8.bf16 %v5905
    %v6176 = vunpack.c.l.s8.bf16 %v5906
    %v6177 = vunpack.c.l.s8.bf16 %v5907
    %v6178 = vunpack.c.l.s8.bf16 %v5908
    %v6179 = vunpack.c.l.s8.bf16 %v5909
    %v6180 = vunpack.c.h.s8.bf16 %v5904
    %v6181 = vunpack.c.h.s8.bf16 %v5905
    %v6182 = vunpack.c.h.s8.bf16 %v5906
    %v6183 = vunpack.c.h.s8.bf16 %v5907
    %v6184 = vunpack.c.h.s8.bf16 %v5908
    %v6185 = vunpack.c.h.s8.bf16 %v5909
    %v6186 = vunpack.c.l.s8.bf16 %v5910
    %v6187 = vunpack.c.l.s8.bf16 %v5911
    %v6188 = vunpack.c.l.s8.bf16 %v5912
    %v6189 = vunpack.c.l.s8.bf16 %v5913
    %v6190 = vunpack.c.l.s8.bf16 %v5914
    %v6191 = vunpack.c.l.s8.bf16 %v5915
    %v6192 = vunpack.c.h.s8.bf16 %v5910
    %v6193 = vunpack.c.h.s8.bf16 %v5911
    %v6194 = vunpack.c.h.s8.bf16 %v5912
    %v6195 = vunpack.c.h.s8.bf16 %v5913
    %v6196 = vunpack.c.h.s8.bf16 %v5914
    %v6197 = vunpack.c.h.s8.bf16 %v5915
    %v6198 = vunpack.c.l.s8.bf16 %v5916
    %v6199 = vunpack.c.l.s8.bf16 %v5917
    %v6200 = vunpack.c.l.s8.bf16 %v5918
    %v6201 = vunpack.c.l.s8.bf16 %v5919
    %v6202 = vunpack.c.l.s8.bf16 %v5920
    %v6203 = vunpack.c.l.s8.bf16 %v5921
    %v6204 = vunpack.c.h.s8.bf16 %v5916
    %v6205 = vunpack.c.h.s8.bf16 %v5917
    %v6206 = vunpack.c.h.s8.bf16 %v5918
    %v6207 = vunpack.c.h.s8.bf16 %v5919
    %v6208 = vunpack.c.h.s8.bf16 %v5920
    %v6209 = vunpack.c.h.s8.bf16 %v5921
    %v6210 = vunpack.c.l.s8.bf16 %v5922
    %v6211 = vunpack.c.l.s8.bf16 %v5923
    %v6212 = vunpack.c.l.s8.bf16 %v5924
    %v6213 = vunpack.c.l.s8.bf16 %v5925
    %v6214 = vunpack.c.l.s8.bf16 %v5926
    %v6215 = vunpack.c.l.s8.bf16 %v5927
    %v6216 = vunpack.c.h.s8.bf16 %v5922
    %v6217 = vunpack.c.h.s8.bf16 %v5923
    %v6218 = vunpack.c.h.s8.bf16 %v5924
    %v6219 = vunpack.c.h.s8.bf16 %v5925
    %v6220 = vunpack.c.h.s8.bf16 %v5926
    %v6221 = vunpack.c.h.s8.bf16 %v5927
    %v6222 = vunpack.c.l.s8.bf16 %v5928
    %v6223 = vunpack.c.l.s8.bf16 %v5929
    %v6224 = vunpack.c.l.s8.bf16 %v5930
    %v6225 = vunpack.c.l.s8.bf16 %v5931
    %v6226 = vunpack.c.l.s8.bf16 %v5932
    %v6227 = vunpack.c.l.s8.bf16 %v5933
    %v6228 = vunpack.c.h.s8.bf16 %v5928
    %v6229 = vunpack.c.h.s8.bf16 %v5929
    %v6230 = vunpack.c.h.s8.bf16 %v5930
    %v6231 = vunpack.c.h.s8.bf16 %v5931
    %v6232 = vunpack.c.h.s8.bf16 %v5932
    %v6233 = vunpack.c.h.s8.bf16 %v5933
    %v6234 = vunpack.c.l.s8.bf16 %v5934
    %v6235 = vunpack.c.l.s8.bf16 %v5935
    %v6236 = vunpack.c.l.s8.bf16 %v5936
    %v6237 = vunpack.c.l.s8.bf16 %v5937
    %v6238 = vunpack.c.l.s8.bf16 %v5938
    %v6239 = vunpack.c.l.s8.bf16 %v5939
    %v6240 = vunpack.c.h.s8.bf16 %v5934
    %v6241 = vunpack.c.h.s8.bf16 %v5935
    %v6242 = vunpack.c.h.s8.bf16 %v5936
    %v6243 = vunpack.c.h.s8.bf16 %v5937
    %v6244 = vunpack.c.h.s8.bf16 %v5938
    %v6245 = vunpack.c.h.s8.bf16 %v5939
    %v6246 = vunpack.c.l.s8.bf16 %v5940
    %v6247 = vunpack.c.l.s8.bf16 %v5941
    %v6248 = vunpack.c.l.s8.bf16 %v5942
    %v6249 = vunpack.c.l.s8.bf16 %v5943
    %v6250 = vunpack.c.l.s8.bf16 %v5944
    %v6251 = vunpack.c.l.s8.bf16 %v5945
    %v6252 = vunpack.c.h.s8.bf16 %v5940
    %v6253 = vunpack.c.h.s8.bf16 %v5941
    %v6254 = vunpack.c.h.s8.bf16 %v5942
    %v6255 = vunpack.c.h.s8.bf16 %v5943
    %v6256 = vunpack.c.h.s8.bf16 %v5944
    %v6257 = vunpack.c.h.s8.bf16 %v5945
    %v6258 = vunpack.c.l.s8.bf16 %v5946
    %v6259 = vunpack.c.l.s8.bf16 %v5947
    %v6260 = vunpack.c.l.s8.bf16 %v5948
    %v6261 = vunpack.c.l.s8.bf16 %v5949
    %v6262 = vunpack.c.l.s8.bf16 %v5950
    %v6263 = vunpack.c.l.s8.bf16 %v5951
    %v6264 = vunpack.c.h.s8.bf16 %v5946
    %v6265 = vunpack.c.h.s8.bf16 %v5947
    %v6266 = vunpack.c.h.s8.bf16 %v5948
    %v6267 = vunpack.c.h.s8.bf16 %v5949
    %v6268 = vunpack.c.h.s8.bf16 %v5950
    %v6269 = vunpack.c.h.s8.bf16 %v5951
    %v6270 = vunpack.c.l.s8.bf16 %v5952
    %v6271 = vunpack.c.l.s8.bf16 %v5953
    %v6272 = vunpack.c.l.s8.bf16 %v5954
    %v6273 = vunpack.c.l.s8.bf16 %v5955
    %v6274 = vunpack.c.l.s8.bf16 %v5956
    %v6275 = vunpack.c.l.s8.bf16 %v5957
    %v6276 = vunpack.c.h.s8.bf16 %v5952
    %v6277 = vunpack.c.h.s8.bf16 %v5953
    %v6278 = vunpack.c.h.s8.bf16 %v5954
    %v6279 = vunpack.c.h.s8.bf16 %v5955
    %v6280 = vunpack.c.h.s8.bf16 %v5956
    %v6281 = vunpack.c.h.s8.bf16 %v5957
    %v6282 = vunpack.c.l.s8.bf16 %v5958
    %v6283 = vunpack.c.l.s8.bf16 %v5959
    %v6284 = vunpack.c.l.s8.bf16 %v5960
    %v6285 = vunpack.c.l.s8.bf16 %v5961
    %v6286 = vunpack.c.l.s8.bf16 %v5962
    %v6287 = vunpack.c.l.s8.bf16 %v5963
    %v6288 = vunpack.c.h.s8.bf16 %v5958
    %v6289 = vunpack.c.h.s8.bf16 %v5959
    %v6290 = vunpack.c.h.s8.bf16 %v5960
    %v6291 = vunpack.c.h.s8.bf16 %v5961
    %v6292 = vunpack.c.h.s8.bf16 %v5962
    %v6293 = vunpack.c.h.s8.bf16 %v5963
    %v6294 = vunpack.c.l.s8.bf16 %v5964
    %v6295 = vunpack.c.l.s8.bf16 %v5965
    %v6296 = vunpack.c.l.s8.bf16 %v5966
    %v6297 = vunpack.c.l.s8.bf16 %v5967
    %v6298 = vunpack.c.l.s8.bf16 %v5968
    %v6299 = vunpack.c.l.s8.bf16 %v5969
    %v6300 = vunpack.c.h.s8.bf16 %v5964
    %v6301 = vunpack.c.h.s8.bf16 %v5965
    %v6302 = vunpack.c.h.s8.bf16 %v5966
    %v6303 = vunpack.c.h.s8.bf16 %v5967
    %v6304 = vunpack.c.h.s8.bf16 %v5968
    %v6305 = vunpack.c.h.s8.bf16 %v5969
    %v6306 = vunpack.c.l.s8.bf16 %v5970
    %v6307 = vunpack.c.l.s8.bf16 %v5971
    %v6308 = vunpack.c.l.s8.bf16 %v5972
    %v6309 = vunpack.c.l.s8.bf16 %v5973
    %v6310 = vunpack.c.l.s8.bf16 %v5974
    %v6311 = vunpack.c.l.s8.bf16 %v5975
    %v6312 = vunpack.c.h.s8.bf16 %v5970
    %v6313 = vunpack.c.h.s8.bf16 %v5971
    %v6314 = vunpack.c.h.s8.bf16 %v5972
    %v6315 = vunpack.c.h.s8.bf16 %v5973
    %v6316 = vunpack.c.h.s8.bf16 %v5974
    %v6317 = vunpack.c.h.s8.bf16 %v5975
    %v6318 = vunpack.c.l.s8.bf16 %v5976
    %v6319 = vunpack.c.l.s8.bf16 %v5977
    %v6320 = vunpack.c.l.s8.bf16 %v5978
    %v6321 = vunpack.c.l.s8.bf16 %v5979
    %v6322 = vunpack.c.l.s8.bf16 %v5980
    %v6323 = vunpack.c.l.s8.bf16 %v5981
    %v6324 = vunpack.c.h.s8.bf16 %v5976
    %v6325 = vunpack.c.h.s8.bf16 %v5977
    %v6326 = vunpack.c.h.s8.bf16 %v5978
    %v6327 = vunpack.c.h.s8.bf16 %v5979
    %v6328 = vunpack.c.h.s8.bf16 %v5980
    %v6329 = vunpack.c.h.s8.bf16 %v5981
    %v6330 = vunpack.c.l.s8.bf16 %v5982
    %v6331 = vunpack.c.l.s8.bf16 %v5983
    %v6332 = vunpack.c.l.s8.bf16 %v5984
    %v6333 = vunpack.c.l.s8.bf16 %v5985
    %v6334 = vunpack.c.l.s8.bf16 %v5986
    %v6335 = vunpack.c.l.s8.bf16 %v5987
    %v6336 = vunpack.c.h.s8.bf16 %v5982
    %v6337 = vunpack.c.h.s8.bf16 %v5983
    %v6338 = vunpack.c.h.s8.bf16 %v5984
    %v6339 = vunpack.c.h.s8.bf16 %v5985
    %v6340 = vunpack.c.h.s8.bf16 %v5986
    %v6341 = vunpack.c.h.s8.bf16 %v5987
    %v6342 = vunpack.c.l.s8.bf16 %v5988
    %v6343 = vunpack.c.l.s8.bf16 %v5989
    %v6344 = vunpack.c.l.s8.bf16 %v5990
    %v6345 = vunpack.c.l.s8.bf16 %v5991
    %v6346 = vunpack.c.l.s8.bf16 %v5992
    %v6347 = vunpack.c.l.s8.bf16 %v5993
    %v6348 = vunpack.c.h.s8.bf16 %v5988
    %v6349 = vunpack.c.h.s8.bf16 %v5989
    %v6350 = vunpack.c.h.s8.bf16 %v5990
    %v6351 = vunpack.c.h.s8.bf16 %v5991
    %v6352 = vunpack.c.h.s8.bf16 %v5992
    %v6353 = vunpack.c.h.s8.bf16 %v5993
    %v6354 = vunpack.c.l.s8.bf16 %v5994
    %v6355 = vunpack.c.l.s8.bf16 %v5995
    %v6356 = vunpack.c.l.s8.bf16 %v5996
    %v6357 = vunpack.c.l.s8.bf16 %v5997
    %v6358 = vunpack.c.l.s8.bf16 %v5998
    %v6359 = vunpack.c.l.s8.bf16 %v5999
    %v6360 = vunpack.c.h.s8.bf16 %v5994
    %v6361 = vunpack.c.h.s8.bf16 %v5995
    %v6362 = vunpack.c.h.s8.bf16 %v5996
    %v6363 = vunpack.c.h.s8.bf16 %v5997
    %v6364 = vunpack.c.h.s8.bf16 %v5998
    %v6365 = vunpack.c.h.s8.bf16 %v5999
    %v6366 = vunpack.c.l.s8.bf16 %v6000
    %v6367 = vunpack.c.l.s8.bf16 %v6001
    %v6368 = vunpack.c.l.s8.bf16 %v6002
    %v6369 = vunpack.c.l.s8.bf16 %v6003
    %v6370 = vunpack.c.l.s8.bf16 %v6004
    %v6371 = vunpack.c.l.s8.bf16 %v6005
    %v6372 = vunpack.c.h.s8.bf16 %v6000
    %v6373 = vunpack.c.h.s8.bf16 %v6001
    %v6374 = vunpack.c.h.s8.bf16 %v6002
    %v6375 = vunpack.c.h.s8.bf16 %v6003
    %v6376 = vunpack.c.h.s8.bf16 %v6004
    %v6377 = vunpack.c.h.s8.bf16 %v6005
    %v6378 = vunpack.c.l.s8.bf16 %v6006
    %v6379 = vunpack.c.l.s8.bf16 %v6007
    %v6380 = vunpack.c.l.s8.bf16 %v6008
    %v6381 = vunpack.c.l.s8.bf16 %v6009
    %v6382 = vunpack.c.l.s8.bf16 %v6010
    %v6383 = vunpack.c.l.s8.bf16 %v6011
    %v6384 = vunpack.c.h.s8.bf16 %v6006
    %v6385 = vunpack.c.h.s8.bf16 %v6007
    %v6386 = vunpack.c.h.s8.bf16 %v6008
    %v6387 = vunpack.c.h.s8.bf16 %v6009
    %v6388 = vunpack.c.h.s8.bf16 %v6010
    %v6389 = vunpack.c.h.s8.bf16 %v6011
    %v6390 = vunpack.c.l.s8.bf16 %v6012
    %v6391 = vunpack.c.l.s8.bf16 %v6013
    %v6392 = vunpack.c.l.s8.bf16 %v6014
    %v6393 = vunpack.c.l.s8.bf16 %v6015
    %v6394 = vunpack.c.l.s8.bf16 %v6016
    %v6395 = vunpack.c.l.s8.bf16 %v6017
    %v6396 = vunpack.c.h.s8.bf16 %v6012
    %v6397 = vunpack.c.h.s8.bf16 %v6013
    %v6398 = vunpack.c.h.s8.bf16 %v6014
    %v6399 = vunpack.c.h.s8.bf16 %v6015
    %v6400 = vunpack.c.h.s8.bf16 %v6016
    %v6401 = vunpack.c.h.s8.bf16 %v6017
    %v6786 = vunpack.c.l.b16 %v6018
    %v6787 = vunpack.c.l.b16 %v6019
    %v6788 = vunpack.c.l.b16 %v6020
    %v6789 = vunpack.c.l.b16 %v6021
    %v6790 = vunpack.c.l.b16 %v6022
    %v6791 = vunpack.c.l.b16 %v6023
    %v6792 = vunpack.c.h.b16 %v6018
    %v6793 = vunpack.c.h.b16 %v6019
    %v6794 = vunpack.c.h.b16 %v6020
    %v6795 = vunpack.c.h.b16 %v6021
    %v6796 = vunpack.c.h.b16 %v6022
    %v6797 = vunpack.c.h.b16 %v6023
    %v6798 = vunpack.c.l.b16 %v6024
    %v6799 = vunpack.c.l.b16 %v6025
    %v6800 = vunpack.c.l.b16 %v6026
    %v6801 = vunpack.c.l.b16 %v6027
    %v6802 = vunpack.c.l.b16 %v6028
    %v6803 = vunpack.c.l.b16 %v6029
    %v6804 = vunpack.c.h.b16 %v6024
    %v6805 = vunpack.c.h.b16 %v6025
    %v6806 = vunpack.c.h.b16 %v6026
    %v6807 = vunpack.c.h.b16 %v6027
    %v6808 = vunpack.c.h.b16 %v6028
    %v6809 = vunpack.c.h.b16 %v6029
    %v6810 = vunpack.c.l.b16 %v6030
    %v6811 = vunpack.c.l.b16 %v6031
    %v6812 = vunpack.c.l.b16 %v6032
    %v6813 = vunpack.c.l.b16 %v6033
    %v6814 = vunpack.c.l.b16 %v6034
    %v6815 = vunpack.c.l.b16 %v6035
    %v6816 = vunpack.c.h.b16 %v6030
    %v6817 = vunpack.c.h.b16 %v6031
    %v6818 = vunpack.c.h.b16 %v6032
    %v6819 = vunpack.c.h.b16 %v6033
    %v6820 = vunpack.c.h.b16 %v6034
    %v6821 = vunpack.c.h.b16 %v6035
    %v6822 = vunpack.c.l.b16 %v6036
    %v6823 = vunpack.c.l.b16 %v6037
    %v6824 = vunpack.c.l.b16 %v6038
    %v6825 = vunpack.c.l.b16 %v6039
    %v6826 = vunpack.c.l.b16 %v6040
    %v6827 = vunpack.c.l.b16 %v6041
    %v6828 = vunpack.c.h.b16 %v6036
    %v6829 = vunpack.c.h.b16 %v6037
    %v6830 = vunpack.c.h.b16 %v6038
    %v6831 = vunpack.c.h.b16 %v6039
    %v6832 = vunpack.c.h.b16 %v6040
    %v6833 = vunpack.c.h.b16 %v6041
    %v6834 = vunpack.c.l.b16 %v6042
    %v6835 = vunpack.c.l.b16 %v6043
    %v6836 = vunpack.c.l.b16 %v6044
    %v6837 = vunpack.c.l.b16 %v6045
    %v6838 = vunpack.c.l.b16 %v6046
    %v6839 = vunpack.c.l.b16 %v6047
    %v6840 = vunpack.c.h.b16 %v6042
    %v6841 = vunpack.c.h.b16 %v6043
    %v6842 = vunpack.c.h.b16 %v6044
    %v6843 = vunpack.c.h.b16 %v6045
    %v6844 = vunpack.c.h.b16 %v6046
    %v6845 = vunpack.c.h.b16 %v6047
    %v6846 = vunpack.c.l.b16 %v6048
    %v6847 = vunpack.c.l.b16 %v6049
    %v6848 = vunpack.c.l.b16 %v6050
    %v6849 = vunpack.c.l.b16 %v6051
    %v6850 = vunpack.c.l.b16 %v6052
    %v6851 = vunpack.c.l.b16 %v6053
    %v6852 = vunpack.c.h.b16 %v6048
    %v6853 = vunpack.c.h.b16 %v6049
    %v6854 = vunpack.c.h.b16 %v6050
    %v6855 = vunpack.c.h.b16 %v6051
    %v6856 = vunpack.c.h.b16 %v6052
    %v6857 = vunpack.c.h.b16 %v6053
    %v6858 = vunpack.c.l.b16 %v6054
    %v6859 = vunpack.c.l.b16 %v6055
    %v6860 = vunpack.c.l.b16 %v6056
    %v6861 = vunpack.c.l.b16 %v6057
    %v6862 = vunpack.c.l.b16 %v6058
    %v6863 = vunpack.c.l.b16 %v6059
    %v6864 = vunpack.c.h.b16 %v6054
    %v6865 = vunpack.c.h.b16 %v6055
    %v6866 = vunpack.c.h.b16 %v6056
    %v6867 = vunpack.c.h.b16 %v6057
    %v6868 = vunpack.c.h.b16 %v6058
    %v6869 = vunpack.c.h.b16 %v6059
    %v6870 = vunpack.c.l.b16 %v6060
    %v6871 = vunpack.c.l.b16 %v6061
    %v6872 = vunpack.c.l.b16 %v6062
    %v6873 = vunpack.c.l.b16 %v6063
    %v6874 = vunpack.c.l.b16 %v6064
    %v6875 = vunpack.c.l.b16 %v6065
    %v6876 = vunpack.c.h.b16 %v6060
    %v6877 = vunpack.c.h.b16 %v6061
    %v6878 = vunpack.c.h.b16 %v6062
    %v6879 = vunpack.c.h.b16 %v6063
    %v6880 = vunpack.c.h.b16 %v6064
    %v6881 = vunpack.c.h.b16 %v6065
    %v6882 = vunpack.c.l.b16 %v6066
    %v6883 = vunpack.c.l.b16 %v6067
    %v6884 = vunpack.c.l.b16 %v6068
    %v6885 = vunpack.c.l.b16 %v6069
    %v6886 = vunpack.c.l.b16 %v6070
    %v6887 = vunpack.c.l.b16 %v6071
    %v6888 = vunpack.c.h.b16 %v6066
    %v6889 = vunpack.c.h.b16 %v6067
    %v6890 = vunpack.c.h.b16 %v6068
    %v6891 = vunpack.c.h.b16 %v6069
    %v6892 = vunpack.c.h.b16 %v6070
    %v6893 = vunpack.c.h.b16 %v6071
    %v6894 = vunpack.c.l.b16 %v6072
    %v6895 = vunpack.c.l.b16 %v6073
    %v6896 = vunpack.c.l.b16 %v6074
    %v6897 = vunpack.c.l.b16 %v6075
    %v6898 = vunpack.c.l.b16 %v6076
    %v6899 = vunpack.c.l.b16 %v6077
    %v6900 = vunpack.c.h.b16 %v6072
    %v6901 = vunpack.c.h.b16 %v6073
    %v6902 = vunpack.c.h.b16 %v6074
    %v6903 = vunpack.c.h.b16 %v6075
    %v6904 = vunpack.c.h.b16 %v6076
    %v6905 = vunpack.c.h.b16 %v6077
    %v6906 = vunpack.c.l.b16 %v6078
    %v6907 = vunpack.c.l.b16 %v6079
    %v6908 = vunpack.c.l.b16 %v6080
    %v6909 = vunpack.c.l.b16 %v6081
    %v6910 = vunpack.c.l.b16 %v6082
    %v6911 = vunpack.c.l.b16 %v6083
    %v6912 = vunpack.c.h.b16 %v6078
    %v6913 = vunpack.c.h.b16 %v6079
    %v6914 = vunpack.c.h.b16 %v6080
    %v6915 = vunpack.c.h.b16 %v6081
    %v6916 = vunpack.c.h.b16 %v6082
    %v6917 = vunpack.c.h.b16 %v6083
    %v6918 = vunpack.c.l.b16 %v6084
    %v6919 = vunpack.c.l.b16 %v6085
    %v6920 = vunpack.c.l.b16 %v6086
    %v6921 = vunpack.c.l.b16 %v6087
    %v6922 = vunpack.c.l.b16 %v6088
    %v6923 = vunpack.c.l.b16 %v6089
    %v6924 = vunpack.c.h.b16 %v6084
    %v6925 = vunpack.c.h.b16 %v6085
    %v6926 = vunpack.c.h.b16 %v6086
    %v6927 = vunpack.c.h.b16 %v6087
    %v6928 = vunpack.c.h.b16 %v6088
    %v6929 = vunpack.c.h.b16 %v6089
    %v6930 = vunpack.c.l.b16 %v6090
    %v6931 = vunpack.c.l.b16 %v6091
    %v6932 = vunpack.c.l.b16 %v6092
    %v6933 = vunpack.c.l.b16 %v6093
    %v6934 = vunpack.c.l.b16 %v6094
    %v6935 = vunpack.c.l.b16 %v6095
    %v6936 = vunpack.c.h.b16 %v6090
    %v6937 = vunpack.c.h.b16 %v6091
    %v6938 = vunpack.c.h.b16 %v6092
    %v6939 = vunpack.c.h.b16 %v6093
    %v6940 = vunpack.c.h.b16 %v6094
    %v6941 = vunpack.c.h.b16 %v6095
    %v6942 = vunpack.c.l.b16 %v6096
    %v6943 = vunpack.c.l.b16 %v6097
    %v6944 = vunpack.c.l.b16 %v6098
    %v6945 = vunpack.c.l.b16 %v6099
    %v6946 = vunpack.c.l.b16 %v6100
    %v6947 = vunpack.c.l.b16 %v6101
    %v6948 = vunpack.c.h.b16 %v6096
    %v6949 = vunpack.c.h.b16 %v6097
    %v6950 = vunpack.c.h.b16 %v6098
    %v6951 = vunpack.c.h.b16 %v6099
    %v6952 = vunpack.c.h.b16 %v6100
    %v6953 = vunpack.c.h.b16 %v6101
    %v6954 = vunpack.c.l.b16 %v6102
    %v6955 = vunpack.c.l.b16 %v6103
    %v6956 = vunpack.c.l.b16 %v6104
    %v6957 = vunpack.c.l.b16 %v6105
    %v6958 = vunpack.c.l.b16 %v6106
    %v6959 = vunpack.c.l.b16 %v6107
    %v6960 = vunpack.c.h.b16 %v6102
    %v6961 = vunpack.c.h.b16 %v6103
    %v6962 = vunpack.c.h.b16 %v6104
    %v6963 = vunpack.c.h.b16 %v6105
    %v6964 = vunpack.c.h.b16 %v6106
    %v6965 = vunpack.c.h.b16 %v6107
    %v6966 = vunpack.c.l.b16 %v6108
    %v6967 = vunpack.c.l.b16 %v6109
    %v6968 = vunpack.c.l.b16 %v6110
    %v6969 = vunpack.c.l.b16 %v6111
    %v6970 = vunpack.c.l.b16 %v6112
    %v6971 = vunpack.c.l.b16 %v6113
    %v6972 = vunpack.c.h.b16 %v6108
    %v6973 = vunpack.c.h.b16 %v6109
    %v6974 = vunpack.c.h.b16 %v6110
    %v6975 = vunpack.c.h.b16 %v6111
    %v6976 = vunpack.c.h.b16 %v6112
    %v6977 = vunpack.c.h.b16 %v6113
    %v6978 = vunpack.c.l.b16 %v6114
    %v6979 = vunpack.c.l.b16 %v6115
    %v6980 = vunpack.c.l.b16 %v6116
    %v6981 = vunpack.c.l.b16 %v6117
    %v6982 = vunpack.c.l.b16 %v6118
    %v6983 = vunpack.c.l.b16 %v6119
    %v6984 = vunpack.c.h.b16 %v6114
    %v6985 = vunpack.c.h.b16 %v6115
    %v6986 = vunpack.c.h.b16 %v6116
    %v6987 = vunpack.c.h.b16 %v6117
    %v6988 = vunpack.c.h.b16 %v6118
    %v6989 = vunpack.c.h.b16 %v6119
    %v6990 = vunpack.c.l.b16 %v6120
    %v6991 = vunpack.c.l.b16 %v6121
    %v6992 = vunpack.c.l.b16 %v6122
    %v6993 = vunpack.c.l.b16 %v6123
    %v6994 = vunpack.c.l.b16 %v6124
    %v6995 = vunpack.c.l.b16 %v6125
    %v6996 = vunpack.c.h.b16 %v6120
    %v6997 = vunpack.c.h.b16 %v6121
    %v6998 = vunpack.c.h.b16 %v6122
    %v6999 = vunpack.c.h.b16 %v6123
    %v7000 = vunpack.c.h.b16 %v6124
    %v7001 = vunpack.c.h.b16 %v6125
    %v7002 = vunpack.c.l.b16 %v6126
    %v7003 = vunpack.c.l.b16 %v6127
    %v7004 = vunpack.c.l.b16 %v6128
    %v7005 = vunpack.c.l.b16 %v6129
    %v7006 = vunpack.c.l.b16 %v6130
    %v7007 = vunpack.c.l.b16 %v6131
    %v7008 = vunpack.c.h.b16 %v6126
    %v7009 = vunpack.c.h.b16 %v6127
    %v7010 = vunpack.c.h.b16 %v6128
    %v7011 = vunpack.c.h.b16 %v6129
    %v7012 = vunpack.c.h.b16 %v6130
    %v7013 = vunpack.c.h.b16 %v6131
    %v7014 = vunpack.c.l.b16 %v6132
    %v7015 = vunpack.c.l.b16 %v6133
    %v7016 = vunpack.c.l.b16 %v6134
    %v7017 = vunpack.c.l.b16 %v6135
    %v7018 = vunpack.c.l.b16 %v6136
    %v7019 = vunpack.c.l.b16 %v6137
    %v7020 = vunpack.c.h.b16 %v6132
    %v7021 = vunpack.c.h.b16 %v6133
    %v7022 = vunpack.c.h.b16 %v6134
    %v7023 = vunpack.c.h.b16 %v6135
    %v7024 = vunpack.c.h.b16 %v6136
    %v7025 = vunpack.c.h.b16 %v6137
    %v7026 = vunpack.c.l.b16 %v6138
    %v7027 = vunpack.c.l.b16 %v6139
    %v7028 = vunpack.c.l.b16 %v6140
    %v7029 = vunpack.c.l.b16 %v6141
    %v7030 = vunpack.c.l.b16 %v6142
    %v7031 = vunpack.c.l.b16 %v6143
    %v7032 = vunpack.c.h.b16 %v6138
    %v7033 = vunpack.c.h.b16 %v6139
    %v7034 = vunpack.c.h.b16 %v6140
    %v7035 = vunpack.c.h.b16 %v6141
    %v7036 = vunpack.c.h.b16 %v6142
    %v7037 = vunpack.c.h.b16 %v6143
    %v7038 = vunpack.c.l.b16 %v6144
    %v7039 = vunpack.c.l.b16 %v6145
    %v7040 = vunpack.c.l.b16 %v6146
    %v7041 = vunpack.c.l.b16 %v6147
    %v7042 = vunpack.c.l.b16 %v6148
    %v7043 = vunpack.c.l.b16 %v6149
    %v7044 = vunpack.c.h.b16 %v6144
    %v7045 = vunpack.c.h.b16 %v6145
    %v7046 = vunpack.c.h.b16 %v6146
    %v7047 = vunpack.c.h.b16 %v6147
    %v7048 = vunpack.c.h.b16 %v6148
    %v7049 = vunpack.c.h.b16 %v6149
    %v7050 = vunpack.c.l.b16 %v6150
    %v7051 = vunpack.c.l.b16 %v6151
    %v7052 = vunpack.c.l.b16 %v6152
    %v7053 = vunpack.c.l.b16 %v6153
    %v7054 = vunpack.c.l.b16 %v6154
    %v7055 = vunpack.c.l.b16 %v6155
    %v7056 = vunpack.c.h.b16 %v6150
    %v7057 = vunpack.c.h.b16 %v6151
    %v7058 = vunpack.c.h.b16 %v6152
    %v7059 = vunpack.c.h.b16 %v6153
    %v7060 = vunpack.c.h.b16 %v6154
    %v7061 = vunpack.c.h.b16 %v6155
    %v7062 = vunpack.c.l.b16 %v6156
    %v7063 = vunpack.c.l.b16 %v6157
    %v7064 = vunpack.c.l.b16 %v6158
    %v7065 = vunpack.c.l.b16 %v6159
    %v7066 = vunpack.c.l.b16 %v6160
    %v7067 = vunpack.c.l.b16 %v6161
    %v7068 = vunpack.c.h.b16 %v6156
    %v7069 = vunpack.c.h.b16 %v6157
    %v7070 = vunpack.c.h.b16 %v6158
    %v7071 = vunpack.c.h.b16 %v6159
    %v7072 = vunpack.c.h.b16 %v6160
    %v7073 = vunpack.c.h.b16 %v6161
    %v7074 = vunpack.c.l.b16 %v6162
    %v7075 = vunpack.c.l.b16 %v6163
    %v7076 = vunpack.c.l.b16 %v6164
    %v7077 = vunpack.c.l.b16 %v6165
    %v7078 = vunpack.c.l.b16 %v6166
    %v7079 = vunpack.c.l.b16 %v6167
    %v7080 = vunpack.c.h.b16 %v6162
    %v7081 = vunpack.c.h.b16 %v6163
    %v7082 = vunpack.c.h.b16 %v6164
    %v7083 = vunpack.c.h.b16 %v6165
    %v7084 = vunpack.c.h.b16 %v6166
    %v7085 = vunpack.c.h.b16 %v6167
    %v7086 = vunpack.c.l.b16 %v6168
    %v7087 = vunpack.c.l.b16 %v6169
    %v7088 = vunpack.c.l.b16 %v6170
    %v7089 = vunpack.c.l.b16 %v6171
    %v7090 = vunpack.c.l.b16 %v6172
    %v7091 = vunpack.c.l.b16 %v6173
    %v7092 = vunpack.c.h.b16 %v6168
    %v7093 = vunpack.c.h.b16 %v6169
    %v7094 = vunpack.c.h.b16 %v6170
    %v7095 = vunpack.c.h.b16 %v6171
    %v7096 = vunpack.c.h.b16 %v6172
    %v7097 = vunpack.c.h.b16 %v6173
    %v7098 = vunpack.c.l.b16 %v6174
    %v7099 = vunpack.c.l.b16 %v6175
    %v7100 = vunpack.c.l.b16 %v6176
    %v7101 = vunpack.c.l.b16 %v6177
    %v7102 = vunpack.c.l.b16 %v6178
    %v7103 = vunpack.c.l.b16 %v6179
    %v7104 = vunpack.c.h.b16 %v6174
    %v7105 = vunpack.c.h.b16 %v6175
    %v7106 = vunpack.c.h.b16 %v6176
    %v7107 = vunpack.c.h.b16 %v6177
    %v7108 = vunpack.c.h.b16 %v6178
    %v7109 = vunpack.c.h.b16 %v6179
    %v7110 = vunpack.c.l.b16 %v6180
    %v7111 = vunpack.c.l.b16 %v6181
    %v7112 = vunpack.c.l.b16 %v6182
    %v7113 = vunpack.c.l.b16 %v6183
    %v7114 = vunpack.c.l.b16 %v6184
    %v7115 = vunpack.c.l.b16 %v6185
    %v7116 = vunpack.c.h.b16 %v6180
    %v7117 = vunpack.c.h.b16 %v6181
    %v7118 = vunpack.c.h.b16 %v6182
    %v7119 = vunpack.c.h.b16 %v6183
    %v7120 = vunpack.c.h.b16 %v6184
    %v7121 = vunpack.c.h.b16 %v6185
    %v7122 = vunpack.c.l.b16 %v6186
    %v7123 = vunpack.c.l.b16 %v6187
    %v7124 = vunpack.c.l.b16 %v6188
    %v7125 = vunpack.c.l.b16 %v6189
    %v7126 = vunpack.c.l.b16 %v6190
    %v7127 = vunpack.c.l.b16 %v6191
    %v7128 = vunpack.c.h.b16 %v6186
    %v7129 = vunpack.c.h.b16 %v6187
    %v7130 = vunpack.c.h.b16 %v6188
    %v7131 = vunpack.c.h.b16 %v6189
    %v7132 = vunpack.c.h.b16 %v6190
    %v7133 = vunpack.c.h.b16 %v6191
    %v7134 = vunpack.c.l.b16 %v6192
    %v7135 = vunpack.c.l.b16 %v6193
    %v7136 = vunpack.c.l.b16 %v6194
    %v7137 = vunpack.c.l.b16 %v6195
    %v7138 = vunpack.c.l.b16 %v6196
    %v7139 = vunpack.c.l.b16 %v6197
    %v7140 = vunpack.c.h.b16 %v6192
    %v7141 = vunpack.c.h.b16 %v6193
    %v7142 = vunpack.c.h.b16 %v6194
    %v7143 = vunpack.c.h.b16 %v6195
    %v7144 = vunpack.c.h.b16 %v6196
    %v7145 = vunpack.c.h.b16 %v6197
    %v7146 = vunpack.c.l.b16 %v6198
    %v7147 = vunpack.c.l.b16 %v6199
    %v7148 = vunpack.c.l.b16 %v6200
    %v7149 = vunpack.c.l.b16 %v6201
    %v7150 = vunpack.c.l.b16 %v6202
    %v7151 = vunpack.c.l.b16 %v6203
    %v7152 = vunpack.c.h.b16 %v6198
    %v7153 = vunpack.c.h.b16 %v6199
    %v7154 = vunpack.c.h.b16 %v6200
    %v7155 = vunpack.c.h.b16 %v6201
    %v7156 = vunpack.c.h.b16 %v6202
    %v7157 = vunpack.c.h.b16 %v6203
    %v7158 = vunpack.c.l.b16 %v6204
    %v7159 = vunpack.c.l.b16 %v6205
    %v7160 = vunpack.c.l.b16 %v6206
    %v7161 = vunpack.c.l.b16 %v6207
    %v7162 = vunpack.c.l.b16 %v6208
    %v7163 = vunpack.c.l.b16 %v6209
    %v7164 = vunpack.c.h.b16 %v6204
    %v7165 = vunpack.c.h.b16 %v6205
    %v7166 = vunpack.c.h.b16 %v6206
    %v7167 = vunpack.c.h.b16 %v6207
    %v7168 = vunpack.c.h.b16 %v6208
    %v7169 = vunpack.c.h.b16 %v6209
    %v7170 = vunpack.c.l.b16 %v6210
    %v7171 = vunpack.c.l.b16 %v6211
    %v7172 = vunpack.c.l.b16 %v6212
    %v7173 = vunpack.c.l.b16 %v6213
    %v7174 = vunpack.c.l.b16 %v6214
    %v7175 = vunpack.c.l.b16 %v6215
    %v7176 = vunpack.c.h.b16 %v6210
    %v7177 = vunpack.c.h.b16 %v6211
    %v7178 = vunpack.c.h.b16 %v6212
    %v7179 = vunpack.c.h.b16 %v6213
    %v7180 = vunpack.c.h.b16 %v6214
    %v7181 = vunpack.c.h.b16 %v6215
    %v7182 = vunpack.c.l.b16 %v6216
    %v7183 = vunpack.c.l.b16 %v6217
    %v7184 = vunpack.c.l.b16 %v6218
    %v7185 = vunpack.c.l.b16 %v6219
    %v7186 = vunpack.c.l.b16 %v6220
    %v7187 = vunpack.c.l.b16 %v6221
    %v7188 = vunpack.c.h.b16 %v6216
    %v7189 = vunpack.c.h.b16 %v6217
    %v7190 = vunpack.c.h.b16 %v6218
    %v7191 = vunpack.c.h.b16 %v6219
    %v7192 = vunpack.c.h.b16 %v6220
    %v7193 = vunpack.c.h.b16 %v6221
    %v7194 = vunpack.c.l.b16 %v6222
    %v7195 = vunpack.c.l.b16 %v6223
    %v7196 = vunpack.c.l.b16 %v6224
    %v7197 = vunpack.c.l.b16 %v6225
    %v7198 = vunpack.c.l.b16 %v6226
    %v7199 = vunpack.c.l.b16 %v6227
    %v7200 = vunpack.c.h.b16 %v6222
    %v7201 = vunpack.c.h.b16 %v6223
    %v7202 = vunpack.c.h.b16 %v6224
    %v7203 = vunpack.c.h.b16 %v6225
    %v7204 = vunpack.c.h.b16 %v6226
    %v7205 = vunpack.c.h.b16 %v6227
    %v7206 = vunpack.c.l.b16 %v6228
    %v7207 = vunpack.c.l.b16 %v6229
    %v7208 = vunpack.c.l.b16 %v6230
    %v7209 = vunpack.c.l.b16 %v6231
    %v7210 = vunpack.c.l.b16 %v6232
    %v7211 = vunpack.c.l.b16 %v6233
    %v7212 = vunpack.c.h.b16 %v6228
    %v7213 = vunpack.c.h.b16 %v6229
    %v7214 = vunpack.c.h.b16 %v6230
    %v7215 = vunpack.c.h.b16 %v6231
    %v7216 = vunpack.c.h.b16 %v6232
    %v7217 = vunpack.c.h.b16 %v6233
    %v7218 = vunpack.c.l.b16 %v6234
    %v7219 = vunpack.c.l.b16 %v6235
    %v7220 = vunpack.c.l.b16 %v6236
    %v7221 = vunpack.c.l.b16 %v6237
    %v7222 = vunpack.c.l.b16 %v6238
    %v7223 = vunpack.c.l.b16 %v6239
    %v7224 = vunpack.c.h.b16 %v6234
    %v7225 = vunpack.c.h.b16 %v6235
    %v7226 = vunpack.c.h.b16 %v6236
    %v7227 = vunpack.c.h.b16 %v6237
    %v7228 = vunpack.c.h.b16 %v6238
    %v7229 = vunpack.c.h.b16 %v6239
    %v7230 = vunpack.c.l.b16 %v6240
    %v7231 = vunpack.c.l.b16 %v6241
    %v7232 = vunpack.c.l.b16 %v6242
    %v7233 = vunpack.c.l.b16 %v6243
    %v7234 = vunpack.c.l.b16 %v6244
    %v7235 = vunpack.c.l.b16 %v6245
    %v7236 = vunpack.c.h.b16 %v6240
    %v7237 = vunpack.c.h.b16 %v6241
    %v7238 = vunpack.c.h.b16 %v6242
    %v7239 = vunpack.c.h.b16 %v6243
    %v7240 = vunpack.c.h.b16 %v6244
    %v7241 = vunpack.c.h.b16 %v6245
    %v7242 = vunpack.c.l.b16 %v6246
    %v7243 = vunpack.c.l.b16 %v6247
    %v7244 = vunpack.c.l.b16 %v6248
    %v7245 = vunpack.c.l.b16 %v6249
    %v7246 = vunpack.c.l.b16 %v6250
    %v7247 = vunpack.c.l.b16 %v6251
    %v7248 = vunpack.c.h.b16 %v6246
    %v7249 = vunpack.c.h.b16 %v6247
    %v7250 = vunpack.c.h.b16 %v6248
    %v7251 = vunpack.c.h.b16 %v6249
    %v7252 = vunpack.c.h.b16 %v6250
    %v7253 = vunpack.c.h.b16 %v6251
    %v7254 = vunpack.c.l.b16 %v6252
    %v7255 = vunpack.c.l.b16 %v6253
    %v7256 = vunpack.c.l.b16 %v6254
    %v7257 = vunpack.c.l.b16 %v6255
    %v7258 = vunpack.c.l.b16 %v6256
    %v7259 = vunpack.c.l.b16 %v6257
    %v7260 = vunpack.c.h.b16 %v6252
    %v7261 = vunpack.c.h.b16 %v6253
    %v7262 = vunpack.c.h.b16 %v6254
    %v7263 = vunpack.c.h.b16 %v6255
    %v7264 = vunpack.c.h.b16 %v6256
    %v7265 = vunpack.c.h.b16 %v6257
    %v7266 = vunpack.c.l.b16 %v6258
    %v7267 = vunpack.c.l.b16 %v6259
    %v7268 = vunpack.c.l.b16 %v6260
    %v7269 = vunpack.c.l.b16 %v6261
    %v7270 = vunpack.c.l.b16 %v6262
    %v7271 = vunpack.c.l.b16 %v6263
    %v7272 = vunpack.c.h.b16 %v6258
    %v7273 = vunpack.c.h.b16 %v6259
    %v7274 = vunpack.c.h.b16 %v6260
    %v7275 = vunpack.c.h.b16 %v6261
    %v7276 = vunpack.c.h.b16 %v6262
    %v7277 = vunpack.c.h.b16 %v6263
    %v7278 = vunpack.c.l.b16 %v6264
    %v7279 = vunpack.c.l.b16 %v6265
    %v7280 = vunpack.c.l.b16 %v6266
    %v7281 = vunpack.c.l.b16 %v6267
    %v7282 = vunpack.c.l.b16 %v6268
    %v7283 = vunpack.c.l.b16 %v6269
    %v7284 = vunpack.c.h.b16 %v6264
    %v7285 = vunpack.c.h.b16 %v6265
    %v7286 = vunpack.c.h.b16 %v6266
    %v7287 = vunpack.c.h.b16 %v6267
    %v7288 = vunpack.c.h.b16 %v6268
    %v7289 = vunpack.c.h.b16 %v6269
    %v7290 = vunpack.c.l.b16 %v6270
    %v7291 = vunpack.c.l.b16 %v6271
    %v7292 = vunpack.c.l.b16 %v6272
    %v7293 = vunpack.c.l.b16 %v6273
    %v7294 = vunpack.c.l.b16 %v6274
    %v7295 = vunpack.c.l.b16 %v6275
    %v7296 = vunpack.c.h.b16 %v6270
    %v7297 = vunpack.c.h.b16 %v6271
    %v7298 = vunpack.c.h.b16 %v6272
    %v7299 = vunpack.c.h.b16 %v6273
    %v7300 = vunpack.c.h.b16 %v6274
    %v7301 = vunpack.c.h.b16 %v6275
    %v7302 = vunpack.c.l.b16 %v6276
    %v7303 = vunpack.c.l.b16 %v6277
    %v7304 = vunpack.c.l.b16 %v6278
    %v7305 = vunpack.c.l.b16 %v6279
    %v7306 = vunpack.c.l.b16 %v6280
    %v7307 = vunpack.c.l.b16 %v6281
    %v7308 = vunpack.c.h.b16 %v6276
    %v7309 = vunpack.c.h.b16 %v6277
    %v7310 = vunpack.c.h.b16 %v6278
    %v7311 = vunpack.c.h.b16 %v6279
    %v7312 = vunpack.c.h.b16 %v6280
    %v7313 = vunpack.c.h.b16 %v6281
    %v7314 = vunpack.c.l.b16 %v6282
    %v7315 = vunpack.c.l.b16 %v6283
    %v7316 = vunpack.c.l.b16 %v6284
    %v7317 = vunpack.c.l.b16 %v6285
    %v7318 = vunpack.c.l.b16 %v6286
    %v7319 = vunpack.c.l.b16 %v6287
    %v7320 = vunpack.c.h.b16 %v6282
    %v7321 = vunpack.c.h.b16 %v6283
    %v7322 = vunpack.c.h.b16 %v6284
    %v7323 = vunpack.c.h.b16 %v6285
    %v7324 = vunpack.c.h.b16 %v6286
    %v7325 = vunpack.c.h.b16 %v6287
    %v7326 = vunpack.c.l.b16 %v6288
    %v7327 = vunpack.c.l.b16 %v6289
    %v7328 = vunpack.c.l.b16 %v6290
    %v7329 = vunpack.c.l.b16 %v6291
    %v7330 = vunpack.c.l.b16 %v6292
    %v7331 = vunpack.c.l.b16 %v6293
    %v7332 = vunpack.c.h.b16 %v6288
    %v7333 = vunpack.c.h.b16 %v6289
    %v7334 = vunpack.c.h.b16 %v6290
    %v7335 = vunpack.c.h.b16 %v6291
    %v7336 = vunpack.c.h.b16 %v6292
    %v7337 = vunpack.c.h.b16 %v6293
    %v7338 = vunpack.c.l.b16 %v6294
    %v7339 = vunpack.c.l.b16 %v6295
    %v7340 = vunpack.c.l.b16 %v6296
    %v7341 = vunpack.c.l.b16 %v6297
    %v7342 = vunpack.c.l.b16 %v6298
    %v7343 = vunpack.c.l.b16 %v6299
    %v7344 = vunpack.c.h.b16 %v6294
    %v7345 = vunpack.c.h.b16 %v6295
    %v7346 = vunpack.c.h.b16 %v6296
    %v7347 = vunpack.c.h.b16 %v6297
    %v7348 = vunpack.c.h.b16 %v6298
    %v7349 = vunpack.c.h.b16 %v6299
    %v7350 = vunpack.c.l.b16 %v6300
    %v7351 = vunpack.c.l.b16 %v6301
    %v7352 = vunpack.c.l.b16 %v6302
    %v7353 = vunpack.c.l.b16 %v6303
    %v7354 = vunpack.c.l.b16 %v6304
    %v7355 = vunpack.c.l.b16 %v6305
    %v7356 = vunpack.c.h.b16 %v6300
    %v7357 = vunpack.c.h.b16 %v6301
    %v7358 = vunpack.c.h.b16 %v6302
    %v7359 = vunpack.c.h.b16 %v6303
    %v7360 = vunpack.c.h.b16 %v6304
    %v7361 = vunpack.c.h.b16 %v6305
    %v7362 = vunpack.c.l.b16 %v6306
    %v7363 = vunpack.c.l.b16 %v6307
    %v7364 = vunpack.c.l.b16 %v6308
    %v7365 = vunpack.c.l.b16 %v6309
    %v7366 = vunpack.c.l.b16 %v6310
    %v7367 = vunpack.c.l.b16 %v6311
    %v7368 = vunpack.c.h.b16 %v6306
    %v7369 = vunpack.c.h.b16 %v6307
    %v7370 = vunpack.c.h.b16 %v6308
    %v7371 = vunpack.c.h.b16 %v6309
    %v7372 = vunpack.c.h.b16 %v6310
    %v7373 = vunpack.c.h.b16 %v6311
    %v7374 = vunpack.c.l.b16 %v6312
    %v7375 = vunpack.c.l.b16 %v6313
    %v7376 = vunpack.c.l.b16 %v6314
    %v7377 = vunpack.c.l.b16 %v6315
    %v7378 = vunpack.c.l.b16 %v6316
    %v7379 = vunpack.c.l.b16 %v6317
    %v7380 = vunpack.c.h.b16 %v6312
    %v7381 = vunpack.c.h.b16 %v6313
    %v7382 = vunpack.c.h.b16 %v6314
    %v7383 = vunpack.c.h.b16 %v6315
    %v7384 = vunpack.c.h.b16 %v6316
    %v7385 = vunpack.c.h.b16 %v6317
    %v7386 = vunpack.c.l.b16 %v6318
    %v7387 = vunpack.c.l.b16 %v6319
    %v7388 = vunpack.c.l.b16 %v6320
    %v7389 = vunpack.c.l.b16 %v6321
    %v7390 = vunpack.c.l.b16 %v6322
    %v7391 = vunpack.c.l.b16 %v6323
    %v7392 = vunpack.c.h.b16 %v6318
    %v7393 = vunpack.c.h.b16 %v6319
    %v7394 = vunpack.c.h.b16 %v6320
    %v7395 = vunpack.c.h.b16 %v6321
    %v7396 = vunpack.c.h.b16 %v6322
    %v7397 = vunpack.c.h.b16 %v6323
    %v7398 = vunpack.c.l.b16 %v6324
    %v7399 = vunpack.c.l.b16 %v6325
    %v7400 = vunpack.c.l.b16 %v6326
    %v7401 = vunpack.c.l.b16 %v6327
    %v7402 = vunpack.c.l.b16 %v6328
    %v7403 = vunpack.c.l.b16 %v6329
    %v7404 = vunpack.c.h.b16 %v6324
    %v7405 = vunpack.c.h.b16 %v6325
    %v7406 = vunpack.c.h.b16 %v6326
    %v7407 = vunpack.c.h.b16 %v6327
    %v7408 = vunpack.c.h.b16 %v6328
    %v7409 = vunpack.c.h.b16 %v6329
    %v7410 = vunpack.c.l.b16 %v6330
    %v7411 = vunpack.c.l.b16 %v6331
    %v7412 = vunpack.c.l.b16 %v6332
    %v7413 = vunpack.c.l.b16 %v6333
    %v7414 = vunpack.c.l.b16 %v6334
    %v7415 = vunpack.c.l.b16 %v6335
    %v7416 = vunpack.c.h.b16 %v6330
    %v7417 = vunpack.c.h.b16 %v6331
    %v7418 = vunpack.c.h.b16 %v6332
    %v7419 = vunpack.c.h.b16 %v6333
    %v7420 = vunpack.c.h.b16 %v6334
    %v7421 = vunpack.c.h.b16 %v6335
    %v7422 = vunpack.c.l.b16 %v6336
    %v7423 = vunpack.c.l.b16 %v6337
    %v7424 = vunpack.c.l.b16 %v6338
    %v7425 = vunpack.c.l.b16 %v6339
    %v7426 = vunpack.c.l.b16 %v6340
    %v7427 = vunpack.c.l.b16 %v6341
    %v7428 = vunpack.c.h.b16 %v6336
    %v7429 = vunpack.c.h.b16 %v6337
    %v7430 = vunpack.c.h.b16 %v6338
    %v7431 = vunpack.c.h.b16 %v6339
    %v7432 = vunpack.c.h.b16 %v6340
    %v7433 = vunpack.c.h.b16 %v6341
    %v7434 = vunpack.c.l.b16 %v6342
    %v7435 = vunpack.c.l.b16 %v6343
    %v7436 = vunpack.c.l.b16 %v6344
    %v7437 = vunpack.c.l.b16 %v6345
    %v7438 = vunpack.c.l.b16 %v6346
    %v7439 = vunpack.c.l.b16 %v6347
    %v7440 = vunpack.c.h.b16 %v6342
    %v7441 = vunpack.c.h.b16 %v6343
    %v7442 = vunpack.c.h.b16 %v6344
    %v7443 = vunpack.c.h.b16 %v6345
    %v7444 = vunpack.c.h.b16 %v6346
    %v7445 = vunpack.c.h.b16 %v6347
    %v7446 = vunpack.c.l.b16 %v6348
    %v7447 = vunpack.c.l.b16 %v6349
    %v7448 = vunpack.c.l.b16 %v6350
    %v7449 = vunpack.c.l.b16 %v6351
    %v7450 = vunpack.c.l.b16 %v6352
    %v7451 = vunpack.c.l.b16 %v6353
    %v7452 = vunpack.c.h.b16 %v6348
    %v7453 = vunpack.c.h.b16 %v6349
    %v7454 = vunpack.c.h.b16 %v6350
    %v7455 = vunpack.c.h.b16 %v6351
    %v7456 = vunpack.c.h.b16 %v6352
    %v7457 = vunpack.c.h.b16 %v6353
    %v7458 = vunpack.c.l.b16 %v6354
    %v7459 = vunpack.c.l.b16 %v6355
    %v7460 = vunpack.c.l.b16 %v6356
    %v7461 = vunpack.c.l.b16 %v6357
    %v7462 = vunpack.c.l.b16 %v6358
    %v7463 = vunpack.c.l.b16 %v6359
    %v7464 = vunpack.c.h.b16 %v6354
    %v7465 = vunpack.c.h.b16 %v6355
    %v7466 = vunpack.c.h.b16 %v6356
    %v7467 = vunpack.c.h.b16 %v6357
    %v7468 = vunpack.c.h.b16 %v6358
    %v7469 = vunpack.c.h.b16 %v6359
    %v7470 = vunpack.c.l.b16 %v6360
    %v7471 = vunpack.c.l.b16 %v6361
    %v7472 = vunpack.c.l.b16 %v6362
    %v7473 = vunpack.c.l.b16 %v6363
    %v7474 = vunpack.c.l.b16 %v6364
    %v7475 = vunpack.c.l.b16 %v6365
    %v7476 = vunpack.c.h.b16 %v6360
    %v7477 = vunpack.c.h.b16 %v6361
    %v7478 = vunpack.c.h.b16 %v6362
    %v7479 = vunpack.c.h.b16 %v6363
    %v7480 = vunpack.c.h.b16 %v6364
    %v7481 = vunpack.c.h.b16 %v6365
    %v7482 = vunpack.c.l.b16 %v6366
    %v7483 = vunpack.c.l.b16 %v6367
    %v7484 = vunpack.c.l.b16 %v6368
    %v7485 = vunpack.c.l.b16 %v6369
    %v7486 = vunpack.c.l.b16 %v6370
    %v7487 = vunpack.c.l.b16 %v6371
    %v7488 = vunpack.c.h.b16 %v6366
    %v7489 = vunpack.c.h.b16 %v6367
    %v7490 = vunpack.c.h.b16 %v6368
    %v7491 = vunpack.c.h.b16 %v6369
    %v7492 = vunpack.c.h.b16 %v6370
    %v7493 = vunpack.c.h.b16 %v6371
    %v7494 = vunpack.c.l.b16 %v6372
    %v7495 = vunpack.c.l.b16 %v6373
    %v7496 = vunpack.c.l.b16 %v6374
    %v7497 = vunpack.c.l.b16 %v6375
    %v7498 = vunpack.c.l.b16 %v6376
    %v7499 = vunpack.c.l.b16 %v6377
    %v7500 = vunpack.c.h.b16 %v6372
    %v7501 = vunpack.c.h.b16 %v6373
    %v7502 = vunpack.c.h.b16 %v6374
    %v7503 = vunpack.c.h.b16 %v6375
    %v7504 = vunpack.c.h.b16 %v6376
    %v7505 = vunpack.c.h.b16 %v6377
    %v7506 = vunpack.c.l.b16 %v6378
    %v7507 = vunpack.c.l.b16 %v6379
    %v7508 = vunpack.c.l.b16 %v6380
    %v7509 = vunpack.c.l.b16 %v6381
    %v7510 = vunpack.c.l.b16 %v6382
    %v7511 = vunpack.c.l.b16 %v6383
    %v7512 = vunpack.c.h.b16 %v6378
    %v7513 = vunpack.c.h.b16 %v6379
    %v7514 = vunpack.c.h.b16 %v6380
    %v7515 = vunpack.c.h.b16 %v6381
    %v7516 = vunpack.c.h.b16 %v6382
    %v7517 = vunpack.c.h.b16 %v6383
    %v7518 = vunpack.c.l.b16 %v6384
    %v7519 = vunpack.c.l.b16 %v6385
    %v7520 = vunpack.c.l.b16 %v6386
    %v7521 = vunpack.c.l.b16 %v6387
    %v7522 = vunpack.c.l.b16 %v6388
    %v7523 = vunpack.c.l.b16 %v6389
    %v7524 = vunpack.c.h.b16 %v6384
    %v7525 = vunpack.c.h.b16 %v6385
    %v7526 = vunpack.c.h.b16 %v6386
    %v7527 = vunpack.c.h.b16 %v6387
    %v7528 = vunpack.c.h.b16 %v6388
    %v7529 = vunpack.c.h.b16 %v6389
    %v7530 = vunpack.c.l.b16 %v6390
    %v7531 = vunpack.c.l.b16 %v6391
    %v7532 = vunpack.c.l.b16 %v6392
    %v7533 = vunpack.c.l.b16 %v6393
    %v7534 = vunpack.c.l.b16 %v6394
    %v7535 = vunpack.c.l.b16 %v6395
    %v7536 = vunpack.c.h.b16 %v6390
    %v7537 = vunpack.c.h.b16 %v6391
    %v7538 = vunpack.c.h.b16 %v6392
    %v7539 = vunpack.c.h.b16 %v6393
    %v7540 = vunpack.c.h.b16 %v6394
    %v7541 = vunpack.c.h.b16 %v6395
    %v7542 = vunpack.c.l.b16 %v6396
    %v7543 = vunpack.c.l.b16 %v6397
    %v7544 = vunpack.c.l.b16 %v6398
    %v7545 = vunpack.c.l.b16 %v6399
    %v7546 = vunpack.c.l.b16 %v6400
    %v7547 = vunpack.c.l.b16 %v6401
    %v7548 = vunpack.c.h.b16 %v6396
    %v7549 = vunpack.c.h.b16 %v6397
    %v7550 = vunpack.c.h.b16 %v6398
    %v7551 = vunpack.c.h.b16 %v6399
    %v7552 = vunpack.c.h.b16 %v6400
    %v7553 = vunpack.c.h.b16 %v6401
    %v7554 = vpack.c.b16 %v6787, %v6786
    %v7555 = vpack.c.b16 %v6789, %v6788
    %v7556 = vpack.c.b16 %v6791, %v6790
    %v7557 = vpack.c.b16 %v6793, %v6792
    %v7558 = vpack.c.b16 %v6795, %v6794
    %v7559 = vpack.c.b16 %v6797, %v6796
    %v7560 = vpack.c.b16 %v6799, %v6798
    %v7561 = vpack.c.b16 %v6801, %v6800
    %v7562 = vpack.c.b16 %v6803, %v6802
    %v7563 = vpack.c.b16 %v6805, %v6804
    %v7564 = vpack.c.b16 %v6807, %v6806
    %v7565 = vpack.c.b16 %v6809, %v6808
    %v7566 = vpack.c.b16 %v6811, %v6810
    %v7567 = vpack.c.b16 %v6813, %v6812
    %v7568 = vpack.c.b16 %v6815, %v6814
    %v7569 = vpack.c.b16 %v6817, %v6816
    %v7570 = vpack.c.b16 %v6819, %v6818
    %v7571 = vpack.c.b16 %v6821, %v6820
    %v7572 = vpack.c.b16 %v6823, %v6822
    %v7573 = vpack.c.b16 %v6825, %v6824
    %v7574 = vpack.c.b16 %v6827, %v6826
    %v7575 = vpack.c.b16 %v6829, %v6828
    %v7576 = vpack.c.b16 %v6831, %v6830
    %v7577 = vpack.c.b16 %v6833, %v6832
    %v7578 = vpack.c.b16 %v6835, %v6834
    %v7579 = vpack.c.b16 %v6837, %v6836
    %v7580 = vpack.c.b16 %v6839, %v6838
    %v7581 = vpack.c.b16 %v6841, %v6840
    %v7582 = vpack.c.b16 %v6843, %v6842
    %v7583 = vpack.c.b16 %v6845, %v6844
    %v7584 = vpack.c.b16 %v6847, %v6846
    %v7585 = vpack.c.b16 %v6849, %v6848
    %v7586 = vpack.c.b16 %v6851, %v6850
    %v7587 = vpack.c.b16 %v6853, %v6852
    %v7588 = vpack.c.b16 %v6855, %v6854
    %v7589 = vpack.c.b16 %v6857, %v6856
    %v7590 = vpack.c.b16 %v6859, %v6858
    %v7591 = vpack.c.b16 %v6861, %v6860
    %v7592 = vpack.c.b16 %v6863, %v6862
    %v7593 = vpack.c.b16 %v6865, %v6864
    %v7594 = vpack.c.b16 %v6867, %v6866
    %v7595 = vpack.c.b16 %v6869, %v6868
    %v7596 = vpack.c.b16 %v6871, %v6870
    %v7597 = vpack.c.b16 %v6873, %v6872
    %v7598 = vpack.c.b16 %v6875, %v6874
    %v7599 = vpack.c.b16 %v6877, %v6876
    %v7600 = vpack.c.b16 %v6879, %v6878
    %v7601 = vpack.c.b16 %v6881, %v6880
    %v7602 = vpack.c.b16 %v6883, %v6882
    %v7603 = vpack.c.b16 %v6885, %v6884
    %v7604 = vpack.c.b16 %v6887, %v6886
    %v7605 = vpack.c.b16 %v6889, %v6888
    %v7606 = vpack.c.b16 %v6891, %v6890
    %v7607 = vpack.c.b16 %v6893, %v6892
    %v7608 = vpack.c.b16 %v6895, %v6894
    %v7609 = vpack.c.b16 %v6897, %v6896
    %v7610 = vpack.c.b16 %v6899, %v6898
    %v7611 = vpack.c.b16 %v6901, %v6900
    %v7612 = vpack.c.b16 %v6903, %v6902
    %v7613 = vpack.c.b16 %v6905, %v6904
    %v7614 = vpack.c.b16 %v6907, %v6906
    %v7615 = vpack.c.b16 %v6909, %v6908
    %v7616 = vpack.c.b16 %v6911, %v6910
    %v7617 = vpack.c.b16 %v6913, %v6912
    %v7618 = vpack.c.b16 %v6915, %v6914
    %v7619 = vpack.c.b16 %v6917, %v6916
    %v7620 = vpack.c.b16 %v6919, %v6918
    %v7621 = vpack.c.b16 %v6921, %v6920
    %v7622 = vpack.c.b16 %v6923, %v6922
    %v7623 = vpack.c.b16 %v6925, %v6924
    %v7624 = vpack.c.b16 %v6927, %v6926
    %v7625 = vpack.c.b16 %v6929, %v6928
    %v7626 = vpack.c.b16 %v6931, %v6930
    %v7627 = vpack.c.b16 %v6933, %v6932
    %v7628 = vpack.c.b16 %v6935, %v6934
    %v7629 = vpack.c.b16 %v6937, %v6936
    %v7630 = vpack.c.b16 %v6939, %v6938
    %v7631 = vpack.c.b16 %v6941, %v6940
    %v7632 = vpack.c.b16 %v6943, %v6942
    %v7633 = vpack.c.b16 %v6945, %v6944
    %v7634 = vpack.c.b16 %v6947, %v6946
    %v7635 = vpack.c.b16 %v6949, %v6948
    %v7636 = vpack.c.b16 %v6951, %v6950
    %v7637 = vpack.c.b16 %v6953, %v6952
    %v7638 = vpack.c.b16 %v6955, %v6954
    %v7639 = vpack.c.b16 %v6957, %v6956
    %v7640 = vpack.c.b16 %v6959, %v6958
    %v7641 = vpack.c.b16 %v6961, %v6960
    %v7642 = vpack.c.b16 %v6963, %v6962
    %v7643 = vpack.c.b16 %v6965, %v6964
    %v7644 = vpack.c.b16 %v6967, %v6966
    %v7645 = vpack.c.b16 %v6969, %v6968
    %v7646 = vpack.c.b16 %v6971, %v6970
    %v7647 = vpack.c.b16 %v6973, %v6972
    %v7648 = vpack.c.b16 %v6975, %v6974
    %v7649 = vpack.c.b16 %v6977, %v6976
    %v7650 = vpack.c.b16 %v6979, %v6978
    %v7651 = vpack.c.b16 %v6981, %v6980
    %v7652 = vpack.c.b16 %v6983, %v6982
    %v7653 = vpack.c.b16 %v6985, %v6984
    %v7654 = vpack.c.b16 %v6987, %v6986
    %v7655 = vpack.c.b16 %v6989, %v6988
    %v7656 = vpack.c.b16 %v6991, %v6990
    %v7657 = vpack.c.b16 %v6993, %v6992
    %v7658 = vpack.c.b16 %v6995, %v6994
    %v7659 = vpack.c.b16 %v6997, %v6996
    %v7660 = vpack.c.b16 %v6999, %v6998
    %v7661 = vpack.c.b16 %v7001, %v7000
    %v7662 = vpack.c.b16 %v7003, %v7002
    %v7663 = vpack.c.b16 %v7005, %v7004
    %v7664 = vpack.c.b16 %v7007, %v7006
    %v7665 = vpack.c.b16 %v7009, %v7008
    %v7666 = vpack.c.b16 %v7011, %v7010
    %v7667 = vpack.c.b16 %v7013, %v7012
    %v7668 = vpack.c.b16 %v7015, %v7014
    %v7669 = vpack.c.b16 %v7017, %v7016
    %v7670 = vpack.c.b16 %v7019, %v7018
    %v7671 = vpack.c.b16 %v7021, %v7020
    %v7672 = vpack.c.b16 %v7023, %v7022
    %v7673 = vpack.c.b16 %v7025, %v7024
    %v7674 = vpack.c.b16 %v7027, %v7026
    %v7675 = vpack.c.b16 %v7029, %v7028
    %v7676 = vpack.c.b16 %v7031, %v7030
    %v7677 = vpack.c.b16 %v7033, %v7032
    %v7678 = vpack.c.b16 %v7035, %v7034
    %v7679 = vpack.c.b16 %v7037, %v7036
    %v7680 = vpack.c.b16 %v7039, %v7038
    %v7681 = vpack.c.b16 %v7041, %v7040
    %v7682 = vpack.c.b16 %v7043, %v7042
    %v7683 = vpack.c.b16 %v7045, %v7044
    %v7684 = vpack.c.b16 %v7047, %v7046
    %v7685 = vpack.c.b16 %v7049, %v7048
    %v7686 = vpack.c.b16 %v7051, %v7050
    %v7687 = vpack.c.b16 %v7053, %v7052
    %v7688 = vpack.c.b16 %v7055, %v7054
    %v7689 = vpack.c.b16 %v7057, %v7056
    %v7690 = vpack.c.b16 %v7059, %v7058
    %v7691 = vpack.c.b16 %v7061, %v7060
    %v7692 = vpack.c.b16 %v7063, %v7062
    %v7693 = vpack.c.b16 %v7065, %v7064
    %v7694 = vpack.c.b16 %v7067, %v7066
    %v7695 = vpack.c.b16 %v7069, %v7068
    %v7696 = vpack.c.b16 %v7071, %v7070
    %v7697 = vpack.c.b16 %v7073, %v7072
    %v7698 = vpack.c.b16 %v7075, %v7074
    %v7699 = vpack.c.b16 %v7077, %v7076
    %v7700 = vpack.c.b16 %v7079, %v7078
    %v7701 = vpack.c.b16 %v7081, %v7080
    %v7702 = vpack.c.b16 %v7083, %v7082
    %v7703 = vpack.c.b16 %v7085, %v7084
    %v7704 = vpack.c.b16 %v7087, %v7086
    %v7705 = vpack.c.b16 %v7089, %v7088
    %v7706 = vpack.c.b16 %v7091, %v7090
    %v7707 = vpack.c.b16 %v7093, %v7092
    %v7708 = vpack.c.b16 %v7095, %v7094
    %v7709 = vpack.c.b16 %v7097, %v7096
    %v7710 = vpack.c.b16 %v7099, %v7098
    %v7711 = vpack.c.b16 %v7101, %v7100
    %v7712 = vpack.c.b16 %v7103, %v7102
    %v7713 = vpack.c.b16 %v7105, %v7104
    %v7714 = vpack.c.b16 %v7107, %v7106
    %v7715 = vpack.c.b16 %v7109, %v7108
    %v7716 = vpack.c.b16 %v7111, %v7110
    %v7717 = vpack.c.b16 %v7113, %v7112
    %v7718 = vpack.c.b16 %v7115, %v7114
    %v7719 = vpack.c.b16 %v7117, %v7116
    %v7720 = vpack.c.b16 %v7119, %v7118
    %v7721 = vpack.c.b16 %v7121, %v7120
    %v7722 = vpack.c.b16 %v7123, %v7122
    %v7723 = vpack.c.b16 %v7125, %v7124
    %v7724 = vpack.c.b16 %v7127, %v7126
    %v7725 = vpack.c.b16 %v7129, %v7128
    %v7726 = vpack.c.b16 %v7131, %v7130
    %v7727 = vpack.c.b16 %v7133, %v7132
    %v7728 = vpack.c.b16 %v7135, %v7134
    %v7729 = vpack.c.b16 %v7137, %v7136
    %v7730 = vpack.c.b16 %v7139, %v7138
    %v7731 = vpack.c.b16 %v7141, %v7140
    %v7732 = vpack.c.b16 %v7143, %v7142
    %v7733 = vpack.c.b16 %v7145, %v7144
    %v7734 = vpack.c.b16 %v7147, %v7146
    %v7735 = vpack.c.b16 %v7149, %v7148
    %v7736 = vpack.c.b16 %v7151, %v7150
    %v7737 = vpack.c.b16 %v7153, %v7152
    %v7738 = vpack.c.b16 %v7155, %v7154
    %v7739 = vpack.c.b16 %v7157, %v7156
    %v7740 = vpack.c.b16 %v7159, %v7158
    %v7741 = vpack.c.b16 %v7161, %v7160
    %v7742 = vpack.c.b16 %v7163, %v7162
    %v7743 = vpack.c.b16 %v7165, %v7164
    %v7744 = vpack.c.b16 %v7167, %v7166
    %v7745 = vpack.c.b16 %v7169, %v7168
    %v7746 = vpack.c.b16 %v7171, %v7170
    %v7747 = vpack.c.b16 %v7173, %v7172
    %v7748 = vpack.c.b16 %v7175, %v7174
    %v7749 = vpack.c.b16 %v7177, %v7176
    %v7750 = vpack.c.b16 %v7179, %v7178
    %v7751 = vpack.c.b16 %v7181, %v7180
    %v7752 = vpack.c.b16 %v7183, %v7182
    %v7753 = vpack.c.b16 %v7185, %v7184
    %v7754 = vpack.c.b16 %v7187, %v7186
    %v7755 = vpack.c.b16 %v7189, %v7188
    %v7756 = vpack.c.b16 %v7191, %v7190
    %v7757 = vpack.c.b16 %v7193, %v7192
    %v7758 = vpack.c.b16 %v7195, %v7194
    %v7759 = vpack.c.b16 %v7197, %v7196
    %v7760 = vpack.c.b16 %v7199, %v7198
    %v7761 = vpack.c.b16 %v7201, %v7200
    %v7762 = vpack.c.b16 %v7203, %v7202
    %v7763 = vpack.c.b16 %v7205, %v7204
    %v7764 = vpack.c.b16 %v7207, %v7206
    %v7765 = vpack.c.b16 %v7209, %v7208
    %v7766 = vpack.c.b16 %v7211, %v7210
    %v7767 = vpack.c.b16 %v7213, %v7212
    %v7768 = vpack.c.b16 %v7215, %v7214
    %v7769 = vpack.c.b16 %v7217, %v7216
    %v7770 = vpack.c.b16 %v7219, %v7218
    %v7771 = vpack.c.b16 %v7221, %v7220
    %v7772 = vpack.c.b16 %v7223, %v7222
    %v7773 = vpack.c.b16 %v7225, %v7224
    %v7774 = vpack.c.b16 %v7227, %v7226
    %v7775 = vpack.c.b16 %v7229, %v7228
    %v7776 = vpack.c.b16 %v7231, %v7230
    %v7777 = vpack.c.b16 %v7233, %v7232
    %v7778 = vpack.c.b16 %v7235, %v7234
    %v7779 = vpack.c.b16 %v7237, %v7236
    %v7780 = vpack.c.b16 %v7239, %v7238
    %v7781 = vpack.c.b16 %v7241, %v7240
    %v7782 = vpack.c.b16 %v7243, %v7242
    %v7783 = vpack.c.b16 %v7245, %v7244
    %v7784 = vpack.c.b16 %v7247, %v7246
    %v7785 = vpack.c.b16 %v7249, %v7248
    %v7786 = vpack.c.b16 %v7251, %v7250
    %v7787 = vpack.c.b16 %v7253, %v7252
    %v7788 = vpack.c.b16 %v7255, %v7254
    %v7789 = vpack.c.b16 %v7257, %v7256
    %v7790 = vpack.c.b16 %v7259, %v7258
    %v7791 = vpack.c.b16 %v7261, %v7260
    %v7792 = vpack.c.b16 %v7263, %v7262
    %v7793 = vpack.c.b16 %v7265, %v7264
    %v7794 = vpack.c.b16 %v7267, %v7266
    %v7795 = vpack.c.b16 %v7269, %v7268
    %v7796 = vpack.c.b16 %v7271, %v7270
    %v7797 = vpack.c.b16 %v7273, %v7272
    %v7798 = vpack.c.b16 %v7275, %v7274
    %v7799 = vpack.c.b16 %v7277, %v7276
    %v7800 = vpack.c.b16 %v7279, %v7278
    %v7801 = vpack.c.b16 %v7281, %v7280
    %v7802 = vpack.c.b16 %v7283, %v7282
    %v7803 = vpack.c.b16 %v7285, %v7284
    %v7804 = vpack.c.b16 %v7287, %v7286
    %v7805 = vpack.c.b16 %v7289, %v7288
    %v7806 = vpack.c.b16 %v7291, %v7290
    %v7807 = vpack.c.b16 %v7293, %v7292
    %v7808 = vpack.c.b16 %v7295, %v7294
    %v7809 = vpack.c.b16 %v7297, %v7296
    %v7810 = vpack.c.b16 %v7299, %v7298
    %v7811 = vpack.c.b16 %v7301, %v7300
    %v7812 = vpack.c.b16 %v7303, %v7302
    %v7813 = vpack.c.b16 %v7305, %v7304
    %v7814 = vpack.c.b16 %v7307, %v7306
    %v7815 = vpack.c.b16 %v7309, %v7308
    %v7816 = vpack.c.b16 %v7311, %v7310
    %v7817 = vpack.c.b16 %v7313, %v7312
    %v7818 = vpack.c.b16 %v7315, %v7314
    %v7819 = vpack.c.b16 %v7317, %v7316
    %v7820 = vpack.c.b16 %v7319, %v7318
    %v7821 = vpack.c.b16 %v7321, %v7320
    %v7822 = vpack.c.b16 %v7323, %v7322
    %v7823 = vpack.c.b16 %v7325, %v7324
    %v7824 = vpack.c.b16 %v7327, %v7326
    %v7825 = vpack.c.b16 %v7329, %v7328
    %v7826 = vpack.c.b16 %v7331, %v7330
    %v7827 = vpack.c.b16 %v7333, %v7332
    %v7828 = vpack.c.b16 %v7335, %v7334
    %v7829 = vpack.c.b16 %v7337, %v7336
    %v7830 = vpack.c.b16 %v7339, %v7338
    %v7831 = vpack.c.b16 %v7341, %v7340
    %v7832 = vpack.c.b16 %v7343, %v7342
    %v7833 = vpack.c.b16 %v7345, %v7344
    %v7834 = vpack.c.b16 %v7347, %v7346
    %v7835 = vpack.c.b16 %v7349, %v7348
    %v7836 = vpack.c.b16 %v7351, %v7350
    %v7837 = vpack.c.b16 %v7353, %v7352
    %v7838 = vpack.c.b16 %v7355, %v7354
    %v7839 = vpack.c.b16 %v7357, %v7356
    %v7840 = vpack.c.b16 %v7359, %v7358
    %v7841 = vpack.c.b16 %v7361, %v7360
    %v7842 = vpack.c.b16 %v7363, %v7362
    %v7843 = vpack.c.b16 %v7365, %v7364
    %v7844 = vpack.c.b16 %v7367, %v7366
    %v7845 = vpack.c.b16 %v7369, %v7368
    %v7846 = vpack.c.b16 %v7371, %v7370
    %v7847 = vpack.c.b16 %v7373, %v7372
    %v7848 = vpack.c.b16 %v7375, %v7374
    %v7849 = vpack.c.b16 %v7377, %v7376
    %v7850 = vpack.c.b16 %v7379, %v7378
    %v7851 = vpack.c.b16 %v7381, %v7380
    %v7852 = vpack.c.b16 %v7383, %v7382
    %v7853 = vpack.c.b16 %v7385, %v7384
    %v7854 = vpack.c.b16 %v7387, %v7386
    %v7855 = vpack.c.b16 %v7389, %v7388
    %v7856 = vpack.c.b16 %v7391, %v7390
    %v7857 = vpack.c.b16 %v7393, %v7392
    %v7858 = vpack.c.b16 %v7395, %v7394
    %v7859 = vpack.c.b16 %v7397, %v7396
    %v7860 = vpack.c.b16 %v7399, %v7398
    %v7861 = vpack.c.b16 %v7401, %v7400
    %v7862 = vpack.c.b16 %v7403, %v7402
    %v7863 = vpack.c.b16 %v7405, %v7404
    %v7864 = vpack.c.b16 %v7407, %v7406
    %v7865 = vpack.c.b16 %v7409, %v7408
    %v7866 = vpack.c.b16 %v7411, %v7410
    %v7867 = vpack.c.b16 %v7413, %v7412
    %v7868 = vpack.c.b16 %v7415, %v7414
    %v7869 = vpack.c.b16 %v7417, %v7416
    %v7870 = vpack.c.b16 %v7419, %v7418
    %v7871 = vpack.c.b16 %v7421, %v7420
    %v7872 = vpack.c.b16 %v7423, %v7422
    %v7873 = vpack.c.b16 %v7425, %v7424
    %v7874 = vpack.c.b16 %v7427, %v7426
    %v7875 = vpack.c.b16 %v7429, %v7428
    %v7876 = vpack.c.b16 %v7431, %v7430
    %v7877 = vpack.c.b16 %v7433, %v7432
    %v7878 = vpack.c.b16 %v7435, %v7434
    %v7879 = vpack.c.b16 %v7437, %v7436
    %v7880 = vpack.c.b16 %v7439, %v7438
    %v7881 = vpack.c.b16 %v7441, %v7440
    %v7882 = vpack.c.b16 %v7443, %v7442
    %v7883 = vpack.c.b16 %v7445, %v7444
    %v7884 = vpack.c.b16 %v7447, %v7446
    %v7885 = vpack.c.b16 %v7449, %v7448
    %v7886 = vpack.c.b16 %v7451, %v7450
    %v7887 = vpack.c.b16 %v7453, %v7452
    %v7888 = vpack.c.b16 %v7455, %v7454
    %v7889 = vpack.c.b16 %v7457, %v7456
    %v7890 = vpack.c.b16 %v7459, %v7458
    %v7891 = vpack.c.b16 %v7461, %v7460
    %v7892 = vpack.c.b16 %v7463, %v7462
    %v7893 = vpack.c.b16 %v7465, %v7464
    %v7894 = vpack.c.b16 %v7467, %v7466
    %v7895 = vpack.c.b16 %v7469, %v7468
    %v7896 = vpack.c.b16 %v7471, %v7470
    %v7897 = vpack.c.b16 %v7473, %v7472
    %v7898 = vpack.c.b16 %v7475, %v7474
    %v7899 = vpack.c.b16 %v7477, %v7476
    %v7900 = vpack.c.b16 %v7479, %v7478
    %v7901 = vpack.c.b16 %v7481, %v7480
    %v7902 = vpack.c.b16 %v7483, %v7482
    %v7903 = vpack.c.b16 %v7485, %v7484
    %v7904 = vpack.c.b16 %v7487, %v7486
    %v7905 = vpack.c.b16 %v7489, %v7488
    %v7906 = vpack.c.b16 %v7491, %v7490
    %v7907 = vpack.c.b16 %v7493, %v7492
    %v7908 = vpack.c.b16 %v7495, %v7494
    %v7909 = vpack.c.b16 %v7497, %v7496
    %v7910 = vpack.c.b16 %v7499, %v7498
    %v7911 = vpack.c.b16 %v7501, %v7500
    %v7912 = vpack.c.b16 %v7503, %v7502
    %v7913 = vpack.c.b16 %v7505, %v7504
    %v7914 = vpack.c.b16 %v7507, %v7506
    %v7915 = vpack.c.b16 %v7509, %v7508
    %v7916 = vpack.c.b16 %v7511, %v7510
    %v7917 = vpack.c.b16 %v7513, %v7512
    %v7918 = vpack.c.b16 %v7515, %v7514
    %v7919 = vpack.c.b16 %v7517, %v7516
    %v7920 = vpack.c.b16 %v7519, %v7518
    %v7921 = vpack.c.b16 %v7521, %v7520
    %v7922 = vpack.c.b16 %v7523, %v7522
    %v7923 = vpack.c.b16 %v7525, %v7524
    %v7924 = vpack.c.b16 %v7527, %v7526
    %v7925 = vpack.c.b16 %v7529, %v7528
    %v7926 = vpack.c.b16 %v7531, %v7530
    %v7927 = vpack.c.b16 %v7533, %v7532
    %v7928 = vpack.c.b16 %v7535, %v7534
    %v7929 = vpack.c.b16 %v7537, %v7536
    %v7930 = vpack.c.b16 %v7539, %v7538
    %v7931 = vpack.c.b16 %v7541, %v7540
    %v7932 = vpack.c.b16 %v7543, %v7542
    %v7933 = vpack.c.b16 %v7545, %v7544
    %v7934 = vpack.c.b16 %v7547, %v7546
    %v7935 = vpack.c.b16 %v7549, %v7548
    %v7936 = vpack.c.b16 %v7551, %v7550
    %v7937 = vpack.c.b16 %v7553, %v7552
    %8322 = vst [vmem:[#allocation5] sm:$0xff] %v7554
    %8323 = vst [vmem:[#allocation5 + $0x8] sm:$0xff] %v7555
    %8324 = vst [vmem:[#allocation5 + $0x10] sm:$0xff] %v7556
    %8325 = vst [vmem:[#allocation5 + $0x18] sm:$0xff] %v7557
    %8326 = vst [vmem:[#allocation5 + $0x20] sm:$0xff] %v7558
    %8327 = vst [vmem:[#allocation5 + $0x28] sm:$0xff] %v7559
    %8328 = vst [vmem:[#allocation5 + $0x30] sm:$0xff] %v7560
    %8329 = vst [vmem:[#allocation5 + $0x38] sm:$0xff] %v7561
    %8330 = vst [vmem:[#allocation5 + $0x40] sm:$0xff] %v7562
    %8331 = vst [vmem:[#allocation5 + $0x48] sm:$0xff] %v7563
    %8332 = vst [vmem:[#allocation5 + $0x50] sm:$0xff] %v7564
    %8333 = vst [vmem:[#allocation5 + $0x58] sm:$0xff] %v7565
    %8334 = vst [vmem:[#allocation5 + $0x60] sm:$0xff] %v7566
    %8335 = vst [vmem:[#allocation5 + $0x68] sm:$0xff] %v7567
    %8336 = vst [vmem:[#allocation5 + $0x70] sm:$0xff] %v7568
    %8337 = vst [vmem:[#allocation5 + $0x78] sm:$0xff] %v7569
    %8338 = vst [vmem:[#allocation5 + $0x80] sm:$0xff] %v7570
    %8339 = vst [vmem:[#allocation5 + $0x88] sm:$0xff] %v7571
    %8340 = vst [vmem:[#allocation5 + $0x90] sm:$0xff] %v7572
    %8341 = vst [vmem:[#allocation5 + $0x98] sm:$0xff] %v7573
    %8342 = vst [vmem:[#allocation5 + $0xa0] sm:$0xff] %v7574
    %8343 = vst [vmem:[#allocation5 + $0xa8] sm:$0xff] %v7575
    %8344 = vst [vmem:[#allocation5 + $0xb0] sm:$0xff] %v7576
    %8345 = vst [vmem:[#allocation5 + $0xb8] sm:$0xff] %v7577
    %8346 = vst [vmem:[#allocation5 + $0xc0] sm:$0xff] %v7578
    %8347 = vst [vmem:[#allocation5 + $0xc8] sm:$0xff] %v7579
    %8348 = vst [vmem:[#allocation5 + $0xd0] sm:$0xff] %v7580
    %8349 = vst [vmem:[#allocation5 + $0xd8] sm:$0xff] %v7581
    %8350 = vst [vmem:[#allocation5 + $0xe0] sm:$0xff] %v7582
    %8351 = vst [vmem:[#allocation5 + $0xe8] sm:$0xff] %v7583
    %8352 = vst [vmem:[#allocation5 + $0xf0] sm:$0xff] %v7584
    %8353 = vst [vmem:[#allocation5 + $0xf8] sm:$0xff] %v7585
    %8354 = vst [vmem:[#allocation5 + $0x100] sm:$0xff] %v7586
    %8355 = vst [vmem:[#allocation5 + $0x108] sm:$0xff] %v7587
    %8356 = vst [vmem:[#allocation5 + $0x110] sm:$0xff] %v7588
    %8357 = vst [vmem:[#allocation5 + $0x118] sm:$0xff] %v7589
    %8358 = vst [vmem:[#allocation5 + $0x120] sm:$0xff] %v7590
    %8359 = vst [vmem:[#allocation5 + $0x128] sm:$0xff] %v7591
    %8360 = vst [vmem:[#allocation5 + $0x130] sm:$0xff] %v7592
    %8361 = vst [vmem:[#allocation5 + $0x138] sm:$0xff] %v7593
    %8362 = vst [vmem:[#allocation5 + $0x140] sm:$0xff] %v7594
    %8363 = vst [vmem:[#allocation5 + $0x148] sm:$0xff] %v7595
    %8364 = vst [vmem:[#allocation5 + $0x150] sm:$0xff] %v7596
    %8365 = vst [vmem:[#allocation5 + $0x158] sm:$0xff] %v7597
    %8366 = vst [vmem:[#allocation5 + $0x160] sm:$0xff] %v7598
    %8367 = vst [vmem:[#allocation5 + $0x168] sm:$0xff] %v7599
    %8368 = vst [vmem:[#allocation5 + $0x170] sm:$0xff] %v7600
    %8369 = vst [vmem:[#allocation5 + $0x178] sm:$0xff] %v7601
    %8370 = vst [vmem:[#allocation5 + $0x180] sm:$0xff] %v7602
    %8371 = vst [vmem:[#allocation5 + $0x188] sm:$0xff] %v7603
    %8372 = vst [vmem:[#allocation5 + $0x190] sm:$0xff] %v7604
    %8373 = vst [vmem:[#allocation5 + $0x198] sm:$0xff] %v7605
    %8374 = vst [vmem:[#allocation5 + $0x1a0] sm:$0xff] %v7606
    %8375 = vst [vmem:[#allocation5 + $0x1a8] sm:$0xff] %v7607
    %8376 = vst [vmem:[#allocation5 + $0x1b0] sm:$0xff] %v7608
    %8377 = vst [vmem:[#allocation5 + $0x1b8] sm:$0xff] %v7609
    %8378 = vst [vmem:[#allocation5 + $0x1c0] sm:$0xff] %v7610
    %8379 = vst [vmem:[#allocation5 + $0x1c8] sm:$0xff] %v7611
    %8380 = vst [vmem:[#allocation5 + $0x1d0] sm:$0xff] %v7612
    %8381 = vst [vmem:[#allocation5 + $0x1d8] sm:$0xff] %v7613
    %8382 = vst [vmem:[#allocation5 + $0x1e0] sm:$0xff] %v7614
    %8383 = vst [vmem:[#allocation5 + $0x1e8] sm:$0xff] %v7615
    %8384 = vst [vmem:[#allocation5 + $0x1f0] sm:$0xff] %v7616
    %8385 = vst [vmem:[#allocation5 + $0x1f8] sm:$0xff] %v7617
    %8386 = vst [vmem:[#allocation5 + $0x200] sm:$0xff] %v7618
    %8387 = vst [vmem:[#allocation5 + $0x208] sm:$0xff] %v7619
    %8388 = vst [vmem:[#allocation5 + $0x210] sm:$0xff] %v7620
    %8389 = vst [vmem:[#allocation5 + $0x218] sm:$0xff] %v7621
    %8390 = vst [vmem:[#allocation5 + $0x220] sm:$0xff] %v7622
    %8391 = vst [vmem:[#allocation5 + $0x228] sm:$0xff] %v7623
    %8392 = vst [vmem:[#allocation5 + $0x230] sm:$0xff] %v7624
    %8393 = vst [vmem:[#allocation5 + $0x238] sm:$0xff] %v7625
    %8394 = vst [vmem:[#allocation5 + $0x240] sm:$0xff] %v7626
    %8395 = vst [vmem:[#allocation5 + $0x248] sm:$0xff] %v7627
    %8396 = vst [vmem:[#allocation5 + $0x250] sm:$0xff] %v7628
    %8397 = vst [vmem:[#allocation5 + $0x258] sm:$0xff] %v7629
    %8398 = vst [vmem:[#allocation5 + $0x260] sm:$0xff] %v7630
    %8399 = vst [vmem:[#allocation5 + $0x268] sm:$0xff] %v7631
    %8400 = vst [vmem:[#allocation5 + $0x270] sm:$0xff] %v7632
    %8401 = vst [vmem:[#allocation5 + $0x278] sm:$0xff] %v7633
    %8402 = vst [vmem:[#allocation5 + $0x280] sm:$0xff] %v7634
    %8403 = vst [vmem:[#allocation5 + $0x288] sm:$0xff] %v7635
    %8404 = vst [vmem:[#allocation5 + $0x290] sm:$0xff] %v7636
    %8405 = vst [vmem:[#allocation5 + $0x298] sm:$0xff] %v7637
    %8406 = vst [vmem:[#allocation5 + $0x2a0] sm:$0xff] %v7638
    %8407 = vst [vmem:[#allocation5 + $0x2a8] sm:$0xff] %v7639
    %8408 = vst [vmem:[#allocation5 + $0x2b0] sm:$0xff] %v7640
    %8409 = vst [vmem:[#allocation5 + $0x2b8] sm:$0xff] %v7641
    %8410 = vst [vmem:[#allocation5 + $0x2c0] sm:$0xff] %v7642
    %8411 = vst [vmem:[#allocation5 + $0x2c8] sm:$0xff] %v7643
    %8412 = vst [vmem:[#allocation5 + $0x2d0] sm:$0xff] %v7644
    %8413 = vst [vmem:[#allocation5 + $0x2d8] sm:$0xff] %v7645
    %8414 = vst [vmem:[#allocation5 + $0x2e0] sm:$0xff] %v7646
    %8415 = vst [vmem:[#allocation5 + $0x2e8] sm:$0xff] %v7647
    %8416 = vst [vmem:[#allocation5 + $0x2f0] sm:$0xff] %v7648
    %8417 = vst [vmem:[#allocation5 + $0x2f8] sm:$0xff] %v7649
    %8418 = vst [vmem:[#allocation5 + $0x300] sm:$0xff] %v7650
    %8419 = vst [vmem:[#allocation5 + $0x308] sm:$0xff] %v7651
    %8420 = vst [vmem:[#allocation5 + $0x310] sm:$0xff] %v7652
    %8421 = vst [vmem:[#allocation5 + $0x318] sm:$0xff] %v7653
    %8422 = vst [vmem:[#allocation5 + $0x320] sm:$0xff] %v7654
    %8423 = vst [vmem:[#allocation5 + $0x328] sm:$0xff] %v7655
    %8424 = vst [vmem:[#allocation5 + $0x330] sm:$0xff] %v7656
    %8425 = vst [vmem:[#allocation5 + $0x338] sm:$0xff] %v7657
    %8426 = vst [vmem:[#allocation5 + $0x340] sm:$0xff] %v7658
    %8427 = vst [vmem:[#allocation5 + $0x348] sm:$0xff] %v7659
    %8428 = vst [vmem:[#allocation5 + $0x350] sm:$0xff] %v7660
    %8429 = vst [vmem:[#allocation5 + $0x358] sm:$0xff] %v7661
    %8430 = vst [vmem:[#allocation5 + $0x360] sm:$0xff] %v7662
    %8431 = vst [vmem:[#allocation5 + $0x368] sm:$0xff] %v7663
    %8432 = vst [vmem:[#allocation5 + $0x370] sm:$0xff] %v7664
    %8433 = vst [vmem:[#allocation5 + $0x378] sm:$0xff] %v7665
    %8434 = vst [vmem:[#allocation5 + $0x380] sm:$0xff] %v7666
    %8435 = vst [vmem:[#allocation5 + $0x388] sm:$0xff] %v7667
    %8436 = vst [vmem:[#allocation5 + $0x390] sm:$0xff] %v7668
    %8437 = vst [vmem:[#allocation5 + $0x398] sm:$0xff] %v7669
    %8438 = vst [vmem:[#allocation5 + $0x3a0] sm:$0xff] %v7670
    %8439 = vst [vmem:[#allocation5 + $0x3a8] sm:$0xff] %v7671
    %8440 = vst [vmem:[#allocation5 + $0x3b0] sm:$0xff] %v7672
    %8441 = vst [vmem:[#allocation5 + $0x3b8] sm:$0xff] %v7673
    %8442 = vst [vmem:[#allocation5 + $0x3c0] sm:$0xff] %v7674
    %8443 = vst [vmem:[#allocation5 + $0x3c8] sm:$0xff] %v7675
    %8444 = vst [vmem:[#allocation5 + $0x3d0] sm:$0xff] %v7676
    %8445 = vst [vmem:[#allocation5 + $0x3d8] sm:$0xff] %v7677
    %8446 = vst [vmem:[#allocation5 + $0x3e0] sm:$0xff] %v7678
    %8447 = vst [vmem:[#allocation5 + $0x3e8] sm:$0xff] %v7679
    %8448 = vst [vmem:[#allocation5 + $0x3f0] sm:$0xff] %v7680
    %8449 = vst [vmem:[#allocation5 + $0x3f8] sm:$0xff] %v7681
    %8450 = vst [vmem:[#allocation5 + $0x400] sm:$0xff] %v7682
    %8451 = vst [vmem:[#allocation5 + $0x408] sm:$0xff] %v7683
    %8452 = vst [vmem:[#allocation5 + $0x410] sm:$0xff] %v7684
    %8453 = vst [vmem:[#allocation5 + $0x418] sm:$0xff] %v7685
    %8454 = vst [vmem:[#allocation5 + $0x420] sm:$0xff] %v7686
    %8455 = vst [vmem:[#allocation5 + $0x428] sm:$0xff] %v7687
    %8456 = vst [vmem:[#allocation5 + $0x430] sm:$0xff] %v7688
    %8457 = vst [vmem:[#allocation5 + $0x438] sm:$0xff] %v7689
    %8458 = vst [vmem:[#allocation5 + $0x440] sm:$0xff] %v7690
    %8459 = vst [vmem:[#allocation5 + $0x448] sm:$0xff] %v7691
    %8460 = vst [vmem:[#allocation5 + $0x450] sm:$0xff] %v7692
    %8461 = vst [vmem:[#allocation5 + $0x458] sm:$0xff] %v7693
    %8462 = vst [vmem:[#allocation5 + $0x460] sm:$0xff] %v7694
    %8463 = vst [vmem:[#allocation5 + $0x468] sm:$0xff] %v7695
    %8464 = vst [vmem:[#allocation5 + $0x470] sm:$0xff] %v7696
    %8465 = vst [vmem:[#allocation5 + $0x478] sm:$0xff] %v7697
    %8466 = vst [vmem:[#allocation5 + $0x480] sm:$0xff] %v7698
    %8467 = vst [vmem:[#allocation5 + $0x488] sm:$0xff] %v7699
    %8468 = vst [vmem:[#allocation5 + $0x490] sm:$0xff] %v7700
    %8469 = vst [vmem:[#allocation5 + $0x498] sm:$0xff] %v7701
    %8470 = vst [vmem:[#allocation5 + $0x4a0] sm:$0xff] %v7702
    %8471 = vst [vmem:[#allocation5 + $0x4a8] sm:$0xff] %v7703
    %8472 = vst [vmem:[#allocation5 + $0x4b0] sm:$0xff] %v7704
    %8473 = vst [vmem:[#allocation5 + $0x4b8] sm:$0xff] %v7705
    %8474 = vst [vmem:[#allocation5 + $0x4c0] sm:$0xff] %v7706
    %8475 = vst [vmem:[#allocation5 + $0x4c8] sm:$0xff] %v7707
    %8476 = vst [vmem:[#allocation5 + $0x4d0] sm:$0xff] %v7708
    %8477 = vst [vmem:[#allocation5 + $0x4d8] sm:$0xff] %v7709
    %8478 = vst [vmem:[#allocation5 + $0x4e0] sm:$0xff] %v7710
    %8479 = vst [vmem:[#allocation5 + $0x4e8] sm:$0xff] %v7711
    %8480 = vst [vmem:[#allocation5 + $0x4f0] sm:$0xff] %v7712
    %8481 = vst [vmem:[#allocation5 + $0x4f8] sm:$0xff] %v7713
    %8482 = vst [vmem:[#allocation5 + $0x500] sm:$0xff] %v7714
    %8483 = vst [vmem:[#allocation5 + $0x508] sm:$0xff] %v7715
    %8484 = vst [vmem:[#allocation5 + $0x510] sm:$0xff] %v7716
    %8485 = vst [vmem:[#allocation5 + $0x518] sm:$0xff] %v7717
    %8486 = vst [vmem:[#allocation5 + $0x520] sm:$0xff] %v7718
    %8487 = vst [vmem:[#allocation5 + $0x528] sm:$0xff] %v7719
    %8488 = vst [vmem:[#allocation5 + $0x530] sm:$0xff] %v7720
    %8489 = vst [vmem:[#allocation5 + $0x538] sm:$0xff] %v7721
    %8490 = vst [vmem:[#allocation5 + $0x540] sm:$0xff] %v7722
    %8491 = vst [vmem:[#allocation5 + $0x548] sm:$0xff] %v7723
    %8492 = vst [vmem:[#allocation5 + $0x550] sm:$0xff] %v7724
    %8493 = vst [vmem:[#allocation5 + $0x558] sm:$0xff] %v7725
    %8494 = vst [vmem:[#allocation5 + $0x560] sm:$0xff] %v7726
    %8495 = vst [vmem:[#allocation5 + $0x568] sm:$0xff] %v7727
    %8496 = vst [vmem:[#allocation5 + $0x570] sm:$0xff] %v7728
    %8497 = vst [vmem:[#allocation5 + $0x578] sm:$0xff] %v7729
    %8498 = vst [vmem:[#allocation5 + $0x580] sm:$0xff] %v7730
    %8499 = vst [vmem:[#allocation5 + $0x588] sm:$0xff] %v7731
    %8500 = vst [vmem:[#allocation5 + $0x590] sm:$0xff] %v7732
    %8501 = vst [vmem:[#allocation5 + $0x598] sm:$0xff] %v7733
    %8502 = vst [vmem:[#allocation5 + $0x5a0] sm:$0xff] %v7734
    %8503 = vst [vmem:[#allocation5 + $0x5a8] sm:$0xff] %v7735
    %8504 = vst [vmem:[#allocation5 + $0x5b0] sm:$0xff] %v7736
    %8505 = vst [vmem:[#allocation5 + $0x5b8] sm:$0xff] %v7737
    %8506 = vst [vmem:[#allocation5 + $0x5c0] sm:$0xff] %v7738
    %8507 = vst [vmem:[#allocation5 + $0x5c8] sm:$0xff] %v7739
    %8508 = vst [vmem:[#allocation5 + $0x5d0] sm:$0xff] %v7740
    %8509 = vst [vmem:[#allocation5 + $0x5d8] sm:$0xff] %v7741
    %8510 = vst [vmem:[#allocation5 + $0x5e0] sm:$0xff] %v7742
    %8511 = vst [vmem:[#allocation5 + $0x5e8] sm:$0xff] %v7743
    %8512 = vst [vmem:[#allocation5 + $0x5f0] sm:$0xff] %v7744
    %8513 = vst [vmem:[#allocation5 + $0x5f8] sm:$0xff] %v7745
    %8514 = vst [vmem:[#allocation5 + $0x600] sm:$0xff] %v7746
    %8515 = vst [vmem:[#allocation5 + $0x608] sm:$0xff] %v7747
    %8516 = vst [vmem:[#allocation5 + $0x610] sm:$0xff] %v7748
    %8517 = vst [vmem:[#allocation5 + $0x618] sm:$0xff] %v7749
    %8518 = vst [vmem:[#allocation5 + $0x620] sm:$0xff] %v7750
    %8519 = vst [vmem:[#allocation5 + $0x628] sm:$0xff] %v7751
    %8520 = vst [vmem:[#allocation5 + $0x630] sm:$0xff] %v7752
    %8521 = vst [vmem:[#allocation5 + $0x638] sm:$0xff] %v7753
    %8522 = vst [vmem:[#allocation5 + $0x640] sm:$0xff] %v7754
    %8523 = vst [vmem:[#allocation5 + $0x648] sm:$0xff] %v7755
    %8524 = vst [vmem:[#allocation5 + $0x650] sm:$0xff] %v7756
    %8525 = vst [vmem:[#allocation5 + $0x658] sm:$0xff] %v7757
    %8526 = vst [vmem:[#allocation5 + $0x660] sm:$0xff] %v7758
    %8527 = vst [vmem:[#allocation5 + $0x668] sm:$0xff] %v7759
    %8528 = vst [vmem:[#allocation5 + $0x670] sm:$0xff] %v7760
    %8529 = vst [vmem:[#allocation5 + $0x678] sm:$0xff] %v7761
    %8530 = vst [vmem:[#allocation5 + $0x680] sm:$0xff] %v7762
    %8531 = vst [vmem:[#allocation5 + $0x688] sm:$0xff] %v7763
    %8532 = vst [vmem:[#allocation5 + $0x690] sm:$0xff] %v7764
    %8533 = vst [vmem:[#allocation5 + $0x698] sm:$0xff] %v7765
    %8534 = vst [vmem:[#allocation5 + $0x6a0] sm:$0xff] %v7766
    %8535 = vst [vmem:[#allocation5 + $0x6a8] sm:$0xff] %v7767
    %8536 = vst [vmem:[#allocation5 + $0x6b0] sm:$0xff] %v7768
    %8537 = vst [vmem:[#allocation5 + $0x6b8] sm:$0xff] %v7769
    %8538 = vst [vmem:[#allocation5 + $0x6c0] sm:$0xff] %v7770
    %8539 = vst [vmem:[#allocation5 + $0x6c8] sm:$0xff] %v7771
    %8540 = vst [vmem:[#allocation5 + $0x6d0] sm:$0xff] %v7772
    %8541 = vst [vmem:[#allocation5 + $0x6d8] sm:$0xff] %v7773
    %8542 = vst [vmem:[#allocation5 + $0x6e0] sm:$0xff] %v7774
    %8543 = vst [vmem:[#allocation5 + $0x6e8] sm:$0xff] %v7775
    %8544 = vst [vmem:[#allocation5 + $0x6f0] sm:$0xff] %v7776
    %8545 = vst [vmem:[#allocation5 + $0x6f8] sm:$0xff] %v7777
    %8546 = vst [vmem:[#allocation5 + $0x700] sm:$0xff] %v7778
    %8547 = vst [vmem:[#allocation5 + $0x708] sm:$0xff] %v7779
    %8548 = vst [vmem:[#allocation5 + $0x710] sm:$0xff] %v7780
    %8549 = vst [vmem:[#allocation5 + $0x718] sm:$0xff] %v7781
    %8550 = vst [vmem:[#allocation5 + $0x720] sm:$0xff] %v7782
    %8551 = vst [vmem:[#allocation5 + $0x728] sm:$0xff] %v7783
    %8552 = vst [vmem:[#allocation5 + $0x730] sm:$0xff] %v7784
    %8553 = vst [vmem:[#allocation5 + $0x738] sm:$0xff] %v7785
    %8554 = vst [vmem:[#allocation5 + $0x740] sm:$0xff] %v7786
    %8555 = vst [vmem:[#allocation5 + $0x748] sm:$0xff] %v7787
    %8556 = vst [vmem:[#allocation5 + $0x750] sm:$0xff] %v7788
    %8557 = vst [vmem:[#allocation5 + $0x758] sm:$0xff] %v7789
    %8558 = vst [vmem:[#allocation5 + $0x760] sm:$0xff] %v7790
    %8559 = vst [vmem:[#allocation5 + $0x768] sm:$0xff] %v7791
    %8560 = vst [vmem:[#allocation5 + $0x770] sm:$0xff] %v7792
    %8561 = vst [vmem:[#allocation5 + $0x778] sm:$0xff] %v7793
    %8562 = vst [vmem:[#allocation5 + $0x780] sm:$0xff] %v7794
    %8563 = vst [vmem:[#allocation5 + $0x788] sm:$0xff] %v7795
    %8564 = vst [vmem:[#allocation5 + $0x790] sm:$0xff] %v7796
    %8565 = vst [vmem:[#allocation5 + $0x798] sm:$0xff] %v7797
    %8566 = vst [vmem:[#allocation5 + $0x7a0] sm:$0xff] %v7798
    %8567 = vst [vmem:[#allocation5 + $0x7a8] sm:$0xff] %v7799
    %8568 = vst [vmem:[#allocation5 + $0x7b0] sm:$0xff] %v7800
    %8569 = vst [vmem:[#allocation5 + $0x7b8] sm:$0xff] %v7801
    %8570 = vst [vmem:[#allocation5 + $0x7c0] sm:$0xff] %v7802
    %8571 = vst [vmem:[#allocation5 + $0x7c8] sm:$0xff] %v7803
    %8572 = vst [vmem:[#allocation5 + $0x7d0] sm:$0xff] %v7804
    %8573 = vst [vmem:[#allocation5 + $0x7d8] sm:$0xff] %v7805
    %8574 = vst [vmem:[#allocation5 + $0x7e0] sm:$0xff] %v7806
    %8575 = vst [vmem:[#allocation5 + $0x7e8] sm:$0xff] %v7807
    %8576 = vst [vmem:[#allocation5 + $0x7f0] sm:$0xff] %v7808
    %8577 = vst [vmem:[#allocation5 + $0x7f8] sm:$0xff] %v7809
    %8578 = vst [vmem:[#allocation5 + $0x800] sm:$0xff] %v7810
    %8579 = vst [vmem:[#allocation5 + $0x808] sm:$0xff] %v7811
    %8580 = vst [vmem:[#allocation5 + $0x810] sm:$0xff] %v7812
    %8581 = vst [vmem:[#allocation5 + $0x818] sm:$0xff] %v7813
    %8582 = vst [vmem:[#allocation5 + $0x820] sm:$0xff] %v7814
    %8583 = vst [vmem:[#allocation5 + $0x828] sm:$0xff] %v7815
    %8584 = vst [vmem:[#allocation5 + $0x830] sm:$0xff] %v7816
    %8585 = vst [vmem:[#allocation5 + $0x838] sm:$0xff] %v7817
    %8586 = vst [vmem:[#allocation5 + $0x840] sm:$0xff] %v7818
    %8587 = vst [vmem:[#allocation5 + $0x848] sm:$0xff] %v7819
    %8588 = vst [vmem:[#allocation5 + $0x850] sm:$0xff] %v7820
    %8589 = vst [vmem:[#allocation5 + $0x858] sm:$0xff] %v7821
    %8590 = vst [vmem:[#allocation5 + $0x860] sm:$0xff] %v7822
    %8591 = vst [vmem:[#allocation5 + $0x868] sm:$0xff] %v7823
    %8592 = vst [vmem:[#allocation5 + $0x870] sm:$0xff] %v7824
    %8593 = vst [vmem:[#allocation5 + $0x878] sm:$0xff] %v7825
    %8594 = vst [vmem:[#allocation5 + $0x880] sm:$0xff] %v7826
    %8595 = vst [vmem:[#allocation5 + $0x888] sm:$0xff] %v7827
    %8596 = vst [vmem:[#allocation5 + $0x890] sm:$0xff] %v7828
    %8597 = vst [vmem:[#allocation5 + $0x898] sm:$0xff] %v7829
    %8598 = vst [vmem:[#allocation5 + $0x8a0] sm:$0xff] %v7830
    %8599 = vst [vmem:[#allocation5 + $0x8a8] sm:$0xff] %v7831
    %8600 = vst [vmem:[#allocation5 + $0x8b0] sm:$0xff] %v7832
    %8601 = vst [vmem:[#allocation5 + $0x8b8] sm:$0xff] %v7833
    %8602 = vst [vmem:[#allocation5 + $0x8c0] sm:$0xff] %v7834
    %8603 = vst [vmem:[#allocation5 + $0x8c8] sm:$0xff] %v7835
    %8604 = vst [vmem:[#allocation5 + $0x8d0] sm:$0xff] %v7836
    %8605 = vst [vmem:[#allocation5 + $0x8d8] sm:$0xff] %v7837
    %8606 = vst [vmem:[#allocation5 + $0x8e0] sm:$0xff] %v7838
    %8607 = vst [vmem:[#allocation5 + $0x8e8] sm:$0xff] %v7839
    %8608 = vst [vmem:[#allocation5 + $0x8f0] sm:$0xff] %v7840
    %8609 = vst [vmem:[#allocation5 + $0x8f8] sm:$0xff] %v7841
    %8610 = vst [vmem:[#allocation5 + $0x900] sm:$0xff] %v7842
    %8611 = vst [vmem:[#allocation5 + $0x908] sm:$0xff] %v7843
    %8612 = vst [vmem:[#allocation5 + $0x910] sm:$0xff] %v7844
    %8613 = vst [vmem:[#allocation5 + $0x918] sm:$0xff] %v7845
    %8614 = vst [vmem:[#allocation5 + $0x920] sm:$0xff] %v7846
    %8615 = vst [vmem:[#allocation5 + $0x928] sm:$0xff] %v7847
    %8616 = vst [vmem:[#allocation5 + $0x930] sm:$0xff] %v7848
    %8617 = vst [vmem:[#allocation5 + $0x938] sm:$0xff] %v7849
    %8618 = vst [vmem:[#allocation5 + $0x940] sm:$0xff] %v7850
    %8619 = vst [vmem:[#allocation5 + $0x948] sm:$0xff] %v7851
    %8620 = vst [vmem:[#allocation5 + $0x950] sm:$0xff] %v7852
    %8621 = vst [vmem:[#allocation5 + $0x958] sm:$0xff] %v7853
    %8622 = vst [vmem:[#allocation5 + $0x960] sm:$0xff] %v7854
    %8623 = vst [vmem:[#allocation5 + $0x968] sm:$0xff] %v7855
    %8624 = vst [vmem:[#allocation5 + $0x970] sm:$0xff] %v7856
    %8625 = vst [vmem:[#allocation5 + $0x978] sm:$0xff] %v7857
    %8626 = vst [vmem:[#allocation5 + $0x980] sm:$0xff] %v7858
    %8627 = vst [vmem:[#allocation5 + $0x988] sm:$0xff] %v7859
    %8628 = vst [vmem:[#allocation5 + $0x990] sm:$0xff] %v7860
    %8629 = vst [vmem:[#allocation5 + $0x998] sm:$0xff] %v7861
    %8630 = vst [vmem:[#allocation5 + $0x9a0] sm:$0xff] %v7862
    %8631 = vst [vmem:[#allocation5 + $0x9a8] sm:$0xff] %v7863
    %8632 = vst [vmem:[#allocation5 + $0x9b0] sm:$0xff] %v7864
    %8633 = vst [vmem:[#allocation5 + $0x9b8] sm:$0xff] %v7865
    %8634 = vst [vmem:[#allocation5 + $0x9c0] sm:$0xff] %v7866
    %8635 = vst [vmem:[#allocation5 + $0x9c8] sm:$0xff] %v7867
    %8636 = vst [vmem:[#allocation5 + $0x9d0] sm:$0xff] %v7868
    %8637 = vst [vmem:[#allocation5 + $0x9d8] sm:$0xff] %v7869
    %8638 = vst [vmem:[#allocation5 + $0x9e0] sm:$0xff] %v7870
    %8639 = vst [vmem:[#allocation5 + $0x9e8] sm:$0xff] %v7871
    %8640 = vst [vmem:[#allocation5 + $0x9f0] sm:$0xff] %v7872
    %8641 = vst [vmem:[#allocation5 + $0x9f8] sm:$0xff] %v7873
    %8642 = vst [vmem:[#allocation5 + $0xa00] sm:$0xff] %v7874
    %8643 = vst [vmem:[#allocation5 + $0xa08] sm:$0xff] %v7875
    %8644 = vst [vmem:[#allocation5 + $0xa10] sm:$0xff] %v7876
    %8645 = vst [vmem:[#allocation5 + $0xa18] sm:$0xff] %v7877
    %8646 = vst [vmem:[#allocation5 + $0xa20] sm:$0xff] %v7878
    %8647 = vst [vmem:[#allocation5 + $0xa28] sm:$0xff] %v7879
    %8648 = vst [vmem:[#allocation5 + $0xa30] sm:$0xff] %v7880
    %8649 = vst [vmem:[#allocation5 + $0xa38] sm:$0xff] %v7881
    %8650 = vst [vmem:[#allocation5 + $0xa40] sm:$0xff] %v7882
    %8651 = vst [vmem:[#allocation5 + $0xa48] sm:$0xff] %v7883
    %8652 = vst [vmem:[#allocation5 + $0xa50] sm:$0xff] %v7884
    %8653 = vst [vmem:[#allocation5 + $0xa58] sm:$0xff] %v7885
    %8654 = vst [vmem:[#allocation5 + $0xa60] sm:$0xff] %v7886
    %8655 = vst [vmem:[#allocation5 + $0xa68] sm:$0xff] %v7887
    %8656 = vst [vmem:[#allocation5 + $0xa70] sm:$0xff] %v7888
    %8657 = vst [vmem:[#allocation5 + $0xa78] sm:$0xff] %v7889
    %8658 = vst [vmem:[#allocation5 + $0xa80] sm:$0xff] %v7890
    %8659 = vst [vmem:[#allocation5 + $0xa88] sm:$0xff] %v7891
    %8660 = vst [vmem:[#allocation5 + $0xa90] sm:$0xff] %v7892
    %8661 = vst [vmem:[#allocation5 + $0xa98] sm:$0xff] %v7893
    %8662 = vst [vmem:[#allocation5 + $0xaa0] sm:$0xff] %v7894
    %8663 = vst [vmem:[#allocation5 + $0xaa8] sm:$0xff] %v7895
    %8664 = vst [vmem:[#allocation5 + $0xab0] sm:$0xff] %v7896
    %8665 = vst [vmem:[#allocation5 + $0xab8] sm:$0xff] %v7897
    %8666 = vst [vmem:[#allocation5 + $0xac0] sm:$0xff] %v7898
    %8667 = vst [vmem:[#allocation5 + $0xac8] sm:$0xff] %v7899
    %8668 = vst [vmem:[#allocation5 + $0xad0] sm:$0xff] %v7900
    %8669 = vst [vmem:[#allocation5 + $0xad8] sm:$0xff] %v7901
    %8670 = vst [vmem:[#allocation5 + $0xae0] sm:$0xff] %v7902
    %8671 = vst [vmem:[#allocation5 + $0xae8] sm:$0xff] %v7903
    %8672 = vst [vmem:[#allocation5 + $0xaf0] sm:$0xff] %v7904
    %8673 = vst [vmem:[#allocation5 + $0xaf8] sm:$0xff] %v7905
    %8674 = vst [vmem:[#allocation5 + $0xb00] sm:$0xff] %v7906
    %8675 = vst [vmem:[#allocation5 + $0xb08] sm:$0xff] %v7907
    %8676 = vst [vmem:[#allocation5 + $0xb10] sm:$0xff] %v7908
    %8677 = vst [vmem:[#allocation5 + $0xb18] sm:$0xff] %v7909
    %8678 = vst [vmem:[#allocation5 + $0xb20] sm:$0xff] %v7910
    %8679 = vst [vmem:[#allocation5 + $0xb28] sm:$0xff] %v7911
    %8680 = vst [vmem:[#allocation5 + $0xb30] sm:$0xff] %v7912
    %8681 = vst [vmem:[#allocation5 + $0xb38] sm:$0xff] %v7913
    %8682 = vst [vmem:[#allocation5 + $0xb40] sm:$0xff] %v7914
    %8683 = vst [vmem:[#allocation5 + $0xb48] sm:$0xff] %v7915
    %8684 = vst [vmem:[#allocation5 + $0xb50] sm:$0xff] %v7916
    %8685 = vst [vmem:[#allocation5 + $0xb58] sm:$0xff] %v7917
    %8686 = vst [vmem:[#allocation5 + $0xb60] sm:$0xff] %v7918
    %8687 = vst [vmem:[#allocation5 + $0xb68] sm:$0xff] %v7919
    %8688 = vst [vmem:[#allocation5 + $0xb70] sm:$0xff] %v7920
    %8689 = vst [vmem:[#allocation5 + $0xb78] sm:$0xff] %v7921
    %8690 = vst [vmem:[#allocation5 + $0xb80] sm:$0xff] %v7922
    %8691 = vst [vmem:[#allocation5 + $0xb88] sm:$0xff] %v7923
    %8692 = vst [vmem:[#allocation5 + $0xb90] sm:$0xff] %v7924
    %8693 = vst [vmem:[#allocation5 + $0xb98] sm:$0xff] %v7925
    %8694 = vst [vmem:[#allocation5 + $0xba0] sm:$0xff] %v7926
    %8695 = vst [vmem:[#allocation5 + $0xba8] sm:$0xff] %v7927
    %8696 = vst [vmem:[#allocation5 + $0xbb0] sm:$0xff] %v7928
    %8697 = vst [vmem:[#allocation5 + $0xbb8] sm:$0xff] %v7929
    %8698 = vst [vmem:[#allocation5 + $0xbc0] sm:$0xff] %v7930
    %8699 = vst [vmem:[#allocation5 + $0xbc8] sm:$0xff] %v7931
    %8700 = vst [vmem:[#allocation5 + $0xbd0] sm:$0xff] %v7932
    %8701 = vst [vmem:[#allocation5 + $0xbd8] sm:$0xff] %v7933
    %8702 = vst [vmem:[#allocation5 + $0xbe0] sm:$0xff] %v7934
    %8703 = vst [vmem:[#allocation5 + $0xbe8] sm:$0xff] %v7935
    %8704 = vst [vmem:[#allocation5 + $0xbf0] sm:$0xff] %v7936
    %8705 = vst [vmem:[#allocation5 + $0xbf8] sm:$0xff] %v7937
    %v8706 = vld [vmem:[#allocation5] sm:$0xff]
    %v8707 = vld [vmem:[#allocation5 + $0x8] sm:$0xff]
    %v8708 = vld [vmem:[#allocation5 + $0x10] sm:$0xff]
    %v8709 = vld [vmem:[#allocation5 + $0x18] sm:$0xff]
    %v8710 = vld [vmem:[#allocation5 + $0x20] sm:$0xff]
    %v8711 = vld [vmem:[#allocation5 + $0x28] sm:$0xff]
    %v8712 = vld [vmem:[#allocation5 + $0x30] sm:$0xff]
    %v8713 = vld [vmem:[#allocation5 + $0x38] sm:$0xff]
    %v8714 = vld [vmem:[#allocation5 + $0x40] sm:$0xff]
    %v8715 = vld [vmem:[#allocation5 + $0x48] sm:$0xff]
    %v8716 = vld [vmem:[#allocation5 + $0x50] sm:$0xff]
    %v8717 = vld [vmem:[#allocation5 + $0x58] sm:$0xff]
    %v8718 = vld [vmem:[#allocation5 + $0x60] sm:$0xff]
    %v8719 = vld [vmem:[#allocation5 + $0x68] sm:$0xff]
    %v8720 = vld [vmem:[#allocation5 + $0x70] sm:$0xff]
    %v8721 = vld [vmem:[#allocation5 + $0x78] sm:$0xff]
    %v8722 = vld [vmem:[#allocation5 + $0x80] sm:$0xff]
    %v8723 = vld [vmem:[#allocation5 + $0x88] sm:$0xff]
    %v8724 = vld [vmem:[#allocation5 + $0x90] sm:$0xff]
    %v8725 = vld [vmem:[#allocation5 + $0x98] sm:$0xff]
    %v8726 = vld [vmem:[#allocation5 + $0xa0] sm:$0xff]
    %v8727 = vld [vmem:[#allocation5 + $0xa8] sm:$0xff]
    %v8728 = vld [vmem:[#allocation5 + $0xb0] sm:$0xff]
    %v8729 = vld [vmem:[#allocation5 + $0xb8] sm:$0xff]
    %v8730 = vld [vmem:[#allocation5 + $0xc0] sm:$0xff]
    %v8731 = vld [vmem:[#allocation5 + $0xc8] sm:$0xff]
    %v8732 = vld [vmem:[#allocation5 + $0xd0] sm:$0xff]
    %v8733 = vld [vmem:[#allocation5 + $0xd8] sm:$0xff]
    %v8734 = vld [vmem:[#allocation5 + $0xe0] sm:$0xff]
    %v8735 = vld [vmem:[#allocation5 + $0xe8] sm:$0xff]
    %v8736 = vld [vmem:[#allocation5 + $0xf0] sm:$0xff]
    %v8737 = vld [vmem:[#allocation5 + $0xf8] sm:$0xff]
    %v8738 = vld [vmem:[#allocation5 + $0x100] sm:$0xff]
    %v8739 = vld [vmem:[#allocation5 + $0x108] sm:$0xff]
    %v8740 = vld [vmem:[#allocation5 + $0x110] sm:$0xff]
    %v8741 = vld [vmem:[#allocation5 + $0x118] sm:$0xff]
    %v8742 = vld [vmem:[#allocation5 + $0x120] sm:$0xff]
    %v8743 = vld [vmem:[#allocation5 + $0x128] sm:$0xff]
    %v8744 = vld [vmem:[#allocation5 + $0x130] sm:$0xff]
    %v8745 = vld [vmem:[#allocation5 + $0x138] sm:$0xff]
    %v8746 = vld [vmem:[#allocation5 + $0x140] sm:$0xff]
    %v8747 = vld [vmem:[#allocation5 + $0x148] sm:$0xff]
    %v8748 = vld [vmem:[#allocation5 + $0x150] sm:$0xff]
    %v8749 = vld [vmem:[#allocation5 + $0x158] sm:$0xff]
    %v8750 = vld [vmem:[#allocation5 + $0x160] sm:$0xff]
    %v8751 = vld [vmem:[#allocation5 + $0x168] sm:$0xff]
    %v8752 = vld [vmem:[#allocation5 + $0x170] sm:$0xff]
    %v8753 = vld [vmem:[#allocation5 + $0x178] sm:$0xff]
    %v8754 = vld [vmem:[#allocation5 + $0x180] sm:$0xff]
    %v8755 = vld [vmem:[#allocation5 + $0x188] sm:$0xff]
    %v8756 = vld [vmem:[#allocation5 + $0x190] sm:$0xff]
    %v8757 = vld [vmem:[#allocation5 + $0x198] sm:$0xff]
    %v8758 = vld [vmem:[#allocation5 + $0x1a0] sm:$0xff]
    %v8759 = vld [vmem:[#allocation5 + $0x1a8] sm:$0xff]
    %v8760 = vld [vmem:[#allocation5 + $0x1b0] sm:$0xff]
    %v8761 = vld [vmem:[#allocation5 + $0x1b8] sm:$0xff]
    %v8762 = vld [vmem:[#allocation5 + $0x1c0] sm:$0xff]
    %v8763 = vld [vmem:[#allocation5 + $0x1c8] sm:$0xff]
    %v8764 = vld [vmem:[#allocation5 + $0x1d0] sm:$0xff]
    %v8765 = vld [vmem:[#allocation5 + $0x1d8] sm:$0xff]
    %v8766 = vld [vmem:[#allocation5 + $0x1e0] sm:$0xff]
    %v8767 = vld [vmem:[#allocation5 + $0x1e8] sm:$0xff]
    %v8768 = vld [vmem:[#allocation5 + $0x1f0] sm:$0xff]
    %v8769 = vld [vmem:[#allocation5 + $0x1f8] sm:$0xff]
    %v8770 = vld [vmem:[#allocation5 + $0x200] sm:$0xff]
    %v8771 = vld [vmem:[#allocation5 + $0x208] sm:$0xff]
    %v8772 = vld [vmem:[#allocation5 + $0x210] sm:$0xff]
    %v8773 = vld [vmem:[#allocation5 + $0x218] sm:$0xff]
    %v8774 = vld [vmem:[#allocation5 + $0x220] sm:$0xff]
    %v8775 = vld [vmem:[#allocation5 + $0x228] sm:$0xff]
    %v8776 = vld [vmem:[#allocation5 + $0x230] sm:$0xff]
    %v8777 = vld [vmem:[#allocation5 + $0x238] sm:$0xff]
    %v8778 = vld [vmem:[#allocation5 + $0x240] sm:$0xff]
    %v8779 = vld [vmem:[#allocation5 + $0x248] sm:$0xff]
    %v8780 = vld [vmem:[#allocation5 + $0x250] sm:$0xff]
    %v8781 = vld [vmem:[#allocation5 + $0x258] sm:$0xff]
    %v8782 = vld [vmem:[#allocation5 + $0x260] sm:$0xff]
    %v8783 = vld [vmem:[#allocation5 + $0x268] sm:$0xff]
    %v8784 = vld [vmem:[#allocation5 + $0x270] sm:$0xff]
    %v8785 = vld [vmem:[#allocation5 + $0x278] sm:$0xff]
    %v8786 = vld [vmem:[#allocation5 + $0x280] sm:$0xff]
    %v8787 = vld [vmem:[#allocation5 + $0x288] sm:$0xff]
    %v8788 = vld [vmem:[#allocation5 + $0x290] sm:$0xff]
    %v8789 = vld [vmem:[#allocation5 + $0x298] sm:$0xff]
    %v8790 = vld [vmem:[#allocation5 + $0x2a0] sm:$0xff]
    %v8791 = vld [vmem:[#allocation5 + $0x2a8] sm:$0xff]
    %v8792 = vld [vmem:[#allocation5 + $0x2b0] sm:$0xff]
    %v8793 = vld [vmem:[#allocation5 + $0x2b8] sm:$0xff]
    %v8794 = vld [vmem:[#allocation5 + $0x2c0] sm:$0xff]
    %v8795 = vld [vmem:[#allocation5 + $0x2c8] sm:$0xff]
    %v8796 = vld [vmem:[#allocation5 + $0x2d0] sm:$0xff]
    %v8797 = vld [vmem:[#allocation5 + $0x2d8] sm:$0xff]
    %v8798 = vld [vmem:[#allocation5 + $0x2e0] sm:$0xff]
    %v8799 = vld [vmem:[#allocation5 + $0x2e8] sm:$0xff]
    %v8800 = vld [vmem:[#allocation5 + $0x2f0] sm:$0xff]
    %v8801 = vld [vmem:[#allocation5 + $0x2f8] sm:$0xff]
    %v8802 = vld [vmem:[#allocation5 + $0x300] sm:$0xff]
    %v8803 = vld [vmem:[#allocation5 + $0x308] sm:$0xff]
    %v8804 = vld [vmem:[#allocation5 + $0x310] sm:$0xff]
    %v8805 = vld [vmem:[#allocation5 + $0x318] sm:$0xff]
    %v8806 = vld [vmem:[#allocation5 + $0x320] sm:$0xff]
    %v8807 = vld [vmem:[#allocation5 + $0x328] sm:$0xff]
    %v8808 = vld [vmem:[#allocation5 + $0x330] sm:$0xff]
    %v8809 = vld [vmem:[#allocation5 + $0x338] sm:$0xff]
    %v8810 = vld [vmem:[#allocation5 + $0x340] sm:$0xff]
    %v8811 = vld [vmem:[#allocation5 + $0x348] sm:$0xff]
    %v8812 = vld [vmem:[#allocation5 + $0x350] sm:$0xff]
    %v8813 = vld [vmem:[#allocation5 + $0x358] sm:$0xff]
    %v8814 = vld [vmem:[#allocation5 + $0x360] sm:$0xff]
    %v8815 = vld [vmem:[#allocation5 + $0x368] sm:$0xff]
    %v8816 = vld [vmem:[#allocation5 + $0x370] sm:$0xff]
    %v8817 = vld [vmem:[#allocation5 + $0x378] sm:$0xff]
    %v8818 = vld [vmem:[#allocation5 + $0x380] sm:$0xff]
    %v8819 = vld [vmem:[#allocation5 + $0x388] sm:$0xff]
    %v8820 = vld [vmem:[#allocation5 + $0x390] sm:$0xff]
    %v8821 = vld [vmem:[#allocation5 + $0x398] sm:$0xff]
    %v8822 = vld [vmem:[#allocation5 + $0x3a0] sm:$0xff]
    %v8823 = vld [vmem:[#allocation5 + $0x3a8] sm:$0xff]
    %v8824 = vld [vmem:[#allocation5 + $0x3b0] sm:$0xff]
    %v8825 = vld [vmem:[#allocation5 + $0x3b8] sm:$0xff]
    %v8826 = vld [vmem:[#allocation5 + $0x3c0] sm:$0xff]
    %v8827 = vld [vmem:[#allocation5 + $0x3c8] sm:$0xff]
    %v8828 = vld [vmem:[#allocation5 + $0x3d0] sm:$0xff]
    %v8829 = vld [vmem:[#allocation5 + $0x3d8] sm:$0xff]
    %v8830 = vld [vmem:[#allocation5 + $0x3e0] sm:$0xff]
    %v8831 = vld [vmem:[#allocation5 + $0x3e8] sm:$0xff]
    %v8832 = vld [vmem:[#allocation5 + $0x3f0] sm:$0xff]
    %v8833 = vld [vmem:[#allocation5 + $0x3f8] sm:$0xff]
    %v8834 = vld [vmem:[#allocation5 + $0x400] sm:$0xff]
    %v8835 = vld [vmem:[#allocation5 + $0x408] sm:$0xff]
    %v8836 = vld [vmem:[#allocation5 + $0x410] sm:$0xff]
    %v8837 = vld [vmem:[#allocation5 + $0x418] sm:$0xff]
    %v8838 = vld [vmem:[#allocation5 + $0x420] sm:$0xff]
    %v8839 = vld [vmem:[#allocation5 + $0x428] sm:$0xff]
    %v8840 = vld [vmem:[#allocation5 + $0x430] sm:$0xff]
    %v8841 = vld [vmem:[#allocation5 + $0x438] sm:$0xff]
    %v8842 = vld [vmem:[#allocation5 + $0x440] sm:$0xff]
    %v8843 = vld [vmem:[#allocation5 + $0x448] sm:$0xff]
    %v8844 = vld [vmem:[#allocation5 + $0x450] sm:$0xff]
    %v8845 = vld [vmem:[#allocation5 + $0x458] sm:$0xff]
    %v8846 = vld [vmem:[#allocation5 + $0x460] sm:$0xff]
    %v8847 = vld [vmem:[#allocation5 + $0x468] sm:$0xff]
    %v8848 = vld [vmem:[#allocation5 + $0x470] sm:$0xff]
    %v8849 = vld [vmem:[#allocation5 + $0x478] sm:$0xff]
    %v8850 = vld [vmem:[#allocation5 + $0x480] sm:$0xff]
    %v8851 = vld [vmem:[#allocation5 + $0x488] sm:$0xff]
    %v8852 = vld [vmem:[#allocation5 + $0x490] sm:$0xff]
    %v8853 = vld [vmem:[#allocation5 + $0x498] sm:$0xff]
    %v8854 = vld [vmem:[#allocation5 + $0x4a0] sm:$0xff]
    %v8855 = vld [vmem:[#allocation5 + $0x4a8] sm:$0xff]
    %v8856 = vld [vmem:[#allocation5 + $0x4b0] sm:$0xff]
    %v8857 = vld [vmem:[#allocation5 + $0x4b8] sm:$0xff]
    %v8858 = vld [vmem:[#allocation5 + $0x4c0] sm:$0xff]
    %v8859 = vld [vmem:[#allocation5 + $0x4c8] sm:$0xff]
    %v8860 = vld [vmem:[#allocation5 + $0x4d0] sm:$0xff]
    %v8861 = vld [vmem:[#allocation5 + $0x4d8] sm:$0xff]
    %v8862 = vld [vmem:[#allocation5 + $0x4e0] sm:$0xff]
    %v8863 = vld [vmem:[#allocation5 + $0x4e8] sm:$0xff]
    %v8864 = vld [vmem:[#allocation5 + $0x4f0] sm:$0xff]
    %v8865 = vld [vmem:[#allocation5 + $0x4f8] sm:$0xff]
    %v8866 = vld [vmem:[#allocation5 + $0x500] sm:$0xff]
    %v8867 = vld [vmem:[#allocation5 + $0x508] sm:$0xff]
    %v8868 = vld [vmem:[#allocation5 + $0x510] sm:$0xff]
    %v8869 = vld [vmem:[#allocation5 + $0x518] sm:$0xff]
    %v8870 = vld [vmem:[#allocation5 + $0x520] sm:$0xff]
    %v8871 = vld [vmem:[#allocation5 + $0x528] sm:$0xff]
    %v8872 = vld [vmem:[#allocation5 + $0x530] sm:$0xff]
    %v8873 = vld [vmem:[#allocation5 + $0x538] sm:$0xff]
    %v8874 = vld [vmem:[#allocation5 + $0x540] sm:$0xff]
    %v8875 = vld [vmem:[#allocation5 + $0x548] sm:$0xff]
    %v8876 = vld [vmem:[#allocation5 + $0x550] sm:$0xff]
    %v8877 = vld [vmem:[#allocation5 + $0x558] sm:$0xff]
    %v8878 = vld [vmem:[#allocation5 + $0x560] sm:$0xff]
    %v8879 = vld [vmem:[#allocation5 + $0x568] sm:$0xff]
    %v8880 = vld [vmem:[#allocation5 + $0x570] sm:$0xff]
    %v8881 = vld [vmem:[#allocation5 + $0x578] sm:$0xff]
    %v8882 = vld [vmem:[#allocation5 + $0x580] sm:$0xff]
    %v8883 = vld [vmem:[#allocation5 + $0x588] sm:$0xff]
    %v8884 = vld [vmem:[#allocation5 + $0x590] sm:$0xff]
    %v8885 = vld [vmem:[#allocation5 + $0x598] sm:$0xff]
    %v8886 = vld [vmem:[#allocation5 + $0x5a0] sm:$0xff]
    %v8887 = vld [vmem:[#allocation5 + $0x5a8] sm:$0xff]
    %v8888 = vld [vmem:[#allocation5 + $0x5b0] sm:$0xff]
    %v8889 = vld [vmem:[#allocation5 + $0x5b8] sm:$0xff]
    %v8890 = vld [vmem:[#allocation5 + $0x5c0] sm:$0xff]
    %v8891 = vld [vmem:[#allocation5 + $0x5c8] sm:$0xff]
    %v8892 = vld [vmem:[#allocation5 + $0x5d0] sm:$0xff]
    %v8893 = vld [vmem:[#allocation5 + $0x5d8] sm:$0xff]
    %v8894 = vld [vmem:[#allocation5 + $0x5e0] sm:$0xff]
    %v8895 = vld [vmem:[#allocation5 + $0x5e8] sm:$0xff]
    %v8896 = vld [vmem:[#allocation5 + $0x5f0] sm:$0xff]
    %v8897 = vld [vmem:[#allocation5 + $0x5f8] sm:$0xff]
    %v8898 = vld [vmem:[#allocation5 + $0x600] sm:$0xff]
    %v8899 = vld [vmem:[#allocation5 + $0x608] sm:$0xff]
    %v8900 = vld [vmem:[#allocation5 + $0x610] sm:$0xff]
    %v8901 = vld [vmem:[#allocation5 + $0x618] sm:$0xff]
    %v8902 = vld [vmem:[#allocation5 + $0x620] sm:$0xff]
    %v8903 = vld [vmem:[#allocation5 + $0x628] sm:$0xff]
    %v8904 = vld [vmem:[#allocation5 + $0x630] sm:$0xff]
    %v8905 = vld [vmem:[#allocation5 + $0x638] sm:$0xff]
    %v8906 = vld [vmem:[#allocation5 + $0x640] sm:$0xff]
    %v8907 = vld [vmem:[#allocation5 + $0x648] sm:$0xff]
    %v8908 = vld [vmem:[#allocation5 + $0x650] sm:$0xff]
    %v8909 = vld [vmem:[#allocation5 + $0x658] sm:$0xff]
    %v8910 = vld [vmem:[#allocation5 + $0x660] sm:$0xff]
    %v8911 = vld [vmem:[#allocation5 + $0x668] sm:$0xff]
    %v8912 = vld [vmem:[#allocation5 + $0x670] sm:$0xff]
    %v8913 = vld [vmem:[#allocation5 + $0x678] sm:$0xff]
    %v8914 = vld [vmem:[#allocation5 + $0x680] sm:$0xff]
    %v8915 = vld [vmem:[#allocation5 + $0x688] sm:$0xff]
    %v8916 = vld [vmem:[#allocation5 + $0x690] sm:$0xff]
    %v8917 = vld [vmem:[#allocation5 + $0x698] sm:$0xff]
    %v8918 = vld [vmem:[#allocation5 + $0x6a0] sm:$0xff]
    %v8919 = vld [vmem:[#allocation5 + $0x6a8] sm:$0xff]
    %v8920 = vld [vmem:[#allocation5 + $0x6b0] sm:$0xff]
    %v8921 = vld [vmem:[#allocation5 + $0x6b8] sm:$0xff]
    %v8922 = vld [vmem:[#allocation5 + $0x6c0] sm:$0xff]
    %v8923 = vld [vmem:[#allocation5 + $0x6c8] sm:$0xff]
    %v8924 = vld [vmem:[#allocation5 + $0x6d0] sm:$0xff]
    %v8925 = vld [vmem:[#allocation5 + $0x6d8] sm:$0xff]
    %v8926 = vld [vmem:[#allocation5 + $0x6e0] sm:$0xff]
    %v8927 = vld [vmem:[#allocation5 + $0x6e8] sm:$0xff]
    %v8928 = vld [vmem:[#allocation5 + $0x6f0] sm:$0xff]
    %v8929 = vld [vmem:[#allocation5 + $0x6f8] sm:$0xff]
    %v8930 = vld [vmem:[#allocation5 + $0x700] sm:$0xff]
    %v8931 = vld [vmem:[#allocation5 + $0x708] sm:$0xff]
    %v8932 = vld [vmem:[#allocation5 + $0x710] sm:$0xff]
    %v8933 = vld [vmem:[#allocation5 + $0x718] sm:$0xff]
    %v8934 = vld [vmem:[#allocation5 + $0x720] sm:$0xff]
    %v8935 = vld [vmem:[#allocation5 + $0x728] sm:$0xff]
    %v8936 = vld [vmem:[#allocation5 + $0x730] sm:$0xff]
    %v8937 = vld [vmem:[#allocation5 + $0x738] sm:$0xff]
    %v8938 = vld [vmem:[#allocation5 + $0x740] sm:$0xff]
    %v8939 = vld [vmem:[#allocation5 + $0x748] sm:$0xff]
    %v8940 = vld [vmem:[#allocation5 + $0x750] sm:$0xff]
    %v8941 = vld [vmem:[#allocation5 + $0x758] sm:$0xff]
    %v8942 = vld [vmem:[#allocation5 + $0x760] sm:$0xff]
    %v8943 = vld [vmem:[#allocation5 + $0x768] sm:$0xff]
    %v8944 = vld [vmem:[#allocation5 + $0x770] sm:$0xff]
    %v8945 = vld [vmem:[#allocation5 + $0x778] sm:$0xff]
    %v8946 = vld [vmem:[#allocation5 + $0x780] sm:$0xff]
    %v8947 = vld [vmem:[#allocation5 + $0x788] sm:$0xff]
    %v8948 = vld [vmem:[#allocation5 + $0x790] sm:$0xff]
    %v8949 = vld [vmem:[#allocation5 + $0x798] sm:$0xff]
    %v8950 = vld [vmem:[#allocation5 + $0x7a0] sm:$0xff]
    %v8951 = vld [vmem:[#allocation5 + $0x7a8] sm:$0xff]
    %v8952 = vld [vmem:[#allocation5 + $0x7b0] sm:$0xff]
    %v8953 = vld [vmem:[#allocation5 + $0x7b8] sm:$0xff]
    %v8954 = vld [vmem:[#allocation5 + $0x7c0] sm:$0xff]
    %v8955 = vld [vmem:[#allocation5 + $0x7c8] sm:$0xff]
    %v8956 = vld [vmem:[#allocation5 + $0x7d0] sm:$0xff]
    %v8957 = vld [vmem:[#allocation5 + $0x7d8] sm:$0xff]
    %v8958 = vld [vmem:[#allocation5 + $0x7e0] sm:$0xff]
    %v8959 = vld [vmem:[#allocation5 + $0x7e8] sm:$0xff]
    %v8960 = vld [vmem:[#allocation5 + $0x7f0] sm:$0xff]
    %v8961 = vld [vmem:[#allocation5 + $0x7f8] sm:$0xff]
    %v8962 = vld [vmem:[#allocation5 + $0x800] sm:$0xff]
    %v8963 = vld [vmem:[#allocation5 + $0x808] sm:$0xff]
    %v8964 = vld [vmem:[#allocation5 + $0x810] sm:$0xff]
    %v8965 = vld [vmem:[#allocation5 + $0x818] sm:$0xff]
    %v8966 = vld [vmem:[#allocation5 + $0x820] sm:$0xff]
    %v8967 = vld [vmem:[#allocation5 + $0x828] sm:$0xff]
    %v8968 = vld [vmem:[#allocation5 + $0x830] sm:$0xff]
    %v8969 = vld [vmem:[#allocation5 + $0x838] sm:$0xff]
    %v8970 = vld [vmem:[#allocation5 + $0x840] sm:$0xff]
    %v8971 = vld [vmem:[#allocation5 + $0x848] sm:$0xff]
    %v8972 = vld [vmem:[#allocation5 + $0x850] sm:$0xff]
    %v8973 = vld [vmem:[#allocation5 + $0x858] sm:$0xff]
    %v8974 = vld [vmem:[#allocation5 + $0x860] sm:$0xff]
    %v8975 = vld [vmem:[#allocation5 + $0x868] sm:$0xff]
    %v8976 = vld [vmem:[#allocation5 + $0x870] sm:$0xff]
    %v8977 = vld [vmem:[#allocation5 + $0x878] sm:$0xff]
    %v8978 = vld [vmem:[#allocation5 + $0x880] sm:$0xff]
    %v8979 = vld [vmem:[#allocation5 + $0x888] sm:$0xff]
    %v8980 = vld [vmem:[#allocation5 + $0x890] sm:$0xff]
    %v8981 = vld [vmem:[#allocation5 + $0x898] sm:$0xff]
    %v8982 = vld [vmem:[#allocation5 + $0x8a0] sm:$0xff]
    %v8983 = vld [vmem:[#allocation5 + $0x8a8] sm:$0xff]
    %v8984 = vld [vmem:[#allocation5 + $0x8b0] sm:$0xff]
    %v8985 = vld [vmem:[#allocation5 + $0x8b8] sm:$0xff]
    %v8986 = vld [vmem:[#allocation5 + $0x8c0] sm:$0xff]
    %v8987 = vld [vmem:[#allocation5 + $0x8c8] sm:$0xff]
    %v8988 = vld [vmem:[#allocation5 + $0x8d0] sm:$0xff]
    %v8989 = vld [vmem:[#allocation5 + $0x8d8] sm:$0xff]
    %v8990 = vld [vmem:[#allocation5 + $0x8e0] sm:$0xff]
    %v8991 = vld [vmem:[#allocation5 + $0x8e8] sm:$0xff]
    %v8992 = vld [vmem:[#allocation5 + $0x8f0] sm:$0xff]
    %v8993 = vld [vmem:[#allocation5 + $0x8f8] sm:$0xff]
    %v8994 = vld [vmem:[#allocation5 + $0x900] sm:$0xff]
    %v8995 = vld [vmem:[#allocation5 + $0x908] sm:$0xff]
    %v8996 = vld [vmem:[#allocation5 + $0x910] sm:$0xff]
    %v8997 = vld [vmem:[#allocation5 + $0x918] sm:$0xff]
    %v8998 = vld [vmem:[#allocation5 + $0x920] sm:$0xff]
    %v8999 = vld [vmem:[#allocation5 + $0x928] sm:$0xff]
    %v9000 = vld [vmem:[#allocation5 + $0x930] sm:$0xff]
    %v9001 = vld [vmem:[#allocation5 + $0x938] sm:$0xff]
    %v9002 = vld [vmem:[#allocation5 + $0x940] sm:$0xff]
    %v9003 = vld [vmem:[#allocation5 + $0x948] sm:$0xff]
    %v9004 = vld [vmem:[#allocation5 + $0x950] sm:$0xff]
    %v9005 = vld [vmem:[#allocation5 + $0x958] sm:$0xff]
    %v9006 = vld [vmem:[#allocation5 + $0x960] sm:$0xff]
    %v9007 = vld [vmem:[#allocation5 + $0x968] sm:$0xff]
    %v9008 = vld [vmem:[#allocation5 + $0x970] sm:$0xff]
    %v9009 = vld [vmem:[#allocation5 + $0x978] sm:$0xff]
    %v9010 = vld [vmem:[#allocation5 + $0x980] sm:$0xff]
    %v9011 = vld [vmem:[#allocation5 + $0x988] sm:$0xff]
    %v9012 = vld [vmem:[#allocation5 + $0x990] sm:$0xff]
    %v9013 = vld [vmem:[#allocation5 + $0x998] sm:$0xff]
    %v9014 = vld [vmem:[#allocation5 + $0x9a0] sm:$0xff]
    %v9015 = vld [vmem:[#allocation5 + $0x9a8] sm:$0xff]
    %v9016 = vld [vmem:[#allocation5 + $0x9b0] sm:$0xff]
    %v9017 = vld [vmem:[#allocation5 + $0x9b8] sm:$0xff]
    %v9018 = vld [vmem:[#allocation5 + $0x9c0] sm:$0xff]
    %v9019 = vld [vmem:[#allocation5 + $0x9c8] sm:$0xff]
    %v9020 = vld [vmem:[#allocation5 + $0x9d0] sm:$0xff]
    %v9021 = vld [vmem:[#allocation5 + $0x9d8] sm:$0xff]
    %v9022 = vld [vmem:[#allocation5 + $0x9e0] sm:$0xff]
    %v9023 = vld [vmem:[#allocation5 + $0x9e8] sm:$0xff]
    %v9024 = vld [vmem:[#allocation5 + $0x9f0] sm:$0xff]
    %v9025 = vld [vmem:[#allocation5 + $0x9f8] sm:$0xff]
    %v9026 = vld [vmem:[#allocation5 + $0xa00] sm:$0xff]
    %v9027 = vld [vmem:[#allocation5 + $0xa08] sm:$0xff]
    %v9028 = vld [vmem:[#allocation5 + $0xa10] sm:$0xff]
    %v9029 = vld [vmem:[#allocation5 + $0xa18] sm:$0xff]
    %v9030 = vld [vmem:[#allocation5 + $0xa20] sm:$0xff]
    %v9031 = vld [vmem:[#allocation5 + $0xa28] sm:$0xff]
    %v9032 = vld [vmem:[#allocation5 + $0xa30] sm:$0xff]
    %v9033 = vld [vmem:[#allocation5 + $0xa38] sm:$0xff]
    %v9034 = vld [vmem:[#allocation5 + $0xa40] sm:$0xff]
    %v9035 = vld [vmem:[#allocation5 + $0xa48] sm:$0xff]
    %v9036 = vld [vmem:[#allocation5 + $0xa50] sm:$0xff]
    %v9037 = vld [vmem:[#allocation5 + $0xa58] sm:$0xff]
    %v9038 = vld [vmem:[#allocation5 + $0xa60] sm:$0xff]
    %v9039 = vld [vmem:[#allocation5 + $0xa68] sm:$0xff]
    %v9040 = vld [vmem:[#allocation5 + $0xa70] sm:$0xff]
    %v9041 = vld [vmem:[#allocation5 + $0xa78] sm:$0xff]
    %v9042 = vld [vmem:[#allocation5 + $0xa80] sm:$0xff]
    %v9043 = vld [vmem:[#allocation5 + $0xa88] sm:$0xff]
    %v9044 = vld [vmem:[#allocation5 + $0xa90] sm:$0xff]
    %v9045 = vld [vmem:[#allocation5 + $0xa98] sm:$0xff]
    %v9046 = vld [vmem:[#allocation5 + $0xaa0] sm:$0xff]
    %v9047 = vld [vmem:[#allocation5 + $0xaa8] sm:$0xff]
    %v9048 = vld [vmem:[#allocation5 + $0xab0] sm:$0xff]
    %v9049 = vld [vmem:[#allocation5 + $0xab8] sm:$0xff]
    %v9050 = vld [vmem:[#allocation5 + $0xac0] sm:$0xff]
    %v9051 = vld [vmem:[#allocation5 + $0xac8] sm:$0xff]
    %v9052 = vld [vmem:[#allocation5 + $0xad0] sm:$0xff]
    %v9053 = vld [vmem:[#allocation5 + $0xad8] sm:$0xff]
    %v9054 = vld [vmem:[#allocation5 + $0xae0] sm:$0xff]
    %v9055 = vld [vmem:[#allocation5 + $0xae8] sm:$0xff]
    %v9056 = vld [vmem:[#allocation5 + $0xaf0] sm:$0xff]
    %v9057 = vld [vmem:[#allocation5 + $0xaf8] sm:$0xff]
    %v9058 = vld [vmem:[#allocation5 + $0xb00] sm:$0xff]
    %v9059 = vld [vmem:[#allocation5 + $0xb08] sm:$0xff]
    %v9060 = vld [vmem:[#allocation5 + $0xb10] sm:$0xff]
    %v9061 = vld [vmem:[#allocation5 + $0xb18] sm:$0xff]
    %v9062 = vld [vmem:[#allocation5 + $0xb20] sm:$0xff]
    %v9063 = vld [vmem:[#allocation5 + $0xb28] sm:$0xff]
    %v9064 = vld [vmem:[#allocation5 + $0xb30] sm:$0xff]
    %v9065 = vld [vmem:[#allocation5 + $0xb38] sm:$0xff]
    %v9066 = vld [vmem:[#allocation5 + $0xb40] sm:$0xff]
    %v9067 = vld [vmem:[#allocation5 + $0xb48] sm:$0xff]
    %v9068 = vld [vmem:[#allocation5 + $0xb50] sm:$0xff]
    %v9069 = vld [vmem:[#allocation5 + $0xb58] sm:$0xff]
    %v9070 = vld [vmem:[#allocation5 + $0xb60] sm:$0xff]
    %v9071 = vld [vmem:[#allocation5 + $0xb68] sm:$0xff]
    %v9072 = vld [vmem:[#allocation5 + $0xb70] sm:$0xff]
    %v9073 = vld [vmem:[#allocation5 + $0xb78] sm:$0xff]
    %v9074 = vld [vmem:[#allocation5 + $0xb80] sm:$0xff]
    %v9075 = vld [vmem:[#allocation5 + $0xb88] sm:$0xff]
    %v9076 = vld [vmem:[#allocation5 + $0xb90] sm:$0xff]
    %v9077 = vld [vmem:[#allocation5 + $0xb98] sm:$0xff]
    %v9078 = vld [vmem:[#allocation5 + $0xba0] sm:$0xff]
    %v9079 = vld [vmem:[#allocation5 + $0xba8] sm:$0xff]
    %v9080 = vld [vmem:[#allocation5 + $0xbb0] sm:$0xff]
    %v9081 = vld [vmem:[#allocation5 + $0xbb8] sm:$0xff]
    %v9082 = vld [vmem:[#allocation5 + $0xbc0] sm:$0xff]
    %v9083 = vld [vmem:[#allocation5 + $0xbc8] sm:$0xff]
    %v9084 = vld [vmem:[#allocation5 + $0xbd0] sm:$0xff]
    %v9085 = vld [vmem:[#allocation5 + $0xbd8] sm:$0xff]
    %v9086 = vld [vmem:[#allocation5 + $0xbe0] sm:$0xff]
    %v9087 = vld [vmem:[#allocation5 + $0xbe8] sm:$0xff]
    %v9088 = vld [vmem:[#allocation5 + $0xbf0] sm:$0xff]
    %v9089 = vld [vmem:[#allocation5 + $0xbf8] sm:$0xff]
    %v9474 = vunpack.c.l.b16 %v8706
    %v9475 = vunpack.c.h.b16 %v8706
    %v9476 = vunpack.c.l.b16 %v8707
    %v9477 = vunpack.c.h.b16 %v8707
    %v9478 = vunpack.c.l.b16 %v8708
    %v9479 = vunpack.c.h.b16 %v8708
    %v9480 = vunpack.c.l.b16 %v8709
    %v9481 = vunpack.c.h.b16 %v8709
    %v9482 = vunpack.c.l.b16 %v8710
    %v9483 = vunpack.c.h.b16 %v8710
    %v9484 = vunpack.c.l.b16 %v8711
    %v9485 = vunpack.c.h.b16 %v8711
    %v9486 = vunpack.c.l.b16 %v8712
    %v9487 = vunpack.c.h.b16 %v8712
    %v9488 = vunpack.c.l.b16 %v8713
    %v9489 = vunpack.c.h.b16 %v8713
    %v9490 = vunpack.c.l.b16 %v8714
    %v9491 = vunpack.c.h.b16 %v8714
    %v9492 = vunpack.c.l.b16 %v8715
    %v9493 = vunpack.c.h.b16 %v8715
    %v9494 = vunpack.c.l.b16 %v8716
    %v9495 = vunpack.c.h.b16 %v8716
    %v9496 = vunpack.c.l.b16 %v8717
    %v9497 = vunpack.c.h.b16 %v8717
    %v9498 = vunpack.c.l.b16 %v8718
    %v9499 = vunpack.c.h.b16 %v8718
    %v9500 = vunpack.c.l.b16 %v8719
    %v9501 = vunpack.c.h.b16 %v8719
    %v9502 = vunpack.c.l.b16 %v8720
    %v9503 = vunpack.c.h.b16 %v8720
    %v9504 = vunpack.c.l.b16 %v8721
    %v9505 = vunpack.c.h.b16 %v8721
    %v9506 = vunpack.c.l.b16 %v8722
    %v9507 = vunpack.c.h.b16 %v8722
    %v9508 = vunpack.c.l.b16 %v8723
    %v9509 = vunpack.c.h.b16 %v8723
    %v9510 = vunpack.c.l.b16 %v8724
    %v9511 = vunpack.c.h.b16 %v8724
    %v9512 = vunpack.c.l.b16 %v8725
    %v9513 = vunpack.c.h.b16 %v8725
    %v9514 = vunpack.c.l.b16 %v8726
    %v9515 = vunpack.c.h.b16 %v8726
    %v9516 = vunpack.c.l.b16 %v8727
    %v9517 = vunpack.c.h.b16 %v8727
    %v9518 = vunpack.c.l.b16 %v8728
    %v9519 = vunpack.c.h.b16 %v8728
    %v9520 = vunpack.c.l.b16 %v8729
    %v9521 = vunpack.c.h.b16 %v8729
    %v9522 = vunpack.c.l.b16 %v8730
    %v9523 = vunpack.c.h.b16 %v8730
    %v9524 = vunpack.c.l.b16 %v8731
    %v9525 = vunpack.c.h.b16 %v8731
    %v9526 = vunpack.c.l.b16 %v8732
    %v9527 = vunpack.c.h.b16 %v8732
    %v9528 = vunpack.c.l.b16 %v8733
    %v9529 = vunpack.c.h.b16 %v8733
    %v9530 = vunpack.c.l.b16 %v8734
    %v9531 = vunpack.c.h.b16 %v8734
    %v9532 = vunpack.c.l.b16 %v8735
    %v9533 = vunpack.c.h.b16 %v8735
    %v9534 = vunpack.c.l.b16 %v8736
    %v9535 = vunpack.c.h.b16 %v8736
    %v9536 = vunpack.c.l.b16 %v8737
    %v9537 = vunpack.c.h.b16 %v8737
    %v9538 = vunpack.c.l.b16 %v8738
    %v9539 = vunpack.c.h.b16 %v8738
    %v9540 = vunpack.c.l.b16 %v8739
    %v9541 = vunpack.c.h.b16 %v8739
    %v9542 = vunpack.c.l.b16 %v8740
    %v9543 = vunpack.c.h.b16 %v8740
    %v9544 = vunpack.c.l.b16 %v8741
    %v9545 = vunpack.c.h.b16 %v8741
    %v9546 = vunpack.c.l.b16 %v8742
    %v9547 = vunpack.c.h.b16 %v8742
    %v9548 = vunpack.c.l.b16 %v8743
    %v9549 = vunpack.c.h.b16 %v8743
    %v9550 = vunpack.c.l.b16 %v8744
    %v9551 = vunpack.c.h.b16 %v8744
    %v9552 = vunpack.c.l.b16 %v8745
    %v9553 = vunpack.c.h.b16 %v8745
    %v9554 = vunpack.c.l.b16 %v8746
    %v9555 = vunpack.c.h.b16 %v8746
    %v9556 = vunpack.c.l.b16 %v8747
    %v9557 = vunpack.c.h.b16 %v8747
    %v9558 = vunpack.c.l.b16 %v8748
    %v9559 = vunpack.c.h.b16 %v8748
    %v9560 = vunpack.c.l.b16 %v8749
    %v9561 = vunpack.c.h.b16 %v8749
    %v9562 = vunpack.c.l.b16 %v8750
    %v9563 = vunpack.c.h.b16 %v8750
    %v9564 = vunpack.c.l.b16 %v8751
    %v9565 = vunpack.c.h.b16 %v8751
    %v9566 = vunpack.c.l.b16 %v8752
    %v9567 = vunpack.c.h.b16 %v8752
    %v9568 = vunpack.c.l.b16 %v8753
    %v9569 = vunpack.c.h.b16 %v8753
    %v9570 = vunpack.c.l.b16 %v8754
    %v9571 = vunpack.c.h.b16 %v8754
    %v9572 = vunpack.c.l.b16 %v8755
    %v9573 = vunpack.c.h.b16 %v8755
    %v9574 = vunpack.c.l.b16 %v8756
    %v9575 = vunpack.c.h.b16 %v8756
    %v9576 = vunpack.c.l.b16 %v8757
    %v9577 = vunpack.c.h.b16 %v8757
    %v9578 = vunpack.c.l.b16 %v8758
    %v9579 = vunpack.c.h.b16 %v8758
    %v9580 = vunpack.c.l.b16 %v8759
    %v9581 = vunpack.c.h.b16 %v8759
    %v9582 = vunpack.c.l.b16 %v8760
    %v9583 = vunpack.c.h.b16 %v8760
    %v9584 = vunpack.c.l.b16 %v8761
    %v9585 = vunpack.c.h.b16 %v8761
    %v9586 = vunpack.c.l.b16 %v8762
    %v9587 = vunpack.c.h.b16 %v8762
    %v9588 = vunpack.c.l.b16 %v8763
    %v9589 = vunpack.c.h.b16 %v8763
    %v9590 = vunpack.c.l.b16 %v8764
    %v9591 = vunpack.c.h.b16 %v8764
    %v9592 = vunpack.c.l.b16 %v8765
    %v9593 = vunpack.c.h.b16 %v8765
    %v9594 = vunpack.c.l.b16 %v8766
    %v9595 = vunpack.c.h.b16 %v8766
    %v9596 = vunpack.c.l.b16 %v8767
    %v9597 = vunpack.c.h.b16 %v8767
    %v9598 = vunpack.c.l.b16 %v8768
    %v9599 = vunpack.c.h.b16 %v8768
    %v9600 = vunpack.c.l.b16 %v8769
    %v9601 = vunpack.c.h.b16 %v8769
    %v9602 = vunpack.c.l.b16 %v8770
    %v9603 = vunpack.c.h.b16 %v8770
    %v9604 = vunpack.c.l.b16 %v8771
    %v9605 = vunpack.c.h.b16 %v8771
    %v9606 = vunpack.c.l.b16 %v8772
    %v9607 = vunpack.c.h.b16 %v8772
    %v9608 = vunpack.c.l.b16 %v8773
    %v9609 = vunpack.c.h.b16 %v8773
    %v9610 = vunpack.c.l.b16 %v8774
    %v9611 = vunpack.c.h.b16 %v8774
    %v9612 = vunpack.c.l.b16 %v8775
    %v9613 = vunpack.c.h.b16 %v8775
    %v9614 = vunpack.c.l.b16 %v8776
    %v9615 = vunpack.c.h.b16 %v8776
    %v9616 = vunpack.c.l.b16 %v8777
    %v9617 = vunpack.c.h.b16 %v8777
    %v9618 = vunpack.c.l.b16 %v8778
    %v9619 = vunpack.c.h.b16 %v8778
    %v9620 = vunpack.c.l.b16 %v8779
    %v9621 = vunpack.c.h.b16 %v8779
    %v9622 = vunpack.c.l.b16 %v8780
    %v9623 = vunpack.c.h.b16 %v8780
    %v9624 = vunpack.c.l.b16 %v8781
    %v9625 = vunpack.c.h.b16 %v8781
    %v9626 = vunpack.c.l.b16 %v8782
    %v9627 = vunpack.c.h.b16 %v8782
    %v9628 = vunpack.c.l.b16 %v8783
    %v9629 = vunpack.c.h.b16 %v8783
    %v9630 = vunpack.c.l.b16 %v8784
    %v9631 = vunpack.c.h.b16 %v8784
    %v9632 = vunpack.c.l.b16 %v8785
    %v9633 = vunpack.c.h.b16 %v8785
    %v9634 = vunpack.c.l.b16 %v8786
    %v9635 = vunpack.c.h.b16 %v8786
    %v9636 = vunpack.c.l.b16 %v8787
    %v9637 = vunpack.c.h.b16 %v8787
    %v9638 = vunpack.c.l.b16 %v8788
    %v9639 = vunpack.c.h.b16 %v8788
    %v9640 = vunpack.c.l.b16 %v8789
    %v9641 = vunpack.c.h.b16 %v8789
    %v9642 = vunpack.c.l.b16 %v8790
    %v9643 = vunpack.c.h.b16 %v8790
    %v9644 = vunpack.c.l.b16 %v8791
    %v9645 = vunpack.c.h.b16 %v8791
    %v9646 = vunpack.c.l.b16 %v8792
    %v9647 = vunpack.c.h.b16 %v8792
    %v9648 = vunpack.c.l.b16 %v8793
    %v9649 = vunpack.c.h.b16 %v8793
    %v9650 = vunpack.c.l.b16 %v8794
    %v9651 = vunpack.c.h.b16 %v8794
    %v9652 = vunpack.c.l.b16 %v8795
    %v9653 = vunpack.c.h.b16 %v8795
    %v9654 = vunpack.c.l.b16 %v8796
    %v9655 = vunpack.c.h.b16 %v8796
    %v9656 = vunpack.c.l.b16 %v8797
    %v9657 = vunpack.c.h.b16 %v8797
    %v9658 = vunpack.c.l.b16 %v8798
    %v9659 = vunpack.c.h.b16 %v8798
    %v9660 = vunpack.c.l.b16 %v8799
    %v9661 = vunpack.c.h.b16 %v8799
    %v9662 = vunpack.c.l.b16 %v8800
    %v9663 = vunpack.c.h.b16 %v8800
    %v9664 = vunpack.c.l.b16 %v8801
    %v9665 = vunpack.c.h.b16 %v8801
    %v9666 = vunpack.c.l.b16 %v8802
    %v9667 = vunpack.c.h.b16 %v8802
    %v9668 = vunpack.c.l.b16 %v8803
    %v9669 = vunpack.c.h.b16 %v8803
    %v9670 = vunpack.c.l.b16 %v8804
    %v9671 = vunpack.c.h.b16 %v8804
    %v9672 = vunpack.c.l.b16 %v8805
    %v9673 = vunpack.c.h.b16 %v8805
    %v9674 = vunpack.c.l.b16 %v8806
    %v9675 = vunpack.c.h.b16 %v8806
    %v9676 = vunpack.c.l.b16 %v8807
    %v9677 = vunpack.c.h.b16 %v8807
    %v9678 = vunpack.c.l.b16 %v8808
    %v9679 = vunpack.c.h.b16 %v8808
    %v9680 = vunpack.c.l.b16 %v8809
    %v9681 = vunpack.c.h.b16 %v8809
    %v9682 = vunpack.c.l.b16 %v8810
    %v9683 = vunpack.c.h.b16 %v8810
    %v9684 = vunpack.c.l.b16 %v8811
    %v9685 = vunpack.c.h.b16 %v8811
    %v9686 = vunpack.c.l.b16 %v8812
    %v9687 = vunpack.c.h.b16 %v8812
    %v9688 = vunpack.c.l.b16 %v8813
    %v9689 = vunpack.c.h.b16 %v8813
    %v9690 = vunpack.c.l.b16 %v8814
    %v9691 = vunpack.c.h.b16 %v8814
    %v9692 = vunpack.c.l.b16 %v8815
    %v9693 = vunpack.c.h.b16 %v8815
    %v9694 = vunpack.c.l.b16 %v8816
    %v9695 = vunpack.c.h.b16 %v8816
    %v9696 = vunpack.c.l.b16 %v8817
    %v9697 = vunpack.c.h.b16 %v8817
    %v9698 = vunpack.c.l.b16 %v8818
    %v9699 = vunpack.c.h.b16 %v8818
    %v9700 = vunpack.c.l.b16 %v8819
    %v9701 = vunpack.c.h.b16 %v8819
    %v9702 = vunpack.c.l.b16 %v8820
    %v9703 = vunpack.c.h.b16 %v8820
    %v9704 = vunpack.c.l.b16 %v8821
    %v9705 = vunpack.c.h.b16 %v8821
    %v9706 = vunpack.c.l.b16 %v8822
    %v9707 = vunpack.c.h.b16 %v8822
    %v9708 = vunpack.c.l.b16 %v8823
    %v9709 = vunpack.c.h.b16 %v8823
    %v9710 = vunpack.c.l.b16 %v8824
    %v9711 = vunpack.c.h.b16 %v8824
    %v9712 = vunpack.c.l.b16 %v8825
    %v9713 = vunpack.c.h.b16 %v8825
    %v9714 = vunpack.c.l.b16 %v8826
    %v9715 = vunpack.c.h.b16 %v8826
    %v9716 = vunpack.c.l.b16 %v8827
    %v9717 = vunpack.c.h.b16 %v8827
    %v9718 = vunpack.c.l.b16 %v8828
    %v9719 = vunpack.c.h.b16 %v8828
    %v9720 = vunpack.c.l.b16 %v8829
    %v9721 = vunpack.c.h.b16 %v8829
    %v9722 = vunpack.c.l.b16 %v8830
    %v9723 = vunpack.c.h.b16 %v8830
    %v9724 = vunpack.c.l.b16 %v8831
    %v9725 = vunpack.c.h.b16 %v8831
    %v9726 = vunpack.c.l.b16 %v8832
    %v9727 = vunpack.c.h.b16 %v8832
    %v9728 = vunpack.c.l.b16 %v8833
    %v9729 = vunpack.c.h.b16 %v8833
    %v9730 = vunpack.c.l.b16 %v8834
    %v9731 = vunpack.c.h.b16 %v8834
    %v9732 = vunpack.c.l.b16 %v8835
    %v9733 = vunpack.c.h.b16 %v8835
    %v9734 = vunpack.c.l.b16 %v8836
    %v9735 = vunpack.c.h.b16 %v8836
    %v9736 = vunpack.c.l.b16 %v8837
    %v9737 = vunpack.c.h.b16 %v8837
    %v9738 = vunpack.c.l.b16 %v8838
    %v9739 = vunpack.c.h.b16 %v8838
    %v9740 = vunpack.c.l.b16 %v8839
    %v9741 = vunpack.c.h.b16 %v8839
    %v9742 = vunpack.c.l.b16 %v8840
    %v9743 = vunpack.c.h.b16 %v8840
    %v9744 = vunpack.c.l.b16 %v8841
    %v9745 = vunpack.c.h.b16 %v8841
    %v9746 = vunpack.c.l.b16 %v8842
    %v9747 = vunpack.c.h.b16 %v8842
    %v9748 = vunpack.c.l.b16 %v8843
    %v9749 = vunpack.c.h.b16 %v8843
    %v9750 = vunpack.c.l.b16 %v8844
    %v9751 = vunpack.c.h.b16 %v8844
    %v9752 = vunpack.c.l.b16 %v8845
    %v9753 = vunpack.c.h.b16 %v8845
    %v9754 = vunpack.c.l.b16 %v8846
    %v9755 = vunpack.c.h.b16 %v8846
    %v9756 = vunpack.c.l.b16 %v8847
    %v9757 = vunpack.c.h.b16 %v8847
    %v9758 = vunpack.c.l.b16 %v8848
    %v9759 = vunpack.c.h.b16 %v8848
    %v9760 = vunpack.c.l.b16 %v8849
    %v9761 = vunpack.c.h.b16 %v8849
    %v9762 = vunpack.c.l.b16 %v8850
    %v9763 = vunpack.c.h.b16 %v8850
    %v9764 = vunpack.c.l.b16 %v8851
    %v9765 = vunpack.c.h.b16 %v8851
    %v9766 = vunpack.c.l.b16 %v8852
    %v9767 = vunpack.c.h.b16 %v8852
    %v9768 = vunpack.c.l.b16 %v8853
    %v9769 = vunpack.c.h.b16 %v8853
    %v9770 = vunpack.c.l.b16 %v8854
    %v9771 = vunpack.c.h.b16 %v8854
    %v9772 = vunpack.c.l.b16 %v8855
    %v9773 = vunpack.c.h.b16 %v8855
    %v9774 = vunpack.c.l.b16 %v8856
    %v9775 = vunpack.c.h.b16 %v8856
    %v9776 = vunpack.c.l.b16 %v8857
    %v9777 = vunpack.c.h.b16 %v8857
    %v9778 = vunpack.c.l.b16 %v8858
    %v9779 = vunpack.c.h.b16 %v8858
    %v9780 = vunpack.c.l.b16 %v8859
    %v9781 = vunpack.c.h.b16 %v8859
    %v9782 = vunpack.c.l.b16 %v8860
    %v9783 = vunpack.c.h.b16 %v8860
    %v9784 = vunpack.c.l.b16 %v8861
    %v9785 = vunpack.c.h.b16 %v8861
    %v9786 = vunpack.c.l.b16 %v8862
    %v9787 = vunpack.c.h.b16 %v8862
    %v9788 = vunpack.c.l.b16 %v8863
    %v9789 = vunpack.c.h.b16 %v8863
    %v9790 = vunpack.c.l.b16 %v8864
    %v9791 = vunpack.c.h.b16 %v8864
    %v9792 = vunpack.c.l.b16 %v8865
    %v9793 = vunpack.c.h.b16 %v8865
    %v9794 = vunpack.c.l.b16 %v8866
    %v9795 = vunpack.c.h.b16 %v8866
    %v9796 = vunpack.c.l.b16 %v8867
    %v9797 = vunpack.c.h.b16 %v8867
    %v9798 = vunpack.c.l.b16 %v8868
    %v9799 = vunpack.c.h.b16 %v8868
    %v9800 = vunpack.c.l.b16 %v8869
    %v9801 = vunpack.c.h.b16 %v8869
    %v9802 = vunpack.c.l.b16 %v8870
    %v9803 = vunpack.c.h.b16 %v8870
    %v9804 = vunpack.c.l.b16 %v8871
    %v9805 = vunpack.c.h.b16 %v8871
    %v9806 = vunpack.c.l.b16 %v8872
    %v9807 = vunpack.c.h.b16 %v8872
    %v9808 = vunpack.c.l.b16 %v8873
    %v9809 = vunpack.c.h.b16 %v8873
    %v9810 = vunpack.c.l.b16 %v8874
    %v9811 = vunpack.c.h.b16 %v8874
    %v9812 = vunpack.c.l.b16 %v8875
    %v9813 = vunpack.c.h.b16 %v8875
    %v9814 = vunpack.c.l.b16 %v8876
    %v9815 = vunpack.c.h.b16 %v8876
    %v9816 = vunpack.c.l.b16 %v8877
    %v9817 = vunpack.c.h.b16 %v8877
    %v9818 = vunpack.c.l.b16 %v8878
    %v9819 = vunpack.c.h.b16 %v8878
    %v9820 = vunpack.c.l.b16 %v8879
    %v9821 = vunpack.c.h.b16 %v8879
    %v9822 = vunpack.c.l.b16 %v8880
    %v9823 = vunpack.c.h.b16 %v8880
    %v9824 = vunpack.c.l.b16 %v8881
    %v9825 = vunpack.c.h.b16 %v8881
    %v9826 = vunpack.c.l.b16 %v8882
    %v9827 = vunpack.c.h.b16 %v8882
    %v9828 = vunpack.c.l.b16 %v8883
    %v9829 = vunpack.c.h.b16 %v8883
    %v9830 = vunpack.c.l.b16 %v8884
    %v9831 = vunpack.c.h.b16 %v8884
    %v9832 = vunpack.c.l.b16 %v8885
    %v9833 = vunpack.c.h.b16 %v8885
    %v9834 = vunpack.c.l.b16 %v8886
    %v9835 = vunpack.c.h.b16 %v8886
    %v9836 = vunpack.c.l.b16 %v8887
    %v9837 = vunpack.c.h.b16 %v8887
    %v9838 = vunpack.c.l.b16 %v8888
    %v9839 = vunpack.c.h.b16 %v8888
    %v9840 = vunpack.c.l.b16 %v8889
    %v9841 = vunpack.c.h.b16 %v8889
    %v9842 = vunpack.c.l.b16 %v8890
    %v9843 = vunpack.c.h.b16 %v8890
    %v9844 = vunpack.c.l.b16 %v8891
    %v9845 = vunpack.c.h.b16 %v8891
    %v9846 = vunpack.c.l.b16 %v8892
    %v9847 = vunpack.c.h.b16 %v8892
    %v9848 = vunpack.c.l.b16 %v8893
    %v9849 = vunpack.c.h.b16 %v8893
    %v9850 = vunpack.c.l.b16 %v8894
    %v9851 = vunpack.c.h.b16 %v8894
    %v9852 = vunpack.c.l.b16 %v8895
    %v9853 = vunpack.c.h.b16 %v8895
    %v9854 = vunpack.c.l.b16 %v8896
    %v9855 = vunpack.c.h.b16 %v8896
    %v9856 = vunpack.c.l.b16 %v8897
    %v9857 = vunpack.c.h.b16 %v8897
    %v9858 = vunpack.c.l.b16 %v8898
    %v9859 = vunpack.c.h.b16 %v8898
    %v9860 = vunpack.c.l.b16 %v8899
    %v9861 = vunpack.c.h.b16 %v8899
    %v9862 = vunpack.c.l.b16 %v8900
    %v9863 = vunpack.c.h.b16 %v8900
    %v9864 = vunpack.c.l.b16 %v8901
    %v9865 = vunpack.c.h.b16 %v8901
    %v9866 = vunpack.c.l.b16 %v8902
    %v9867 = vunpack.c.h.b16 %v8902
    %v9868 = vunpack.c.l.b16 %v8903
    %v9869 = vunpack.c.h.b16 %v8903
    %v9870 = vunpack.c.l.b16 %v8904
    %v9871 = vunpack.c.h.b16 %v8904
    %v9872 = vunpack.c.l.b16 %v8905
    %v9873 = vunpack.c.h.b16 %v8905
    %v9874 = vunpack.c.l.b16 %v8906
    %v9875 = vunpack.c.h.b16 %v8906
    %v9876 = vunpack.c.l.b16 %v8907
    %v9877 = vunpack.c.h.b16 %v8907
    %v9878 = vunpack.c.l.b16 %v8908
    %v9879 = vunpack.c.h.b16 %v8908
    %v9880 = vunpack.c.l.b16 %v8909
    %v9881 = vunpack.c.h.b16 %v8909
    %v9882 = vunpack.c.l.b16 %v8910
    %v9883 = vunpack.c.h.b16 %v8910
    %v9884 = vunpack.c.l.b16 %v8911
    %v9885 = vunpack.c.h.b16 %v8911
    %v9886 = vunpack.c.l.b16 %v8912
    %v9887 = vunpack.c.h.b16 %v8912
    %v9888 = vunpack.c.l.b16 %v8913
    %v9889 = vunpack.c.h.b16 %v8913
    %v9890 = vunpack.c.l.b16 %v8914
    %v9891 = vunpack.c.h.b16 %v8914
    %v9892 = vunpack.c.l.b16 %v8915
    %v9893 = vunpack.c.h.b16 %v8915
    %v9894 = vunpack.c.l.b16 %v8916
    %v9895 = vunpack.c.h.b16 %v8916
    %v9896 = vunpack.c.l.b16 %v8917
    %v9897 = vunpack.c.h.b16 %v8917
    %v9898 = vunpack.c.l.b16 %v8918
    %v9899 = vunpack.c.h.b16 %v8918
    %v9900 = vunpack.c.l.b16 %v8919
    %v9901 = vunpack.c.h.b16 %v8919
    %v9902 = vunpack.c.l.b16 %v8920
    %v9903 = vunpack.c.h.b16 %v8920
    %v9904 = vunpack.c.l.b16 %v8921
    %v9905 = vunpack.c.h.b16 %v8921
    %v9906 = vunpack.c.l.b16 %v8922
    %v9907 = vunpack.c.h.b16 %v8922
    %v9908 = vunpack.c.l.b16 %v8923
    %v9909 = vunpack.c.h.b16 %v8923
    %v9910 = vunpack.c.l.b16 %v8924
    %v9911 = vunpack.c.h.b16 %v8924
    %v9912 = vunpack.c.l.b16 %v8925
    %v9913 = vunpack.c.h.b16 %v8925
    %v9914 = vunpack.c.l.b16 %v8926
    %v9915 = vunpack.c.h.b16 %v8926
    %v9916 = vunpack.c.l.b16 %v8927
    %v9917 = vunpack.c.h.b16 %v8927
    %v9918 = vunpack.c.l.b16 %v8928
    %v9919 = vunpack.c.h.b16 %v8928
    %v9920 = vunpack.c.l.b16 %v8929
    %v9921 = vunpack.c.h.b16 %v8929
    %v9922 = vunpack.c.l.b16 %v8930
    %v9923 = vunpack.c.h.b16 %v8930
    %v9924 = vunpack.c.l.b16 %v8931
    %v9925 = vunpack.c.h.b16 %v8931
    %v9926 = vunpack.c.l.b16 %v8932
    %v9927 = vunpack.c.h.b16 %v8932
    %v9928 = vunpack.c.l.b16 %v8933
    %v9929 = vunpack.c.h.b16 %v8933
    %v9930 = vunpack.c.l.b16 %v8934
    %v9931 = vunpack.c.h.b16 %v8934
    %v9932 = vunpack.c.l.b16 %v8935
    %v9933 = vunpack.c.h.b16 %v8935
    %v9934 = vunpack.c.l.b16 %v8936
    %v9935 = vunpack.c.h.b16 %v8936
    %v9936 = vunpack.c.l.b16 %v8937
    %v9937 = vunpack.c.h.b16 %v8937
    %v9938 = vunpack.c.l.b16 %v8938
    %v9939 = vunpack.c.h.b16 %v8938
    %v9940 = vunpack.c.l.b16 %v8939
    %v9941 = vunpack.c.h.b16 %v8939
    %v9942 = vunpack.c.l.b16 %v8940
    %v9943 = vunpack.c.h.b16 %v8940
    %v9944 = vunpack.c.l.b16 %v8941
    %v9945 = vunpack.c.h.b16 %v8941
    %v9946 = vunpack.c.l.b16 %v8942
    %v9947 = vunpack.c.h.b16 %v8942
    %v9948 = vunpack.c.l.b16 %v8943
    %v9949 = vunpack.c.h.b16 %v8943
    %v9950 = vunpack.c.l.b16 %v8944
    %v9951 = vunpack.c.h.b16 %v8944
    %v9952 = vunpack.c.l.b16 %v8945
    %v9953 = vunpack.c.h.b16 %v8945
    %v9954 = vunpack.c.l.b16 %v8946
    %v9955 = vunpack.c.h.b16 %v8946
    %v9956 = vunpack.c.l.b16 %v8947
    %v9957 = vunpack.c.h.b16 %v8947
    %v9958 = vunpack.c.l.b16 %v8948
    %v9959 = vunpack.c.h.b16 %v8948
    %v9960 = vunpack.c.l.b16 %v8949
    %v9961 = vunpack.c.h.b16 %v8949
    %v9962 = vunpack.c.l.b16 %v8950
    %v9963 = vunpack.c.h.b16 %v8950
    %v9964 = vunpack.c.l.b16 %v8951
    %v9965 = vunpack.c.h.b16 %v8951
    %v9966 = vunpack.c.l.b16 %v8952
    %v9967 = vunpack.c.h.b16 %v8952
    %v9968 = vunpack.c.l.b16 %v8953
    %v9969 = vunpack.c.h.b16 %v8953
    %v9970 = vunpack.c.l.b16 %v8954
    %v9971 = vunpack.c.h.b16 %v8954
    %v9972 = vunpack.c.l.b16 %v8955
    %v9973 = vunpack.c.h.b16 %v8955
    %v9974 = vunpack.c.l.b16 %v8956
    %v9975 = vunpack.c.h.b16 %v8956
    %v9976 = vunpack.c.l.b16 %v8957
    %v9977 = vunpack.c.h.b16 %v8957
    %v9978 = vunpack.c.l.b16 %v8958
    %v9979 = vunpack.c.h.b16 %v8958
    %v9980 = vunpack.c.l.b16 %v8959
    %v9981 = vunpack.c.h.b16 %v8959
    %v9982 = vunpack.c.l.b16 %v8960
    %v9983 = vunpack.c.h.b16 %v8960
    %v9984 = vunpack.c.l.b16 %v8961
    %v9985 = vunpack.c.h.b16 %v8961
    %v9986 = vunpack.c.l.b16 %v8962
    %v9987 = vunpack.c.h.b16 %v8962
    %v9988 = vunpack.c.l.b16 %v8963
    %v9989 = vunpack.c.h.b16 %v8963
    %v9990 = vunpack.c.l.b16 %v8964
    %v9991 = vunpack.c.h.b16 %v8964
    %v9992 = vunpack.c.l.b16 %v8965
    %v9993 = vunpack.c.h.b16 %v8965
    %v9994 = vunpack.c.l.b16 %v8966
    %v9995 = vunpack.c.h.b16 %v8966
    %v9996 = vunpack.c.l.b16 %v8967
    %v9997 = vunpack.c.h.b16 %v8967
    %v9998 = vunpack.c.l.b16 %v8968
    %v9999 = vunpack.c.h.b16 %v8968
    %v10000 = vunpack.c.l.b16 %v8969
    %v10001 = vunpack.c.h.b16 %v8969
    %v10002 = vunpack.c.l.b16 %v8970
    %v10003 = vunpack.c.h.b16 %v8970
    %v10004 = vunpack.c.l.b16 %v8971
    %v10005 = vunpack.c.h.b16 %v8971
    %v10006 = vunpack.c.l.b16 %v8972
    %v10007 = vunpack.c.h.b16 %v8972
    %v10008 = vunpack.c.l.b16 %v8973
    %v10009 = vunpack.c.h.b16 %v8973
    %v10010 = vunpack.c.l.b16 %v8974
    %v10011 = vunpack.c.h.b16 %v8974
    %v10012 = vunpack.c.l.b16 %v8975
    %v10013 = vunpack.c.h.b16 %v8975
    %v10014 = vunpack.c.l.b16 %v8976
    %v10015 = vunpack.c.h.b16 %v8976
    %v10016 = vunpack.c.l.b16 %v8977
    %v10017 = vunpack.c.h.b16 %v8977
    %v10018 = vunpack.c.l.b16 %v8978
    %v10019 = vunpack.c.h.b16 %v8978
    %v10020 = vunpack.c.l.b16 %v8979
    %v10021 = vunpack.c.h.b16 %v8979
    %v10022 = vunpack.c.l.b16 %v8980
    %v10023 = vunpack.c.h.b16 %v8980
    %v10024 = vunpack.c.l.b16 %v8981
    %v10025 = vunpack.c.h.b16 %v8981
    %v10026 = vunpack.c.l.b16 %v8982
    %v10027 = vunpack.c.h.b16 %v8982
    %v10028 = vunpack.c.l.b16 %v8983
    %v10029 = vunpack.c.h.b16 %v8983
    %v10030 = vunpack.c.l.b16 %v8984
    %v10031 = vunpack.c.h.b16 %v8984
    %v10032 = vunpack.c.l.b16 %v8985
    %v10033 = vunpack.c.h.b16 %v8985
    %v10034 = vunpack.c.l.b16 %v8986
    %v10035 = vunpack.c.h.b16 %v8986
    %v10036 = vunpack.c.l.b16 %v8987
    %v10037 = vunpack.c.h.b16 %v8987
    %v10038 = vunpack.c.l.b16 %v8988
    %v10039 = vunpack.c.h.b16 %v8988
    %v10040 = vunpack.c.l.b16 %v8989
    %v10041 = vunpack.c.h.b16 %v8989
    %v10042 = vunpack.c.l.b16 %v8990
    %v10043 = vunpack.c.h.b16 %v8990
    %v10044 = vunpack.c.l.b16 %v8991
    %v10045 = vunpack.c.h.b16 %v8991
    %v10046 = vunpack.c.l.b16 %v8992
    %v10047 = vunpack.c.h.b16 %v8992
    %v10048 = vunpack.c.l.b16 %v8993
    %v10049 = vunpack.c.h.b16 %v8993
    %v10050 = vunpack.c.l.b16 %v8994
    %v10051 = vunpack.c.h.b16 %v8994
    %v10052 = vunpack.c.l.b16 %v8995
    %v10053 = vunpack.c.h.b16 %v8995
    %v10054 = vunpack.c.l.b16 %v8996
    %v10055 = vunpack.c.h.b16 %v8996
    %v10056 = vunpack.c.l.b16 %v8997
    %v10057 = vunpack.c.h.b16 %v8997
    %v10058 = vunpack.c.l.b16 %v8998
    %v10059 = vunpack.c.h.b16 %v8998
    %v10060 = vunpack.c.l.b16 %v8999
    %v10061 = vunpack.c.h.b16 %v8999
    %v10062 = vunpack.c.l.b16 %v9000
    %v10063 = vunpack.c.h.b16 %v9000
    %v10064 = vunpack.c.l.b16 %v9001
    %v10065 = vunpack.c.h.b16 %v9001
    %v10066 = vunpack.c.l.b16 %v9002
    %v10067 = vunpack.c.h.b16 %v9002
    %v10068 = vunpack.c.l.b16 %v9003
    %v10069 = vunpack.c.h.b16 %v9003
    %v10070 = vunpack.c.l.b16 %v9004
    %v10071 = vunpack.c.h.b16 %v9004
    %v10072 = vunpack.c.l.b16 %v9005
    %v10073 = vunpack.c.h.b16 %v9005
    %v10074 = vunpack.c.l.b16 %v9006
    %v10075 = vunpack.c.h.b16 %v9006
    %v10076 = vunpack.c.l.b16 %v9007
    %v10077 = vunpack.c.h.b16 %v9007
    %v10078 = vunpack.c.l.b16 %v9008
    %v10079 = vunpack.c.h.b16 %v9008
    %v10080 = vunpack.c.l.b16 %v9009
    %v10081 = vunpack.c.h.b16 %v9009
    %v10082 = vunpack.c.l.b16 %v9010
    %v10083 = vunpack.c.h.b16 %v9010
    %v10084 = vunpack.c.l.b16 %v9011
    %v10085 = vunpack.c.h.b16 %v9011
    %v10086 = vunpack.c.l.b16 %v9012
    %v10087 = vunpack.c.h.b16 %v9012
    %v10088 = vunpack.c.l.b16 %v9013
    %v10089 = vunpack.c.h.b16 %v9013
    %v10090 = vunpack.c.l.b16 %v9014
    %v10091 = vunpack.c.h.b16 %v9014
    %v10092 = vunpack.c.l.b16 %v9015
    %v10093 = vunpack.c.h.b16 %v9015
    %v10094 = vunpack.c.l.b16 %v9016
    %v10095 = vunpack.c.h.b16 %v9016
    %v10096 = vunpack.c.l.b16 %v9017
    %v10097 = vunpack.c.h.b16 %v9017
    %v10098 = vunpack.c.l.b16 %v9018
    %v10099 = vunpack.c.h.b16 %v9018
    %v10100 = vunpack.c.l.b16 %v9019
    %v10101 = vunpack.c.h.b16 %v9019
    %v10102 = vunpack.c.l.b16 %v9020
    %v10103 = vunpack.c.h.b16 %v9020
    %v10104 = vunpack.c.l.b16 %v9021
    %v10105 = vunpack.c.h.b16 %v9021
    %v10106 = vunpack.c.l.b16 %v9022
    %v10107 = vunpack.c.h.b16 %v9022
    %v10108 = vunpack.c.l.b16 %v9023
    %v10109 = vunpack.c.h.b16 %v9023
    %v10110 = vunpack.c.l.b16 %v9024
    %v10111 = vunpack.c.h.b16 %v9024
    %v10112 = vunpack.c.l.b16 %v9025
    %v10113 = vunpack.c.h.b16 %v9025
    %v10114 = vunpack.c.l.b16 %v9026
    %v10115 = vunpack.c.h.b16 %v9026
    %v10116 = vunpack.c.l.b16 %v9027
    %v10117 = vunpack.c.h.b16 %v9027
    %v10118 = vunpack.c.l.b16 %v9028
    %v10119 = vunpack.c.h.b16 %v9028
    %v10120 = vunpack.c.l.b16 %v9029
    %v10121 = vunpack.c.h.b16 %v9029
    %v10122 = vunpack.c.l.b16 %v9030
    %v10123 = vunpack.c.h.b16 %v9030
    %v10124 = vunpack.c.l.b16 %v9031
    %v10125 = vunpack.c.h.b16 %v9031
    %v10126 = vunpack.c.l.b16 %v9032
    %v10127 = vunpack.c.h.b16 %v9032
    %v10128 = vunpack.c.l.b16 %v9033
    %v10129 = vunpack.c.h.b16 %v9033
    %v10130 = vunpack.c.l.b16 %v9034
    %v10131 = vunpack.c.h.b16 %v9034
    %v10132 = vunpack.c.l.b16 %v9035
    %v10133 = vunpack.c.h.b16 %v9035
    %v10134 = vunpack.c.l.b16 %v9036
    %v10135 = vunpack.c.h.b16 %v9036
    %v10136 = vunpack.c.l.b16 %v9037
    %v10137 = vunpack.c.h.b16 %v9037
    %v10138 = vunpack.c.l.b16 %v9038
    %v10139 = vunpack.c.h.b16 %v9038
    %v10140 = vunpack.c.l.b16 %v9039
    %v10141 = vunpack.c.h.b16 %v9039
    %v10142 = vunpack.c.l.b16 %v9040
    %v10143 = vunpack.c.h.b16 %v9040
    %v10144 = vunpack.c.l.b16 %v9041
    %v10145 = vunpack.c.h.b16 %v9041
    %v10146 = vunpack.c.l.b16 %v9042
    %v10147 = vunpack.c.h.b16 %v9042
    %v10148 = vunpack.c.l.b16 %v9043
    %v10149 = vunpack.c.h.b16 %v9043
    %v10150 = vunpack.c.l.b16 %v9044
    %v10151 = vunpack.c.h.b16 %v9044
    %v10152 = vunpack.c.l.b16 %v9045
    %v10153 = vunpack.c.h.b16 %v9045
    %v10154 = vunpack.c.l.b16 %v9046
    %v10155 = vunpack.c.h.b16 %v9046
    %v10156 = vunpack.c.l.b16 %v9047
    %v10157 = vunpack.c.h.b16 %v9047
    %v10158 = vunpack.c.l.b16 %v9048
    %v10159 = vunpack.c.h.b16 %v9048
    %v10160 = vunpack.c.l.b16 %v9049
    %v10161 = vunpack.c.h.b16 %v9049
    %v10162 = vunpack.c.l.b16 %v9050
    %v10163 = vunpack.c.h.b16 %v9050
    %v10164 = vunpack.c.l.b16 %v9051
    %v10165 = vunpack.c.h.b16 %v9051
    %v10166 = vunpack.c.l.b16 %v9052
    %v10167 = vunpack.c.h.b16 %v9052
    %v10168 = vunpack.c.l.b16 %v9053
    %v10169 = vunpack.c.h.b16 %v9053
    %v10170 = vunpack.c.l.b16 %v9054
    %v10171 = vunpack.c.h.b16 %v9054
    %v10172 = vunpack.c.l.b16 %v9055
    %v10173 = vunpack.c.h.b16 %v9055
    %v10174 = vunpack.c.l.b16 %v9056
    %v10175 = vunpack.c.h.b16 %v9056
    %v10176 = vunpack.c.l.b16 %v9057
    %v10177 = vunpack.c.h.b16 %v9057
    %v10178 = vunpack.c.l.b16 %v9058
    %v10179 = vunpack.c.h.b16 %v9058
    %v10180 = vunpack.c.l.b16 %v9059
    %v10181 = vunpack.c.h.b16 %v9059
    %v10182 = vunpack.c.l.b16 %v9060
    %v10183 = vunpack.c.h.b16 %v9060
    %v10184 = vunpack.c.l.b16 %v9061
    %v10185 = vunpack.c.h.b16 %v9061
    %v10186 = vunpack.c.l.b16 %v9062
    %v10187 = vunpack.c.h.b16 %v9062
    %v10188 = vunpack.c.l.b16 %v9063
    %v10189 = vunpack.c.h.b16 %v9063
    %v10190 = vunpack.c.l.b16 %v9064
    %v10191 = vunpack.c.h.b16 %v9064
    %v10192 = vunpack.c.l.b16 %v9065
    %v10193 = vunpack.c.h.b16 %v9065
    %v10194 = vunpack.c.l.b16 %v9066
    %v10195 = vunpack.c.h.b16 %v9066
    %v10196 = vunpack.c.l.b16 %v9067
    %v10197 = vunpack.c.h.b16 %v9067
    %v10198 = vunpack.c.l.b16 %v9068
    %v10199 = vunpack.c.h.b16 %v9068
    %v10200 = vunpack.c.l.b16 %v9069
    %v10201 = vunpack.c.h.b16 %v9069
    %v10202 = vunpack.c.l.b16 %v9070
    %v10203 = vunpack.c.h.b16 %v9070
    %v10204 = vunpack.c.l.b16 %v9071
    %v10205 = vunpack.c.h.b16 %v9071
    %v10206 = vunpack.c.l.b16 %v9072
    %v10207 = vunpack.c.h.b16 %v9072
    %v10208 = vunpack.c.l.b16 %v9073
    %v10209 = vunpack.c.h.b16 %v9073
    %v10210 = vunpack.c.l.b16 %v9074
    %v10211 = vunpack.c.h.b16 %v9074
    %v10212 = vunpack.c.l.b16 %v9075
    %v10213 = vunpack.c.h.b16 %v9075
    %v10214 = vunpack.c.l.b16 %v9076
    %v10215 = vunpack.c.h.b16 %v9076
    %v10216 = vunpack.c.l.b16 %v9077
    %v10217 = vunpack.c.h.b16 %v9077
    %v10218 = vunpack.c.l.b16 %v9078
    %v10219 = vunpack.c.h.b16 %v9078
    %v10220 = vunpack.c.l.b16 %v9079
    %v10221 = vunpack.c.h.b16 %v9079
    %v10222 = vunpack.c.l.b16 %v9080
    %v10223 = vunpack.c.h.b16 %v9080
    %v10224 = vunpack.c.l.b16 %v9081
    %v10225 = vunpack.c.h.b16 %v9081
    %v10226 = vunpack.c.l.b16 %v9082
    %v10227 = vunpack.c.h.b16 %v9082
    %v10228 = vunpack.c.l.b16 %v9083
    %v10229 = vunpack.c.h.b16 %v9083
    %v10230 = vunpack.c.l.b16 %v9084
    %v10231 = vunpack.c.h.b16 %v9084
    %v10232 = vunpack.c.l.b16 %v9085
    %v10233 = vunpack.c.h.b16 %v9085
    %v10234 = vunpack.c.l.b16 %v9086
    %v10235 = vunpack.c.h.b16 %v9086
    %v10236 = vunpack.c.l.b16 %v9087
    %v10237 = vunpack.c.h.b16 %v9087
    %v10238 = vunpack.c.l.b16 %v9088
    %v10239 = vunpack.c.h.b16 %v9088
    %v10240 = vunpack.c.l.b16 %v9089
    %v10241 = vunpack.c.h.b16 %v9089
    %v10242 = vpack.c.b16 %v9480, %v9474
    %v10243 = vpack.c.b16 %v9481, %v9475
    %v10244 = vpack.c.b16 %v9482, %v9476
    %v10245 = vpack.c.b16 %v9483, %v9477
    %v10246 = vpack.c.b16 %v9484, %v9478
    %v10247 = vpack.c.b16 %v9485, %v9479
    %v10248 = vpack.c.b16 %v9492, %v9486
    %v10249 = vpack.c.b16 %v9493, %v9487
    %v10250 = vpack.c.b16 %v9494, %v9488
    %v10251 = vpack.c.b16 %v9495, %v9489
    %v10252 = vpack.c.b16 %v9496, %v9490
    %v10253 = vpack.c.b16 %v9497, %v9491
    %v10254 = vpack.c.b16 %v9504, %v9498
    %v10255 = vpack.c.b16 %v9505, %v9499
    %v10256 = vpack.c.b16 %v9506, %v9500
    %v10257 = vpack.c.b16 %v9507, %v9501
    %v10258 = vpack.c.b16 %v9508, %v9502
    %v10259 = vpack.c.b16 %v9509, %v9503
    %v10260 = vpack.c.b16 %v9516, %v9510
    %v10261 = vpack.c.b16 %v9517, %v9511
    %v10262 = vpack.c.b16 %v9518, %v9512
    %v10263 = vpack.c.b16 %v9519, %v9513
    %v10264 = vpack.c.b16 %v9520, %v9514
    %v10265 = vpack.c.b16 %v9521, %v9515
    %v10266 = vpack.c.b16 %v9528, %v9522
    %v10267 = vpack.c.b16 %v9529, %v9523
    %v10268 = vpack.c.b16 %v9530, %v9524
    %v10269 = vpack.c.b16 %v9531, %v9525
    %v10270 = vpack.c.b16 %v9532, %v9526
    %v10271 = vpack.c.b16 %v9533, %v9527
    %v10272 = vpack.c.b16 %v9540, %v9534
    %v10273 = vpack.c.b16 %v9541, %v9535
    %v10274 = vpack.c.b16 %v9542, %v9536
    %v10275 = vpack.c.b16 %v9543, %v9537
    %v10276 = vpack.c.b16 %v9544, %v9538
    %v10277 = vpack.c.b16 %v9545, %v9539
    %v10278 = vpack.c.b16 %v9552, %v9546
    %v10279 = vpack.c.b16 %v9553, %v9547
    %v10280 = vpack.c.b16 %v9554, %v9548
    %v10281 = vpack.c.b16 %v9555, %v9549
    %v10282 = vpack.c.b16 %v9556, %v9550
    %v10283 = vpack.c.b16 %v9557, %v9551
    %v10284 = vpack.c.b16 %v9564, %v9558
    %v10285 = vpack.c.b16 %v9565, %v9559
    %v10286 = vpack.c.b16 %v9566, %v9560
    %v10287 = vpack.c.b16 %v9567, %v9561
    %v10288 = vpack.c.b16 %v9568, %v9562
    %v10289 = vpack.c.b16 %v9569, %v9563
    %v10290 = vpack.c.b16 %v9576, %v9570
    %v10291 = vpack.c.b16 %v9577, %v9571
    %v10292 = vpack.c.b16 %v9578, %v9572
    %v10293 = vpack.c.b16 %v9579, %v9573
    %v10294 = vpack.c.b16 %v9580, %v9574
    %v10295 = vpack.c.b16 %v9581, %v9575
    %v10296 = vpack.c.b16 %v9588, %v9582
    %v10297 = vpack.c.b16 %v9589, %v9583
    %v10298 = vpack.c.b16 %v9590, %v9584
    %v10299 = vpack.c.b16 %v9591, %v9585
    %v10300 = vpack.c.b16 %v9592, %v9586
    %v10301 = vpack.c.b16 %v9593, %v9587
    %v10302 = vpack.c.b16 %v9600, %v9594
    %v10303 = vpack.c.b16 %v9601, %v9595
    %v10304 = vpack.c.b16 %v9602, %v9596
    %v10305 = vpack.c.b16 %v9603, %v9597
    %v10306 = vpack.c.b16 %v9604, %v9598
    %v10307 = vpack.c.b16 %v9605, %v9599
    %v10308 = vpack.c.b16 %v9612, %v9606
    %v10309 = vpack.c.b16 %v9613, %v9607
    %v10310 = vpack.c.b16 %v9614, %v9608
    %v10311 = vpack.c.b16 %v9615, %v9609
    %v10312 = vpack.c.b16 %v9616, %v9610
    %v10313 = vpack.c.b16 %v9617, %v9611
    %v10314 = vpack.c.b16 %v9624, %v9618
    %v10315 = vpack.c.b16 %v9625, %v9619
    %v10316 = vpack.c.b16 %v9626, %v9620
    %v10317 = vpack.c.b16 %v9627, %v9621
    %v10318 = vpack.c.b16 %v9628, %v9622
    %v10319 = vpack.c.b16 %v9629, %v9623
    %v10320 = vpack.c.b16 %v9636, %v9630
    %v10321 = vpack.c.b16 %v9637, %v9631
    %v10322 = vpack.c.b16 %v9638, %v9632
    %v10323 = vpack.c.b16 %v9639, %v9633
    %v10324 = vpack.c.b16 %v9640, %v9634
    %v10325 = vpack.c.b16 %v9641, %v9635
    %v10326 = vpack.c.b16 %v9648, %v9642
    %v10327 = vpack.c.b16 %v9649, %v9643
    %v10328 = vpack.c.b16 %v9650, %v9644
    %v10329 = vpack.c.b16 %v9651, %v9645
    %v10330 = vpack.c.b16 %v9652, %v9646
    %v10331 = vpack.c.b16 %v9653, %v9647
    %v10332 = vpack.c.b16 %v9660, %v9654
    %v10333 = vpack.c.b16 %v9661, %v9655
    %v10334 = vpack.c.b16 %v9662, %v9656
    %v10335 = vpack.c.b16 %v9663, %v9657
    %v10336 = vpack.c.b16 %v9664, %v9658
    %v10337 = vpack.c.b16 %v9665, %v9659
    %v10338 = vpack.c.b16 %v9672, %v9666
    %v10339 = vpack.c.b16 %v9673, %v9667
    %v10340 = vpack.c.b16 %v9674, %v9668
    %v10341 = vpack.c.b16 %v9675, %v9669
    %v10342 = vpack.c.b16 %v9676, %v9670
    %v10343 = vpack.c.b16 %v9677, %v9671
    %v10344 = vpack.c.b16 %v9684, %v9678
    %v10345 = vpack.c.b16 %v9685, %v9679
    %v10346 = vpack.c.b16 %v9686, %v9680
    %v10347 = vpack.c.b16 %v9687, %v9681
    %v10348 = vpack.c.b16 %v9688, %v9682
    %v10349 = vpack.c.b16 %v9689, %v9683
    %v10350 = vpack.c.b16 %v9696, %v9690
    %v10351 = vpack.c.b16 %v9697, %v9691
    %v10352 = vpack.c.b16 %v9698, %v9692
    %v10353 = vpack.c.b16 %v9699, %v9693
    %v10354 = vpack.c.b16 %v9700, %v9694
    %v10355 = vpack.c.b16 %v9701, %v9695
    %v10356 = vpack.c.b16 %v9708, %v9702
    %v10357 = vpack.c.b16 %v9709, %v9703
    %v10358 = vpack.c.b16 %v9710, %v9704
    %v10359 = vpack.c.b16 %v9711, %v9705
    %v10360 = vpack.c.b16 %v9712, %v9706
    %v10361 = vpack.c.b16 %v9713, %v9707
    %v10362 = vpack.c.b16 %v9720, %v9714
    %v10363 = vpack.c.b16 %v9721, %v9715
    %v10364 = vpack.c.b16 %v9722, %v9716
    %v10365 = vpack.c.b16 %v9723, %v9717
    %v10366 = vpack.c.b16 %v9724, %v9718
    %v10367 = vpack.c.b16 %v9725, %v9719
    %v10368 = vpack.c.b16 %v9732, %v9726
    %v10369 = vpack.c.b16 %v9733, %v9727
    %v10370 = vpack.c.b16 %v9734, %v9728
    %v10371 = vpack.c.b16 %v9735, %v9729
    %v10372 = vpack.c.b16 %v9736, %v9730
    %v10373 = vpack.c.b16 %v9737, %v9731
    %v10374 = vpack.c.b16 %v9744, %v9738
    %v10375 = vpack.c.b16 %v9745, %v9739
    %v10376 = vpack.c.b16 %v9746, %v9740
    %v10377 = vpack.c.b16 %v9747, %v9741
    %v10378 = vpack.c.b16 %v9748, %v9742
    %v10379 = vpack.c.b16 %v9749, %v9743
    %v10380 = vpack.c.b16 %v9756, %v9750
    %v10381 = vpack.c.b16 %v9757, %v9751
    %v10382 = vpack.c.b16 %v9758, %v9752
    %v10383 = vpack.c.b16 %v9759, %v9753
    %v10384 = vpack.c.b16 %v9760, %v9754
    %v10385 = vpack.c.b16 %v9761, %v9755
    %v10386 = vpack.c.b16 %v9768, %v9762
    %v10387 = vpack.c.b16 %v9769, %v9763
    %v10388 = vpack.c.b16 %v9770, %v9764
    %v10389 = vpack.c.b16 %v9771, %v9765
    %v10390 = vpack.c.b16 %v9772, %v9766
    %v10391 = vpack.c.b16 %v9773, %v9767
    %v10392 = vpack.c.b16 %v9780, %v9774
    %v10393 = vpack.c.b16 %v9781, %v9775
    %v10394 = vpack.c.b16 %v9782, %v9776
    %v10395 = vpack.c.b16 %v9783, %v9777
    %v10396 = vpack.c.b16 %v9784, %v9778
    %v10397 = vpack.c.b16 %v9785, %v9779
    %v10398 = vpack.c.b16 %v9792, %v9786
    %v10399 = vpack.c.b16 %v9793, %v9787
    %v10400 = vpack.c.b16 %v9794, %v9788
    %v10401 = vpack.c.b16 %v9795, %v9789
    %v10402 = vpack.c.b16 %v9796, %v9790
    %v10403 = vpack.c.b16 %v9797, %v9791
    %v10404 = vpack.c.b16 %v9804, %v9798
    %v10405 = vpack.c.b16 %v9805, %v9799
    %v10406 = vpack.c.b16 %v9806, %v9800
    %v10407 = vpack.c.b16 %v9807, %v9801
    %v10408 = vpack.c.b16 %v9808, %v9802
    %v10409 = vpack.c.b16 %v9809, %v9803
    %v10410 = vpack.c.b16 %v9816, %v9810
    %v10411 = vpack.c.b16 %v9817, %v9811
    %v10412 = vpack.c.b16 %v9818, %v9812
    %v10413 = vpack.c.b16 %v9819, %v9813
    %v10414 = vpack.c.b16 %v9820, %v9814
    %v10415 = vpack.c.b16 %v9821, %v9815
    %v10416 = vpack.c.b16 %v9828, %v9822
    %v10417 = vpack.c.b16 %v9829, %v9823
    %v10418 = vpack.c.b16 %v9830, %v9824
    %v10419 = vpack.c.b16 %v9831, %v9825
    %v10420 = vpack.c.b16 %v9832, %v9826
    %v10421 = vpack.c.b16 %v9833, %v9827
    %v10422 = vpack.c.b16 %v9840, %v9834
    %v10423 = vpack.c.b16 %v9841, %v9835
    %v10424 = vpack.c.b16 %v9842, %v9836
    %v10425 = vpack.c.b16 %v9843, %v9837
    %v10426 = vpack.c.b16 %v9844, %v9838
    %v10427 = vpack.c.b16 %v9845, %v9839
    %v10428 = vpack.c.b16 %v9852, %v9846
    %v10429 = vpack.c.b16 %v9853, %v9847
    %v10430 = vpack.c.b16 %v9854, %v9848
    %v10431 = vpack.c.b16 %v9855, %v9849
    %v10432 = vpack.c.b16 %v9856, %v9850
    %v10433 = vpack.c.b16 %v9857, %v9851
    %v10434 = vpack.c.b16 %v9864, %v9858
    %v10435 = vpack.c.b16 %v9865, %v9859
    %v10436 = vpack.c.b16 %v9866, %v9860
    %v10437 = vpack.c.b16 %v9867, %v9861
    %v10438 = vpack.c.b16 %v9868, %v9862
    %v10439 = vpack.c.b16 %v9869, %v9863
    %v10440 = vpack.c.b16 %v9876, %v9870
    %v10441 = vpack.c.b16 %v9877, %v9871
    %v10442 = vpack.c.b16 %v9878, %v9872
    %v10443 = vpack.c.b16 %v9879, %v9873
    %v10444 = vpack.c.b16 %v9880, %v9874
    %v10445 = vpack.c.b16 %v9881, %v9875
    %v10446 = vpack.c.b16 %v9888, %v9882
    %v10447 = vpack.c.b16 %v9889, %v9883
    %v10448 = vpack.c.b16 %v9890, %v9884
    %v10449 = vpack.c.b16 %v9891, %v9885
    %v10450 = vpack.c.b16 %v9892, %v9886
    %v10451 = vpack.c.b16 %v9893, %v9887
    %v10452 = vpack.c.b16 %v9900, %v9894
    %v10453 = vpack.c.b16 %v9901, %v9895
    %v10454 = vpack.c.b16 %v9902, %v9896
    %v10455 = vpack.c.b16 %v9903, %v9897
    %v10456 = vpack.c.b16 %v9904, %v9898
    %v10457 = vpack.c.b16 %v9905, %v9899
    %v10458 = vpack.c.b16 %v9912, %v9906
    %v10459 = vpack.c.b16 %v9913, %v9907
    %v10460 = vpack.c.b16 %v9914, %v9908
    %v10461 = vpack.c.b16 %v9915, %v9909
    %v10462 = vpack.c.b16 %v9916, %v9910
    %v10463 = vpack.c.b16 %v9917, %v9911
    %v10464 = vpack.c.b16 %v9924, %v9918
    %v10465 = vpack.c.b16 %v9925, %v9919
    %v10466 = vpack.c.b16 %v9926, %v9920
    %v10467 = vpack.c.b16 %v9927, %v9921
    %v10468 = vpack.c.b16 %v9928, %v9922
    %v10469 = vpack.c.b16 %v9929, %v9923
    %v10470 = vpack.c.b16 %v9936, %v9930
    %v10471 = vpack.c.b16 %v9937, %v9931
    %v10472 = vpack.c.b16 %v9938, %v9932
    %v10473 = vpack.c.b16 %v9939, %v9933
    %v10474 = vpack.c.b16 %v9940, %v9934
    %v10475 = vpack.c.b16 %v9941, %v9935
    %v10476 = vpack.c.b16 %v9948, %v9942
    %v10477 = vpack.c.b16 %v9949, %v9943
    %v10478 = vpack.c.b16 %v9950, %v9944
    %v10479 = vpack.c.b16 %v9951, %v9945
    %v10480 = vpack.c.b16 %v9952, %v9946
    %v10481 = vpack.c.b16 %v9953, %v9947
    %v10482 = vpack.c.b16 %v9960, %v9954
    %v10483 = vpack.c.b16 %v9961, %v9955
    %v10484 = vpack.c.b16 %v9962, %v9956
    %v10485 = vpack.c.b16 %v9963, %v9957
    %v10486 = vpack.c.b16 %v9964, %v9958
    %v10487 = vpack.c.b16 %v9965, %v9959
    %v10488 = vpack.c.b16 %v9972, %v9966
    %v10489 = vpack.c.b16 %v9973, %v9967
    %v10490 = vpack.c.b16 %v9974, %v9968
    %v10491 = vpack.c.b16 %v9975, %v9969
    %v10492 = vpack.c.b16 %v9976, %v9970
    %v10493 = vpack.c.b16 %v9977, %v9971
    %v10494 = vpack.c.b16 %v9984, %v9978
    %v10495 = vpack.c.b16 %v9985, %v9979
    %v10496 = vpack.c.b16 %v9986, %v9980
    %v10497 = vpack.c.b16 %v9987, %v9981
    %v10498 = vpack.c.b16 %v9988, %v9982
    %v10499 = vpack.c.b16 %v9989, %v9983
    %v10500 = vpack.c.b16 %v9996, %v9990
    %v10501 = vpack.c.b16 %v9997, %v9991
    %v10502 = vpack.c.b16 %v9998, %v9992
    %v10503 = vpack.c.b16 %v9999, %v9993
    %v10504 = vpack.c.b16 %v10000, %v9994
    %v10505 = vpack.c.b16 %v10001, %v9995
    %v10506 = vpack.c.b16 %v10008, %v10002
    %v10507 = vpack.c.b16 %v10009, %v10003
    %v10508 = vpack.c.b16 %v10010, %v10004
    %v10509 = vpack.c.b16 %v10011, %v10005
    %v10510 = vpack.c.b16 %v10012, %v10006
    %v10511 = vpack.c.b16 %v10013, %v10007
    %v10512 = vpack.c.b16 %v10020, %v10014
    %v10513 = vpack.c.b16 %v10021, %v10015
    %v10514 = vpack.c.b16 %v10022, %v10016
    %v10515 = vpack.c.b16 %v10023, %v10017
    %v10516 = vpack.c.b16 %v10024, %v10018
    %v10517 = vpack.c.b16 %v10025, %v10019
    %v10518 = vpack.c.b16 %v10032, %v10026
    %v10519 = vpack.c.b16 %v10033, %v10027
    %v10520 = vpack.c.b16 %v10034, %v10028
    %v10521 = vpack.c.b16 %v10035, %v10029
    %v10522 = vpack.c.b16 %v10036, %v10030
    %v10523 = vpack.c.b16 %v10037, %v10031
    %v10524 = vpack.c.b16 %v10044, %v10038
    %v10525 = vpack.c.b16 %v10045, %v10039
    %v10526 = vpack.c.b16 %v10046, %v10040
    %v10527 = vpack.c.b16 %v10047, %v10041
    %v10528 = vpack.c.b16 %v10048, %v10042
    %v10529 = vpack.c.b16 %v10049, %v10043
    %v10530 = vpack.c.b16 %v10056, %v10050
    %v10531 = vpack.c.b16 %v10057, %v10051
    %v10532 = vpack.c.b16 %v10058, %v10052
    %v10533 = vpack.c.b16 %v10059, %v10053
    %v10534 = vpack.c.b16 %v10060, %v10054
    %v10535 = vpack.c.b16 %v10061, %v10055
    %v10536 = vpack.c.b16 %v10068, %v10062
    %v10537 = vpack.c.b16 %v10069, %v10063
    %v10538 = vpack.c.b16 %v10070, %v10064
    %v10539 = vpack.c.b16 %v10071, %v10065
    %v10540 = vpack.c.b16 %v10072, %v10066
    %v10541 = vpack.c.b16 %v10073, %v10067
    %v10542 = vpack.c.b16 %v10080, %v10074
    %v10543 = vpack.c.b16 %v10081, %v10075
    %v10544 = vpack.c.b16 %v10082, %v10076
    %v10545 = vpack.c.b16 %v10083, %v10077
    %v10546 = vpack.c.b16 %v10084, %v10078
    %v10547 = vpack.c.b16 %v10085, %v10079
    %v10548 = vpack.c.b16 %v10092, %v10086
    %v10549 = vpack.c.b16 %v10093, %v10087
    %v10550 = vpack.c.b16 %v10094, %v10088
    %v10551 = vpack.c.b16 %v10095, %v10089
    %v10552 = vpack.c.b16 %v10096, %v10090
    %v10553 = vpack.c.b16 %v10097, %v10091
    %v10554 = vpack.c.b16 %v10104, %v10098
    %v10555 = vpack.c.b16 %v10105, %v10099
    %v10556 = vpack.c.b16 %v10106, %v10100
    %v10557 = vpack.c.b16 %v10107, %v10101
    %v10558 = vpack.c.b16 %v10108, %v10102
    %v10559 = vpack.c.b16 %v10109, %v10103
    %v10560 = vpack.c.b16 %v10116, %v10110
    %v10561 = vpack.c.b16 %v10117, %v10111
    %v10562 = vpack.c.b16 %v10118, %v10112
    %v10563 = vpack.c.b16 %v10119, %v10113
    %v10564 = vpack.c.b16 %v10120, %v10114
    %v10565 = vpack.c.b16 %v10121, %v10115
    %v10566 = vpack.c.b16 %v10128, %v10122
    %v10567 = vpack.c.b16 %v10129, %v10123
    %v10568 = vpack.c.b16 %v10130, %v10124
    %v10569 = vpack.c.b16 %v10131, %v10125
    %v10570 = vpack.c.b16 %v10132, %v10126
    %v10571 = vpack.c.b16 %v10133, %v10127
    %v10572 = vpack.c.b16 %v10140, %v10134
    %v10573 = vpack.c.b16 %v10141, %v10135
    %v10574 = vpack.c.b16 %v10142, %v10136
    %v10575 = vpack.c.b16 %v10143, %v10137
    %v10576 = vpack.c.b16 %v10144, %v10138
    %v10577 = vpack.c.b16 %v10145, %v10139
    %v10578 = vpack.c.b16 %v10152, %v10146
    %v10579 = vpack.c.b16 %v10153, %v10147
    %v10580 = vpack.c.b16 %v10154, %v10148
    %v10581 = vpack.c.b16 %v10155, %v10149
    %v10582 = vpack.c.b16 %v10156, %v10150
    %v10583 = vpack.c.b16 %v10157, %v10151
    %v10584 = vpack.c.b16 %v10164, %v10158
    %v10585 = vpack.c.b16 %v10165, %v10159
    %v10586 = vpack.c.b16 %v10166, %v10160
    %v10587 = vpack.c.b16 %v10167, %v10161
    %v10588 = vpack.c.b16 %v10168, %v10162
    %v10589 = vpack.c.b16 %v10169, %v10163
    %v10590 = vpack.c.b16 %v10176, %v10170
    %v10591 = vpack.c.b16 %v10177, %v10171
    %v10592 = vpack.c.b16 %v10178, %v10172
    %v10593 = vpack.c.b16 %v10179, %v10173
    %v10594 = vpack.c.b16 %v10180, %v10174
    %v10595 = vpack.c.b16 %v10181, %v10175
    %v10596 = vpack.c.b16 %v10188, %v10182
    %v10597 = vpack.c.b16 %v10189, %v10183
    %v10598 = vpack.c.b16 %v10190, %v10184
    %v10599 = vpack.c.b16 %v10191, %v10185
    %v10600 = vpack.c.b16 %v10192, %v10186
    %v10601 = vpack.c.b16 %v10193, %v10187
    %v10602 = vpack.c.b16 %v10200, %v10194
    %v10603 = vpack.c.b16 %v10201, %v10195
    %v10604 = vpack.c.b16 %v10202, %v10196
    %v10605 = vpack.c.b16 %v10203, %v10197
    %v10606 = vpack.c.b16 %v10204, %v10198
    %v10607 = vpack.c.b16 %v10205, %v10199
    %v10608 = vpack.c.b16 %v10212, %v10206
    %v10609 = vpack.c.b16 %v10213, %v10207
    %v10610 = vpack.c.b16 %v10214, %v10208
    %v10611 = vpack.c.b16 %v10215, %v10209
    %v10612 = vpack.c.b16 %v10216, %v10210
    %v10613 = vpack.c.b16 %v10217, %v10211
    %v10614 = vpack.c.b16 %v10224, %v10218
    %v10615 = vpack.c.b16 %v10225, %v10219
    %v10616 = vpack.c.b16 %v10226, %v10220
    %v10617 = vpack.c.b16 %v10227, %v10221
    %v10618 = vpack.c.b16 %v10228, %v10222
    %v10619 = vpack.c.b16 %v10229, %v10223
    %v10620 = vpack.c.b16 %v10236, %v10230
    %v10621 = vpack.c.b16 %v10237, %v10231
    %v10622 = vpack.c.b16 %v10238, %v10232
    %v10623 = vpack.c.b16 %v10239, %v10233
    %v10624 = vpack.c.b16 %v10240, %v10234
    %v10625 = vpack.c.b16 %v10241, %v10235
    %11010 = vmatprep.subr.bf16.mxu0 %v10285
    %11011 = vmatpush1.bf16.msra.mxu0 %v10284
    %11012 = vmatprep.subr.bf16.mxu0 %v10279
    %11013 = vmatpush1.bf16.msra.mxu0 %v10278
    %11014 = vmatprep.subr.bf16.mxu0 %v10273
    %11015 = vmatpush1.bf16.msra.mxu0 %v10272
    %11016 = vmatprep.subr.bf16.mxu0 %v10267
    %11017 = vmatpush1.bf16.msra.mxu0 %v10266
    %11018 = vmatprep.subr.bf16.mxu0 %v10261
    %11019 = vmatpush1.bf16.msra.mxu0 %v10260
    %11020 = vmatprep.subr.bf16.mxu0 %v10255
    %11021 = vmatpush1.bf16.msra.mxu0 %v10254
    %11022 = vmatprep.subr.bf16.mxu0 %v10249
    %11023 = vmatpush1.bf16.msra.mxu0 %v10248
    %11024 = vmatprep.subr.bf16.mxu0 %v10243
    %11025 = vmatpush1.bf16.msra.mxu0 %v10242
    %11026 = vmatprep.subr.bf16.mxu0 %v10333
    %11027 = vmatpush2.bf16.msra.mxu0 %v10332
    %11028 = vmatprep.subr.bf16.mxu0 %v10327
    %11029 = vmatpush2.bf16.msra.mxu0 %v10326
    %11030 = vmatprep.subr.bf16.mxu0 %v10321
    %11031 = vmatpush2.bf16.msra.mxu0 %v10320
    %11032 = vmatprep.subr.bf16.mxu0 %v10315
    %11033 = vmatpush2.bf16.msra.mxu0 %v10314
    %11034 = vmatprep.subr.bf16.mxu0 %v10309
    %11035 = vmatpush2.bf16.msra.mxu0 %v10308
    %11036 = vmatprep.subr.bf16.mxu0 %v10303
    %11037 = vmatpush2.bf16.msra.mxu0 %v10302
    %11038 = vmatprep.subr.bf16.mxu0 %v10297
    %11039 = vmatpush2.bf16.msra.mxu0 %v10296
    %11040 = vmatprep.subr.bf16.mxu0 %v10291
    %11041 = vmatpush2.bf16.msra.mxu0 %v10290
    %11042 = vmatprep.mubr.bf16.mxu0 %v5815
    %11043 = vmatmul.mubr.bf16.gmra.mxu0 %v5814
    %v11044 = vpop.f32.mrf.mxu0
    %v11045 = vadd.f32 0.0, %v11044
    %v11046 = vpop.f32.mrf.mxu0
    %v11047 = vadd.f32 0.0, %v11046
    %v11048 = vpop.f32.mrf.mxu0
    %v11049 = vpop.f32.mrf.mxu0
    %11050 = vdwg.mxu0
    %11051 = vmatprep.subr.bf16.mxu0 %v10381
    %11052 = vmatpush1.bf16.msra.mxu0 %v10380
    %11053 = vmatprep.subr.bf16.mxu0 %v10375
    %11054 = vmatpush1.bf16.msra.mxu0 %v10374
    %11055 = vmatprep.subr.bf16.mxu0 %v10369
    %11056 = vmatpush1.bf16.msra.mxu0 %v10368
    %11057 = vmatprep.subr.bf16.mxu0 %v10363
    %11058 = vmatpush1.bf16.msra.mxu0 %v10362
    %11059 = vmatprep.subr.bf16.mxu0 %v10357
    %11060 = vmatpush1.bf16.msra.mxu0 %v10356
    %11061 = vmatprep.subr.bf16.mxu0 %v10351
    %11062 = vmatpush1.bf16.msra.mxu0 %v10350
    %11063 = vmatprep.subr.bf16.mxu0 %v10345
    %11064 = vmatpush1.bf16.msra.mxu0 %v10344
    %11065 = vmatprep.subr.bf16.mxu0 %v10339
    %11066 = vmatpush1.bf16.msra.mxu0 %v10338
    %11067 = vmatprep.subr.bf16.mxu0 %v10429
    %11068 = vmatpush2.bf16.msra.mxu0 %v10428
    %11069 = vmatprep.subr.bf16.mxu0 %v10423
    %11070 = vmatpush2.bf16.msra.mxu0 %v10422
    %11071 = vmatprep.subr.bf16.mxu0 %v10417
    %11072 = vmatpush2.bf16.msra.mxu0 %v10416
    %11073 = vmatprep.subr.bf16.mxu0 %v10411
    %11074 = vmatpush2.bf16.msra.mxu0 %v10410
    %11075 = vmatprep.subr.bf16.mxu0 %v10405
    %11076 = vmatpush2.bf16.msra.mxu0 %v10404
    %11077 = vmatprep.subr.bf16.mxu0 %v10399
    %11078 = vmatpush2.bf16.msra.mxu0 %v10398
    %11079 = vmatprep.subr.bf16.mxu0 %v10393
    %11080 = vmatpush2.bf16.msra.mxu0 %v10392
    %11081 = vmatprep.subr.bf16.mxu0 %v10387
    %11082 = vmatpush2.bf16.msra.mxu0 %v10386
    %11083 = vmatprep.mubr.bf16.mxu0 %v5817
    %11084 = vmatmul.mubr.bf16.gmra.mxu0 %v5816
    %v11085 = vpop.f32.mrf.mxu0
    %v11086 = vadd.f32 %v11045, %v11085
    %v11087 = vpop.f32.mrf.mxu0
    %v11088 = vadd.f32 %v11047, %v11087
    %v11089 = vpop.f32.mrf.mxu0
    %v11090 = vpop.f32.mrf.mxu0
    %11091 = vdwg.mxu0
    %11092 = vmatprep.subr.bf16.mxu0 %v10477
    %11093 = vmatpush1.bf16.msra.mxu0 %v10476
    %11094 = vmatprep.subr.bf16.mxu0 %v10471
    %11095 = vmatpush1.bf16.msra.mxu0 %v10470
    %11096 = vmatprep.subr.bf16.mxu0 %v10465
    %11097 = vmatpush1.bf16.msra.mxu0 %v10464
    %11098 = vmatprep.subr.bf16.mxu0 %v10459
    %11099 = vmatpush1.bf16.msra.mxu0 %v10458
    %11100 = vmatprep.subr.bf16.mxu0 %v10453
    %11101 = vmatpush1.bf16.msra.mxu0 %v10452
    %11102 = vmatprep.subr.bf16.mxu0 %v10447
    %11103 = vmatpush1.bf16.msra.mxu0 %v10446
    %11104 = vmatprep.subr.bf16.mxu0 %v10441
    %11105 = vmatpush1.bf16.msra.mxu0 %v10440
    %11106 = vmatprep.subr.bf16.mxu0 %v10435
    %11107 = vmatpush1.bf16.msra.mxu0 %v10434
    %11108 = vmatprep.subr.bf16.mxu0 %v10525
    %11109 = vmatpush2.bf16.msra.mxu0 %v10524
    %11110 = vmatprep.subr.bf16.mxu0 %v10519
    %11111 = vmatpush2.bf16.msra.mxu0 %v10518
    %11112 = vmatprep.subr.bf16.mxu0 %v10513
    %11113 = vmatpush2.bf16.msra.mxu0 %v10512
    %11114 = vmatprep.subr.bf16.mxu0 %v10507
    %11115 = vmatpush2.bf16.msra.mxu0 %v10506
    %11116 = vmatprep.subr.bf16.mxu0 %v10501
    %11117 = vmatpush2.bf16.msra.mxu0 %v10500
    %11118 = vmatprep.subr.bf16.mxu0 %v10495
    %11119 = vmatpush2.bf16.msra.mxu0 %v10494
    %11120 = vmatprep.subr.bf16.mxu0 %v10489
    %11121 = vmatpush2.bf16.msra.mxu0 %v10488
    %11122 = vmatprep.subr.bf16.mxu0 %v10483
    %11123 = vmatpush2.bf16.msra.mxu0 %v10482
    %11124 = vmatprep.mubr.bf16.mxu0 %v5819
    %11125 = vmatmul.mubr.bf16.gmra.mxu0 %v5818
    %v11126 = vpop.f32.mrf.mxu0
    %v11127 = vadd.f32 %v11086, %v11126
    %v11128 = vpop.f32.mrf.mxu0
    %v11129 = vadd.f32 %v11088, %v11128
    %v11130 = vpop.f32.mrf.mxu0
    %v11131 = vpop.f32.mrf.mxu0
    %11132 = vdwg.mxu0
    %11133 = vmatprep.subr.bf16.mxu0 %v10573
    %11134 = vmatpush1.bf16.msra.mxu0 %v10572
    %11135 = vmatprep.subr.bf16.mxu0 %v10567
    %11136 = vmatpush1.bf16.msra.mxu0 %v10566
    %11137 = vmatprep.subr.bf16.mxu0 %v10561
    %11138 = vmatpush1.bf16.msra.mxu0 %v10560
    %11139 = vmatprep.subr.bf16.mxu0 %v10555
    %11140 = vmatpush1.bf16.msra.mxu0 %v10554
    %11141 = vmatprep.subr.bf16.mxu0 %v10549
    %11142 = vmatpush1.bf16.msra.mxu0 %v10548
    %11143 = vmatprep.subr.bf16.mxu0 %v10543
    %11144 = vmatpush1.bf16.msra.mxu0 %v10542
    %11145 = vmatprep.subr.bf16.mxu0 %v10537
    %11146 = vmatpush1.bf16.msra.mxu0 %v10536
    %11147 = vmatprep.subr.bf16.mxu0 %v10531
    %11148 = vmatpush1.bf16.msra.mxu0 %v10530
    %11149 = vmatprep.subr.bf16.mxu0 %v10621
    %11150 = vmatpush2.bf16.msra.mxu0 %v10620
    %11151 = vmatprep.subr.bf16.mxu0 %v10615
    %11152 = vmatpush2.bf16.msra.mxu0 %v10614
    %11153 = vmatprep.subr.bf16.mxu0 %v10609
    %11154 = vmatpush2.bf16.msra.mxu0 %v10608
    %11155 = vmatprep.subr.bf16.mxu0 %v10603
    %11156 = vmatpush2.bf16.msra.mxu0 %v10602
    %11157 = vmatprep.subr.bf16.mxu0 %v10597
    %11158 = vmatpush2.bf16.msra.mxu0 %v10596
    %11159 = vmatprep.subr.bf16.mxu0 %v10591
    %11160 = vmatpush2.bf16.msra.mxu0 %v10590
    %11161 = vmatprep.subr.bf16.mxu0 %v10585
    %11162 = vmatpush2.bf16.msra.mxu0 %v10584
    %11163 = vmatprep.subr.bf16.mxu0 %v10579
    %11164 = vmatpush2.bf16.msra.mxu0 %v10578
    %11165 = vmatprep.mubr.bf16.mxu0 %v5821
    %11166 = vmatmul.mubr.bf16.gmra.mxu0 %v5820
    %v11167 = vpop.f32.mrf.mxu0
    %v11168 = vadd.f32 %v11127, %v11167
    %v11169 = vpop.f32.mrf.mxu0
    %v11170 = vadd.f32 %v11129, %v11169
    %v11171 = vpop.f32.mrf.mxu0
    %v11172 = vpop.f32.mrf.mxu0
    %11173 = vdwg.mxu0
    %11174 = vmatprep.subr.bf16.mxu0 %v10287
    %11175 = vmatpush1.bf16.msra.mxu0 %v10286
    %11176 = vmatprep.subr.bf16.mxu0 %v10281
    %11177 = vmatpush1.bf16.msra.mxu0 %v10280
    %11178 = vmatprep.subr.bf16.mxu0 %v10275
    %11179 = vmatpush1.bf16.msra.mxu0 %v10274
    %11180 = vmatprep.subr.bf16.mxu0 %v10269
    %11181 = vmatpush1.bf16.msra.mxu0 %v10268
    %11182 = vmatprep.subr.bf16.mxu0 %v10263
    %11183 = vmatpush1.bf16.msra.mxu0 %v10262
    %11184 = vmatprep.subr.bf16.mxu0 %v10257
    %11185 = vmatpush1.bf16.msra.mxu0 %v10256
    %11186 = vmatprep.subr.bf16.mxu0 %v10251
    %11187 = vmatpush1.bf16.msra.mxu0 %v10250
    %11188 = vmatprep.subr.bf16.mxu0 %v10245
    %11189 = vmatpush1.bf16.msra.mxu0 %v10244
    %11190 = vmatprep.subr.bf16.mxu0 %v10335
    %11191 = vmatpush2.bf16.msra.mxu0 %v10334
    %11192 = vmatprep.subr.bf16.mxu0 %v10329
    %11193 = vmatpush2.bf16.msra.mxu0 %v10328
    %11194 = vmatprep.subr.bf16.mxu0 %v10323
    %11195 = vmatpush2.bf16.msra.mxu0 %v10322
    %11196 = vmatprep.subr.bf16.mxu0 %v10317
    %11197 = vmatpush2.bf16.msra.mxu0 %v10316
    %11198 = vmatprep.subr.bf16.mxu0 %v10311
    %11199 = vmatpush2.bf16.msra.mxu0 %v10310
    %11200 = vmatprep.subr.bf16.mxu0 %v10305
    %11201 = vmatpush2.bf16.msra.mxu0 %v10304
    %11202 = vmatprep.subr.bf16.mxu0 %v10299
    %11203 = vmatpush2.bf16.msra.mxu0 %v10298
    %11204 = vmatprep.subr.bf16.mxu0 %v10293
    %11205 = vmatpush2.bf16.msra.mxu0 %v10292
    %11206 = vmatprep.mubr.bf16.mxu0 %v5815
    %11207 = vmatmul.mubr.bf16.gmra.mxu0 %v5814
    %v11208 = vpop.f32.mrf.mxu0
    %v11209 = vadd.f32 0.0, %v11208
    %v11210 = vpop.f32.mrf.mxu0
    %v11211 = vadd.f32 0.0, %v11210
    %v11212 = vpop.f32.mrf.mxu0
    %v11213 = vpop.f32.mrf.mxu0
    %11214 = vdwg.mxu0
    %11215 = vmatprep.subr.bf16.mxu0 %v10383
    %11216 = vmatpush1.bf16.msra.mxu0 %v10382
    %11217 = vmatprep.subr.bf16.mxu0 %v10377
    %11218 = vmatpush1.bf16.msra.mxu0 %v10376
    %11219 = vmatprep.subr.bf16.mxu0 %v10371
    %11220 = vmatpush1.bf16.msra.mxu0 %v10370
    %11221 = vmatprep.subr.bf16.mxu0 %v10365
    %11222 = vmatpush1.bf16.msra.mxu0 %v10364
    %11223 = vmatprep.subr.bf16.mxu0 %v10359
    %11224 = vmatpush1.bf16.msra.mxu0 %v10358
    %11225 = vmatprep.subr.bf16.mxu0 %v10353
    %11226 = vmatpush1.bf16.msra.mxu0 %v10352
    %11227 = vmatprep.subr.bf16.mxu0 %v10347
    %11228 = vmatpush1.bf16.msra.mxu0 %v10346
    %11229 = vmatprep.subr.bf16.mxu0 %v10341
    %11230 = vmatpush1.bf16.msra.mxu0 %v10340
    %11231 = vmatprep.subr.bf16.mxu0 %v10431
    %11232 = vmatpush2.bf16.msra.mxu0 %v10430
    %11233 = vmatprep.subr.bf16.mxu0 %v10425
    %11234 = vmatpush2.bf16.msra.mxu0 %v10424
    %11235 = vmatprep.subr.bf16.mxu0 %v10419
    %11236 = vmatpush2.bf16.msra.mxu0 %v10418
    %11237 = vmatprep.subr.bf16.mxu0 %v10413
    %11238 = vmatpush2.bf16.msra.mxu0 %v10412
    %11239 = vmatprep.subr.bf16.mxu0 %v10407
    %11240 = vmatpush2.bf16.msra.mxu0 %v10406
    %11241 = vmatprep.subr.bf16.mxu0 %v10401
    %11242 = vmatpush2.bf16.msra.mxu0 %v10400
    %11243 = vmatprep.subr.bf16.mxu0 %v10395
    %11244 = vmatpush2.bf16.msra.mxu0 %v10394
    %11245 = vmatprep.subr.bf16.mxu0 %v10389
    %11246 = vmatpush2.bf16.msra.mxu0 %v10388
    %11247 = vmatprep.mubr.bf16.mxu0 %v5817
    %11248 = vmatmul.mubr.bf16.gmra.mxu0 %v5816
    %v11249 = vpop.f32.mrf.mxu0
    %v11250 = vadd.f32 %v11209, %v11249
    %v11251 = vpop.f32.mrf.mxu0
    %v11252 = vadd.f32 %v11211, %v11251
    %v11253 = vpop.f32.mrf.mxu0
    %v11254 = vpop.f32.mrf.mxu0
    %11255 = vdwg.mxu0
    %11256 = vmatprep.subr.bf16.mxu0 %v10479
    %11257 = vmatpush1.bf16.msra.mxu0 %v10478
    %11258 = vmatprep.subr.bf16.mxu0 %v10473
    %11259 = vmatpush1.bf16.msra.mxu0 %v10472
    %11260 = vmatprep.subr.bf16.mxu0 %v10467
    %11261 = vmatpush1.bf16.msra.mxu0 %v10466
    %11262 = vmatprep.subr.bf16.mxu0 %v10461
    %11263 = vmatpush1.bf16.msra.mxu0 %v10460
    %11264 = vmatprep.subr.bf16.mxu0 %v10455
    %11265 = vmatpush1.bf16.msra.mxu0 %v10454
    %11266 = vmatprep.subr.bf16.mxu0 %v10449
    %11267 = vmatpush1.bf16.msra.mxu0 %v10448
    %11268 = vmatprep.subr.bf16.mxu0 %v10443
    %11269 = vmatpush1.bf16.msra.mxu0 %v10442
    %11270 = vmatprep.subr.bf16.mxu0 %v10437
    %11271 = vmatpush1.bf16.msra.mxu0 %v10436
    %11272 = vmatprep.subr.bf16.mxu0 %v10527
    %11273 = vmatpush2.bf16.msra.mxu0 %v10526
    %11274 = vmatprep.subr.bf16.mxu0 %v10521
    %11275 = vmatpush2.bf16.msra.mxu0 %v10520
    %11276 = vmatprep.subr.bf16.mxu0 %v10515
    %11277 = vmatpush2.bf16.msra.mxu0 %v10514
    %11278 = vmatprep.subr.bf16.mxu0 %v10509
    %11279 = vmatpush2.bf16.msra.mxu0 %v10508
    %11280 = vmatprep.subr.bf16.mxu0 %v10503
    %11281 = vmatpush2.bf16.msra.mxu0 %v10502
    %11282 = vmatprep.subr.bf16.mxu0 %v10497
    %11283 = vmatpush2.bf16.msra.mxu0 %v10496
    %11284 = vmatprep.subr.bf16.mxu0 %v10491
    %11285 = vmatpush2.bf16.msra.mxu0 %v10490
    %11286 = vmatprep.subr.bf16.mxu0 %v10485
    %11287 = vmatpush2.bf16.msra.mxu0 %v10484
    %11288 = vmatprep.mubr.bf16.mxu0 %v5819
    %11289 = vmatmul.mubr.bf16.gmra.mxu0 %v5818
    %v11290 = vpop.f32.mrf.mxu0
    %v11291 = vadd.f32 %v11250, %v11290
    %v11292 = vpop.f32.mrf.mxu0
    %v11293 = vadd.f32 %v11252, %v11292
    %v11294 = vpop.f32.mrf.mxu0
    %v11295 = vpop.f32.mrf.mxu0
    %11296 = vdwg.mxu0
    %11297 = vmatprep.subr.bf16.mxu0 %v10575
    %11298 = vmatpush1.bf16.msra.mxu0 %v10574
    %11299 = vmatprep.subr.bf16.mxu0 %v10569
    %11300 = vmatpush1.bf16.msra.mxu0 %v10568
    %11301 = vmatprep.subr.bf16.mxu0 %v10563
    %11302 = vmatpush1.bf16.msra.mxu0 %v10562
    %11303 = vmatprep.subr.bf16.mxu0 %v10557
    %11304 = vmatpush1.bf16.msra.mxu0 %v10556
    %11305 = vmatprep.subr.bf16.mxu0 %v10551
    %11306 = vmatpush1.bf16.msra.mxu0 %v10550
    %11307 = vmatprep.subr.bf16.mxu0 %v10545
    %11308 = vmatpush1.bf16.msra.mxu0 %v10544
    %11309 = vmatprep.subr.bf16.mxu0 %v10539
    %11310 = vmatpush1.bf16.msra.mxu0 %v10538
    %11311 = vmatprep.subr.bf16.mxu0 %v10533
    %11312 = vmatpush1.bf16.msra.mxu0 %v10532
    %11313 = vmatprep.subr.bf16.mxu0 %v10623
    %11314 = vmatpush2.bf16.msra.mxu0 %v10622
    %11315 = vmatprep.subr.bf16.mxu0 %v10617
    %11316 = vmatpush2.bf16.msra.mxu0 %v10616
    %11317 = vmatprep.subr.bf16.mxu0 %v10611
    %11318 = vmatpush2.bf16.msra.mxu0 %v10610
    %11319 = vmatprep.subr.bf16.mxu0 %v10605
    %11320 = vmatpush2.bf16.msra.mxu0 %v10604
    %11321 = vmatprep.subr.bf16.mxu0 %v10599
    %11322 = vmatpush2.bf16.msra.mxu0 %v10598
    %11323 = vmatprep.subr.bf16.mxu0 %v10593
    %11324 = vmatpush2.bf16.msra.mxu0 %v10592
    %11325 = vmatprep.subr.bf16.mxu0 %v10587
    %11326 = vmatpush2.bf16.msra.mxu0 %v10586
    %11327 = vmatprep.subr.bf16.mxu0 %v10581
    %11328 = vmatpush2.bf16.msra.mxu0 %v10580
    %11329 = vmatprep.mubr.bf16.mxu0 %v5821
    %11330 = vmatmul.mubr.bf16.gmra.mxu0 %v5820
    %v11331 = vpop.f32.mrf.mxu0
    %v11332 = vadd.f32 %v11291, %v11331
    %v11333 = vpop.f32.mrf.mxu0
    %v11334 = vadd.f32 %v11293, %v11333
    %v11335 = vpop.f32.mrf.mxu0
    %v11336 = vpop.f32.mrf.mxu0
    %11337 = vdwg.mxu0
    %11338 = vmatprep.subr.bf16.mxu0 %v10289
    %11339 = vmatpush1.bf16.msra.mxu0 %v10288
    %11340 = vmatprep.subr.bf16.mxu0 %v10283
    %11341 = vmatpush1.bf16.msra.mxu0 %v10282
    %11342 = vmatprep.subr.bf16.mxu0 %v10277
    %11343 = vmatpush1.bf16.msra.mxu0 %v10276
    %11344 = vmatprep.subr.bf16.mxu0 %v10271
    %11345 = vmatpush1.bf16.msra.mxu0 %v10270
    %11346 = vmatprep.subr.bf16.mxu0 %v10265
    %11347 = vmatpush1.bf16.msra.mxu0 %v10264
    %11348 = vmatprep.subr.bf16.mxu0 %v10259
    %11349 = vmatpush1.bf16.msra.mxu0 %v10258
    %11350 = vmatprep.subr.bf16.mxu0 %v10253
    %11351 = vmatpush1.bf16.msra.mxu0 %v10252
    %11352 = vmatprep.subr.bf16.mxu0 %v10247
    %11353 = vmatpush1.bf16.msra.mxu0 %v10246
    %11354 = vmatprep.subr.bf16.mxu0 %v10337
    %11355 = vmatpush2.bf16.msra.mxu0 %v10336
    %11356 = vmatprep.subr.bf16.mxu0 %v10331
    %11357 = vmatpush2.bf16.msra.mxu0 %v10330
    %11358 = vmatprep.subr.bf16.mxu0 %v10325
    %11359 = vmatpush2.bf16.msra.mxu0 %v10324
    %11360 = vmatprep.subr.bf16.mxu0 %v10319
    %11361 = vmatpush2.bf16.msra.mxu0 %v10318
    %11362 = vmatprep.subr.bf16.mxu0 %v10313
    %11363 = vmatpush2.bf16.msra.mxu0 %v10312
    %11364 = vmatprep.subr.bf16.mxu0 %v10307
    %11365 = vmatpush2.bf16.msra.mxu0 %v10306
    %11366 = vmatprep.subr.bf16.mxu0 %v10301
    %11367 = vmatpush2.bf16.msra.mxu0 %v10300
    %11368 = vmatprep.subr.bf16.mxu0 %v10295
    %11369 = vmatpush2.bf16.msra.mxu0 %v10294
    %11370 = vmatprep.mubr.bf16.mxu0 %v5815
    %11371 = vmatmul.mubr.bf16.gmra.mxu0 %v5814
    %v11372 = vpop.f32.mrf.mxu0
    %v11373 = vadd.f32 0.0, %v11372
    %v11374 = vpop.f32.mrf.mxu0
    %v11375 = vadd.f32 0.0, %v11374
    %v11376 = vpop.f32.mrf.mxu0
    %v11377 = vpop.f32.mrf.mxu0
    %11378 = vdwg.mxu0
    %11379 = vmatprep.subr.bf16.mxu0 %v10385
    %11380 = vmatpush1.bf16.msra.mxu0 %v10384
    %11381 = vmatprep.subr.bf16.mxu0 %v10379
    %11382 = vmatpush1.bf16.msra.mxu0 %v10378
    %11383 = vmatprep.subr.bf16.mxu0 %v10373
    %11384 = vmatpush1.bf16.msra.mxu0 %v10372
    %11385 = vmatprep.subr.bf16.mxu0 %v10367
    %11386 = vmatpush1.bf16.msra.mxu0 %v10366
    %11387 = vmatprep.subr.bf16.mxu0 %v10361
    %11388 = vmatpush1.bf16.msra.mxu0 %v10360
    %11389 = vmatprep.subr.bf16.mxu0 %v10355
    %11390 = vmatpush1.bf16.msra.mxu0 %v10354
    %11391 = vmatprep.subr.bf16.mxu0 %v10349
    %11392 = vmatpush1.bf16.msra.mxu0 %v10348
    %11393 = vmatprep.subr.bf16.mxu0 %v10343
    %11394 = vmatpush1.bf16.msra.mxu0 %v10342
    %11395 = vmatprep.subr.bf16.mxu0 %v10433
    %11396 = vmatpush2.bf16.msra.mxu0 %v10432
    %11397 = vmatprep.subr.bf16.mxu0 %v10427
    %11398 = vmatpush2.bf16.msra.mxu0 %v10426
    %11399 = vmatprep.subr.bf16.mxu0 %v10421
    %11400 = vmatpush2.bf16.msra.mxu0 %v10420
    %11401 = vmatprep.subr.bf16.mxu0 %v10415
    %11402 = vmatpush2.bf16.msra.mxu0 %v10414
    %11403 = vmatprep.subr.bf16.mxu0 %v10409
    %11404 = vmatpush2.bf16.msra.mxu0 %v10408
    %11405 = vmatprep.subr.bf16.mxu0 %v10403
    %11406 = vmatpush2.bf16.msra.mxu0 %v10402
    %11407 = vmatprep.subr.bf16.mxu0 %v10397
    %11408 = vmatpush2.bf16.msra.mxu0 %v10396
    %11409 = vmatprep.subr.bf16.mxu0 %v10391
    %11410 = vmatpush2.bf16.msra.mxu0 %v10390
    %11411 = vmatprep.mubr.bf16.mxu0 %v5817
    %11412 = vmatmul.mubr.bf16.gmra.mxu0 %v5816
    %v11413 = vpop.f32.mrf.mxu0
    %v11414 = vadd.f32 %v11373, %v11413
    %v11415 = vpop.f32.mrf.mxu0
    %v11416 = vadd.f32 %v11375, %v11415
    %v11417 = vpop.f32.mrf.mxu0
    %v11418 = vpop.f32.mrf.mxu0
    %11419 = vdwg.mxu0
    %11420 = vmatprep.subr.bf16.mxu0 %v10481
    %11421 = vmatpush1.bf16.msra.mxu0 %v10480
    %11422 = vmatprep.subr.bf16.mxu0 %v10475
    %11423 = vmatpush1.bf16.msra.mxu0 %v10474
    %11424 = vmatprep.subr.bf16.mxu0 %v10469
    %11425 = vmatpush1.bf16.msra.mxu0 %v10468
    %11426 = vmatprep.subr.bf16.mxu0 %v10463
    %11427 = vmatpush1.bf16.msra.mxu0 %v10462
    %11428 = vmatprep.subr.bf16.mxu0 %v10457
    %11429 = vmatpush1.bf16.msra.mxu0 %v10456
    %11430 = vmatprep.subr.bf16.mxu0 %v10451
    %11431 = vmatpush1.bf16.msra.mxu0 %v10450
    %11432 = vmatprep.subr.bf16.mxu0 %v10445
    %11433 = vmatpush1.bf16.msra.mxu0 %v10444
    %11434 = vmatprep.subr.bf16.mxu0 %v10439
    %11435 = vmatpush1.bf16.msra.mxu0 %v10438
    %11436 = vmatprep.subr.bf16.mxu0 %v10529
    %11437 = vmatpush2.bf16.msra.mxu0 %v10528
    %11438 = vmatprep.subr.bf16.mxu0 %v10523
    %11439 = vmatpush2.bf16.msra.mxu0 %v10522
    %11440 = vmatprep.subr.bf16.mxu0 %v10517
    %11441 = vmatpush2.bf16.msra.mxu0 %v10516
    %11442 = vmatprep.subr.bf16.mxu0 %v10511
    %11443 = vmatpush2.bf16.msra.mxu0 %v10510
    %11444 = vmatprep.subr.bf16.mxu0 %v10505
    %11445 = vmatpush2.bf16.msra.mxu0 %v10504
    %11446 = vmatprep.subr.bf16.mxu0 %v10499
    %11447 = vmatpush2.bf16.msra.mxu0 %v10498
    %11448 = vmatprep.subr.bf16.mxu0 %v10493
    %11449 = vmatpush2.bf16.msra.mxu0 %v10492
    %11450 = vmatprep.subr.bf16.mxu0 %v10487
    %11451 = vmatpush2.bf16.msra.mxu0 %v10486
    %11452 = vmatprep.mubr.bf16.mxu0 %v5819
    %11453 = vmatmul.mubr.bf16.gmra.mxu0 %v5818
    %v11454 = vpop.f32.mrf.mxu0
    %v11455 = vadd.f32 %v11414, %v11454
    %v11456 = vpop.f32.mrf.mxu0
    %v11457 = vadd.f32 %v11416, %v11456
    %v11458 = vpop.f32.mrf.mxu0
    %v11459 = vpop.f32.mrf.mxu0
    %11460 = vdwg.mxu0
    %11461 = vmatprep.subr.bf16.mxu0 %v10577
    %11462 = vmatpush1.bf16.msra.mxu0 %v10576
    %11463 = vmatprep.subr.bf16.mxu0 %v10571
    %11464 = vmatpush1.bf16.msra.mxu0 %v10570
    %11465 = vmatprep.subr.bf16.mxu0 %v10565
    %11466 = vmatpush1.bf16.msra.mxu0 %v10564
    %11467 = vmatprep.subr.bf16.mxu0 %v10559
    %11468 = vmatpush1.bf16.msra.mxu0 %v10558
    %11469 = vmatprep.subr.bf16.mxu0 %v10553
    %11470 = vmatpush1.bf16.msra.mxu0 %v10552
    %11471 = vmatprep.subr.bf16.mxu0 %v10547
    %11472 = vmatpush1.bf16.msra.mxu0 %v10546
    %11473 = vmatprep.subr.bf16.mxu0 %v10541
    %11474 = vmatpush1.bf16.msra.mxu0 %v10540
    %11475 = vmatprep.subr.bf16.mxu0 %v10535
    %11476 = vmatpush1.bf16.msra.mxu0 %v10534
    %11477 = vmatprep.subr.bf16.mxu0 %v10625
    %11478 = vmatpush2.bf16.msra.mxu0 %v10624
    %11479 = vmatprep.subr.bf16.mxu0 %v10619
    %11480 = vmatpush2.bf16.msra.mxu0 %v10618
    %11481 = vmatprep.subr.bf16.mxu0 %v10613
    %11482 = vmatpush2.bf16.msra.mxu0 %v10612
    %11483 = vmatprep.subr.bf16.mxu0 %v10607
    %11484 = vmatpush2.bf16.msra.mxu0 %v10606
    %11485 = vmatprep.subr.bf16.mxu0 %v10601
    %11486 = vmatpush2.bf16.msra.mxu0 %v10600
    %11487 = vmatprep.subr.bf16.mxu0 %v10595
    %11488 = vmatpush2.bf16.msra.mxu0 %v10594
    %11489 = vmatprep.subr.bf16.mxu0 %v10589
    %11490 = vmatpush2.bf16.msra.mxu0 %v10588
    %11491 = vmatprep.subr.bf16.mxu0 %v10583
    %11492 = vmatpush2.bf16.msra.mxu0 %v10582
    %11493 = vmatprep.mubr.bf16.mxu0 %v5821
    %11494 = vmatmul.mubr.bf16.gmra.mxu0 %v5820
    %v11495 = vpop.f32.mrf.mxu0
    %v11496 = vadd.f32 %v11455, %v11495
    %v11497 = vpop.f32.mrf.mxu0
    %v11498 = vadd.f32 %v11457, %v11497
    %v11499 = vpop.f32.mrf.mxu0
    %v11500 = vpop.f32.mrf.mxu0
    %11501 = vdwg.mxu0
    %v11502 = vld [vmem:[%s14] sm:$0x3f]
    %v11504 = vlaneseq
    %v11505 = vshrl.u32 %v11504, 7
    %v11506 = vsub.s32 0, %v11505
    %v11507 = vrot.slane %v11502, %v11506
    %v11508 = vlaneseq
    %v11509 = vshrl.u32 %v11508, 7
    %v11510 = vsub.s32 1, %v11509
    %v11511 = vrot.slane %v11502, %v11510
    %v11512 = vlaneseq
    %v11513 = vshrl.u32 %v11512, 7
    %v11514 = vsub.s32 2, %v11513
    %v11515 = vrot.slane %v11502, %v11514
    %v11516 = vlaneseq
    %v11517 = vshrl.u32 %v11516, 7
    %v11518 = vsub.s32 3, %v11517
    %v11519 = vrot.slane %v11502, %v11518
    %v11520 = vlaneseq
    %v11521 = vshrl.u32 %v11520, 7
    %v11522 = vsub.s32 4, %v11521
    %v11523 = vrot.slane %v11502, %v11522
    %v11524 = vlaneseq
    %v11525 = vshrl.u32 %v11524, 7
    %v11526 = vsub.s32 5, %v11525
    %v11527 = vrot.slane %v11502, %v11526
    %v11534 = vmul.f32 %v11168, %v11507
    %v11535 = vmul.f32 %v11170, %v11511
    %v11536 = vmul.f32 %v11332, %v11515
    %v11537 = vmul.f32 %v11334, %v11519
    %v11538 = vmul.f32 %v11496, %v11523
    %v11539 = vmul.f32 %v11498, %v11527
    %v11540 = vld [vmem:[%s15] sm:$0x3f]
    %v11542 = vlaneseq
    %v11543 = vshrl.u32 %v11542, 7
    %v11544 = vsub.s32 0, %v11543
    %v11545 = vrot.slane %v11540, %v11544
    %v11546 = vlaneseq
    %v11547 = vshrl.u32 %v11546, 7
    %v11548 = vsub.s32 1, %v11547
    %v11549 = vrot.slane %v11540, %v11548
    %v11550 = vlaneseq
    %v11551 = vshrl.u32 %v11550, 7
    %v11552 = vsub.s32 2, %v11551
    %v11553 = vrot.slane %v11540, %v11552
    %v11554 = vlaneseq
    %v11555 = vshrl.u32 %v11554, 7
    %v11556 = vsub.s32 3, %v11555
    %v11557 = vrot.slane %v11540, %v11556
    %v11558 = vlaneseq
    %v11559 = vshrl.u32 %v11558, 7
    %v11560 = vsub.s32 4, %v11559
    %v11561 = vrot.slane %v11540, %v11560
    %v11562 = vlaneseq
    %v11563 = vshrl.u32 %v11562, 7
    %v11564 = vsub.s32 5, %v11563
    %v11565 = vrot.slane %v11540, %v11564
    %v11572 = vadd.f32 %v11534, %v11545
    %v11573 = vadd.f32 %v11535, %v11549
    %v11574 = vadd.f32 %v11536, %v11553
    %v11575 = vadd.f32 %v11537, %v11557
    %v11576 = vadd.f32 %v11538, %v11561
    %v11577 = vadd.f32 %v11539, %v11565
    %v11578 = vxor.u32 %v11572, 2147483648
    %v11579 = vxor.u32 %v11573, 2147483648
    %v11580 = vxor.u32 %v11574, 2147483648
    %v11581 = vxor.u32 %v11575, 2147483648
    %v11582 = vxor.u32 %v11576, 2147483648
    %v11583 = vxor.u32 %v11577, 2147483648
    %v11584 = vmul.f32 %v11578, 1.442695
    %v11585 = vpow.pop %v11584
    %v11586 = vmul.f32 %v11579, 1.442695
    %v11587 = vpow.pop %v11586
    %v11588 = vmul.f32 %v11580, 1.442695
    %v11589 = vpow.pop %v11588
    %v11590 = vmul.f32 %v11581, 1.442695
    %v11591 = vpow.pop %v11590
    %v11592 = vmul.f32 %v11582, 1.442695
    %v11593 = vpow.pop %v11592
    %v11594 = vmul.f32 %v11583, 1.442695
    %v11595 = vpow.pop %v11594
    %v11596 = vadd.f32 %v11585, 1.0
    %v11597 = vadd.f32 %v11587, 1.0
    %v11598 = vadd.f32 %v11589, 1.0
    %v11599 = vadd.f32 %v11591, 1.0
    %v11600 = vadd.f32 %v11593, 1.0
    %v11601 = vadd.f32 %v11595, 1.0
    %v11602 = vrcp.pop %v11596
    %v11603 = vmul.f32 1.0, %v11602
    %v11604 = vrcp.pop %v11597
    %v11605 = vmul.f32 1.0, %v11604
    %v11606 = vrcp.pop %v11598
    %v11607 = vmul.f32 1.0, %v11606
    %v11608 = vrcp.pop %v11599
    %v11609 = vmul.f32 1.0, %v11608
    %v11610 = vrcp.pop %v11600
    %v11611 = vmul.f32 1.0, %v11610
    %v11612 = vrcp.pop %v11601
    %v11613 = vmul.f32 1.0, %v11612
    %v11620 = vcombine.low %v11603, %v11605
    %v11621 = vcombine.low %v11607, %v11609
    %v11622 = vcombine.low %v11611, %v11613
    %v11624 = vunpack.c.l.s4 1966171168
    %v11625 = vunpack.c.0.s8 %v11624
    %v11626 = vlaneseq
    %v11627 = vshrl.u32 %v11626, 7
    %v11628 = vsub.s32 %v11625, %v11627
    %v11629 = vrot.slane %v11620, %v11628
    %v11631 = vunpack.c.l.s4 1966171168
    %v11632 = vunpack.c.0.s8 %v11631
    %v11633 = vlaneseq
    %v11634 = vshrl.u32 %v11633, 7
    %v11635 = vsub.s32 %v11632, %v11634
    %v11636 = vrot.slane %v11621, %v11635
    %v11638 = vunpack.c.l.s4 1966171168
    %v11639 = vunpack.c.0.s8 %v11638
    %v11640 = vlaneseq
    %v11641 = vshrl.u32 %v11640, 7
    %v11642 = vsub.s32 %v11639, %v11641
    %v11643 = vrot.slane %v11622, %v11642
    %v11644 = vcombine.low %v11629, %v11636
    %v11646 = vunpack.c.l.s4 1966171168
    %v11647 = vunpack.c.0.s8 %v11646
    %v11648 = vlaneseq
    %v11649 = vshrl.u32 %v11648, 7
    %v11650 = vsub.s32 %v11647, %v11649
    %v11651 = vrot.slane %v11644, %v11650
    %v11653 = vunpack.c.l.s4 1966171168
    %v11654 = vunpack.c.0.s8 %v11653
    %v11655 = vlaneseq
    %v11656 = vshrl.u32 %v11655, 7
    %v11657 = vsub.s32 %v11654, %v11656
    %v11658 = vrot.slane %v11643, %v11657
    %v11659 = vcombine.low %v11651, %v11658
    %v11661 = vlaneseq
    %vm11662 = vcmp.ge.s32.totalorder %v11661, 0
    %vm11663 = vcmp.lt.s32.totalorder %v11661, 768
    %vm11664 = vmand %vm11662, %vm11663
    %11665 = vst.msk [vmem:[%s16] sm:$0x3f] %vm11664, %v11659
    // Predicated region
    $region70: #{mesh_renderer_forward.1} parent=1 // pred_check
      _
    $region71: #{mesh_renderer_forward.1} parent=1 // pred_check_branch
      %11667 = sbr.rel (0) target = $region73
    $region72: #{mesh_renderer_forward.1} parent=1 // pred_region
      _
    $region73: #{mesh_renderer_forward.1} parent=1 // pred_fallthru
      _
    // Predicated region
    $region74: #{mesh_renderer_forward.1} parent=1 // pred_check
      _
    $region75: #{mesh_renderer_forward.1} parent=1 // pred_check_branch
      %11669 = sbr.rel (0) target = $region77
    $region76: #{mesh_renderer_forward.1} parent=1 // pred_region
      _
    $region77: #{mesh_renderer_forward.1} parent=1 // pred_fallthru
      _
    %11670 = vsyncpa [#allocation8], 1
  %11671 = vsyncmov [#allocation6]
  %s11672 = vpop.sfrf %11671
  %p11673 = scmp.eq.s32.totalorder %s11672, 0
  %p11674 = pneg %p11673
  %11676 = shalt.err (%p11674)
  %s11677 = scalar_lea.sflag [#allocation6], 1
  %11678 = vsyncmov %s11677
  %s11679 = vpop.sfrf %11678
  %p11680 = scmp.eq.s32.totalorder %s11679, 0
  %p11681 = pneg %p11680
  %11683 = shalt.err (%p11681)

</llo_original>
